<compile_context>
chip_gen: v7x
topology: tpu7x:2x2x1
jax: 0.10.0
libtpu: 0.0.40
codegen_flags: <defaults>
</compile_context>

<pallas_src>
import functools

import jax
import jax.numpy as jnp
from jax.experimental import pallas as pl
from jax.experimental.pallas import tpu as pltpu


def _round_up(x, m):
    return (x + m - 1) // m * m


# ----------------------------- Pallas kernels ------------------------------


def _matmul_bias_act_kernel(x_ref, w_ref, b_ref, o_ref, *, apply_relu):
    acc = jnp.dot(x_ref[...], w_ref[...], preferred_element_type=jnp.float32)
    acc = acc + b_ref[...]
    if apply_relu:
        acc = jnp.maximum(acc, 0.0)
    o_ref[...] = acc.astype(o_ref.dtype)


def linear_pallas(x, w, b_row, *, relu):
    """y = x @ w + b (optionally ReLU).  x:(M,K), w:(K,N), b_row:(1,N)."""
    M, K = x.shape
    _, N = w.shape
    # Row tiling: one full-extent tile for small M (single grid step, no
    # pipeline overhead); two parallel tiles for conv1-sized M so both
    # TensorCores are used on v7x (no-op cost on single-TC v5e/v6e).
    if M >= 512:
        tm = _round_up(pl.cdiv(M, 2), 8)
    else:
        tm = _round_up(M, 8)
    M_pad = _round_up(M, tm)
    x_p = x if M_pad == M else jnp.pad(x, ((0, M_pad - M), (0, 0)))
    out = pl.pallas_call(
        functools.partial(_matmul_bias_act_kernel, apply_relu=relu),
        out_shape=jax.ShapeDtypeStruct((M_pad, N), jnp.float32),
        grid=(M_pad // tm,),
        in_specs=[
            pl.BlockSpec((tm, K), lambda i: (i, 0)),   # row tile of activations
            pl.BlockSpec((K, N), lambda i: (0, 0)),    # full weight resident
            pl.BlockSpec((1, N), lambda i: (0, 0)),    # bias row
        ],
        out_specs=pl.BlockSpec((tm, N), lambda i: (i, 0)),
        compiler_params=pltpu.CompilerParams(dimension_semantics=("parallel",)),
    )(x_p, w, b_row)
    return out if M_pad == M else out[:M]


def _fc_head_kernel(x_ref, w1_ref, b1_ref, w2a_ref, b2a_ref, w2v_ref, b2v_ref,
                    o_ref, *, n_actions):
    # fc1_adv & fc1_val fused as one (K,1024) matmul.
    h = jnp.dot(x_ref[...], w1_ref[...], preferred_element_type=jnp.float32)
    h = jnp.maximum(h + b1_ref[...], 0.0)
    hid = w2a_ref.shape[0]                      # 512
    # fc2_adv on the adv half (output padded to 128 lanes, pad cols are 0),
    # fc2_val on the val half.
    a = jnp.dot(h[:, :hid], w2a_ref[...],
                preferred_element_type=jnp.float32) + b2a_ref[...]
    v = jnp.dot(h[:, hid:], w2v_ref[...],
                preferred_element_type=jnp.float32) + b2v_ref[...]
    # Padded adv columns are exactly zero => sum over 128 == sum over actions.
    mean_a = jnp.sum(a, axis=1, keepdims=True) * (1.0 / n_actions)
    o_ref[...] = (a + v - mean_a).astype(o_ref.dtype)


def fc_head_pallas(x, w1, b1, w2a, b2a, w2v, b2v, n_actions):
    """Fused fc1(adv,val) -> ReLU -> fc2(adv,val) -> dueling combine."""
    B, K = x.shape
    B_pad = max(8, _round_up(B, 8))
    x_p = x if B_pad == B else jnp.pad(x, ((0, B_pad - B), (0, 0)))
    n_pad = w2a.shape[1]                        # 128-lane padded action dim
    out = pl.pallas_call(
        functools.partial(_fc_head_kernel, n_actions=n_actions),
        out_shape=jax.ShapeDtypeStruct((B_pad, n_pad), jnp.float32),
        # All FC weights (~13 MB f32) live in VMEM; raise the scoped limit so
        # the 16 MiB v5e default cannot reject / spill it (<= 64 MiB v7x VMEM).
        compiler_params=pltpu.CompilerParams(vmem_limit_bytes=48 * 1024 * 1024),
    )(x_p, w1, b1, w2a, b2a, w2v, b2v)
    return out[:B, :n_actions]


# ------------------------------ conv via im2col ----------------------------


def _im2col(x, ksize, stride):
    """x: (B,H,W,C) -> (B,OH,OW, C*k*k) with feature order (c, kh, kw)."""
    B, H, W, C = x.shape
    OH = (H - ksize) // stride + 1
    OW = (W - ksize) // stride + 1
    cols = []
    for kh in range(ksize):
        for kw in range(ksize):
            cols.append(x[:, kh:kh + stride * OH:stride,
                          kw:kw + stride * OW:stride, :])
    p = jnp.stack(cols, axis=-1)                   # (B, OH, OW, C, k*k)
    return p.reshape(B, OH, OW, C * ksize * ksize), OH, OW


def conv2d_relu(x_nhwc, w_mat, b_row, ksize, stride, out_ch):
    """w_mat: (C*k*k, O) pre-reshaped from OIHW; b_row: (1, O)."""
    patches, OH, OW = _im2col(x_nhwc, ksize, stride)
    B = x_nhwc.shape[0]
    K = patches.shape[-1]
    y = linear_pallas(patches.reshape(B * OH * OW, K), w_mat, b_row, relu=True)
    return y.reshape(B, OH, OW, out_ch)


# ------------------------------ model wiring -------------------------------


def init_params(key, n_actions, n_states):
    """PyTorch-layout parameters (Conv OIHW, Linear (out,in))."""
    ks = jax.random.split(key, 14)

    def u(k, shape, fan_in):
        bound = 1.0 / jnp.sqrt(float(fan_in))
        return jax.random.uniform(k, shape, jnp.float32, -bound, bound)

    return {
        "conv1_w": u(ks[0], (32, n_states, 8, 8), n_states * 64),
        "conv1_b": u(ks[1], (32,), n_states * 64),
        "conv2_w": u(ks[2], (64, 32, 4, 4), 32 * 16),
        "conv2_b": u(ks[3], (64,), 32 * 16),
        "conv3_w": u(ks[4], (64, 64, 3, 3), 64 * 9),
        "conv3_b": u(ks[5], (64,), 64 * 9),
        "fc1_adv_w": u(ks[6], (512, 3136), 3136),
        "fc1_adv_b": u(ks[7], (512,), 3136),
        "fc1_val_w": u(ks[8], (512, 3136), 3136),
        "fc1_val_b": u(ks[9], (512,), 3136),
        "fc2_adv_w": u(ks[10], (n_actions, 512), 512),
        "fc2_adv_b": u(ks[11], (n_actions,), 512),
        "fc2_val_w": u(ks[12], (1, 512), 512),
        "fc2_val_b": u(ks[13], (1,), 512),
    }


def prepare_params(params):
    """One-time (outside jit) reshape/transpose/concat into kernel layout."""
    n_actions = params["fc2_adv_w"].shape[0]
    hid = params["fc1_adv_w"].shape[0]                  # 512
    n_pad = _round_up(max(n_actions, 1), 128)           # lane-dense fc2 output
    w2a = jnp.zeros((hid, n_pad), jnp.float32)
    w2a = w2a.at[:, :n_actions].set(params["fc2_adv_w"].T)
    b2a = jnp.zeros((1, n_pad), jnp.float32)
    b2a = b2a.at[:, :n_actions].set(params["fc2_adv_b"][None, :])

    # fc1 adv | val fused into one (3136, 1024) weight + (1, 1024) bias.
    w1 = jnp.concatenate([params["fc1_adv_w"].T, params["fc1_val_w"].T], axis=1)
    # Permute w1 rows from PyTorch's NCHW-flatten order (c,h,w) to NHWC-flatten
    # order (h,w,c) so the forward pass can feed conv3's NHWC activations
    # directly (no per-forward transpose of the (B,7,7,64) tensor).
    w1 = w1.reshape(64, 7, 7, 2 * hid).transpose(1, 2, 0, 3).reshape(3136,
                                                                     2 * hid)
    return {
        "c1_w": params["conv1_w"].reshape(params["conv1_w"].shape[0], -1).T,
        "c1_b": params["conv1_b"][None, :],
        "c2_w": params["conv2_w"].reshape(params["conv2_w"].shape[0], -1).T,
        "c2_b": params["conv2_b"][None, :],
        "c3_w": params["conv3_w"].reshape(params["conv3_w"].shape[0], -1).T,
        "c3_b": params["conv3_b"][None, :],
        "w1": w1,
        "b1": jnp.concatenate([params["fc1_adv_b"],
                               params["fc1_val_b"]])[None, :],
        "w2a": w2a,
        "b2a": b2a,
        "w2v": params["fc2_val_w"].T,                   # (512, 1)
        "b2v": params["fc2_val_b"][None, :],            # (1, 1)
    }


def d2qn_forward(prep, x_nchw, *, n_actions):
    x = jnp.transpose(x_nchw, (0, 2, 3, 1))                            # NHWC
    x = conv2d_relu(x, prep["c1_w"], prep["c1_b"], 8, 4, 32)           # (B,20,20,32)
    x = conv2d_relu(x, prep["c2_w"], prep["c2_b"], 4, 2, 64)           # (B, 9, 9,64)
    x = conv2d_relu(x, prep["c3_w"], prep["c3_b"], 3, 1, 64)           # (B, 7, 7,64)
    B = x.shape[0]
    # NHWC flatten; fc1 weight rows were pre-permuted to match (see prepare).
    x = x.reshape(B, -1)
    return fc_head_pallas(x, prep["w1"], prep["b1"], prep["w2a"],
                          prep["b2a"], prep["w2v"], prep["b2v"], n_actions)


def d2qn_reference(params, x_nchw):
    """Pure-JAX reference (PyTorch semantics) for correctness check."""
    def conv(x, w, b, s):
        y = jax.lax.conv_general_dilated(
            x, w, (s, s), "VALID", dimension_numbers=("NCHW", "OIHW", "NCHW"))
        return jax.nn.relu(y + b[None, :, None, None])

    x = conv(x_nchw, params["conv1_w"], params["conv1_b"], 4)
    x = conv(x, params["conv2_w"], params["conv2_b"], 2)
    x = conv(x, params["conv3_w"], params["conv3_b"], 1)
    B = x.shape[0]
    x = x.reshape(B, -1)
    a = jax.nn.relu(x @ params["fc1_adv_w"].T + params["fc1_adv_b"])
    v = jax.nn.relu(x @ params["fc1_val_w"].T + params["fc1_val_b"])
    a = a @ params["fc2_adv_w"].T + params["fc2_adv_b"]
    v = v @ params["fc2_val_w"].T + params["fc2_val_b"]
    return a + v - jnp.mean(a, axis=1, keepdims=True)


if __name__ == "__main__":
    n_actions, n_states, batch = 6, 4, 2
    key = jax.random.PRNGKey(0)
    kp, kx = jax.random.split(key)
    params = init_params(kp, n_actions, n_states)
    prep = prepare_params(params)          # one-time layout prep, outside jit
    # 84x84 spatial size is required by the module (fc1 expects 7*7*64 feats).
    x = jax.random.uniform(kx, (batch, n_states, 84, 84), jnp.float32)

    fwd = jax.jit(functools.partial(d2qn_forward, n_actions=n_actions))
    y = jax.block_until_ready(fwd(prep, x))
    assert y.shape == (batch, n_actions), y.shape

    y_ref = jax.block_until_ready(jax.jit(d2qn_reference)(params, x))
    assert jnp.allclose(y, y_ref, rtol=1e-4, atol=1e-4), (
        float(jnp.max(jnp.abs(y - y_ref))))

    print("KERNEL_OK")
</pallas_src>

<mosaic_0001>
module attributes {stable_mosaic.version = 11 : i64} {
  func.func @_matmul_bias_act_kernel(%arg0: i32, %arg1: memref<400x256xf32, #tpu.memory_space<vmem>>, %arg2: memref<256x32xf32, #tpu.memory_space<vmem>>, %arg3: memref<1x32xf32, #tpu.memory_space<vmem>>, %arg4: memref<400x32xf32, #tpu.memory_space<vmem>>) attributes {dimension_semantics = [#tpu.dimension_semantics<parallel>], iteration_bounds = array<i64: 2>, scalar_prefetch = 0 : i64, scratch_operands = 0 : i64, tpu.core_type = #tpu.core_type<tc>, window_params = [{transform_indices = @transform_0, window_bounds = array<i64: 400, 256>}, {pipeline_mode = #tpu.pipeline_mode<synchronous>, transform_indices = @transform_1, window_bounds = array<i64: 256, 32>}, {pipeline_mode = #tpu.pipeline_mode<synchronous>, transform_indices = @transform_2, window_bounds = array<i64: 1, 32>}, {transform_indices = @transform_3, window_bounds = array<i64: 400, 32>}]} {
    %c0 = arith.constant 0 : index
    %c0_0 = arith.constant 0 : index
    %0 = vector.load %arg1[%c0, %c0_0] : memref<400x256xf32, #tpu.memory_space<vmem>>, vector<400x256xf32>
    %c0_1 = arith.constant 0 : index
    %c0_2 = arith.constant 0 : index
    %1 = vector.load %arg2[%c0_1, %c0_2] : memref<256x32xf32, #tpu.memory_space<vmem>>, vector<256x32xf32>
    %cst = arith.constant dense<0.000000e+00> : vector<400x32xf32>
    %2 = tpu.matmul %0, %1, %cst {dimension_numbers = #tpu.dot_dimension_numbers<[1], [0], [0], [1], [0, 0, 1, 1], [], []>} : vector<400x256xf32>, vector<256x32xf32>, vector<400x32xf32> -> vector<400x32xf32>
    %c0_3 = arith.constant 0 : index
    %c0_4 = arith.constant 0 : index
    %3 = vector.load %arg3[%c0_3, %c0_4] : memref<1x32xf32, #tpu.memory_space<vmem>>, vector<1x32xf32>
    %4 = vector.broadcast %3 : vector<1x32xf32> to vector<400x32xf32>
    %5 = arith.addf %2, %4 : vector<400x32xf32>
    %cst_5 = arith.constant 0.000000e+00 : f32
    %6 = vector.broadcast %cst_5 : f32 to vector<400x32xf32>
    %7 = arith.maximumf %5, %6 : vector<400x32xf32>
    %c0_6 = arith.constant 0 : index
    %c0_7 = arith.constant 0 : index
    %8 = vector.load %arg4[%c0_6, %c0_7] : memref<400x32xf32, #tpu.memory_space<vmem>>, vector<400x32xf32>
    tpu.vector_store %arg4[%c0_6, %c0_7], %7 {strides = array<i32>} : memref<400x32xf32, #tpu.memory_space<vmem>>, vector<400x32xf32>,
    return
  }
  func.func @transform_0(%arg0: i32) -> (i32, i32) {
    %c0_i32 = arith.constant 0 : i32
    %c0_i32_0 = arith.constant 0 : i32
    return %arg0, %c0_i32 : i32, i32
  }
  func.func @transform_1(%arg0: i32) -> (i32, i32) {
    %c0_i32 = arith.constant 0 : i32
    %c0_i32_0 = arith.constant 0 : i32
    %c0_i32_1 = arith.constant 0 : i32
    return %c0_i32, %c0_i32_0 : i32, i32
  }
  func.func @transform_2(%arg0: i32) -> (i32, i32) {
    %c0_i32 = arith.constant 0 : i32
    %c0_i32_0 = arith.constant 0 : i32
    %c0_i32_1 = arith.constant 0 : i32
    return %c0_i32, %c0_i32_0 : i32, i32
  }
  func.func @transform_3(%arg0: i32) -> (i32, i32) {
    %c0_i32 = arith.constant 0 : i32
    %c0_i32_0 = arith.constant 0 : i32
    return %arg0, %c0_i32 : i32, i32
  }
}

module attributes {stable_mosaic.version = 11 : i64} {
  func.func @_matmul_bias_act_kernel(%arg0: i32, %arg1: memref<168x512xf32, #tpu.memory_space<vmem>>, %arg2: memref<512x64xf32, #tpu.memory_space<vmem>>, %arg3: memref<1x64xf32, #tpu.memory_space<vmem>>, %arg4: memref<168x64xf32, #tpu.memory_space<vmem>>) attributes {dimension_semantics = [#tpu.dimension_semantics<parallel>], iteration_bounds = array<i64: 1>, scalar_prefetch = 0 : i64, scratch_operands = 0 : i64, tpu.core_type = #tpu.core_type<tc>, window_params = [{transform_indices = @transform_0, window_bounds = array<i64: 168, 512>}, {pipeline_mode = #tpu.pipeline_mode<synchronous>, transform_indices = @transform_1, window_bounds = array<i64: 512, 64>}, {pipeline_mode = #tpu.pipeline_mode<synchronous>, transform_indices = @transform_2, window_bounds = array<i64: 1, 64>}, {transform_indices = @transform_3, window_bounds = array<i64: 168, 64>}]} {
    %c0 = arith.constant 0 : index
    %c0_0 = arith.constant 0 : index
    %0 = vector.load %arg1[%c0, %c0_0] : memref<168x512xf32, #tpu.memory_space<vmem>>, vector<168x512xf32>
    %c0_1 = arith.constant 0 : index
    %c0_2 = arith.constant 0 : index
    %1 = vector.load %arg2[%c0_1, %c0_2] : memref<512x64xf32, #tpu.memory_space<vmem>>, vector<512x64xf32>
    %cst = arith.constant dense<0.000000e+00> : vector<168x64xf32>
    %2 = tpu.matmul %0, %1, %cst {dimension_numbers = #tpu.dot_dimension_numbers<[1], [0], [0], [1], [0, 0, 1, 1], [], []>} : vector<168x512xf32>, vector<512x64xf32>, vector<168x64xf32> -> vector<168x64xf32>
    %c0_3 = arith.constant 0 : index
    %c0_4 = arith.constant 0 : index
    %3 = vector.load %arg3[%c0_3, %c0_4] : memref<1x64xf32, #tpu.memory_space<vmem>>, vector<1x64xf32>
    %4 = vector.broadcast %3 : vector<1x64xf32> to vector<168x64xf32>
    %5 = arith.addf %2, %4 : vector<168x64xf32>
    %cst_5 = arith.constant 0.000000e+00 : f32
    %6 = vector.broadcast %cst_5 : f32 to vector<168x64xf32>
    %7 = arith.maximumf %5, %6 : vector<168x64xf32>
    %c0_6 = arith.constant 0 : index
    %c0_7 = arith.constant 0 : index
    %8 = vector.load %arg4[%c0_6, %c0_7] : memref<168x64xf32, #tpu.memory_space<vmem>>, vector<168x64xf32>
    tpu.vector_store %arg4[%c0_6, %c0_7], %7 {strides = array<i32>} : memref<168x64xf32, #tpu.memory_space<vmem>>, vector<168x64xf32>,
    return
  }
  func.func @transform_0(%arg0: i32) -> (i32, i32) {
    %c0_i32 = arith.constant 0 : i32
    %c0_i32_0 = arith.constant 0 : i32
    return %arg0, %c0_i32 : i32, i32
  }
  func.func @transform_1(%arg0: i32) -> (i32, i32) {
    %c0_i32 = arith.constant 0 : i32
    %c0_i32_0 = arith.constant 0 : i32
    %c0_i32_1 = arith.constant 0 : i32
    return %c0_i32, %c0_i32_0 : i32, i32
  }
  func.func @transform_2(%arg0: i32) -> (i32, i32) {
    %c0_i32 = arith.constant 0 : i32
    %c0_i32_0 = arith.constant 0 : i32
    %c0_i32_1 = arith.constant 0 : i32
    return %c0_i32, %c0_i32_0 : i32, i32
  }
  func.func @transform_3(%arg0: i32) -> (i32, i32) {
    %c0_i32 = arith.constant 0 : i32
    %c0_i32_0 = arith.constant 0 : i32
    return %arg0, %c0_i32 : i32, i32
  }
}

module attributes {stable_mosaic.version = 11 : i64} {
  func.func @_matmul_bias_act_kernel(%arg0: i32, %arg1: memref<104x576xf32, #tpu.memory_space<vmem>>, %arg2: memref<576x64xf32, #tpu.memory_space<vmem>>, %arg3: memref<1x64xf32, #tpu.memory_space<vmem>>, %arg4: memref<104x64xf32, #tpu.memory_space<vmem>>) attributes {dimension_semantics = [#tpu.dimension_semantics<parallel>], iteration_bounds = array<i64: 1>, scalar_prefetch = 0 : i64, scratch_operands = 0 : i64, tpu.core_type = #tpu.core_type<tc>, window_params = [{transform_indices = @transform_0, window_bounds = array<i64: 104, 576>}, {pipeline_mode = #tpu.pipeline_mode<synchronous>, transform_indices = @transform_1, window_bounds = array<i64: 576, 64>}, {pipeline_mode = #tpu.pipeline_mode<synchronous>, transform_indices = @transform_2, window_bounds = array<i64: 1, 64>}, {transform_indices = @transform_3, window_bounds = array<i64: 104, 64>}]} {
    %c0 = arith.constant 0 : index
    %c0_0 = arith.constant 0 : index
    %0 = vector.load %arg1[%c0, %c0_0] : memref<104x576xf32, #tpu.memory_space<vmem>>, vector<104x576xf32>
    %c0_1 = arith.constant 0 : index
    %c0_2 = arith.constant 0 : index
    %1 = vector.load %arg2[%c0_1, %c0_2] : memref<576x64xf32, #tpu.memory_space<vmem>>, vector<576x64xf32>
    %cst = arith.constant dense<0.000000e+00> : vector<104x64xf32>
    %2 = tpu.matmul %0, %1, %cst {dimension_numbers = #tpu.dot_dimension_numbers<[1], [0], [0], [1], [0, 0, 1, 1], [], []>} : vector<104x576xf32>, vector<576x64xf32>, vector<104x64xf32> -> vector<104x64xf32>
    %c0_3 = arith.constant 0 : index
    %c0_4 = arith.constant 0 : index
    %3 = vector.load %arg3[%c0_3, %c0_4] : memref<1x64xf32, #tpu.memory_space<vmem>>, vector<1x64xf32>
    %4 = vector.broadcast %3 : vector<1x64xf32> to vector<104x64xf32>
    %5 = arith.addf %2, %4 : vector<104x64xf32>
    %cst_5 = arith.constant 0.000000e+00 : f32
    %6 = vector.broadcast %cst_5 : f32 to vector<104x64xf32>
    %7 = arith.maximumf %5, %6 : vector<104x64xf32>
    %c0_6 = arith.constant 0 : index
    %c0_7 = arith.constant 0 : index
    %8 = vector.load %arg4[%c0_6, %c0_7] : memref<104x64xf32, #tpu.memory_space<vmem>>, vector<104x64xf32>
    tpu.vector_store %arg4[%c0_6, %c0_7], %7 {strides = array<i32>} : memref<104x64xf32, #tpu.memory_space<vmem>>, vector<104x64xf32>,
    return
  }
  func.func @transform_0(%arg0: i32) -> (i32, i32) {
    %c0_i32 = arith.constant 0 : i32
    %c0_i32_0 = arith.constant 0 : i32
    return %arg0, %c0_i32 : i32, i32
  }
  func.func @transform_1(%arg0: i32) -> (i32, i32) {
    %c0_i32 = arith.constant 0 : i32
    %c0_i32_0 = arith.constant 0 : i32
    %c0_i32_1 = arith.constant 0 : i32
    return %c0_i32, %c0_i32_0 : i32, i32
  }
  func.func @transform_2(%arg0: i32) -> (i32, i32) {
    %c0_i32 = arith.constant 0 : i32
    %c0_i32_0 = arith.constant 0 : i32
    %c0_i32_1 = arith.constant 0 : i32
    return %c0_i32, %c0_i32_0 : i32, i32
  }
  func.func @transform_3(%arg0: i32) -> (i32, i32) {
    %c0_i32 = arith.constant 0 : i32
    %c0_i32_0 = arith.constant 0 : i32
    return %arg0, %c0_i32 : i32, i32
  }
}

module attributes {stable_mosaic.version = 11 : i64} {
  func.func @_fc_head_kernel(%arg0: memref<8x3136xf32, #tpu.memory_space<vmem>>, %arg1: memref<3136x1024xf32, #tpu.memory_space<vmem>>, %arg2: memref<1x1024xf32, #tpu.memory_space<vmem>>, %arg3: memref<512x128xf32, #tpu.memory_space<vmem>>, %arg4: memref<1x128xf32, #tpu.memory_space<vmem>>, %arg5: memref<512x1xf32, #tpu.memory_space<vmem>>, %arg6: memref<1x1xf32, #tpu.memory_space<vmem>>, %arg7: memref<8x128xf32, #tpu.memory_space<vmem>>) attributes {dimension_semantics = [], scalar_prefetch = 0 : i64, scratch_operands = 0 : i64, tpu.core_type = #tpu.core_type<tc>} {
    %c0 = arith.constant 0 : index
    %c0_0 = arith.constant 0 : index
    %0 = vector.load %arg0[%c0, %c0_0] : memref<8x3136xf32, #tpu.memory_space<vmem>>, vector<8x3136xf32>
    %c0_1 = arith.constant 0 : index
    %c0_2 = arith.constant 0 : index
    %1 = vector.load %arg1[%c0_1, %c0_2] : memref<3136x1024xf32, #tpu.memory_space<vmem>>, vector<3136x1024xf32>
    %cst = arith.constant dense<0.000000e+00> : vector<8x1024xf32>
    %2 = tpu.matmul %0, %1, %cst {dimension_numbers = #tpu.dot_dimension_numbers<[1], [0], [0], [1], [0, 0, 1, 1], [], []>} : vector<8x3136xf32>, vector<3136x1024xf32>, vector<8x1024xf32> -> vector<8x1024xf32>
    %c0_3 = arith.constant 0 : index
    %c0_4 = arith.constant 0 : index
    %3 = vector.load %arg2[%c0_3, %c0_4] : memref<1x1024xf32, #tpu.memory_space<vmem>>, vector<1x1024xf32>
    %4 = vector.broadcast %3 : vector<1x1024xf32> to vector<8x1024xf32>
    %5 = arith.addf %2, %4 : vector<8x1024xf32>
    %cst_5 = arith.constant 0.000000e+00 : f32
    %6 = vector.broadcast %cst_5 : f32 to vector<8x1024xf32>
    %7 = arith.maximumf %5, %6 : vector<8x1024xf32>
    %8 = vector.extract_strided_slice %7 {offsets = [0, 0], sizes = [8, 512], strides = [1, 1]} : vector<8x1024xf32> to vector<8x512xf32>
    %c0_6 = arith.constant 0 : index
    %c0_7 = arith.constant 0 : index
    %9 = vector.load %arg3[%c0_6, %c0_7] : memref<512x128xf32, #tpu.memory_space<vmem>>, vector<512x128xf32>
    %cst_8 = arith.constant dense<0.000000e+00> : vector<8x128xf32>
    %10 = tpu.matmul %8, %9, %cst_8 {dimension_numbers = #tpu.dot_dimension_numbers<[1], [0], [0], [1], [0, 0, 1, 1], [], []>} : vector<8x512xf32>, vector<512x128xf32>, vector<8x128xf32> -> vector<8x128xf32>
    %c0_9 = arith.constant 0 : index
    %c0_10 = arith.constant 0 : index
    %11 = vector.load %arg4[%c0_9, %c0_10] : memref<1x128xf32, #tpu.memory_space<vmem>>, vector<1x128xf32>
    %12 = vector.broadcast %11 : vector<1x128xf32> to vector<8x128xf32>
    %13 = arith.addf %10, %12 : vector<8x128xf32>
    %14 = vector.extract_strided_slice %7 {offsets = [0, 512], sizes = [8, 512], strides = [1, 1]} : vector<8x1024xf32> to vector<8x512xf32>
    %c0_11 = arith.constant 0 : index
    %c0_12 = arith.constant 0 : index
    %15 = vector.load %arg5[%c0_11, %c0_12] : memref<512x1xf32, #tpu.memory_space<vmem>>, vector<512x1xf32>
    %cst_13 = arith.constant dense<0.000000e+00> : vector<8x1xf32>
    %16 = tpu.matmul %14, %15, %cst_13 {dimension_numbers = #tpu.dot_dimension_numbers<[1], [0], [0], [1], [0, 0, 1, 1], [], []>} : vector<8x512xf32>, vector<512x1xf32>, vector<8x1xf32> -> vector<8x1xf32>
    %c0_14 = arith.constant 0 : index
    %c0_15 = arith.constant 0 : index
    %17 = vector.load %arg6[%c0_14, %c0_15] : memref<1x1xf32, #tpu.memory_space<vmem>>, vector<1x1xf32>
    %18 = vector.broadcast %17 : vector<1x1xf32> to vector<8x1xf32>
    %19 = arith.addf %16, %18 : vector<8x1xf32>
    %cst_16 = arith.constant dense<0.000000e+00> : vector<8xf32>
    %20 = vector.multi_reduction <add>, %13, %cst_16 [1] : vector<8x128xf32> to vector<8xf32>
    %21 = vector.shape_cast %20 : vector<8xf32> to vector<8x1xf32>
    %cst_17 = arith.constant 0.166666672 : f32
    %22 = vector.broadcast %cst_17 : f32 to vector<8x1xf32>
    %23 = arith.mulf %21, %22 : vector<8x1xf32>
    %24 = vector.broadcast %19 : vector<8x1xf32> to vector<8x128xf32>
    %25 = arith.addf %13, %24 : vector<8x128xf32>
    %26 = vector.broadcast %23 : vector<8x1xf32> to vector<8x128xf32>
    %27 = arith.subf %25, %26 : vector<8x128xf32>
    %c0_18 = arith.constant 0 : index
    %c0_19 = arith.constant 0 : index
    %28 = vector.load %arg7[%c0_18, %c0_19] : memref<8x128xf32, #tpu.memory_space<vmem>>, vector<8x128xf32>
    tpu.vector_store %arg7[%c0_18, %c0_19], %27 {strides = array<i32>} : memref<8x128xf32, #tpu.memory_space<vmem>>, vector<8x128xf32>,
    return
  }
}

</mosaic_0001>

<llo_original>
// kernel: d2qn_forward.4
$region0: #{d2qn_forward.4}
  #allocation0 [shape = 'u32[]', space=smem, size = 0x4, offset = 0x4, fixed_abs, tag = 'smem constant byte address 0x4 - core index']
  #allocation1 [shape = 'u32[144,128]{1,0:T(1,128)}', space=vmem, size = 0x12000, scoped, tag = 'internal scratch']
  %s0 = inlined_call_operand.vmem [shape: f32[800,256], index: 0, kind: input, shape index: {}]
  %s1 = inlined_call_operand.vmem [shape: f32[256,32], index: 1, kind: input, shape index: {}]
  %s2 = inlined_call_operand.vmem [shape: f32[1,32], index: 2, kind: input, shape index: {}]
  %s3 = inlined_call_operand.vmem [shape: f32[800,32], index: 3, kind: output, shape index: {}]
  %s4 = sld [smem:[#allocation0]]
  $region45: #{d2qn_forward.4} parent=0
    _
  %s6 = ssub.s32 1, %s4
  %s7 = scalar_select 0, %s6, %s4
  loop: start=0, step=1, limit=4
  $region2: #{d2qn_forward.4} parent=0 // loop_pre_header
    _
  $region3: #{d2qn_forward.4} parent=0 // loop_header
    %s9 = sphi 0, %s13
    %p10 = scmp.ge.s32.totalorder %s9, 4
    %s19 = sphi 0, %s21
    %s22 = sphi 0, %s19
    %s23 = sphi 0, %s22
    %s39 = sphi 0, %s23
    %s43 = sphi 0, %s43
    %s45 = sphi 0, %s43
    %s46 = sphi 0, %s45
    %s60 = sphi 0, %s46
    %s64 = sphi 0, %s64
    %s66 = sphi 0, %s64
    %s67 = sphi 0, %s66
    %s81 = sphi 0, %s67
    %s87 = sphi 0, %s89
    %s90 = sphi 0, %s87
    %s91 = sphi 0, %s90
    %s107 = sphi 0, %s91
  $region4: #{d2qn_forward.4} parent=0 // loop_header_branch
    %12 = sbr.rel (%p10) target = $region8
  $region5: #{d2qn_forward.4} parent=0 // loop_body
    %s14 = ssub.s32 %s9, 1
    %s15 = ssub.s32 %s9, 2
    %s16 = sadd.s32 %s9, 1
    %s17 = ssub.s32 %s9, %s16
    %p18 = scmp.eq.s32.totalorder %s17, 0
    %s20 = sadd.s32 %s19, 1
    %s21 = scalar_select %p18, %s19, %s20
    %p24 = pneg %p18
    %p25 = scmp.eq.s32.totalorder %s9, 1
    %p26 = por %p24, %p25
    %p27 = scmp.ne.s32.totalorder %s19, %s22
    %p28 = scmp.eq.s32.totalorder %s9, 0
    %p29 = por %p27, %p28
    %p30 = scmp.ne.s32.totalorder %s19, %s22
    %p31 = scmp.eq.s32.totalorder %s14, 1
    %p32 = por %p30, %p31
    %p33 = scmp.ne.s32.totalorder %s22, %s23
    %p34 = scmp.eq.s32.totalorder %s14, 0
    %p35 = por %p33, %p34
    %p36 = scmp.ne.s32.totalorder %s22, %s23
    %p37 = scmp.eq.s32.totalorder %s15, 1
    %p38 = por %p36, %p37
    %p40 = scmp.ne.s32.totalorder %s23, %s39
    %p41 = scmp.eq.s32.totalorder %s15, 0
    %p42 = por %p40, %p41
    %s44 = sadd.s32 %s43, 1
    %p47 = scmp.eq.s32.totalorder %s9, 1
    %p48 = scmp.ne.s32.totalorder %s43, %s45
    %p49 = scmp.eq.s32.totalorder %s9, 0
    %p50 = por %p48, %p49
    %p51 = scmp.ne.s32.totalorder %s43, %s45
    %p52 = scmp.eq.s32.totalorder %s14, 1
    %p53 = por %p51, %p52
    %p54 = scmp.ne.s32.totalorder %s45, %s46
    %p55 = scmp.eq.s32.totalorder %s14, 0
    %p56 = por %p54, %p55
    %p57 = scmp.ne.s32.totalorder %s45, %s46
    %p58 = scmp.eq.s32.totalorder %s15, 1
    %p59 = por %p57, %p58
    %p61 = scmp.ne.s32.totalorder %s46, %s60
    %p62 = scmp.eq.s32.totalorder %s15, 0
    %p63 = por %p61, %p62
    %s65 = sadd.s32 %s64, 1
    %p68 = scmp.eq.s32.totalorder %s9, 1
    %p69 = scmp.ne.s32.totalorder %s64, %s66
    %p70 = scmp.eq.s32.totalorder %s9, 0
    %p71 = por %p69, %p70
    %p72 = scmp.ne.s32.totalorder %s64, %s66
    %p73 = scmp.eq.s32.totalorder %s14, 1
    %p74 = por %p72, %p73
    %p75 = scmp.ne.s32.totalorder %s66, %s67
    %p76 = scmp.eq.s32.totalorder %s14, 0
    %p77 = por %p75, %p76
    %p78 = scmp.ne.s32.totalorder %s66, %s67
    %p79 = scmp.eq.s32.totalorder %s15, 1
    %p80 = por %p78, %p79
    %p82 = scmp.ne.s32.totalorder %s67, %s81
    %p83 = scmp.eq.s32.totalorder %s15, 0
    %p84 = por %p82, %p83
    %s85 = ssub.s32 %s9, %s16
    %p86 = scmp.eq.s32.totalorder %s85, 0
    %s88 = sadd.s32 %s87, 1
    %s89 = scalar_select %p86, %s87, %s88
    %p92 = pneg %p86
    %p93 = scmp.eq.s32.totalorder %s9, 1
    %p94 = por %p92, %p93
    %p95 = scmp.ne.s32.totalorder %s87, %s90
    %p96 = scmp.eq.s32.totalorder %s9, 0
    %p97 = por %p95, %p96
    %p98 = scmp.ne.s32.totalorder %s87, %s90
    %p99 = scmp.eq.s32.totalorder %s14, 1
    %p100 = por %p98, %p99
    %p101 = scmp.ne.s32.totalorder %s90, %s91
    %p102 = scmp.eq.s32.totalorder %s14, 0
    %p103 = por %p101, %p102
    %p104 = scmp.ne.s32.totalorder %s90, %s91
    %p105 = scmp.eq.s32.totalorder %s15, 1
    %p106 = por %p104, %p105
    %p108 = scmp.ne.s32.totalorder %s91, %s107
    %p109 = scmp.eq.s32.totalorder %s15, 0
    %p110 = por %p108, %p109
    %p111 = scmp.le.s32.totalorder 1, %s9
    %p112 = scmp.lt.s32.totalorder %s9, 3
    %p113 = pnand %p111, %p112
    %p114 = pneg %p113
    // Predicated region
    $region9: #{d2qn_forward.4} parent=5 // pred_check
      _
    $region10: #{d2qn_forward.4} parent=5 // pred_check_branch
      %116 = sbr.rel (%p113) target = $region12
    $region11: #{d2qn_forward.4} parent=5 // pred_region
      %s117 = ssub.s32 %s9, 1
      // Predicated region
      $region13: #{d2qn_forward.4} parent=11 // pred_check
        %p118 = pneg %p56
      $region14: #{d2qn_forward.4} parent=11 // pred_check_branch
        %120 = sbr.rel (%p118) target = $region16
      $region15: #{d2qn_forward.4} parent=11 // pred_region
        _
      $region16: #{d2qn_forward.4} parent=11 // pred_fallthru
        _
      // Predicated region
      $region17: #{d2qn_forward.4} parent=11 // pred_check
        %p121 = pneg %p77
      $region18: #{d2qn_forward.4} parent=11 // pred_check_branch
        %123 = sbr.rel (%p121) target = $region20
      $region19: #{d2qn_forward.4} parent=11 // pred_region
        _
      $region20: #{d2qn_forward.4} parent=11 // pred_fallthru
        _
    $region12: #{d2qn_forward.4} parent=5 // pred_fallthru
      _
    %p124 = scmp.lt.s32.totalorder %s9, 2
    // Predicated region
    $region21: #{d2qn_forward.4} parent=5 // pred_check
      %p125 = pneg %p124
    $region22: #{d2qn_forward.4} parent=5 // pred_check_branch
      %127 = sbr.rel (%p125) target = $region24
    $region23: #{d2qn_forward.4} parent=5 // pred_region
      // Predicated region
      $region25: #{d2qn_forward.4} parent=23 // pred_check
        %p128 = pneg %p29
      $region26: #{d2qn_forward.4} parent=23 // pred_check_branch
        %130 = sbr.rel (%p128) target = $region28
      $region27: #{d2qn_forward.4} parent=23 // pred_region
        %s131 = smul.u32 50, %s9
        %p132 = scmp.lt.s32.totalorder %s131, 99
        %s133 = scalar_select %p132, %s131, 99
        %s134 = smul.addr %s133, 2
        %s135 = smul.addr %s134, 8
        %s136 = scalar_lea.vmem %s0, %s135
        %s137 = smul.u32 50, %s9
      $region28: #{d2qn_forward.4} parent=23 // pred_fallthru
        _
    $region24: #{d2qn_forward.4} parent=5 // pred_fallthru
      _
    %p138 = scmp.le.s32.totalorder 1, %s9
    %p139 = scmp.lt.s32.totalorder %s9, 3
    %p140 = pnand %p138, %p139
    %p141 = pneg %p140
    // Predicated region
    $region29: #{d2qn_forward.4} parent=5 // pred_check
      _
    $region30: #{d2qn_forward.4} parent=5 // pred_check_branch
      %143 = sbr.rel (%p140) target = $region32
    $region31: #{d2qn_forward.4} parent=5 // pred_region
      %s144 = ssub.s32 %s9, 1
      %s145 = smul.u32 50, %s14
      %p146 = scmp.lt.s32.totalorder %s145, 99
      %s147 = scalar_select %p146, %s145, 99
      %s148 = smul.addr %s147, 2
      %s149 = smul.addr %s148, 8
      %s150 = scalar_lea.vmem %s0, %s149
      %p151 = pneg %p35
      %p152 = pneg %p32
      %p153 = pneg %p56
      %p154 = pneg %p53
      %p155 = pneg %p77
      %p156 = pneg %p74
      %p157 = pneg %p103
      %p158 = pneg %p100
      %s159 = smul.u32 50, %s14
      %p160 = scmp.lt.s32.totalorder %s159, 99
      %s161 = scalar_select %p160, %s159, 99
      %s162 = smul.addr %s161, 8
      %s163 = scalar_lea.vmem %s3, %s162
      %s164 = smul.u32 50, %s14
      %p165 = scmp.lt.s32.totalorder %s164, 99
      %s166 = scalar_select %p165, %s164, 99
      %s167 = smul.addr %s166, 2
      %s168 = smul.addr %s167, 8
      %s169 = scalar_lea.vmem %s0, %s168
      %s170 = smul.u32 50, %s14
      %s171 = smul.u32 50, %s14
      %p172 = scmp.lt.s32.totalorder %s171, 99
      %s173 = scalar_select %p172, %s171, 99
      %s174 = smul.addr %s173, 8
      %s175 = scalar_lea.vmem %s3, %s174
      %s176 = smul.u32 50, %s14
      %v177 = vld [vmem:[%s169] sm:$0xff]
      %v178 = vld [vmem:[%s169 + $0x8] sm:$0xff]
      %v179 = vld [vmem:[%s169 + $0x10] sm:$0xff]
      %v180 = vld [vmem:[%s169 + $0x18] sm:$0xff]
      %v181 = vld [vmem:[%s169 + $0x20] sm:$0xff]
      %v182 = vld [vmem:[%s169 + $0x28] sm:$0xff]
      %v183 = vld [vmem:[%s169 + $0x30] sm:$0xff]
      %v184 = vld [vmem:[%s169 + $0x38] sm:$0xff]
      %v185 = vld [vmem:[%s169 + $0x40] sm:$0xff]
      %v186 = vld [vmem:[%s169 + $0x48] sm:$0xff]
      %v187 = vld [vmem:[%s169 + $0x50] sm:$0xff]
      %v188 = vld [vmem:[%s169 + $0x58] sm:$0xff]
      %v189 = vld [vmem:[%s169 + $0x60] sm:$0xff]
      %v190 = vld [vmem:[%s169 + $0x68] sm:$0xff]
      %v191 = vld [vmem:[%s169 + $0x70] sm:$0xff]
      %v192 = vld [vmem:[%s169 + $0x78] sm:$0xff]
      %v193 = vld [vmem:[%s169 + $0x80] sm:$0xff]
      %v194 = vld [vmem:[%s169 + $0x88] sm:$0xff]
      %v195 = vld [vmem:[%s169 + $0x90] sm:$0xff]
      %v196 = vld [vmem:[%s169 + $0x98] sm:$0xff]
      %v197 = vld [vmem:[%s169 + $0xa0] sm:$0xff]
      %v198 = vld [vmem:[%s169 + $0xa8] sm:$0xff]
      %v199 = vld [vmem:[%s169 + $0xb0] sm:$0xff]
      %v200 = vld [vmem:[%s169 + $0xb8] sm:$0xff]
      %v201 = vld [vmem:[%s169 + $0xc0] sm:$0xff]
      %v202 = vld [vmem:[%s169 + $0xc8] sm:$0xff]
      %v203 = vld [vmem:[%s169 + $0xd0] sm:$0xff]
      %v204 = vld [vmem:[%s169 + $0xd8] sm:$0xff]
      %v205 = vld [vmem:[%s169 + $0xe0] sm:$0xff]
      %v206 = vld [vmem:[%s169 + $0xe8] sm:$0xff]
      %v207 = vld [vmem:[%s169 + $0xf0] sm:$0xff]
      %v208 = vld [vmem:[%s169 + $0xf8] sm:$0xff]
      %v209 = vld [vmem:[%s169 + $0x100] sm:$0xff]
      %v210 = vld [vmem:[%s169 + $0x108] sm:$0xff]
      %v211 = vld [vmem:[%s169 + $0x110] sm:$0xff]
      %v212 = vld [vmem:[%s169 + $0x118] sm:$0xff]
      %v213 = vld [vmem:[%s169 + $0x120] sm:$0xff]
      %v214 = vld [vmem:[%s169 + $0x128] sm:$0xff]
      %v215 = vld [vmem:[%s169 + $0x130] sm:$0xff]
      %v216 = vld [vmem:[%s169 + $0x138] sm:$0xff]
      %v217 = vld [vmem:[%s169 + $0x140] sm:$0xff]
      %v218 = vld [vmem:[%s169 + $0x148] sm:$0xff]
      %v219 = vld [vmem:[%s169 + $0x150] sm:$0xff]
      %v220 = vld [vmem:[%s169 + $0x158] sm:$0xff]
      %v221 = vld [vmem:[%s169 + $0x160] sm:$0xff]
      %v222 = vld [vmem:[%s169 + $0x168] sm:$0xff]
      %v223 = vld [vmem:[%s169 + $0x170] sm:$0xff]
      %v224 = vld [vmem:[%s169 + $0x178] sm:$0xff]
      %v225 = vld [vmem:[%s169 + $0x180] sm:$0xff]
      %v226 = vld [vmem:[%s169 + $0x188] sm:$0xff]
      %v227 = vld [vmem:[%s169 + $0x190] sm:$0xff]
      %v228 = vld [vmem:[%s169 + $0x198] sm:$0xff]
      %v229 = vld [vmem:[%s169 + $0x1a0] sm:$0xff]
      %v230 = vld [vmem:[%s169 + $0x1a8] sm:$0xff]
      %v231 = vld [vmem:[%s169 + $0x1b0] sm:$0xff]
      %v232 = vld [vmem:[%s169 + $0x1b8] sm:$0xff]
      %v233 = vld [vmem:[%s169 + $0x1c0] sm:$0xff]
      %v234 = vld [vmem:[%s169 + $0x1c8] sm:$0xff]
      %v235 = vld [vmem:[%s169 + $0x1d0] sm:$0xff]
      %v236 = vld [vmem:[%s169 + $0x1d8] sm:$0xff]
      %v237 = vld [vmem:[%s169 + $0x1e0] sm:$0xff]
      %v238 = vld [vmem:[%s169 + $0x1e8] sm:$0xff]
      %v239 = vld [vmem:[%s169 + $0x1f0] sm:$0xff]
      %v240 = vld [vmem:[%s169 + $0x1f8] sm:$0xff]
      %v241 = vld [vmem:[%s169 + $0x200] sm:$0xff]
      %v242 = vld [vmem:[%s169 + $0x208] sm:$0xff]
      %v243 = vld [vmem:[%s169 + $0x210] sm:$0xff]
      %v244 = vld [vmem:[%s169 + $0x218] sm:$0xff]
      %v245 = vld [vmem:[%s169 + $0x220] sm:$0xff]
      %v246 = vld [vmem:[%s169 + $0x228] sm:$0xff]
      %v247 = vld [vmem:[%s169 + $0x230] sm:$0xff]
      %v248 = vld [vmem:[%s169 + $0x238] sm:$0xff]
      %v249 = vld [vmem:[%s169 + $0x240] sm:$0xff]
      %v250 = vld [vmem:[%s169 + $0x248] sm:$0xff]
      %v251 = vld [vmem:[%s169 + $0x250] sm:$0xff]
      %v252 = vld [vmem:[%s169 + $0x258] sm:$0xff]
      %v253 = vld [vmem:[%s169 + $0x260] sm:$0xff]
      %v254 = vld [vmem:[%s169 + $0x268] sm:$0xff]
      %v255 = vld [vmem:[%s169 + $0x270] sm:$0xff]
      %v256 = vld [vmem:[%s169 + $0x278] sm:$0xff]
      %v257 = vld [vmem:[%s169 + $0x280] sm:$0xff]
      %v258 = vld [vmem:[%s169 + $0x288] sm:$0xff]
      %v259 = vld [vmem:[%s169 + $0x290] sm:$0xff]
      %v260 = vld [vmem:[%s169 + $0x298] sm:$0xff]
      %v261 = vld [vmem:[%s169 + $0x2a0] sm:$0xff]
      %v262 = vld [vmem:[%s169 + $0x2a8] sm:$0xff]
      %v263 = vld [vmem:[%s169 + $0x2b0] sm:$0xff]
      %v264 = vld [vmem:[%s169 + $0x2b8] sm:$0xff]
      %v265 = vld [vmem:[%s169 + $0x2c0] sm:$0xff]
      %v266 = vld [vmem:[%s169 + $0x2c8] sm:$0xff]
      %v267 = vld [vmem:[%s169 + $0x2d0] sm:$0xff]
      %v268 = vld [vmem:[%s169 + $0x2d8] sm:$0xff]
      %v269 = vld [vmem:[%s169 + $0x2e0] sm:$0xff]
      %v270 = vld [vmem:[%s169 + $0x2e8] sm:$0xff]
      %v271 = vld [vmem:[%s169 + $0x2f0] sm:$0xff]
      %v272 = vld [vmem:[%s169 + $0x2f8] sm:$0xff]
      %v273 = vld [vmem:[%s169 + $0x300] sm:$0xff]
      %v274 = vld [vmem:[%s169 + $0x308] sm:$0xff]
      %v275 = vld [vmem:[%s169 + $0x310] sm:$0xff]
      %v276 = vld [vmem:[%s169 + $0x318] sm:$0xff]
      %v277 = vld [vmem:[%s1] sm:$0xff]
      %v278 = vld [vmem:[%s1 + $0x8] sm:$0xff]
      %v279 = vld [vmem:[%s1 + $0x10] sm:$0xff]
      %v280 = vld [vmem:[%s1 + $0x18] sm:$0xff]
      %v281 = vld [vmem:[%s1 + $0x20] sm:$0xff]
      %v282 = vld [vmem:[%s1 + $0x28] sm:$0xff]
      %v283 = vld [vmem:[%s1 + $0x30] sm:$0xff]
      %v284 = vld [vmem:[%s1 + $0x38] sm:$0xff]
      %v285 = vld [vmem:[%s1 + $0x40] sm:$0xff]
      %v286 = vld [vmem:[%s1 + $0x48] sm:$0xff]
      %v287 = vld [vmem:[%s1 + $0x50] sm:$0xff]
      %v288 = vld [vmem:[%s1 + $0x58] sm:$0xff]
      %v289 = vld [vmem:[%s1 + $0x60] sm:$0xff]
      %v290 = vld [vmem:[%s1 + $0x68] sm:$0xff]
      %v291 = vld [vmem:[%s1 + $0x70] sm:$0xff]
      %v292 = vld [vmem:[%s1 + $0x78] sm:$0xff]
      %v293 = vld [vmem:[%s1 + $0x80] sm:$0xff]
      %v294 = vld [vmem:[%s1 + $0x88] sm:$0xff]
      %v295 = vld [vmem:[%s1 + $0x90] sm:$0xff]
      %v296 = vld [vmem:[%s1 + $0x98] sm:$0xff]
      %v297 = vld [vmem:[%s1 + $0xa0] sm:$0xff]
      %v298 = vld [vmem:[%s1 + $0xa8] sm:$0xff]
      %v299 = vld [vmem:[%s1 + $0xb0] sm:$0xff]
      %v300 = vld [vmem:[%s1 + $0xb8] sm:$0xff]
      %v301 = vld [vmem:[%s1 + $0xc0] sm:$0xff]
      %v302 = vld [vmem:[%s1 + $0xc8] sm:$0xff]
      %v303 = vld [vmem:[%s1 + $0xd0] sm:$0xff]
      %v304 = vld [vmem:[%s1 + $0xd8] sm:$0xff]
      %v305 = vld [vmem:[%s1 + $0xe0] sm:$0xff]
      %v306 = vld [vmem:[%s1 + $0xe8] sm:$0xff]
      %v307 = vld [vmem:[%s1 + $0xf0] sm:$0xff]
      %v308 = vld [vmem:[%s1 + $0xf8] sm:$0xff]
      %v309 = vld [vmem:[%s2] sm:$0x1]
      %v311 = vlaneseq
      %v312 = vshrl.u32 %v311, 7
      %v313 = vsub.s32 0, %v312
      %v314 = vrot.slane %v309, %v313
      %316 = vmatprep.subr.mxu0 0.0
      %317 = vmatpush1.msra.mxu0 %v277
      %318 = vmatprep.subr.mxu0 0.0
      %319 = vmatpush1.msra.mxu0 %v278
      %320 = vmatprep.subr.mxu0 0.0
      %321 = vmatpush1.msra.mxu0 %v279
      %322 = vmatprep.subr.mxu0 0.0
      %323 = vmatpush1.msra.mxu0 %v280
      %324 = vmatprep.subr.mxu0 0.0
      %325 = vmatpush1.msra.mxu0 %v281
      %326 = vmatprep.subr.mxu0 0.0
      %327 = vmatpush1.msra.mxu0 %v282
      %328 = vmatprep.subr.mxu0 0.0
      %329 = vmatpush1.msra.mxu0 %v283
      %330 = vmatprep.subr.mxu0 0.0
      %331 = vmatpush1.msra.mxu0 %v284
      %332 = vmatprep.subr.mxu0 0.0
      %333 = vmatpush1.msra.mxu0 %v285
      %334 = vmatprep.subr.mxu0 0.0
      %335 = vmatpush1.msra.mxu0 %v286
      %336 = vmatprep.subr.mxu0 0.0
      %337 = vmatpush1.msra.mxu0 %v287
      %338 = vmatprep.subr.mxu0 0.0
      %339 = vmatpush1.msra.mxu0 %v288
      %340 = vmatprep.subr.mxu0 0.0
      %341 = vmatpush1.msra.mxu0 %v289
      %342 = vmatprep.subr.mxu0 0.0
      %343 = vmatpush1.msra.mxu0 %v290
      %344 = vmatprep.subr.mxu0 0.0
      %345 = vmatpush1.msra.mxu0 %v291
      %346 = vmatprep.subr.mxu0 0.0
      %347 = vmatpush1.msra.mxu0 %v292
      %348 = vmatprep.subr.mxu0 0.0
      %349 = vmatpush1.msra.mxu0 %v293
      %350 = vmatprep.subr.mxu0 0.0
      %351 = vmatpush1.msra.mxu0 %v294
      %352 = vmatprep.subr.mxu0 0.0
      %353 = vmatpush1.msra.mxu0 %v295
      %354 = vmatprep.subr.mxu0 0.0
      %355 = vmatpush1.msra.mxu0 %v296
      %356 = vmatprep.subr.mxu0 0.0
      %357 = vmatpush1.msra.mxu0 %v297
      %358 = vmatprep.subr.mxu0 0.0
      %359 = vmatpush1.msra.mxu0 %v298
      %360 = vmatprep.subr.mxu0 0.0
      %361 = vmatpush1.msra.mxu0 %v299
      %362 = vmatprep.subr.mxu0 0.0
      %363 = vmatpush1.msra.mxu0 %v300
      %364 = vmatprep.subr.mxu0 0.0
      %365 = vmatpush1.msra.mxu0 %v301
      %366 = vmatprep.subr.mxu0 0.0
      %367 = vmatpush1.msra.mxu0 %v302
      %368 = vmatprep.subr.mxu0 0.0
      %369 = vmatpush1.msra.mxu0 %v303
      %370 = vmatprep.subr.mxu0 0.0
      %371 = vmatpush1.msra.mxu0 %v304
      %372 = vmatprep.subr.mxu0 0.0
      %373 = vmatpush1.msra.mxu0 %v305
      %374 = vmatprep.subr.mxu0 0.0
      %375 = vmatpush1.msra.mxu0 %v306
      %376 = vmatprep.subr.mxu0 0.0
      %377 = vmatpush1.msra.mxu0 %v307
      %378 = vmatprep.subr.mxu0 0.0
      %379 = vmatpush1.msra.mxu0 %v308
      %380 = vmatprep.mubr.f32.mxu0 %v178
      %381 = vmatmul.mubr.f32.gmra.mrb[0].mxu0 %v177
      %v382 = vpop.f32.mrb[0].mxu0
      %v383 = vadd.f32 %v314, %v382
      %v384 = vpop.f32.mrb[0].mxu0
      %385 = vmatprep.mubr.f32.mxu0 %v180
      %386 = vmatmul.mubr.f32.gmra.mrb[0].mxu0 %v179
      %v387 = vpop.f32.mrb[0].mxu0
      %v388 = vadd.f32 %v314, %v387
      %v389 = vpop.f32.mrb[0].mxu0
      %390 = vmatprep.mubr.f32.mxu0 %v182
      %391 = vmatmul.mubr.f32.gmra.mrb[0].mxu0 %v181
      %v392 = vpop.f32.mrb[0].mxu0
      %v393 = vadd.f32 %v314, %v392
      %v394 = vpop.f32.mrb[0].mxu0
      %395 = vmatprep.mubr.f32.mxu0 %v184
      %396 = vmatmul.mubr.f32.gmra.mrb[0].mxu0 %v183
      %v397 = vpop.f32.mrb[0].mxu0
      %v398 = vadd.f32 %v314, %v397
      %v399 = vpop.f32.mrb[0].mxu0
      %400 = vmatprep.mubr.f32.mxu0 %v186
      %401 = vmatmul.mubr.f32.gmra.mrb[0].mxu0 %v185
      %v402 = vpop.f32.mrb[0].mxu0
      %v403 = vadd.f32 %v314, %v402
      %v404 = vpop.f32.mrb[0].mxu0
      %405 = vmatprep.mubr.f32.mxu0 %v188
      %406 = vmatmul.mubr.f32.gmra.mrb[0].mxu0 %v187
      %v407 = vpop.f32.mrb[0].mxu0
      %v408 = vadd.f32 %v314, %v407
      %v409 = vpop.f32.mrb[0].mxu0
      %410 = vmatprep.mubr.f32.mxu0 %v190
      %411 = vmatmul.mubr.f32.gmra.mrb[0].mxu0 %v189
      %v412 = vpop.f32.mrb[0].mxu0
      %v413 = vadd.f32 %v314, %v412
      %v414 = vpop.f32.mrb[0].mxu0
      %415 = vmatprep.mubr.f32.mxu0 %v192
      %416 = vmatmul.mubr.f32.gmra.mrb[0].mxu0 %v191
      %v417 = vpop.f32.mrb[0].mxu0
      %v418 = vadd.f32 %v314, %v417
      %v419 = vpop.f32.mrb[0].mxu0
      %420 = vmatprep.mubr.f32.mxu0 %v194
      %421 = vmatmul.mubr.f32.gmra.mrb[0].mxu0 %v193
      %v422 = vpop.f32.mrb[0].mxu0
      %v423 = vadd.f32 %v314, %v422
      %v424 = vpop.f32.mrb[0].mxu0
      %425 = vmatprep.mubr.f32.mxu0 %v196
      %426 = vmatmul.mubr.f32.gmra.mrb[0].mxu0 %v195
      %v427 = vpop.f32.mrb[0].mxu0
      %v428 = vadd.f32 %v314, %v427
      %v429 = vpop.f32.mrb[0].mxu0
      %430 = vmatprep.mubr.f32.mxu0 %v198
      %431 = vmatmul.mubr.f32.gmra.mrb[0].mxu0 %v197
      %v432 = vpop.f32.mrb[0].mxu0
      %v433 = vadd.f32 %v314, %v432
      %v434 = vpop.f32.mrb[0].mxu0
      %435 = vmatprep.mubr.f32.mxu0 %v200
      %436 = vmatmul.mubr.f32.gmra.mrb[0].mxu0 %v199
      %v437 = vpop.f32.mrb[0].mxu0
      %v438 = vadd.f32 %v314, %v437
      %v439 = vpop.f32.mrb[0].mxu0
      %440 = vmatprep.mubr.f32.mxu0 %v202
      %441 = vmatmul.mubr.f32.gmra.mrb[0].mxu0 %v201
      %v442 = vpop.f32.mrb[0].mxu0
      %v443 = vadd.f32 %v314, %v442
      %v444 = vpop.f32.mrb[0].mxu0
      %445 = vmatprep.mubr.f32.mxu0 %v204
      %446 = vmatmul.mubr.f32.gmra.mrb[0].mxu0 %v203
      %v447 = vpop.f32.mrb[0].mxu0
      %v448 = vadd.f32 %v314, %v447
      %v449 = vpop.f32.mrb[0].mxu0
      %450 = vmatprep.mubr.f32.mxu0 %v206
      %451 = vmatmul.mubr.f32.gmra.mrb[0].mxu0 %v205
      %v452 = vpop.f32.mrb[0].mxu0
      %v453 = vadd.f32 %v314, %v452
      %v454 = vpop.f32.mrb[0].mxu0
      %455 = vmatprep.mubr.f32.mxu0 %v208
      %456 = vmatmul.mubr.f32.gmra.mrb[0].mxu0 %v207
      %v457 = vpop.f32.mrb[0].mxu0
      %v458 = vadd.f32 %v314, %v457
      %v459 = vpop.f32.mrb[0].mxu0
      %460 = vmatprep.mubr.f32.mxu0 %v210
      %461 = vmatmul.mubr.f32.gmra.mrb[0].mxu0 %v209
      %v462 = vpop.f32.mrb[0].mxu0
      %v463 = vadd.f32 %v314, %v462
      %v464 = vpop.f32.mrb[0].mxu0
      %465 = vmatprep.mubr.f32.mxu0 %v212
      %466 = vmatmul.mubr.f32.gmra.mrb[0].mxu0 %v211
      %v467 = vpop.f32.mrb[0].mxu0
      %v468 = vadd.f32 %v314, %v467
      %v469 = vpop.f32.mrb[0].mxu0
      %470 = vmatprep.mubr.f32.mxu0 %v214
      %471 = vmatmul.mubr.f32.gmra.mrb[0].mxu0 %v213
      %v472 = vpop.f32.mrb[0].mxu0
      %v473 = vadd.f32 %v314, %v472
      %v474 = vpop.f32.mrb[0].mxu0
      %475 = vmatprep.mubr.f32.mxu0 %v216
      %476 = vmatmul.mubr.f32.gmra.mrb[0].mxu0 %v215
      %v477 = vpop.f32.mrb[0].mxu0
      %v478 = vadd.f32 %v314, %v477
      %v479 = vpop.f32.mrb[0].mxu0
      %480 = vmatprep.mubr.f32.mxu0 %v218
      %481 = vmatmul.mubr.f32.gmra.mrb[0].mxu0 %v217
      %v482 = vpop.f32.mrb[0].mxu0
      %v483 = vadd.f32 %v314, %v482
      %v484 = vpop.f32.mrb[0].mxu0
      %485 = vmatprep.mubr.f32.mxu0 %v220
      %486 = vmatmul.mubr.f32.gmra.mrb[0].mxu0 %v219
      %v487 = vpop.f32.mrb[0].mxu0
      %v488 = vadd.f32 %v314, %v487
      %v489 = vpop.f32.mrb[0].mxu0
      %490 = vmatprep.mubr.f32.mxu0 %v222
      %491 = vmatmul.mubr.f32.gmra.mrb[0].mxu0 %v221
      %v492 = vpop.f32.mrb[0].mxu0
      %v493 = vadd.f32 %v314, %v492
      %v494 = vpop.f32.mrb[0].mxu0
      %495 = vmatprep.mubr.f32.mxu0 %v224
      %496 = vmatmul.mubr.f32.gmra.mrb[0].mxu0 %v223
      %v497 = vpop.f32.mrb[0].mxu0
      %v498 = vadd.f32 %v314, %v497
      %v499 = vpop.f32.mrb[0].mxu0
      %500 = vmatprep.mubr.f32.mxu0 %v226
      %501 = vmatmul.mubr.f32.gmra.mrb[0].mxu0 %v225
      %v502 = vpop.f32.mrb[0].mxu0
      %v503 = vadd.f32 %v314, %v502
      %v504 = vpop.f32.mrb[0].mxu0
      %505 = vmatprep.mubr.f32.mxu0 %v228
      %506 = vmatmul.mubr.f32.gmra.mrb[0].mxu0 %v227
      %v507 = vpop.f32.mrb[0].mxu0
      %v508 = vadd.f32 %v314, %v507
      %v509 = vpop.f32.mrb[0].mxu0
      %510 = vmatprep.mubr.f32.mxu0 %v230
      %511 = vmatmul.mubr.f32.gmra.mrb[0].mxu0 %v229
      %v512 = vpop.f32.mrb[0].mxu0
      %v513 = vadd.f32 %v314, %v512
      %v514 = vpop.f32.mrb[0].mxu0
      %515 = vmatprep.mubr.f32.mxu0 %v232
      %516 = vmatmul.mubr.f32.gmra.mrb[0].mxu0 %v231
      %v517 = vpop.f32.mrb[0].mxu0
      %v518 = vadd.f32 %v314, %v517
      %v519 = vpop.f32.mrb[0].mxu0
      %520 = vmatprep.mubr.f32.mxu0 %v234
      %521 = vmatmul.mubr.f32.gmra.mrb[0].mxu0 %v233
      %v522 = vpop.f32.mrb[0].mxu0
      %v523 = vadd.f32 %v314, %v522
      %v524 = vpop.f32.mrb[0].mxu0
      %525 = vmatprep.mubr.f32.mxu0 %v236
      %526 = vmatmul.mubr.f32.gmra.mrb[0].mxu0 %v235
      %v527 = vpop.f32.mrb[0].mxu0
      %v528 = vadd.f32 %v314, %v527
      %v529 = vpop.f32.mrb[0].mxu0
      %530 = vmatprep.mubr.f32.mxu0 %v238
      %531 = vmatmul.mubr.f32.gmra.mrb[0].mxu0 %v237
      %v532 = vpop.f32.mrb[0].mxu0
      %v533 = vadd.f32 %v314, %v532
      %v534 = vpop.f32.mrb[0].mxu0
      %535 = vmatprep.mubr.f32.mxu0 %v240
      %536 = vmatmul.mubr.f32.gmra.mrb[0].mxu0 %v239
      %v537 = vpop.f32.mrb[0].mxu0
      %v538 = vadd.f32 %v314, %v537
      %v539 = vpop.f32.mrb[0].mxu0
      %540 = vmatprep.mubr.f32.mxu0 %v242
      %541 = vmatmul.mubr.f32.gmra.mrb[0].mxu0 %v241
      %v542 = vpop.f32.mrb[0].mxu0
      %v543 = vadd.f32 %v314, %v542
      %v544 = vpop.f32.mrb[0].mxu0
      %545 = vmatprep.mubr.f32.mxu0 %v244
      %546 = vmatmul.mubr.f32.gmra.mrb[0].mxu0 %v243
      %v547 = vpop.f32.mrb[0].mxu0
      %v548 = vadd.f32 %v314, %v547
      %v549 = vpop.f32.mrb[0].mxu0
      %550 = vmatprep.mubr.f32.mxu0 %v246
      %551 = vmatmul.mubr.f32.gmra.mrb[0].mxu0 %v245
      %v552 = vpop.f32.mrb[0].mxu0
      %v553 = vadd.f32 %v314, %v552
      %v554 = vpop.f32.mrb[0].mxu0
      %555 = vmatprep.mubr.f32.mxu0 %v248
      %556 = vmatmul.mubr.f32.gmra.mrb[0].mxu0 %v247
      %v557 = vpop.f32.mrb[0].mxu0
      %v558 = vadd.f32 %v314, %v557
      %v559 = vpop.f32.mrb[0].mxu0
      %560 = vmatprep.mubr.f32.mxu0 %v250
      %561 = vmatmul.mubr.f32.gmra.mrb[0].mxu0 %v249
      %v562 = vpop.f32.mrb[0].mxu0
      %v563 = vadd.f32 %v314, %v562
      %v564 = vpop.f32.mrb[0].mxu0
      %565 = vmatprep.mubr.f32.mxu0 %v252
      %566 = vmatmul.mubr.f32.gmra.mrb[0].mxu0 %v251
      %v567 = vpop.f32.mrb[0].mxu0
      %v568 = vadd.f32 %v314, %v567
      %v569 = vpop.f32.mrb[0].mxu0
      %570 = vmatprep.mubr.f32.mxu0 %v254
      %571 = vmatmul.mubr.f32.gmra.mrb[0].mxu0 %v253
      %v572 = vpop.f32.mrb[0].mxu0
      %v573 = vadd.f32 %v314, %v572
      %v574 = vpop.f32.mrb[0].mxu0
      %575 = vmatprep.mubr.f32.mxu0 %v256
      %576 = vmatmul.mubr.f32.gmra.mrb[0].mxu0 %v255
      %v577 = vpop.f32.mrb[0].mxu0
      %v578 = vadd.f32 %v314, %v577
      %v579 = vpop.f32.mrb[0].mxu0
      %580 = vmatprep.mubr.f32.mxu0 %v258
      %581 = vmatmul.mubr.f32.gmra.mrb[0].mxu0 %v257
      %v582 = vpop.f32.mrb[0].mxu0
      %v583 = vadd.f32 %v314, %v582
      %v584 = vpop.f32.mrb[0].mxu0
      %585 = vmatprep.mubr.f32.mxu0 %v260
      %586 = vmatmul.mubr.f32.gmra.mrb[0].mxu0 %v259
      %v587 = vpop.f32.mrb[0].mxu0
      %v588 = vadd.f32 %v314, %v587
      %v589 = vpop.f32.mrb[0].mxu0
      %590 = vmatprep.mubr.f32.mxu0 %v262
      %591 = vmatmul.mubr.f32.gmra.mrb[0].mxu0 %v261
      %v592 = vpop.f32.mrb[0].mxu0
      %v593 = vadd.f32 %v314, %v592
      %v594 = vpop.f32.mrb[0].mxu0
      %595 = vmatprep.mubr.f32.mxu0 %v264
      %596 = vmatmul.mubr.f32.gmra.mrb[0].mxu0 %v263
      %v597 = vpop.f32.mrb[0].mxu0
      %v598 = vadd.f32 %v314, %v597
      %v599 = vpop.f32.mrb[0].mxu0
      %600 = vmatprep.mubr.f32.mxu0 %v266
      %601 = vmatmul.mubr.f32.gmra.mrb[0].mxu0 %v265
      %v602 = vpop.f32.mrb[0].mxu0
      %v603 = vadd.f32 %v314, %v602
      %v604 = vpop.f32.mrb[0].mxu0
      %605 = vmatprep.mubr.f32.mxu0 %v268
      %606 = vmatmul.mubr.f32.gmra.mrb[0].mxu0 %v267
      %v607 = vpop.f32.mrb[0].mxu0
      %v608 = vadd.f32 %v314, %v607
      %v609 = vpop.f32.mrb[0].mxu0
      %610 = vmatprep.mubr.f32.mxu0 %v270
      %611 = vmatmul.mubr.f32.gmra.mrb[0].mxu0 %v269
      %v612 = vpop.f32.mrb[0].mxu0
      %v613 = vadd.f32 %v314, %v612
      %v614 = vpop.f32.mrb[0].mxu0
      %615 = vmatprep.mubr.f32.mxu0 %v272
      %616 = vmatmul.mubr.f32.gmra.mrb[0].mxu0 %v271
      %v617 = vpop.f32.mrb[0].mxu0
      %v618 = vadd.f32 %v314, %v617
      %v619 = vpop.f32.mrb[0].mxu0
      %620 = vmatprep.mubr.f32.mxu0 %v274
      %621 = vmatmul.mubr.f32.gmra.mrb[0].mxu0 %v273
      %v622 = vpop.f32.mrb[0].mxu0
      %v623 = vadd.f32 %v314, %v622
      %v624 = vpop.f32.mrb[0].mxu0
      %625 = vmatprep.mubr.f32.mxu0 %v276
      %626 = vmatmul.mubr.f32.gmra.mrb[0].mxu0 %v275
      %v627 = vpop.f32.mrb[0].mxu0
      %v628 = vadd.f32 %v314, %v627
      %v629 = vpop.f32.mrb[0].mxu0
      %630 = vdwg.mxu0
      %v631 = vmax.f32 %v383, 0.0
      %v632 = vmax.f32 %v388, 0.0
      %v633 = vmax.f32 %v393, 0.0
      %v634 = vmax.f32 %v398, 0.0
      %v635 = vmax.f32 %v403, 0.0
      %v636 = vmax.f32 %v408, 0.0
      %v637 = vmax.f32 %v413, 0.0
      %v638 = vmax.f32 %v418, 0.0
      %v639 = vmax.f32 %v423, 0.0
      %v640 = vmax.f32 %v428, 0.0
      %v641 = vmax.f32 %v433, 0.0
      %v642 = vmax.f32 %v438, 0.0
      %v643 = vmax.f32 %v443, 0.0
      %v644 = vmax.f32 %v448, 0.0
      %v645 = vmax.f32 %v453, 0.0
      %v646 = vmax.f32 %v458, 0.0
      %v647 = vmax.f32 %v463, 0.0
      %v648 = vmax.f32 %v468, 0.0
      %v649 = vmax.f32 %v473, 0.0
      %v650 = vmax.f32 %v478, 0.0
      %v651 = vmax.f32 %v483, 0.0
      %v652 = vmax.f32 %v488, 0.0
      %v653 = vmax.f32 %v493, 0.0
      %v654 = vmax.f32 %v498, 0.0
      %v655 = vmax.f32 %v503, 0.0
      %v656 = vmax.f32 %v508, 0.0
      %v657 = vmax.f32 %v513, 0.0
      %v658 = vmax.f32 %v518, 0.0
      %v659 = vmax.f32 %v523, 0.0
      %v660 = vmax.f32 %v528, 0.0
      %v661 = vmax.f32 %v533, 0.0
      %v662 = vmax.f32 %v538, 0.0
      %v663 = vmax.f32 %v543, 0.0
      %v664 = vmax.f32 %v548, 0.0
      %v665 = vmax.f32 %v553, 0.0
      %v666 = vmax.f32 %v558, 0.0
      %v667 = vmax.f32 %v563, 0.0
      %v668 = vmax.f32 %v568, 0.0
      %v669 = vmax.f32 %v573, 0.0
      %v670 = vmax.f32 %v578, 0.0
      %v671 = vmax.f32 %v583, 0.0
      %v672 = vmax.f32 %v588, 0.0
      %v673 = vmax.f32 %v593, 0.0
      %v674 = vmax.f32 %v598, 0.0
      %v675 = vmax.f32 %v603, 0.0
      %v676 = vmax.f32 %v608, 0.0
      %v677 = vmax.f32 %v613, 0.0
      %v678 = vmax.f32 %v618, 0.0
      %v679 = vmax.f32 %v623, 0.0
      %v680 = vmax.f32 %v628, 0.0
      %vm681 = vcmask 261120
      %682 = vst.msk [vmem:[%s175] sm:$0xff] %vm681, %v631
      %683 = vst.msk [vmem:[%s175 + $0x8] sm:$0xff] %vm681, %v632
      %684 = vst.msk [vmem:[%s175 + $0x10] sm:$0xff] %vm681, %v633
      %685 = vst.msk [vmem:[%s175 + $0x18] sm:$0xff] %vm681, %v634
      %686 = vst.msk [vmem:[%s175 + $0x20] sm:$0xff] %vm681, %v635
      %687 = vst.msk [vmem:[%s175 + $0x28] sm:$0xff] %vm681, %v636
      %688 = vst.msk [vmem:[%s175 + $0x30] sm:$0xff] %vm681, %v637
      %689 = vst.msk [vmem:[%s175 + $0x38] sm:$0xff] %vm681, %v638
      %690 = vst.msk [vmem:[%s175 + $0x40] sm:$0xff] %vm681, %v639
      %691 = vst.msk [vmem:[%s175 + $0x48] sm:$0xff] %vm681, %v640
      %692 = vst.msk [vmem:[%s175 + $0x50] sm:$0xff] %vm681, %v641
      %693 = vst.msk [vmem:[%s175 + $0x58] sm:$0xff] %vm681, %v642
      %694 = vst.msk [vmem:[%s175 + $0x60] sm:$0xff] %vm681, %v643
      %695 = vst.msk [vmem:[%s175 + $0x68] sm:$0xff] %vm681, %v644
      %696 = vst.msk [vmem:[%s175 + $0x70] sm:$0xff] %vm681, %v645
      %697 = vst.msk [vmem:[%s175 + $0x78] sm:$0xff] %vm681, %v646
      %698 = vst.msk [vmem:[%s175 + $0x80] sm:$0xff] %vm681, %v647
      %699 = vst.msk [vmem:[%s175 + $0x88] sm:$0xff] %vm681, %v648
      %700 = vst.msk [vmem:[%s175 + $0x90] sm:$0xff] %vm681, %v649
      %701 = vst.msk [vmem:[%s175 + $0x98] sm:$0xff] %vm681, %v650
      %702 = vst.msk [vmem:[%s175 + $0xa0] sm:$0xff] %vm681, %v651
      %703 = vst.msk [vmem:[%s175 + $0xa8] sm:$0xff] %vm681, %v652
      %704 = vst.msk [vmem:[%s175 + $0xb0] sm:$0xff] %vm681, %v653
      %705 = vst.msk [vmem:[%s175 + $0xb8] sm:$0xff] %vm681, %v654
      %706 = vst.msk [vmem:[%s175 + $0xc0] sm:$0xff] %vm681, %v655
      %707 = vst.msk [vmem:[%s175 + $0xc8] sm:$0xff] %vm681, %v656
      %708 = vst.msk [vmem:[%s175 + $0xd0] sm:$0xff] %vm681, %v657
      %709 = vst.msk [vmem:[%s175 + $0xd8] sm:$0xff] %vm681, %v658
      %710 = vst.msk [vmem:[%s175 + $0xe0] sm:$0xff] %vm681, %v659
      %711 = vst.msk [vmem:[%s175 + $0xe8] sm:$0xff] %vm681, %v660
      %712 = vst.msk [vmem:[%s175 + $0xf0] sm:$0xff] %vm681, %v661
      %713 = vst.msk [vmem:[%s175 + $0xf8] sm:$0xff] %vm681, %v662
      %714 = vst.msk [vmem:[%s175 + $0x100] sm:$0xff] %vm681, %v663
      %715 = vst.msk [vmem:[%s175 + $0x108] sm:$0xff] %vm681, %v664
      %716 = vst.msk [vmem:[%s175 + $0x110] sm:$0xff] %vm681, %v665
      %717 = vst.msk [vmem:[%s175 + $0x118] sm:$0xff] %vm681, %v666
      %718 = vst.msk [vmem:[%s175 + $0x120] sm:$0xff] %vm681, %v667
      %719 = vst.msk [vmem:[%s175 + $0x128] sm:$0xff] %vm681, %v668
      %720 = vst.msk [vmem:[%s175 + $0x130] sm:$0xff] %vm681, %v669
      %721 = vst.msk [vmem:[%s175 + $0x138] sm:$0xff] %vm681, %v670
      %722 = vst.msk [vmem:[%s175 + $0x140] sm:$0xff] %vm681, %v671
      %723 = vst.msk [vmem:[%s175 + $0x148] sm:$0xff] %vm681, %v672
      %724 = vst.msk [vmem:[%s175 + $0x150] sm:$0xff] %vm681, %v673
      %725 = vst.msk [vmem:[%s175 + $0x158] sm:$0xff] %vm681, %v674
      %726 = vst.msk [vmem:[%s175 + $0x160] sm:$0xff] %vm681, %v675
      %727 = vst.msk [vmem:[%s175 + $0x168] sm:$0xff] %vm681, %v676
      %728 = vst.msk [vmem:[%s175 + $0x170] sm:$0xff] %vm681, %v677
      %729 = vst.msk [vmem:[%s175 + $0x178] sm:$0xff] %vm681, %v678
      %730 = vst.msk [vmem:[%s175 + $0x180] sm:$0xff] %vm681, %v679
      %731 = vst.msk [vmem:[%s175 + $0x188] sm:$0xff] %vm681, %v680
      %s732 = smul.u32 50, %s14
      %p733 = scmp.lt.s32.totalorder %s732, 99
      %s734 = scalar_select %p733, %s732, 99
      %s735 = smul.addr %s734, 8
      %s736 = scalar_lea.vmem %s3, %s735
      // Predicated region
      $region33: #{d2qn_forward.4} parent=31 // pred_check
        %p737 = pneg %p100
      $region34: #{d2qn_forward.4} parent=31 // pred_check_branch
        %739 = sbr.rel (%p737) target = $region36
      $region35: #{d2qn_forward.4} parent=31 // pred_region
        %s740 = smul.u32 50, %s14
      $region36: #{d2qn_forward.4} parent=31 // pred_fallthru
        _
    $region32: #{d2qn_forward.4} parent=5 // pred_fallthru
      _
    %p741 = scmp.le.s32.totalorder 2, %s9
    // Predicated region
    $region37: #{d2qn_forward.4} parent=5 // pred_check
      %p742 = pneg %p741
    $region38: #{d2qn_forward.4} parent=5 // pred_check_branch
      %744 = sbr.rel (%p742) target = $region40
    $region39: #{d2qn_forward.4} parent=5 // pred_region
      %s745 = ssub.s32 %s9, 2
      // Predicated region
      $region41: #{d2qn_forward.4} parent=39 // pred_check
        %p746 = pneg %p106
      $region42: #{d2qn_forward.4} parent=39 // pred_check_branch
        %748 = sbr.rel (%p746) target = $region44
      $region43: #{d2qn_forward.4} parent=39 // pred_region
        %s749 = smul.u32 50, %s15
        %p750 = scmp.lt.s32.totalorder %s749, 99
        %s751 = scalar_select %p750, %s749, 99
        %s752 = smul.addr %s751, 8
        %s753 = scalar_lea.vmem %s3, %s752
      $region44: #{d2qn_forward.4} parent=39 // pred_fallthru
        _
    $region40: #{d2qn_forward.4} parent=5 // pred_fallthru
      _
  $region6: #{d2qn_forward.4} parent=0 // loop_footer
    %s13 = sadd.s32 1, %s9
  $region7: #{d2qn_forward.4} parent=0 // loop_footer_branch
    %8 = sbr.rel target = $region3
  $region8: #{d2qn_forward.4} parent=0 // loop_exit
    _

// kernel: d2qn_forward.5
$region0: #{d2qn_forward.5}
  #allocation0 [shape = 'u32[]', space=smem, size = 0x4, offset = 0x4, fixed_abs, tag = 'smem constant byte address 0x4 - core index']
  #allocation1 [shape = 'u32[144,128]{1,0:T(1,128)}', space=vmem, size = 0x12000, scoped, tag = 'internal scratch']
  %s0 = inlined_call_operand.vmem [shape: f32[168,512], index: 0, kind: input, shape index: {}]
  %s1 = inlined_call_operand.vmem [shape: f32[512,64], index: 1, kind: input, shape index: {}]
  %s2 = inlined_call_operand.vmem [shape: f32[1,64], index: 2, kind: input, shape index: {}]
  %s3 = inlined_call_operand.vmem [shape: f32[168,64], index: 3, kind: output, shape index: {}]
  %s4 = sld [smem:[#allocation0]]
  $region22: #{d2qn_forward.5} parent=0
    _
  %s6 = ssub.s32 1, %s4
  %s7 = scalar_select 0, %s6, %s4
  // Predicated region
  $region2: #{d2qn_forward.5} parent=0 // pred_check
    _
  $region3: #{d2qn_forward.5} parent=0 // pred_check_branch
    %9 = sbr.rel (0) target = $region5
  $region4: #{d2qn_forward.5} parent=0 // pred_region
    _
  $region5: #{d2qn_forward.5} parent=0 // pred_fallthru
    _
  // Predicated region
  $region6: #{d2qn_forward.5} parent=0 // pred_check
    _
  $region7: #{d2qn_forward.5} parent=0 // pred_check_branch
    %11 = sbr.rel (0) target = $region9
  $region8: #{d2qn_forward.5} parent=0 // pred_region
    _
  $region9: #{d2qn_forward.5} parent=0 // pred_fallthru
    _
  // Predicated region
  $region10: #{d2qn_forward.5} parent=0 // pred_check
    _
  $region11: #{d2qn_forward.5} parent=0 // pred_check_branch
    %13 = sbr.rel (0) target = $region13
  $region12: #{d2qn_forward.5} parent=0 // pred_region
    _
  $region13: #{d2qn_forward.5} parent=0 // pred_fallthru
    _
  %v14 = vld [vmem:[%s0] sm:$0xff]
  %v15 = vld [vmem:[%s0 + $0x8] sm:$0xff]
  %v16 = vld [vmem:[%s0 + $0x10] sm:$0xff]
  %v17 = vld [vmem:[%s0 + $0x18] sm:$0xff]
  %v18 = vld [vmem:[%s0 + $0x20] sm:$0xff]
  %v19 = vld [vmem:[%s0 + $0x28] sm:$0xff]
  %v20 = vld [vmem:[%s0 + $0x30] sm:$0xff]
  %v21 = vld [vmem:[%s0 + $0x38] sm:$0xff]
  %v22 = vld [vmem:[%s0 + $0x40] sm:$0xff]
  %v23 = vld [vmem:[%s0 + $0x48] sm:$0xff]
  %v24 = vld [vmem:[%s0 + $0x50] sm:$0xff]
  %v25 = vld [vmem:[%s0 + $0x58] sm:$0xff]
  %v26 = vld [vmem:[%s0 + $0x60] sm:$0xff]
  %v27 = vld [vmem:[%s0 + $0x68] sm:$0xff]
  %v28 = vld [vmem:[%s0 + $0x70] sm:$0xff]
  %v29 = vld [vmem:[%s0 + $0x78] sm:$0xff]
  %v30 = vld [vmem:[%s0 + $0x80] sm:$0xff]
  %v31 = vld [vmem:[%s0 + $0x88] sm:$0xff]
  %v32 = vld [vmem:[%s0 + $0x90] sm:$0xff]
  %v33 = vld [vmem:[%s0 + $0x98] sm:$0xff]
  %v34 = vld [vmem:[%s0 + $0xa0] sm:$0xff]
  %v35 = vld [vmem:[%s0 + $0xa8] sm:$0xff]
  %v36 = vld [vmem:[%s0 + $0xb0] sm:$0xff]
  %v37 = vld [vmem:[%s0 + $0xb8] sm:$0xff]
  %v38 = vld [vmem:[%s0 + $0xc0] sm:$0xff]
  %v39 = vld [vmem:[%s0 + $0xc8] sm:$0xff]
  %v40 = vld [vmem:[%s0 + $0xd0] sm:$0xff]
  %v41 = vld [vmem:[%s0 + $0xd8] sm:$0xff]
  %v42 = vld [vmem:[%s0 + $0xe0] sm:$0xff]
  %v43 = vld [vmem:[%s0 + $0xe8] sm:$0xff]
  %v44 = vld [vmem:[%s0 + $0xf0] sm:$0xff]
  %v45 = vld [vmem:[%s0 + $0xf8] sm:$0xff]
  %v46 = vld [vmem:[%s0 + $0x100] sm:$0xff]
  %v47 = vld [vmem:[%s0 + $0x108] sm:$0xff]
  %v48 = vld [vmem:[%s0 + $0x110] sm:$0xff]
  %v49 = vld [vmem:[%s0 + $0x118] sm:$0xff]
  %v50 = vld [vmem:[%s0 + $0x120] sm:$0xff]
  %v51 = vld [vmem:[%s0 + $0x128] sm:$0xff]
  %v52 = vld [vmem:[%s0 + $0x130] sm:$0xff]
  %v53 = vld [vmem:[%s0 + $0x138] sm:$0xff]
  %v54 = vld [vmem:[%s0 + $0x140] sm:$0xff]
  %v55 = vld [vmem:[%s0 + $0x148] sm:$0xff]
  %v56 = vld [vmem:[%s0 + $0x150] sm:$0xff]
  %v57 = vld [vmem:[%s0 + $0x158] sm:$0xff]
  %v58 = vld [vmem:[%s0 + $0x160] sm:$0xff]
  %v59 = vld [vmem:[%s0 + $0x168] sm:$0xff]
  %v60 = vld [vmem:[%s0 + $0x170] sm:$0xff]
  %v61 = vld [vmem:[%s0 + $0x178] sm:$0xff]
  %v62 = vld [vmem:[%s0 + $0x180] sm:$0xff]
  %v63 = vld [vmem:[%s0 + $0x188] sm:$0xff]
  %v64 = vld [vmem:[%s0 + $0x190] sm:$0xff]
  %v65 = vld [vmem:[%s0 + $0x198] sm:$0xff]
  %v66 = vld [vmem:[%s0 + $0x1a0] sm:$0xff]
  %v67 = vld [vmem:[%s0 + $0x1a8] sm:$0xff]
  %v68 = vld [vmem:[%s0 + $0x1b0] sm:$0xff]
  %v69 = vld [vmem:[%s0 + $0x1b8] sm:$0xff]
  %v70 = vld [vmem:[%s0 + $0x1c0] sm:$0xff]
  %v71 = vld [vmem:[%s0 + $0x1c8] sm:$0xff]
  %v72 = vld [vmem:[%s0 + $0x1d0] sm:$0xff]
  %v73 = vld [vmem:[%s0 + $0x1d8] sm:$0xff]
  %v74 = vld [vmem:[%s0 + $0x1e0] sm:$0xff]
  %v75 = vld [vmem:[%s0 + $0x1e8] sm:$0xff]
  %v76 = vld [vmem:[%s0 + $0x1f0] sm:$0xff]
  %v77 = vld [vmem:[%s0 + $0x1f8] sm:$0xff]
  %v78 = vld [vmem:[%s0 + $0x200] sm:$0xff]
  %v79 = vld [vmem:[%s0 + $0x208] sm:$0xff]
  %v80 = vld [vmem:[%s0 + $0x210] sm:$0xff]
  %v81 = vld [vmem:[%s0 + $0x218] sm:$0xff]
  %v82 = vld [vmem:[%s0 + $0x220] sm:$0xff]
  %v83 = vld [vmem:[%s0 + $0x228] sm:$0xff]
  %v84 = vld [vmem:[%s0 + $0x230] sm:$0xff]
  %v85 = vld [vmem:[%s0 + $0x238] sm:$0xff]
  %v86 = vld [vmem:[%s0 + $0x240] sm:$0xff]
  %v87 = vld [vmem:[%s0 + $0x248] sm:$0xff]
  %v88 = vld [vmem:[%s0 + $0x250] sm:$0xff]
  %v89 = vld [vmem:[%s0 + $0x258] sm:$0xff]
  %v90 = vld [vmem:[%s0 + $0x260] sm:$0xff]
  %v91 = vld [vmem:[%s0 + $0x268] sm:$0xff]
  %v92 = vld [vmem:[%s0 + $0x270] sm:$0xff]
  %v93 = vld [vmem:[%s0 + $0x278] sm:$0xff]
  %v94 = vld [vmem:[%s0 + $0x280] sm:$0xff]
  %v95 = vld [vmem:[%s0 + $0x288] sm:$0xff]
  %v96 = vld [vmem:[%s0 + $0x290] sm:$0xff]
  %v97 = vld [vmem:[%s0 + $0x298] sm:$0xff]
  %v98 = vld [vmem:[%s1] sm:$0xff]
  %v99 = vld [vmem:[%s1 + $0x8] sm:$0xff]
  %v100 = vld [vmem:[%s1 + $0x10] sm:$0xff]
  %v101 = vld [vmem:[%s1 + $0x18] sm:$0xff]
  %v102 = vld [vmem:[%s1 + $0x20] sm:$0xff]
  %v103 = vld [vmem:[%s1 + $0x28] sm:$0xff]
  %v104 = vld [vmem:[%s1 + $0x30] sm:$0xff]
  %v105 = vld [vmem:[%s1 + $0x38] sm:$0xff]
  %v106 = vld [vmem:[%s1 + $0x40] sm:$0xff]
  %v107 = vld [vmem:[%s1 + $0x48] sm:$0xff]
  %v108 = vld [vmem:[%s1 + $0x50] sm:$0xff]
  %v109 = vld [vmem:[%s1 + $0x58] sm:$0xff]
  %v110 = vld [vmem:[%s1 + $0x60] sm:$0xff]
  %v111 = vld [vmem:[%s1 + $0x68] sm:$0xff]
  %v112 = vld [vmem:[%s1 + $0x70] sm:$0xff]
  %v113 = vld [vmem:[%s1 + $0x78] sm:$0xff]
  %v114 = vld [vmem:[%s1 + $0x80] sm:$0xff]
  %v115 = vld [vmem:[%s1 + $0x88] sm:$0xff]
  %v116 = vld [vmem:[%s1 + $0x90] sm:$0xff]
  %v117 = vld [vmem:[%s1 + $0x98] sm:$0xff]
  %v118 = vld [vmem:[%s1 + $0xa0] sm:$0xff]
  %v119 = vld [vmem:[%s1 + $0xa8] sm:$0xff]
  %v120 = vld [vmem:[%s1 + $0xb0] sm:$0xff]
  %v121 = vld [vmem:[%s1 + $0xb8] sm:$0xff]
  %v122 = vld [vmem:[%s1 + $0xc0] sm:$0xff]
  %v123 = vld [vmem:[%s1 + $0xc8] sm:$0xff]
  %v124 = vld [vmem:[%s1 + $0xd0] sm:$0xff]
  %v125 = vld [vmem:[%s1 + $0xd8] sm:$0xff]
  %v126 = vld [vmem:[%s1 + $0xe0] sm:$0xff]
  %v127 = vld [vmem:[%s1 + $0xe8] sm:$0xff]
  %v128 = vld [vmem:[%s1 + $0xf0] sm:$0xff]
  %v129 = vld [vmem:[%s1 + $0xf8] sm:$0xff]
  %v130 = vld [vmem:[%s1 + $0x100] sm:$0xff]
  %v131 = vld [vmem:[%s1 + $0x108] sm:$0xff]
  %v132 = vld [vmem:[%s1 + $0x110] sm:$0xff]
  %v133 = vld [vmem:[%s1 + $0x118] sm:$0xff]
  %v134 = vld [vmem:[%s1 + $0x120] sm:$0xff]
  %v135 = vld [vmem:[%s1 + $0x128] sm:$0xff]
  %v136 = vld [vmem:[%s1 + $0x130] sm:$0xff]
  %v137 = vld [vmem:[%s1 + $0x138] sm:$0xff]
  %v138 = vld [vmem:[%s1 + $0x140] sm:$0xff]
  %v139 = vld [vmem:[%s1 + $0x148] sm:$0xff]
  %v140 = vld [vmem:[%s1 + $0x150] sm:$0xff]
  %v141 = vld [vmem:[%s1 + $0x158] sm:$0xff]
  %v142 = vld [vmem:[%s1 + $0x160] sm:$0xff]
  %v143 = vld [vmem:[%s1 + $0x168] sm:$0xff]
  %v144 = vld [vmem:[%s1 + $0x170] sm:$0xff]
  %v145 = vld [vmem:[%s1 + $0x178] sm:$0xff]
  %v146 = vld [vmem:[%s1 + $0x180] sm:$0xff]
  %v147 = vld [vmem:[%s1 + $0x188] sm:$0xff]
  %v148 = vld [vmem:[%s1 + $0x190] sm:$0xff]
  %v149 = vld [vmem:[%s1 + $0x198] sm:$0xff]
  %v150 = vld [vmem:[%s1 + $0x1a0] sm:$0xff]
  %v151 = vld [vmem:[%s1 + $0x1a8] sm:$0xff]
  %v152 = vld [vmem:[%s1 + $0x1b0] sm:$0xff]
  %v153 = vld [vmem:[%s1 + $0x1b8] sm:$0xff]
  %v154 = vld [vmem:[%s1 + $0x1c0] sm:$0xff]
  %v155 = vld [vmem:[%s1 + $0x1c8] sm:$0xff]
  %v156 = vld [vmem:[%s1 + $0x1d0] sm:$0xff]
  %v157 = vld [vmem:[%s1 + $0x1d8] sm:$0xff]
  %v158 = vld [vmem:[%s1 + $0x1e0] sm:$0xff]
  %v159 = vld [vmem:[%s1 + $0x1e8] sm:$0xff]
  %v160 = vld [vmem:[%s1 + $0x1f0] sm:$0xff]
  %v161 = vld [vmem:[%s1 + $0x1f8] sm:$0xff]
  %v162 = vld [vmem:[%s2] sm:$0x1]
  %v164 = vlaneseq
  %v165 = vshrl.u32 %v164, 7
  %v166 = vsub.s32 0, %v165
  %v167 = vrot.slane %v162, %v166
  %169 = vmatprep.subr.mxu0 0.0
  %170 = vmatpush1.msra.mxu0 %v98
  %171 = vmatprep.subr.mxu0 0.0
  %172 = vmatpush1.msra.mxu0 %v99
  %173 = vmatprep.subr.mxu0 0.0
  %174 = vmatpush1.msra.mxu0 %v100
  %175 = vmatprep.subr.mxu0 0.0
  %176 = vmatpush1.msra.mxu0 %v101
  %177 = vmatprep.subr.mxu0 0.0
  %178 = vmatpush1.msra.mxu0 %v102
  %179 = vmatprep.subr.mxu0 0.0
  %180 = vmatpush1.msra.mxu0 %v103
  %181 = vmatprep.subr.mxu0 0.0
  %182 = vmatpush1.msra.mxu0 %v104
  %183 = vmatprep.subr.mxu0 0.0
  %184 = vmatpush1.msra.mxu0 %v105
  %185 = vmatprep.subr.mxu0 0.0
  %186 = vmatpush1.msra.mxu0 %v106
  %187 = vmatprep.subr.mxu0 0.0
  %188 = vmatpush1.msra.mxu0 %v107
  %189 = vmatprep.subr.mxu0 0.0
  %190 = vmatpush1.msra.mxu0 %v108
  %191 = vmatprep.subr.mxu0 0.0
  %192 = vmatpush1.msra.mxu0 %v109
  %193 = vmatprep.subr.mxu0 0.0
  %194 = vmatpush1.msra.mxu0 %v110
  %195 = vmatprep.subr.mxu0 0.0
  %196 = vmatpush1.msra.mxu0 %v111
  %197 = vmatprep.subr.mxu0 0.0
  %198 = vmatpush1.msra.mxu0 %v112
  %199 = vmatprep.subr.mxu0 0.0
  %200 = vmatpush1.msra.mxu0 %v113
  %201 = vmatprep.subr.mxu0 0.0
  %202 = vmatpush1.msra.mxu0 %v114
  %203 = vmatprep.subr.mxu0 0.0
  %204 = vmatpush1.msra.mxu0 %v115
  %205 = vmatprep.subr.mxu0 0.0
  %206 = vmatpush1.msra.mxu0 %v116
  %207 = vmatprep.subr.mxu0 0.0
  %208 = vmatpush1.msra.mxu0 %v117
  %209 = vmatprep.subr.mxu0 0.0
  %210 = vmatpush1.msra.mxu0 %v118
  %211 = vmatprep.subr.mxu0 0.0
  %212 = vmatpush1.msra.mxu0 %v119
  %213 = vmatprep.subr.mxu0 0.0
  %214 = vmatpush1.msra.mxu0 %v120
  %215 = vmatprep.subr.mxu0 0.0
  %216 = vmatpush1.msra.mxu0 %v121
  %217 = vmatprep.subr.mxu0 0.0
  %218 = vmatpush1.msra.mxu0 %v122
  %219 = vmatprep.subr.mxu0 0.0
  %220 = vmatpush1.msra.mxu0 %v123
  %221 = vmatprep.subr.mxu0 0.0
  %222 = vmatpush1.msra.mxu0 %v124
  %223 = vmatprep.subr.mxu0 0.0
  %224 = vmatpush1.msra.mxu0 %v125
  %225 = vmatprep.subr.mxu0 0.0
  %226 = vmatpush1.msra.mxu0 %v126
  %227 = vmatprep.subr.mxu0 0.0
  %228 = vmatpush1.msra.mxu0 %v127
  %229 = vmatprep.subr.mxu0 0.0
  %230 = vmatpush1.msra.mxu0 %v128
  %231 = vmatprep.subr.mxu0 0.0
  %232 = vmatpush1.msra.mxu0 %v129
  %233 = vmatprep.mubr.f32.mxu0 %v15
  %234 = vmatmul.mubr.f32.gmra.mrb[0].mxu0 %v14
  %v235 = vpop.f32.mrb[0].mxu0
  %v236 = vadd.f32 %v167, %v235
  %v237 = vpop.f32.mrb[0].mxu0
  %238 = vmatprep.mubr.f32.mxu0 %v19
  %239 = vmatmul.mubr.f32.gmra.mrb[0].mxu0 %v18
  %v240 = vpop.f32.mrb[0].mxu0
  %v241 = vadd.f32 %v167, %v240
  %v242 = vpop.f32.mrb[0].mxu0
  %243 = vmatprep.mubr.f32.mxu0 %v23
  %244 = vmatmul.mubr.f32.gmra.mrb[0].mxu0 %v22
  %v245 = vpop.f32.mrb[0].mxu0
  %v246 = vadd.f32 %v167, %v245
  %v247 = vpop.f32.mrb[0].mxu0
  %248 = vmatprep.mubr.f32.mxu0 %v27
  %249 = vmatmul.mubr.f32.gmra.mrb[0].mxu0 %v26
  %v250 = vpop.f32.mrb[0].mxu0
  %v251 = vadd.f32 %v167, %v250
  %v252 = vpop.f32.mrb[0].mxu0
  %253 = vmatprep.mubr.f32.mxu0 %v31
  %254 = vmatmul.mubr.f32.gmra.mrb[0].mxu0 %v30
  %v255 = vpop.f32.mrb[0].mxu0
  %v256 = vadd.f32 %v167, %v255
  %v257 = vpop.f32.mrb[0].mxu0
  %258 = vmatprep.mubr.f32.mxu0 %v35
  %259 = vmatmul.mubr.f32.gmra.mrb[0].mxu0 %v34
  %v260 = vpop.f32.mrb[0].mxu0
  %v261 = vadd.f32 %v167, %v260
  %v262 = vpop.f32.mrb[0].mxu0
  %263 = vmatprep.mubr.f32.mxu0 %v39
  %264 = vmatmul.mubr.f32.gmra.mrb[0].mxu0 %v38
  %v265 = vpop.f32.mrb[0].mxu0
  %v266 = vadd.f32 %v167, %v265
  %v267 = vpop.f32.mrb[0].mxu0
  %268 = vmatprep.mubr.f32.mxu0 %v43
  %269 = vmatmul.mubr.f32.gmra.mrb[0].mxu0 %v42
  %v270 = vpop.f32.mrb[0].mxu0
  %v271 = vadd.f32 %v167, %v270
  %v272 = vpop.f32.mrb[0].mxu0
  %273 = vmatprep.mubr.f32.mxu0 %v47
  %274 = vmatmul.mubr.f32.gmra.mrb[0].mxu0 %v46
  %v275 = vpop.f32.mrb[0].mxu0
  %v276 = vadd.f32 %v167, %v275
  %v277 = vpop.f32.mrb[0].mxu0
  %278 = vmatprep.mubr.f32.mxu0 %v51
  %279 = vmatmul.mubr.f32.gmra.mrb[0].mxu0 %v50
  %v280 = vpop.f32.mrb[0].mxu0
  %v281 = vadd.f32 %v167, %v280
  %v282 = vpop.f32.mrb[0].mxu0
  %283 = vmatprep.mubr.f32.mxu0 %v55
  %284 = vmatmul.mubr.f32.gmra.mrb[0].mxu0 %v54
  %v285 = vpop.f32.mrb[0].mxu0
  %v286 = vadd.f32 %v167, %v285
  %v287 = vpop.f32.mrb[0].mxu0
  %288 = vmatprep.mubr.f32.mxu0 %v59
  %289 = vmatmul.mubr.f32.gmra.mrb[0].mxu0 %v58
  %v290 = vpop.f32.mrb[0].mxu0
  %v291 = vadd.f32 %v167, %v290
  %v292 = vpop.f32.mrb[0].mxu0
  %293 = vmatprep.mubr.f32.mxu0 %v63
  %294 = vmatmul.mubr.f32.gmra.mrb[0].mxu0 %v62
  %v295 = vpop.f32.mrb[0].mxu0
  %v296 = vadd.f32 %v167, %v295
  %v297 = vpop.f32.mrb[0].mxu0
  %298 = vmatprep.mubr.f32.mxu0 %v67
  %299 = vmatmul.mubr.f32.gmra.mrb[0].mxu0 %v66
  %v300 = vpop.f32.mrb[0].mxu0
  %v301 = vadd.f32 %v167, %v300
  %v302 = vpop.f32.mrb[0].mxu0
  %303 = vmatprep.mubr.f32.mxu0 %v71
  %304 = vmatmul.mubr.f32.gmra.mrb[0].mxu0 %v70
  %v305 = vpop.f32.mrb[0].mxu0
  %v306 = vadd.f32 %v167, %v305
  %v307 = vpop.f32.mrb[0].mxu0
  %308 = vmatprep.mubr.f32.mxu0 %v75
  %309 = vmatmul.mubr.f32.gmra.mrb[0].mxu0 %v74
  %v310 = vpop.f32.mrb[0].mxu0
  %v311 = vadd.f32 %v167, %v310
  %v312 = vpop.f32.mrb[0].mxu0
  %313 = vmatprep.mubr.f32.mxu0 %v79
  %314 = vmatmul.mubr.f32.gmra.mrb[0].mxu0 %v78
  %v315 = vpop.f32.mrb[0].mxu0
  %v316 = vadd.f32 %v167, %v315
  %v317 = vpop.f32.mrb[0].mxu0
  %318 = vmatprep.mubr.f32.mxu0 %v83
  %319 = vmatmul.mubr.f32.gmra.mrb[0].mxu0 %v82
  %v320 = vpop.f32.mrb[0].mxu0
  %v321 = vadd.f32 %v167, %v320
  %v322 = vpop.f32.mrb[0].mxu0
  %323 = vmatprep.mubr.f32.mxu0 %v87
  %324 = vmatmul.mubr.f32.gmra.mrb[0].mxu0 %v86
  %v325 = vpop.f32.mrb[0].mxu0
  %v326 = vadd.f32 %v167, %v325
  %v327 = vpop.f32.mrb[0].mxu0
  %328 = vmatprep.mubr.f32.mxu0 %v91
  %329 = vmatmul.mubr.f32.gmra.mrb[0].mxu0 %v90
  %v330 = vpop.f32.mrb[0].mxu0
  %v331 = vadd.f32 %v167, %v330
  %v332 = vpop.f32.mrb[0].mxu0
  %333 = vmatprep.mubr.f32.mxu0 %v95
  %334 = vmatmul.mubr.f32.gmra.mrb[0].mxu0 %v94
  %v335 = vpop.f32.mrb[0].mxu0
  %v336 = vadd.f32 %v167, %v335
  %v337 = vpop.f32.mrb[0].mxu0
  %338 = vdwg.mxu0
  %339 = vmatprep.subr.mxu0 0.0
  %340 = vmatpush1.msra.mxu0 %v130
  %341 = vmatprep.subr.mxu0 0.0
  %342 = vmatpush1.msra.mxu0 %v131
  %343 = vmatprep.subr.mxu0 0.0
  %344 = vmatpush1.msra.mxu0 %v132
  %345 = vmatprep.subr.mxu0 0.0
  %346 = vmatpush1.msra.mxu0 %v133
  %347 = vmatprep.subr.mxu0 0.0
  %348 = vmatpush1.msra.mxu0 %v134
  %349 = vmatprep.subr.mxu0 0.0
  %350 = vmatpush1.msra.mxu0 %v135
  %351 = vmatprep.subr.mxu0 0.0
  %352 = vmatpush1.msra.mxu0 %v136
  %353 = vmatprep.subr.mxu0 0.0
  %354 = vmatpush1.msra.mxu0 %v137
  %355 = vmatprep.subr.mxu0 0.0
  %356 = vmatpush1.msra.mxu0 %v138
  %357 = vmatprep.subr.mxu0 0.0
  %358 = vmatpush1.msra.mxu0 %v139
  %359 = vmatprep.subr.mxu0 0.0
  %360 = vmatpush1.msra.mxu0 %v140
  %361 = vmatprep.subr.mxu0 0.0
  %362 = vmatpush1.msra.mxu0 %v141
  %363 = vmatprep.subr.mxu0 0.0
  %364 = vmatpush1.msra.mxu0 %v142
  %365 = vmatprep.subr.mxu0 0.0
  %366 = vmatpush1.msra.mxu0 %v143
  %367 = vmatprep.subr.mxu0 0.0
  %368 = vmatpush1.msra.mxu0 %v144
  %369 = vmatprep.subr.mxu0 0.0
  %370 = vmatpush1.msra.mxu0 %v145
  %371 = vmatprep.subr.mxu0 0.0
  %372 = vmatpush1.msra.mxu0 %v146
  %373 = vmatprep.subr.mxu0 0.0
  %374 = vmatpush1.msra.mxu0 %v147
  %375 = vmatprep.subr.mxu0 0.0
  %376 = vmatpush1.msra.mxu0 %v148
  %377 = vmatprep.subr.mxu0 0.0
  %378 = vmatpush1.msra.mxu0 %v149
  %379 = vmatprep.subr.mxu0 0.0
  %380 = vmatpush1.msra.mxu0 %v150
  %381 = vmatprep.subr.mxu0 0.0
  %382 = vmatpush1.msra.mxu0 %v151
  %383 = vmatprep.subr.mxu0 0.0
  %384 = vmatpush1.msra.mxu0 %v152
  %385 = vmatprep.subr.mxu0 0.0
  %386 = vmatpush1.msra.mxu0 %v153
  %387 = vmatprep.subr.mxu0 0.0
  %388 = vmatpush1.msra.mxu0 %v154
  %389 = vmatprep.subr.mxu0 0.0
  %390 = vmatpush1.msra.mxu0 %v155
  %391 = vmatprep.subr.mxu0 0.0
  %392 = vmatpush1.msra.mxu0 %v156
  %393 = vmatprep.subr.mxu0 0.0
  %394 = vmatpush1.msra.mxu0 %v157
  %395 = vmatprep.subr.mxu0 0.0
  %396 = vmatpush1.msra.mxu0 %v158
  %397 = vmatprep.subr.mxu0 0.0
  %398 = vmatpush1.msra.mxu0 %v159
  %399 = vmatprep.subr.mxu0 0.0
  %400 = vmatpush1.msra.mxu0 %v160
  %401 = vmatprep.subr.mxu0 0.0
  %402 = vmatpush1.msra.mxu0 %v161
  %403 = vmatprep.mubr.f32.mxu0 %v17
  %404 = vmatmul.mubr.f32.gmra.mrb[0].mxu0 %v16
  %v405 = vpop.f32.mrb[0].mxu0
  %v406 = vadd.f32 %v236, %v405
  %v407 = vpop.f32.mrb[0].mxu0
  %408 = vmatprep.mubr.f32.mxu0 %v21
  %409 = vmatmul.mubr.f32.gmra.mrb[0].mxu0 %v20
  %v410 = vpop.f32.mrb[0].mxu0
  %v411 = vadd.f32 %v241, %v410
  %v412 = vpop.f32.mrb[0].mxu0
  %413 = vmatprep.mubr.f32.mxu0 %v25
  %414 = vmatmul.mubr.f32.gmra.mrb[0].mxu0 %v24
  %v415 = vpop.f32.mrb[0].mxu0
  %v416 = vadd.f32 %v246, %v415
  %v417 = vpop.f32.mrb[0].mxu0
  %418 = vmatprep.mubr.f32.mxu0 %v29
  %419 = vmatmul.mubr.f32.gmra.mrb[0].mxu0 %v28
  %v420 = vpop.f32.mrb[0].mxu0
  %v421 = vadd.f32 %v251, %v420
  %v422 = vpop.f32.mrb[0].mxu0
  %423 = vmatprep.mubr.f32.mxu0 %v33
  %424 = vmatmul.mubr.f32.gmra.mrb[0].mxu0 %v32
  %v425 = vpop.f32.mrb[0].mxu0
  %v426 = vadd.f32 %v256, %v425
  %v427 = vpop.f32.mrb[0].mxu0
  %428 = vmatprep.mubr.f32.mxu0 %v37
  %429 = vmatmul.mubr.f32.gmra.mrb[0].mxu0 %v36
  %v430 = vpop.f32.mrb[0].mxu0
  %v431 = vadd.f32 %v261, %v430
  %v432 = vpop.f32.mrb[0].mxu0
  %433 = vmatprep.mubr.f32.mxu0 %v41
  %434 = vmatmul.mubr.f32.gmra.mrb[0].mxu0 %v40
  %v435 = vpop.f32.mrb[0].mxu0
  %v436 = vadd.f32 %v266, %v435
  %v437 = vpop.f32.mrb[0].mxu0
  %438 = vmatprep.mubr.f32.mxu0 %v45
  %439 = vmatmul.mubr.f32.gmra.mrb[0].mxu0 %v44
  %v440 = vpop.f32.mrb[0].mxu0
  %v441 = vadd.f32 %v271, %v440
  %v442 = vpop.f32.mrb[0].mxu0
  %443 = vmatprep.mubr.f32.mxu0 %v49
  %444 = vmatmul.mubr.f32.gmra.mrb[0].mxu0 %v48
  %v445 = vpop.f32.mrb[0].mxu0
  %v446 = vadd.f32 %v276, %v445
  %v447 = vpop.f32.mrb[0].mxu0
  %448 = vmatprep.mubr.f32.mxu0 %v53
  %449 = vmatmul.mubr.f32.gmra.mrb[0].mxu0 %v52
  %v450 = vpop.f32.mrb[0].mxu0
  %v451 = vadd.f32 %v281, %v450
  %v452 = vpop.f32.mrb[0].mxu0
  %453 = vmatprep.mubr.f32.mxu0 %v57
  %454 = vmatmul.mubr.f32.gmra.mrb[0].mxu0 %v56
  %v455 = vpop.f32.mrb[0].mxu0
  %v456 = vadd.f32 %v286, %v455
  %v457 = vpop.f32.mrb[0].mxu0
  %458 = vmatprep.mubr.f32.mxu0 %v61
  %459 = vmatmul.mubr.f32.gmra.mrb[0].mxu0 %v60
  %v460 = vpop.f32.mrb[0].mxu0
  %v461 = vadd.f32 %v291, %v460
  %v462 = vpop.f32.mrb[0].mxu0
  %463 = vmatprep.mubr.f32.mxu0 %v65
  %464 = vmatmul.mubr.f32.gmra.mrb[0].mxu0 %v64
  %v465 = vpop.f32.mrb[0].mxu0
  %v466 = vadd.f32 %v296, %v465
  %v467 = vpop.f32.mrb[0].mxu0
  %468 = vmatprep.mubr.f32.mxu0 %v69
  %469 = vmatmul.mubr.f32.gmra.mrb[0].mxu0 %v68
  %v470 = vpop.f32.mrb[0].mxu0
  %v471 = vadd.f32 %v301, %v470
  %v472 = vpop.f32.mrb[0].mxu0
  %473 = vmatprep.mubr.f32.mxu0 %v73
  %474 = vmatmul.mubr.f32.gmra.mrb[0].mxu0 %v72
  %v475 = vpop.f32.mrb[0].mxu0
  %v476 = vadd.f32 %v306, %v475
  %v477 = vpop.f32.mrb[0].mxu0
  %478 = vmatprep.mubr.f32.mxu0 %v77
  %479 = vmatmul.mubr.f32.gmra.mrb[0].mxu0 %v76
  %v480 = vpop.f32.mrb[0].mxu0
  %v481 = vadd.f32 %v311, %v480
  %v482 = vpop.f32.mrb[0].mxu0
  %483 = vmatprep.mubr.f32.mxu0 %v81
  %484 = vmatmul.mubr.f32.gmra.mrb[0].mxu0 %v80
  %v485 = vpop.f32.mrb[0].mxu0
  %v486 = vadd.f32 %v316, %v485
  %v487 = vpop.f32.mrb[0].mxu0
  %488 = vmatprep.mubr.f32.mxu0 %v85
  %489 = vmatmul.mubr.f32.gmra.mrb[0].mxu0 %v84
  %v490 = vpop.f32.mrb[0].mxu0
  %v491 = vadd.f32 %v321, %v490
  %v492 = vpop.f32.mrb[0].mxu0
  %493 = vmatprep.mubr.f32.mxu0 %v89
  %494 = vmatmul.mubr.f32.gmra.mrb[0].mxu0 %v88
  %v495 = vpop.f32.mrb[0].mxu0
  %v496 = vadd.f32 %v326, %v495
  %v497 = vpop.f32.mrb[0].mxu0
  %498 = vmatprep.mubr.f32.mxu0 %v93
  %499 = vmatmul.mubr.f32.gmra.mrb[0].mxu0 %v92
  %v500 = vpop.f32.mrb[0].mxu0
  %v501 = vadd.f32 %v331, %v500
  %v502 = vpop.f32.mrb[0].mxu0
  %503 = vmatprep.mubr.f32.mxu0 %v97
  %504 = vmatmul.mubr.f32.gmra.mrb[0].mxu0 %v96
  %v505 = vpop.f32.mrb[0].mxu0
  %v506 = vadd.f32 %v336, %v505
  %v507 = vpop.f32.mrb[0].mxu0
  %508 = vdwg.mxu0
  %v509 = vmax.f32 %v406, 0.0
  %v510 = vmax.f32 %v411, 0.0
  %v511 = vmax.f32 %v416, 0.0
  %v512 = vmax.f32 %v421, 0.0
  %v513 = vmax.f32 %v426, 0.0
  %v514 = vmax.f32 %v431, 0.0
  %v515 = vmax.f32 %v436, 0.0
  %v516 = vmax.f32 %v441, 0.0
  %v517 = vmax.f32 %v446, 0.0
  %v518 = vmax.f32 %v451, 0.0
  %v519 = vmax.f32 %v456, 0.0
  %v520 = vmax.f32 %v461, 0.0
  %v521 = vmax.f32 %v466, 0.0
  %v522 = vmax.f32 %v471, 0.0
  %v523 = vmax.f32 %v476, 0.0
  %v524 = vmax.f32 %v481, 0.0
  %v525 = vmax.f32 %v486, 0.0
  %v526 = vmax.f32 %v491, 0.0
  %v527 = vmax.f32 %v496, 0.0
  %v528 = vmax.f32 %v501, 0.0
  %v529 = vmax.f32 %v506, 0.0
  %vm530 = vcmask 523264
  %531 = vst.msk [vmem:[%s3] sm:$0xff] %vm530, %v509
  %532 = vst.msk [vmem:[%s3 + $0x8] sm:$0xff] %vm530, %v510
  %533 = vst.msk [vmem:[%s3 + $0x10] sm:$0xff] %vm530, %v511
  %534 = vst.msk [vmem:[%s3 + $0x18] sm:$0xff] %vm530, %v512
  %535 = vst.msk [vmem:[%s3 + $0x20] sm:$0xff] %vm530, %v513
  %536 = vst.msk [vmem:[%s3 + $0x28] sm:$0xff] %vm530, %v514
  %537 = vst.msk [vmem:[%s3 + $0x30] sm:$0xff] %vm530, %v515
  %538 = vst.msk [vmem:[%s3 + $0x38] sm:$0xff] %vm530, %v516
  %539 = vst.msk [vmem:[%s3 + $0x40] sm:$0xff] %vm530, %v517
  %540 = vst.msk [vmem:[%s3 + $0x48] sm:$0xff] %vm530, %v518
  %541 = vst.msk [vmem:[%s3 + $0x50] sm:$0xff] %vm530, %v519
  %542 = vst.msk [vmem:[%s3 + $0x58] sm:$0xff] %vm530, %v520
  %543 = vst.msk [vmem:[%s3 + $0x60] sm:$0xff] %vm530, %v521
  %544 = vst.msk [vmem:[%s3 + $0x68] sm:$0xff] %vm530, %v522
  %545 = vst.msk [vmem:[%s3 + $0x70] sm:$0xff] %vm530, %v523
  %546 = vst.msk [vmem:[%s3 + $0x78] sm:$0xff] %vm530, %v524
  %547 = vst.msk [vmem:[%s3 + $0x80] sm:$0xff] %vm530, %v525
  %548 = vst.msk [vmem:[%s3 + $0x88] sm:$0xff] %vm530, %v526
  %549 = vst.msk [vmem:[%s3 + $0x90] sm:$0xff] %vm530, %v527
  %550 = vst.msk [vmem:[%s3 + $0x98] sm:$0xff] %vm530, %v528
  %551 = vst.msk [vmem:[%s3 + $0xa0] sm:$0xff] %vm530, %v529
  // Predicated region
  $region14: #{d2qn_forward.5} parent=0 // pred_check
    _
  $region15: #{d2qn_forward.5} parent=0 // pred_check_branch
    %553 = sbr.rel (0) target = $region17
  $region16: #{d2qn_forward.5} parent=0 // pred_region
    _
  $region17: #{d2qn_forward.5} parent=0 // pred_fallthru
    _
  // Predicated region
  $region18: #{d2qn_forward.5} parent=0 // pred_check
    _
  $region19: #{d2qn_forward.5} parent=0 // pred_check_branch
    %555 = sbr.rel (0) target = $region21
  $region20: #{d2qn_forward.5} parent=0 // pred_region
    _
  $region21: #{d2qn_forward.5} parent=0 // pred_fallthru
    _

// kernel: d2qn_forward.6
$region0: #{d2qn_forward.6}
  #allocation0 [shape = 'u32[]', space=smem, size = 0x4, offset = 0x4, fixed_abs, tag = 'smem constant byte address 0x4 - core index']
  #allocation1 [shape = 'u32[144,128]{1,0:T(1,128)}', space=vmem, size = 0x12000, scoped, tag = 'internal scratch']
  %s0 = inlined_call_operand.vmem [shape: f32[104,576], index: 0, kind: input, shape index: {}]
  %s1 = inlined_call_operand.vmem [shape: f32[576,64], index: 1, kind: input, shape index: {}]
  %s2 = inlined_call_operand.vmem [shape: f32[1,64], index: 2, kind: input, shape index: {}]
  %s3 = inlined_call_operand.vmem [shape: f32[104,64], index: 3, kind: output, shape index: {}]
  %s4 = sld [smem:[#allocation0]]
  $region22: #{d2qn_forward.6} parent=0
    _
  %s6 = ssub.s32 1, %s4
  %s7 = scalar_select 0, %s6, %s4
  // Predicated region
  $region2: #{d2qn_forward.6} parent=0 // pred_check
    _
  $region3: #{d2qn_forward.6} parent=0 // pred_check_branch
    %9 = sbr.rel (0) target = $region5
  $region4: #{d2qn_forward.6} parent=0 // pred_region
    _
  $region5: #{d2qn_forward.6} parent=0 // pred_fallthru
    _
  // Predicated region
  $region6: #{d2qn_forward.6} parent=0 // pred_check
    _
  $region7: #{d2qn_forward.6} parent=0 // pred_check_branch
    %11 = sbr.rel (0) target = $region9
  $region8: #{d2qn_forward.6} parent=0 // pred_region
    _
  $region9: #{d2qn_forward.6} parent=0 // pred_fallthru
    _
  // Predicated region
  $region10: #{d2qn_forward.6} parent=0 // pred_check
    _
  $region11: #{d2qn_forward.6} parent=0 // pred_check_branch
    %13 = sbr.rel (0) target = $region13
  $region12: #{d2qn_forward.6} parent=0 // pred_region
    _
  $region13: #{d2qn_forward.6} parent=0 // pred_fallthru
    _
  %v14 = vld [vmem:[%s0] sm:$0xff]
  %v15 = vld [vmem:[%s0 + $0x8] sm:$0xff]
  %v16 = vld [vmem:[%s0 + $0x10] sm:$0xff]
  %v17 = vld [vmem:[%s0 + $0x18] sm:$0xff]
  %v18 = vld [vmem:[%s0 + $0x20] sm:$0xff]
  %v19 = vld [vmem:[%s0 + $0x28] sm:$0xff]
  %v20 = vld [vmem:[%s0 + $0x30] sm:$0xff]
  %v21 = vld [vmem:[%s0 + $0x38] sm:$0xff]
  %v22 = vld [vmem:[%s0 + $0x40] sm:$0xff]
  %v23 = vld [vmem:[%s0 + $0x48] sm:$0xff]
  %v24 = vld [vmem:[%s0 + $0x50] sm:$0xff]
  %v25 = vld [vmem:[%s0 + $0x58] sm:$0xff]
  %v26 = vld [vmem:[%s0 + $0x60] sm:$0xff]
  %v27 = vld [vmem:[%s0 + $0x68] sm:$0xff]
  %v28 = vld [vmem:[%s0 + $0x70] sm:$0xff]
  %v29 = vld [vmem:[%s0 + $0x78] sm:$0xff]
  %v30 = vld [vmem:[%s0 + $0x80] sm:$0xff]
  %v31 = vld [vmem:[%s0 + $0x88] sm:$0xff]
  %v32 = vld [vmem:[%s0 + $0x90] sm:$0xff]
  %v33 = vld [vmem:[%s0 + $0x98] sm:$0xff]
  %v34 = vld [vmem:[%s0 + $0xa0] sm:$0xff]
  %v35 = vld [vmem:[%s0 + $0xa8] sm:$0xff]
  %v36 = vld [vmem:[%s0 + $0xb0] sm:$0xff]
  %v37 = vld [vmem:[%s0 + $0xb8] sm:$0xff]
  %v38 = vld [vmem:[%s0 + $0xc0] sm:$0xff]
  %v39 = vld [vmem:[%s0 + $0xc8] sm:$0xff]
  %v40 = vld [vmem:[%s0 + $0xd0] sm:$0xff]
  %v41 = vld [vmem:[%s0 + $0xd8] sm:$0xff]
  %v42 = vld [vmem:[%s0 + $0xe0] sm:$0xff]
  %v43 = vld [vmem:[%s0 + $0xe8] sm:$0xff]
  %v44 = vld [vmem:[%s0 + $0xf0] sm:$0xff]
  %v45 = vld [vmem:[%s0 + $0xf8] sm:$0xff]
  %v46 = vld [vmem:[%s0 + $0x100] sm:$0xff]
  %v47 = vld [vmem:[%s0 + $0x108] sm:$0xff]
  %v48 = vld [vmem:[%s0 + $0x110] sm:$0xff]
  %v49 = vld [vmem:[%s0 + $0x118] sm:$0xff]
  %v50 = vld [vmem:[%s0 + $0x120] sm:$0xff]
  %v51 = vld [vmem:[%s0 + $0x128] sm:$0xff]
  %v52 = vld [vmem:[%s0 + $0x130] sm:$0xff]
  %v53 = vld [vmem:[%s0 + $0x138] sm:$0xff]
  %v54 = vld [vmem:[%s0 + $0x140] sm:$0xff]
  %v55 = vld [vmem:[%s0 + $0x148] sm:$0xff]
  %v56 = vld [vmem:[%s0 + $0x150] sm:$0xff]
  %v57 = vld [vmem:[%s0 + $0x158] sm:$0xff]
  %v58 = vld [vmem:[%s0 + $0x160] sm:$0xff]
  %v59 = vld [vmem:[%s0 + $0x168] sm:$0xff]
  %v60 = vld [vmem:[%s0 + $0x170] sm:$0xff]
  %v61 = vld [vmem:[%s0 + $0x178] sm:$0xff]
  %v62 = vld [vmem:[%s0 + $0x180] sm:$0xff]
  %v63 = vld [vmem:[%s0 + $0x188] sm:$0xff]
  %v64 = vld [vmem:[%s0 + $0x190] sm:$0xff]
  %v65 = vld [vmem:[%s0 + $0x198] sm:$0xff]
  %v66 = vld [vmem:[%s0 + $0x1a0] sm:$0xff]
  %v67 = vld [vmem:[%s0 + $0x1a8] sm:$0xff]
  %v68 = vld [vmem:[%s0 + $0x1b0] sm:$0xff]
  %v69 = vld [vmem:[%s0 + $0x1b8] sm:$0xff]
  %v70 = vld [vmem:[%s0 + $0x1c0] sm:$0xff]
  %v71 = vld [vmem:[%s0 + $0x1c8] sm:$0xff]
  %v72 = vld [vmem:[%s0 + $0x1d0] sm:$0xff]
  %v73 = vld [vmem:[%s0 + $0x1d8] sm:$0xff]
  %v74 = vld [vmem:[%s0 + $0x1e0] sm:$0xff]
  %v75 = vld [vmem:[%s0 + $0x1e8] sm:$0xff]
  %v76 = vld [vmem:[%s0 + $0x1f0] sm:$0xff]
  %v77 = vld [vmem:[%s0 + $0x1f8] sm:$0xff]
  %v78 = vld [vmem:[%s0 + $0x200] sm:$0xff]
  %v79 = vld [vmem:[%s1] sm:$0xff]
  %v80 = vld [vmem:[%s1 + $0x8] sm:$0xff]
  %v81 = vld [vmem:[%s1 + $0x10] sm:$0xff]
  %v82 = vld [vmem:[%s1 + $0x18] sm:$0xff]
  %v83 = vld [vmem:[%s1 + $0x20] sm:$0xff]
  %v84 = vld [vmem:[%s1 + $0x28] sm:$0xff]
  %v85 = vld [vmem:[%s1 + $0x30] sm:$0xff]
  %v86 = vld [vmem:[%s1 + $0x38] sm:$0xff]
  %v87 = vld [vmem:[%s1 + $0x40] sm:$0xff]
  %v88 = vld [vmem:[%s1 + $0x48] sm:$0xff]
  %v89 = vld [vmem:[%s1 + $0x50] sm:$0xff]
  %v90 = vld [vmem:[%s1 + $0x58] sm:$0xff]
  %v91 = vld [vmem:[%s1 + $0x60] sm:$0xff]
  %v92 = vld [vmem:[%s1 + $0x68] sm:$0xff]
  %v93 = vld [vmem:[%s1 + $0x70] sm:$0xff]
  %v94 = vld [vmem:[%s1 + $0x78] sm:$0xff]
  %v95 = vld [vmem:[%s1 + $0x80] sm:$0xff]
  %v96 = vld [vmem:[%s1 + $0x88] sm:$0xff]
  %v97 = vld [vmem:[%s1 + $0x90] sm:$0xff]
  %v98 = vld [vmem:[%s1 + $0x98] sm:$0xff]
  %v99 = vld [vmem:[%s1 + $0xa0] sm:$0xff]
  %v100 = vld [vmem:[%s1 + $0xa8] sm:$0xff]
  %v101 = vld [vmem:[%s1 + $0xb0] sm:$0xff]
  %v102 = vld [vmem:[%s1 + $0xb8] sm:$0xff]
  %v103 = vld [vmem:[%s1 + $0xc0] sm:$0xff]
  %v104 = vld [vmem:[%s1 + $0xc8] sm:$0xff]
  %v105 = vld [vmem:[%s1 + $0xd0] sm:$0xff]
  %v106 = vld [vmem:[%s1 + $0xd8] sm:$0xff]
  %v107 = vld [vmem:[%s1 + $0xe0] sm:$0xff]
  %v108 = vld [vmem:[%s1 + $0xe8] sm:$0xff]
  %v109 = vld [vmem:[%s1 + $0xf0] sm:$0xff]
  %v110 = vld [vmem:[%s1 + $0xf8] sm:$0xff]
  %v111 = vld [vmem:[%s1 + $0x100] sm:$0xff]
  %v112 = vld [vmem:[%s1 + $0x108] sm:$0xff]
  %v113 = vld [vmem:[%s1 + $0x110] sm:$0xff]
  %v114 = vld [vmem:[%s1 + $0x118] sm:$0xff]
  %v115 = vld [vmem:[%s1 + $0x120] sm:$0xff]
  %v116 = vld [vmem:[%s1 + $0x128] sm:$0xff]
  %v117 = vld [vmem:[%s1 + $0x130] sm:$0xff]
  %v118 = vld [vmem:[%s1 + $0x138] sm:$0xff]
  %v119 = vld [vmem:[%s1 + $0x140] sm:$0xff]
  %v120 = vld [vmem:[%s1 + $0x148] sm:$0xff]
  %v121 = vld [vmem:[%s1 + $0x150] sm:$0xff]
  %v122 = vld [vmem:[%s1 + $0x158] sm:$0xff]
  %v123 = vld [vmem:[%s1 + $0x160] sm:$0xff]
  %v124 = vld [vmem:[%s1 + $0x168] sm:$0xff]
  %v125 = vld [vmem:[%s1 + $0x170] sm:$0xff]
  %v126 = vld [vmem:[%s1 + $0x178] sm:$0xff]
  %v127 = vld [vmem:[%s1 + $0x180] sm:$0xff]
  %v128 = vld [vmem:[%s1 + $0x188] sm:$0xff]
  %v129 = vld [vmem:[%s1 + $0x190] sm:$0xff]
  %v130 = vld [vmem:[%s1 + $0x198] sm:$0xff]
  %v131 = vld [vmem:[%s1 + $0x1a0] sm:$0xff]
  %v132 = vld [vmem:[%s1 + $0x1a8] sm:$0xff]
  %v133 = vld [vmem:[%s1 + $0x1b0] sm:$0xff]
  %v134 = vld [vmem:[%s1 + $0x1b8] sm:$0xff]
  %v135 = vld [vmem:[%s1 + $0x1c0] sm:$0xff]
  %v136 = vld [vmem:[%s1 + $0x1c8] sm:$0xff]
  %v137 = vld [vmem:[%s1 + $0x1d0] sm:$0xff]
  %v138 = vld [vmem:[%s1 + $0x1d8] sm:$0xff]
  %v139 = vld [vmem:[%s1 + $0x1e0] sm:$0xff]
  %v140 = vld [vmem:[%s1 + $0x1e8] sm:$0xff]
  %v141 = vld [vmem:[%s1 + $0x1f0] sm:$0xff]
  %v142 = vld [vmem:[%s1 + $0x1f8] sm:$0xff]
  %v143 = vld [vmem:[%s1 + $0x200] sm:$0xff]
  %v144 = vld [vmem:[%s1 + $0x208] sm:$0xff]
  %v145 = vld [vmem:[%s1 + $0x210] sm:$0xff]
  %v146 = vld [vmem:[%s1 + $0x218] sm:$0xff]
  %v147 = vld [vmem:[%s1 + $0x220] sm:$0xff]
  %v148 = vld [vmem:[%s1 + $0x228] sm:$0xff]
  %v149 = vld [vmem:[%s1 + $0x230] sm:$0xff]
  %v150 = vld [vmem:[%s1 + $0x238] sm:$0xff]
  %v151 = vld [vmem:[%s2] sm:$0x1]
  %v153 = vlaneseq
  %v154 = vshrl.u32 %v153, 7
  %v155 = vsub.s32 0, %v154
  %v156 = vrot.slane %v151, %v155
  %vm158 = vcmask 523264
  %v160 = vsel %vm158, %v18, 0
  %v163 = vsel %vm158, %v23, 0
  %v166 = vsel %vm158, %v28, 0
  %v169 = vsel %vm158, %v33, 0
  %v172 = vsel %vm158, %v38, 0
  %v175 = vsel %vm158, %v43, 0
  %v178 = vsel %vm158, %v48, 0
  %v181 = vsel %vm158, %v53, 0
  %v184 = vsel %vm158, %v58, 0
  %v187 = vsel %vm158, %v63, 0
  %v190 = vsel %vm158, %v68, 0
  %v193 = vsel %vm158, %v73, 0
  %v196 = vsel %vm158, %v78, 0
  %198 = vmatprep.subr.mxu0 0.0
  %199 = vmatpush1.msra.mxu0 %v79
  %200 = vmatprep.subr.mxu0 0.0
  %201 = vmatpush1.msra.mxu0 %v80
  %202 = vmatprep.subr.mxu0 0.0
  %203 = vmatpush1.msra.mxu0 %v81
  %204 = vmatprep.subr.mxu0 0.0
  %205 = vmatpush1.msra.mxu0 %v82
  %206 = vmatprep.subr.mxu0 0.0
  %207 = vmatpush1.msra.mxu0 %v83
  %208 = vmatprep.subr.mxu0 0.0
  %209 = vmatpush1.msra.mxu0 %v84
  %210 = vmatprep.subr.mxu0 0.0
  %211 = vmatpush1.msra.mxu0 %v85
  %212 = vmatprep.subr.mxu0 0.0
  %213 = vmatpush1.msra.mxu0 %v86
  %214 = vmatprep.subr.mxu0 0.0
  %215 = vmatpush1.msra.mxu0 %v87
  %216 = vmatprep.subr.mxu0 0.0
  %217 = vmatpush1.msra.mxu0 %v88
  %218 = vmatprep.subr.mxu0 0.0
  %219 = vmatpush1.msra.mxu0 %v89
  %220 = vmatprep.subr.mxu0 0.0
  %221 = vmatpush1.msra.mxu0 %v90
  %222 = vmatprep.subr.mxu0 0.0
  %223 = vmatpush1.msra.mxu0 %v91
  %224 = vmatprep.subr.mxu0 0.0
  %225 = vmatpush1.msra.mxu0 %v92
  %226 = vmatprep.subr.mxu0 0.0
  %227 = vmatpush1.msra.mxu0 %v93
  %228 = vmatprep.subr.mxu0 0.0
  %229 = vmatpush1.msra.mxu0 %v94
  %230 = vmatprep.subr.mxu0 0.0
  %231 = vmatpush1.msra.mxu0 %v95
  %232 = vmatprep.subr.mxu0 0.0
  %233 = vmatpush1.msra.mxu0 %v96
  %234 = vmatprep.subr.mxu0 0.0
  %235 = vmatpush1.msra.mxu0 %v97
  %236 = vmatprep.subr.mxu0 0.0
  %237 = vmatpush1.msra.mxu0 %v98
  %238 = vmatprep.subr.mxu0 0.0
  %239 = vmatpush1.msra.mxu0 %v99
  %240 = vmatprep.subr.mxu0 0.0
  %241 = vmatpush1.msra.mxu0 %v100
  %242 = vmatprep.subr.mxu0 0.0
  %243 = vmatpush1.msra.mxu0 %v101
  %244 = vmatprep.subr.mxu0 0.0
  %245 = vmatpush1.msra.mxu0 %v102
  %246 = vmatprep.subr.mxu0 0.0
  %247 = vmatpush1.msra.mxu0 %v103
  %248 = vmatprep.subr.mxu0 0.0
  %249 = vmatpush1.msra.mxu0 %v104
  %250 = vmatprep.subr.mxu0 0.0
  %251 = vmatpush1.msra.mxu0 %v105
  %252 = vmatprep.subr.mxu0 0.0
  %253 = vmatpush1.msra.mxu0 %v106
  %254 = vmatprep.subr.mxu0 0.0
  %255 = vmatpush1.msra.mxu0 %v107
  %256 = vmatprep.subr.mxu0 0.0
  %257 = vmatpush1.msra.mxu0 %v108
  %258 = vmatprep.subr.mxu0 0.0
  %259 = vmatpush1.msra.mxu0 %v109
  %260 = vmatprep.subr.mxu0 0.0
  %261 = vmatpush1.msra.mxu0 %v110
  %262 = vmatprep.mubr.f32.mxu0 %v15
  %263 = vmatmul.mubr.f32.gmra.mrb[0].mxu0 %v14
  %v264 = vpop.f32.mrb[0].mxu0
  %v265 = vadd.f32 %v156, %v264
  %v266 = vpop.f32.mrb[0].mxu0
  %267 = vmatprep.mubr.f32.mxu0 %v20
  %268 = vmatmul.mubr.f32.gmra.mrb[0].mxu0 %v19
  %v269 = vpop.f32.mrb[0].mxu0
  %v270 = vadd.f32 %v156, %v269
  %v271 = vpop.f32.mrb[0].mxu0
  %272 = vmatprep.mubr.f32.mxu0 %v25
  %273 = vmatmul.mubr.f32.gmra.mrb[0].mxu0 %v24
  %v274 = vpop.f32.mrb[0].mxu0
  %v275 = vadd.f32 %v156, %v274
  %v276 = vpop.f32.mrb[0].mxu0
  %277 = vmatprep.mubr.f32.mxu0 %v30
  %278 = vmatmul.mubr.f32.gmra.mrb[0].mxu0 %v29
  %v279 = vpop.f32.mrb[0].mxu0
  %v280 = vadd.f32 %v156, %v279
  %v281 = vpop.f32.mrb[0].mxu0
  %282 = vmatprep.mubr.f32.mxu0 %v35
  %283 = vmatmul.mubr.f32.gmra.mrb[0].mxu0 %v34
  %v284 = vpop.f32.mrb[0].mxu0
  %v285 = vadd.f32 %v156, %v284
  %v286 = vpop.f32.mrb[0].mxu0
  %287 = vmatprep.mubr.f32.mxu0 %v40
  %288 = vmatmul.mubr.f32.gmra.mrb[0].mxu0 %v39
  %v289 = vpop.f32.mrb[0].mxu0
  %v290 = vadd.f32 %v156, %v289
  %v291 = vpop.f32.mrb[0].mxu0
  %292 = vmatprep.mubr.f32.mxu0 %v45
  %293 = vmatmul.mubr.f32.gmra.mrb[0].mxu0 %v44
  %v294 = vpop.f32.mrb[0].mxu0
  %v295 = vadd.f32 %v156, %v294
  %v296 = vpop.f32.mrb[0].mxu0
  %297 = vmatprep.mubr.f32.mxu0 %v50
  %298 = vmatmul.mubr.f32.gmra.mrb[0].mxu0 %v49
  %v299 = vpop.f32.mrb[0].mxu0
  %v300 = vadd.f32 %v156, %v299
  %v301 = vpop.f32.mrb[0].mxu0
  %302 = vmatprep.mubr.f32.mxu0 %v55
  %303 = vmatmul.mubr.f32.gmra.mrb[0].mxu0 %v54
  %v304 = vpop.f32.mrb[0].mxu0
  %v305 = vadd.f32 %v156, %v304
  %v306 = vpop.f32.mrb[0].mxu0
  %307 = vmatprep.mubr.f32.mxu0 %v60
  %308 = vmatmul.mubr.f32.gmra.mrb[0].mxu0 %v59
  %v309 = vpop.f32.mrb[0].mxu0
  %v310 = vadd.f32 %v156, %v309
  %v311 = vpop.f32.mrb[0].mxu0
  %312 = vmatprep.mubr.f32.mxu0 %v65
  %313 = vmatmul.mubr.f32.gmra.mrb[0].mxu0 %v64
  %v314 = vpop.f32.mrb[0].mxu0
  %v315 = vadd.f32 %v156, %v314
  %v316 = vpop.f32.mrb[0].mxu0
  %317 = vmatprep.mubr.f32.mxu0 %v70
  %318 = vmatmul.mubr.f32.gmra.mrb[0].mxu0 %v69
  %v319 = vpop.f32.mrb[0].mxu0
  %v320 = vadd.f32 %v156, %v319
  %v321 = vpop.f32.mrb[0].mxu0
  %322 = vmatprep.mubr.f32.mxu0 %v75
  %323 = vmatmul.mubr.f32.gmra.mrb[0].mxu0 %v74
  %v324 = vpop.f32.mrb[0].mxu0
  %v325 = vadd.f32 %v156, %v324
  %v326 = vpop.f32.mrb[0].mxu0
  %327 = vdwg.mxu0
  %328 = vmatprep.subr.mxu0 0.0
  %329 = vmatpush1.msra.mxu0 %v111
  %330 = vmatprep.subr.mxu0 0.0
  %331 = vmatpush1.msra.mxu0 %v112
  %332 = vmatprep.subr.mxu0 0.0
  %333 = vmatpush1.msra.mxu0 %v113
  %334 = vmatprep.subr.mxu0 0.0
  %335 = vmatpush1.msra.mxu0 %v114
  %336 = vmatprep.subr.mxu0 0.0
  %337 = vmatpush1.msra.mxu0 %v115
  %338 = vmatprep.subr.mxu0 0.0
  %339 = vmatpush1.msra.mxu0 %v116
  %340 = vmatprep.subr.mxu0 0.0
  %341 = vmatpush1.msra.mxu0 %v117
  %342 = vmatprep.subr.mxu0 0.0
  %343 = vmatpush1.msra.mxu0 %v118
  %344 = vmatprep.subr.mxu0 0.0
  %345 = vmatpush1.msra.mxu0 %v119
  %346 = vmatprep.subr.mxu0 0.0
  %347 = vmatpush1.msra.mxu0 %v120
  %348 = vmatprep.subr.mxu0 0.0
  %349 = vmatpush1.msra.mxu0 %v121
  %350 = vmatprep.subr.mxu0 0.0
  %351 = vmatpush1.msra.mxu0 %v122
  %352 = vmatprep.subr.mxu0 0.0
  %353 = vmatpush1.msra.mxu0 %v123
  %354 = vmatprep.subr.mxu0 0.0
  %355 = vmatpush1.msra.mxu0 %v124
  %356 = vmatprep.subr.mxu0 0.0
  %357 = vmatpush1.msra.mxu0 %v125
  %358 = vmatprep.subr.mxu0 0.0
  %359 = vmatpush1.msra.mxu0 %v126
  %360 = vmatprep.subr.mxu0 0.0
  %361 = vmatpush1.msra.mxu0 %v127
  %362 = vmatprep.subr.mxu0 0.0
  %363 = vmatpush1.msra.mxu0 %v128
  %364 = vmatprep.subr.mxu0 0.0
  %365 = vmatpush1.msra.mxu0 %v129
  %366 = vmatprep.subr.mxu0 0.0
  %367 = vmatpush1.msra.mxu0 %v130
  %368 = vmatprep.subr.mxu0 0.0
  %369 = vmatpush1.msra.mxu0 %v131
  %370 = vmatprep.subr.mxu0 0.0
  %371 = vmatpush1.msra.mxu0 %v132
  %372 = vmatprep.subr.mxu0 0.0
  %373 = vmatpush1.msra.mxu0 %v133
  %374 = vmatprep.subr.mxu0 0.0
  %375 = vmatpush1.msra.mxu0 %v134
  %376 = vmatprep.subr.mxu0 0.0
  %377 = vmatpush1.msra.mxu0 %v135
  %378 = vmatprep.subr.mxu0 0.0
  %379 = vmatpush1.msra.mxu0 %v136
  %380 = vmatprep.subr.mxu0 0.0
  %381 = vmatpush1.msra.mxu0 %v137
  %382 = vmatprep.subr.mxu0 0.0
  %383 = vmatpush1.msra.mxu0 %v138
  %384 = vmatprep.subr.mxu0 0.0
  %385 = vmatpush1.msra.mxu0 %v139
  %386 = vmatprep.subr.mxu0 0.0
  %387 = vmatpush1.msra.mxu0 %v140
  %388 = vmatprep.subr.mxu0 0.0
  %389 = vmatpush1.msra.mxu0 %v141
  %390 = vmatprep.subr.mxu0 0.0
  %391 = vmatpush1.msra.mxu0 %v142
  %392 = vmatprep.mubr.f32.mxu0 %v17
  %393 = vmatmul.mubr.f32.gmra.mrb[0].mxu0 %v16
  %v394 = vpop.f32.mrb[0].mxu0
  %v395 = vadd.f32 %v265, %v394
  %v396 = vpop.f32.mrb[0].mxu0
  %397 = vmatprep.mubr.f32.mxu0 %v22
  %398 = vmatmul.mubr.f32.gmra.mrb[0].mxu0 %v21
  %v399 = vpop.f32.mrb[0].mxu0
  %v400 = vadd.f32 %v270, %v399
  %v401 = vpop.f32.mrb[0].mxu0
  %402 = vmatprep.mubr.f32.mxu0 %v27
  %403 = vmatmul.mubr.f32.gmra.mrb[0].mxu0 %v26
  %v404 = vpop.f32.mrb[0].mxu0
  %v405 = vadd.f32 %v275, %v404
  %v406 = vpop.f32.mrb[0].mxu0
  %407 = vmatprep.mubr.f32.mxu0 %v32
  %408 = vmatmul.mubr.f32.gmra.mrb[0].mxu0 %v31
  %v409 = vpop.f32.mrb[0].mxu0
  %v410 = vadd.f32 %v280, %v409
  %v411 = vpop.f32.mrb[0].mxu0
  %412 = vmatprep.mubr.f32.mxu0 %v37
  %413 = vmatmul.mubr.f32.gmra.mrb[0].mxu0 %v36
  %v414 = vpop.f32.mrb[0].mxu0
  %v415 = vadd.f32 %v285, %v414
  %v416 = vpop.f32.mrb[0].mxu0
  %417 = vmatprep.mubr.f32.mxu0 %v42
  %418 = vmatmul.mubr.f32.gmra.mrb[0].mxu0 %v41
  %v419 = vpop.f32.mrb[0].mxu0
  %v420 = vadd.f32 %v290, %v419
  %v421 = vpop.f32.mrb[0].mxu0
  %422 = vmatprep.mubr.f32.mxu0 %v47
  %423 = vmatmul.mubr.f32.gmra.mrb[0].mxu0 %v46
  %v424 = vpop.f32.mrb[0].mxu0
  %v425 = vadd.f32 %v295, %v424
  %v426 = vpop.f32.mrb[0].mxu0
  %427 = vmatprep.mubr.f32.mxu0 %v52
  %428 = vmatmul.mubr.f32.gmra.mrb[0].mxu0 %v51
  %v429 = vpop.f32.mrb[0].mxu0
  %v430 = vadd.f32 %v300, %v429
  %v431 = vpop.f32.mrb[0].mxu0
  %432 = vmatprep.mubr.f32.mxu0 %v57
  %433 = vmatmul.mubr.f32.gmra.mrb[0].mxu0 %v56
  %v434 = vpop.f32.mrb[0].mxu0
  %v435 = vadd.f32 %v305, %v434
  %v436 = vpop.f32.mrb[0].mxu0
  %437 = vmatprep.mubr.f32.mxu0 %v62
  %438 = vmatmul.mubr.f32.gmra.mrb[0].mxu0 %v61
  %v439 = vpop.f32.mrb[0].mxu0
  %v440 = vadd.f32 %v310, %v439
  %v441 = vpop.f32.mrb[0].mxu0
  %442 = vmatprep.mubr.f32.mxu0 %v67
  %443 = vmatmul.mubr.f32.gmra.mrb[0].mxu0 %v66
  %v444 = vpop.f32.mrb[0].mxu0
  %v445 = vadd.f32 %v315, %v444
  %v446 = vpop.f32.mrb[0].mxu0
  %447 = vmatprep.mubr.f32.mxu0 %v72
  %448 = vmatmul.mubr.f32.gmra.mrb[0].mxu0 %v71
  %v449 = vpop.f32.mrb[0].mxu0
  %v450 = vadd.f32 %v320, %v449
  %v451 = vpop.f32.mrb[0].mxu0
  %452 = vmatprep.mubr.f32.mxu0 %v77
  %453 = vmatmul.mubr.f32.gmra.mrb[0].mxu0 %v76
  %v454 = vpop.f32.mrb[0].mxu0
  %v455 = vadd.f32 %v325, %v454
  %v456 = vpop.f32.mrb[0].mxu0
  %457 = vdwg.mxu0
  %458 = vmatprep.subr.mxu0 0.0
  %459 = vmatpush1.msra.mxu0 %v143
  %460 = vmatprep.subr.mxu0 0.0
  %461 = vmatpush1.msra.mxu0 %v144
  %462 = vmatprep.subr.mxu0 0.0
  %463 = vmatpush1.msra.mxu0 %v145
  %464 = vmatprep.subr.mxu0 0.0
  %465 = vmatpush1.msra.mxu0 %v146
  %466 = vmatprep.subr.mxu0 0.0
  %467 = vmatpush1.msra.mxu0 %v147
  %468 = vmatprep.subr.mxu0 0.0
  %469 = vmatpush1.msra.mxu0 %v148
  %470 = vmatprep.subr.mxu0 0.0
  %471 = vmatpush1.msra.mxu0 %v149
  %472 = vmatprep.subr.mxu0 0.0
  %473 = vmatpush1.msra.mxu0 %v150
  %474 = vmatprep.subr.mxu0 0.0
  %475 = vmatpush1.msra.mxu0 0.0
  %476 = vmatprep.subr.mxu0 0.0
  %477 = vmatpush1.msra.mxu0 0.0
  %478 = vmatprep.subr.mxu0 0.0
  %479 = vmatpush1.msra.mxu0 0.0
  %480 = vmatprep.subr.mxu0 0.0
  %481 = vmatpush1.msra.mxu0 0.0
  %482 = vmatprep.subr.mxu0 0.0
  %483 = vmatpush1.msra.mxu0 0.0
  %484 = vmatprep.subr.mxu0 0.0
  %485 = vmatpush1.msra.mxu0 0.0
  %486 = vmatprep.subr.mxu0 0.0
  %487 = vmatpush1.msra.mxu0 0.0
  %488 = vmatprep.subr.mxu0 0.0
  %489 = vmatpush1.msra.mxu0 0.0
  %490 = vmatprep.subr.mxu0 0.0
  %491 = vmatpush1.msra.mxu0 0.0
  %492 = vmatprep.subr.mxu0 0.0
  %493 = vmatpush1.msra.mxu0 0.0
  %494 = vmatprep.subr.mxu0 0.0
  %495 = vmatpush1.msra.mxu0 0.0
  %496 = vmatprep.subr.mxu0 0.0
  %497 = vmatpush1.msra.mxu0 0.0
  %498 = vmatprep.subr.mxu0 0.0
  %499 = vmatpush1.msra.mxu0 0.0
  %500 = vmatprep.subr.mxu0 0.0
  %501 = vmatpush1.msra.mxu0 0.0
  %502 = vmatprep.subr.mxu0 0.0
  %503 = vmatpush1.msra.mxu0 0.0
  %504 = vmatprep.subr.mxu0 0.0
  %505 = vmatpush1.msra.mxu0 0.0
  %506 = vmatprep.subr.mxu0 0.0
  %507 = vmatpush1.msra.mxu0 0.0
  %508 = vmatprep.subr.mxu0 0.0
  %509 = vmatpush1.msra.mxu0 0.0
  %510 = vmatprep.subr.mxu0 0.0
  %511 = vmatpush1.msra.mxu0 0.0
  %512 = vmatprep.subr.mxu0 0.0
  %513 = vmatpush1.msra.mxu0 0.0
  %514 = vmatprep.subr.mxu0 0.0
  %515 = vmatpush1.msra.mxu0 0.0
  %516 = vmatprep.subr.mxu0 0.0
  %517 = vmatpush1.msra.mxu0 0.0
  %518 = vmatprep.subr.mxu0 0.0
  %519 = vmatpush1.msra.mxu0 0.0
  %520 = vmatprep.subr.mxu0 0.0
  %521 = vmatpush1.msra.mxu0 0.0
  %522 = vmatprep.mubr.f32.mxu0 0.0
  %523 = vmatmul.mubr.f32.gmra.mrb[0].mxu0 %v160
  %v524 = vpop.f32.mrb[0].mxu0
  %v525 = vadd.f32 %v395, %v524
  %v526 = vpop.f32.mrb[0].mxu0
  %527 = vmatprep.mubr.f32.mxu0 0.0
  %528 = vmatmul.mubr.f32.gmra.mrb[0].mxu0 %v163
  %v529 = vpop.f32.mrb[0].mxu0
  %v530 = vadd.f32 %v400, %v529
  %v531 = vpop.f32.mrb[0].mxu0
  %532 = vmatprep.mubr.f32.mxu0 0.0
  %533 = vmatmul.mubr.f32.gmra.mrb[0].mxu0 %v166
  %v534 = vpop.f32.mrb[0].mxu0
  %v535 = vadd.f32 %v405, %v534
  %v536 = vpop.f32.mrb[0].mxu0
  %537 = vmatprep.mubr.f32.mxu0 0.0
  %538 = vmatmul.mubr.f32.gmra.mrb[0].mxu0 %v169
  %v539 = vpop.f32.mrb[0].mxu0
  %v540 = vadd.f32 %v410, %v539
  %v541 = vpop.f32.mrb[0].mxu0
  %542 = vmatprep.mubr.f32.mxu0 0.0
  %543 = vmatmul.mubr.f32.gmra.mrb[0].mxu0 %v172
  %v544 = vpop.f32.mrb[0].mxu0
  %v545 = vadd.f32 %v415, %v544
  %v546 = vpop.f32.mrb[0].mxu0
  %547 = vmatprep.mubr.f32.mxu0 0.0
  %548 = vmatmul.mubr.f32.gmra.mrb[0].mxu0 %v175
  %v549 = vpop.f32.mrb[0].mxu0
  %v550 = vadd.f32 %v420, %v549
  %v551 = vpop.f32.mrb[0].mxu0
  %552 = vmatprep.mubr.f32.mxu0 0.0
  %553 = vmatmul.mubr.f32.gmra.mrb[0].mxu0 %v178
  %v554 = vpop.f32.mrb[0].mxu0
  %v555 = vadd.f32 %v425, %v554
  %v556 = vpop.f32.mrb[0].mxu0
  %557 = vmatprep.mubr.f32.mxu0 0.0
  %558 = vmatmul.mubr.f32.gmra.mrb[0].mxu0 %v181
  %v559 = vpop.f32.mrb[0].mxu0
  %v560 = vadd.f32 %v430, %v559
  %v561 = vpop.f32.mrb[0].mxu0
  %562 = vmatprep.mubr.f32.mxu0 0.0
  %563 = vmatmul.mubr.f32.gmra.mrb[0].mxu0 %v184
  %v564 = vpop.f32.mrb[0].mxu0
  %v565 = vadd.f32 %v435, %v564
  %v566 = vpop.f32.mrb[0].mxu0
  %567 = vmatprep.mubr.f32.mxu0 0.0
  %568 = vmatmul.mubr.f32.gmra.mrb[0].mxu0 %v187
  %v569 = vpop.f32.mrb[0].mxu0
  %v570 = vadd.f32 %v440, %v569
  %v571 = vpop.f32.mrb[0].mxu0
  %572 = vmatprep.mubr.f32.mxu0 0.0
  %573 = vmatmul.mubr.f32.gmra.mrb[0].mxu0 %v190
  %v574 = vpop.f32.mrb[0].mxu0
  %v575 = vadd.f32 %v445, %v574
  %v576 = vpop.f32.mrb[0].mxu0
  %577 = vmatprep.mubr.f32.mxu0 0.0
  %578 = vmatmul.mubr.f32.gmra.mrb[0].mxu0 %v193
  %v579 = vpop.f32.mrb[0].mxu0
  %v580 = vadd.f32 %v450, %v579
  %v581 = vpop.f32.mrb[0].mxu0
  %582 = vmatprep.mubr.f32.mxu0 0.0
  %583 = vmatmul.mubr.f32.gmra.mrb[0].mxu0 %v196
  %v584 = vpop.f32.mrb[0].mxu0
  %v585 = vadd.f32 %v455, %v584
  %v586 = vpop.f32.mrb[0].mxu0
  %587 = vdwg.mxu0
  %v588 = vmax.f32 %v525, 0.0
  %v589 = vmax.f32 %v530, 0.0
  %v590 = vmax.f32 %v535, 0.0
  %v591 = vmax.f32 %v540, 0.0
  %v592 = vmax.f32 %v545, 0.0
  %v593 = vmax.f32 %v550, 0.0
  %v594 = vmax.f32 %v555, 0.0
  %v595 = vmax.f32 %v560, 0.0
  %v596 = vmax.f32 %v565, 0.0
  %v597 = vmax.f32 %v570, 0.0
  %v598 = vmax.f32 %v575, 0.0
  %v599 = vmax.f32 %v580, 0.0
  %v600 = vmax.f32 %v585, 0.0
  %601 = vst.msk [vmem:[%s3] sm:$0xff] %vm158, %v588
  %602 = vst.msk [vmem:[%s3 + $0x8] sm:$0xff] %vm158, %v589
  %603 = vst.msk [vmem:[%s3 + $0x10] sm:$0xff] %vm158, %v590
  %604 = vst.msk [vmem:[%s3 + $0x18] sm:$0xff] %vm158, %v591
  %605 = vst.msk [vmem:[%s3 + $0x20] sm:$0xff] %vm158, %v592
  %606 = vst.msk [vmem:[%s3 + $0x28] sm:$0xff] %vm158, %v593
  %607 = vst.msk [vmem:[%s3 + $0x30] sm:$0xff] %vm158, %v594
  %608 = vst.msk [vmem:[%s3 + $0x38] sm:$0xff] %vm158, %v595
  %609 = vst.msk [vmem:[%s3 + $0x40] sm:$0xff] %vm158, %v596
  %610 = vst.msk [vmem:[%s3 + $0x48] sm:$0xff] %vm158, %v597
  %611 = vst.msk [vmem:[%s3 + $0x50] sm:$0xff] %vm158, %v598
  %612 = vst.msk [vmem:[%s3 + $0x58] sm:$0xff] %vm158, %v599
  %613 = vst.msk [vmem:[%s3 + $0x60] sm:$0xff] %vm158, %v600
  // Predicated region
  $region14: #{d2qn_forward.6} parent=0 // pred_check
    _
  $region15: #{d2qn_forward.6} parent=0 // pred_check_branch
    %615 = sbr.rel (0) target = $region17
  $region16: #{d2qn_forward.6} parent=0 // pred_region
    _
  $region17: #{d2qn_forward.6} parent=0 // pred_fallthru
    _
  // Predicated region
  $region18: #{d2qn_forward.6} parent=0 // pred_check
    _
  $region19: #{d2qn_forward.6} parent=0 // pred_check_branch
    %617 = sbr.rel (0) target = $region21
  $region20: #{d2qn_forward.6} parent=0 // pred_region
    _
  $region21: #{d2qn_forward.6} parent=0 // pred_fallthru
    _

// kernel: d2qn_forward.7
$region0: #{d2qn_forward.7}
  #allocation0 [shape = 'u32[]', space=smem, size = 0x4, offset = 0x4, fixed_abs, tag = 'smem constant byte address 0x4 - core index']
  #allocation1 [shape = 'u32[144,128]{1,0:T(1,128)}', space=vmem, size = 0x12000, scoped, tag = 'internal scratch']
  #allocation2 [shape = 'f32[1,1]{1,0:T(1,128)S(1)}', space=vmem, size = 0x200, scoped, tag = 'scoped memory for d2qn_forward.7']
  %s0 = inlined_call_operand.vmem [shape: f32[8,3136], index: 0, kind: input, shape index: {}]
  %s1 = inlined_call_operand.vmem [shape: f32[3136,1024], index: 1, kind: input, shape index: {}]
  %s2 = inlined_call_operand.vmem [shape: f32[1,1024], index: 2, kind: input, shape index: {}]
  %s3 = inlined_call_operand.vmem [shape: f32[512,128], index: 3, kind: input, shape index: {}]
  %s4 = inlined_call_operand.vmem [shape: f32[1,128], index: 4, kind: input, shape index: {}]
  %s5 = inlined_call_operand.vmem [shape: f32[512,1], index: 5, kind: input, shape index: {}]
  %s6 = inlined_call_operand.<no memory space> [shape: f32[1,1], index: 6, kind: input, shape index: {}]
  %s7 = inlined_call_operand.vmem [shape: f32[8,128], index: 7, kind: output, shape index: {}]
  %s8 = sld [smem:[#allocation0]]
  $region38: #{d2qn_forward.7} parent=0
    _
  %s10 = ssub.s32 1, %s8
  %s11 = scalar_select 0, %s10, %s8
  %v12 = vstv %s6
  %13 = vst [vmem:[#allocation2] sm:$0x1] %v12
  // Predicated region
  $region2: #{d2qn_forward.7} parent=0 // pred_check
    _
  $region3: #{d2qn_forward.7} parent=0 // pred_check_branch
    %15 = sbr.rel (0) target = $region5
  $region4: #{d2qn_forward.7} parent=0 // pred_region
    _
  $region5: #{d2qn_forward.7} parent=0 // pred_fallthru
    _
  // Predicated region
  $region6: #{d2qn_forward.7} parent=0 // pred_check
    _
  $region7: #{d2qn_forward.7} parent=0 // pred_check_branch
    %17 = sbr.rel (0) target = $region9
  $region8: #{d2qn_forward.7} parent=0 // pred_region
    _
  $region9: #{d2qn_forward.7} parent=0 // pred_fallthru
    _
  // Predicated region
  $region10: #{d2qn_forward.7} parent=0 // pred_check
    _
  $region11: #{d2qn_forward.7} parent=0 // pred_check_branch
    %19 = sbr.rel (0) target = $region13
  $region12: #{d2qn_forward.7} parent=0 // pred_region
    _
  $region13: #{d2qn_forward.7} parent=0 // pred_fallthru
    _
  // Predicated region
  $region14: #{d2qn_forward.7} parent=0 // pred_check
    _
  $region15: #{d2qn_forward.7} parent=0 // pred_check_branch
    %21 = sbr.rel (0) target = $region17
  $region16: #{d2qn_forward.7} parent=0 // pred_region
    _
  $region17: #{d2qn_forward.7} parent=0 // pred_fallthru
    _
  // Predicated region
  $region18: #{d2qn_forward.7} parent=0 // pred_check
    _
  $region19: #{d2qn_forward.7} parent=0 // pred_check_branch
    %23 = sbr.rel (0) target = $region21
  $region20: #{d2qn_forward.7} parent=0 // pred_region
    _
  $region21: #{d2qn_forward.7} parent=0 // pred_fallthru
    _
  // Predicated region
  $region22: #{d2qn_forward.7} parent=0 // pred_check
    _
  $region23: #{d2qn_forward.7} parent=0 // pred_check_branch
    %25 = sbr.rel (0) target = $region25
  $region24: #{d2qn_forward.7} parent=0 // pred_region
    _
  $region25: #{d2qn_forward.7} parent=0 // pred_fallthru
    _
  // Predicated region
  $region26: #{d2qn_forward.7} parent=0 // pred_check
    _
  $region27: #{d2qn_forward.7} parent=0 // pred_check_branch
    %27 = sbr.rel (0) target = $region29
  $region28: #{d2qn_forward.7} parent=0 // pred_region
    _
  $region29: #{d2qn_forward.7} parent=0 // pred_fallthru
    _
  %v28 = vld [vmem:[%s0] sm:$0xff]
  %v29 = vld [vmem:[%s0 + $0x8] sm:$0xff]
  %v30 = vld [vmem:[%s0 + $0x10] sm:$0xff]
  %v31 = vld [vmem:[%s0 + $0x18] sm:$0xff]
  %v32 = vld [vmem:[%s0 + $0x20] sm:$0xff]
  %v33 = vld [vmem:[%s0 + $0x28] sm:$0xff]
  %v34 = vld [vmem:[%s0 + $0x30] sm:$0xff]
  %v35 = vld [vmem:[%s0 + $0x38] sm:$0xff]
  %v36 = vld [vmem:[%s0 + $0x40] sm:$0xff]
  %v37 = vld [vmem:[%s0 + $0x48] sm:$0xff]
  %v38 = vld [vmem:[%s0 + $0x50] sm:$0xff]
  %v39 = vld [vmem:[%s0 + $0x58] sm:$0xff]
  %v40 = vld [vmem:[%s0 + $0x60] sm:$0xff]
  %v41 = vld [vmem:[%s0 + $0x68] sm:$0xff]
  %v42 = vld [vmem:[%s0 + $0x70] sm:$0xff]
  %v43 = vld [vmem:[%s0 + $0x78] sm:$0xff]
  %v44 = vld [vmem:[%s0 + $0x80] sm:$0xff]
  %v45 = vld [vmem:[%s0 + $0x88] sm:$0xff]
  %v46 = vld [vmem:[%s0 + $0x90] sm:$0xff]
  %v47 = vld [vmem:[%s0 + $0x98] sm:$0xff]
  %v48 = vld [vmem:[%s0 + $0xa0] sm:$0xff]
  %v49 = vld [vmem:[%s0 + $0xa8] sm:$0xff]
  %v50 = vld [vmem:[%s0 + $0xb0] sm:$0xff]
  %v51 = vld [vmem:[%s0 + $0xb8] sm:$0xff]
  %v52 = vld [vmem:[%s0 + $0xc0] sm:$0xff]
  %v53 = vld [vmem:[%s1] sm:$0xff]
  %v54 = vld [vmem:[%s1 + $0x8] sm:$0xff]
  %v55 = vld [vmem:[%s1 + $0x10] sm:$0xff]
  %v56 = vld [vmem:[%s1 + $0x18] sm:$0xff]
  %v57 = vld [vmem:[%s1 + $0x20] sm:$0xff]
  %v58 = vld [vmem:[%s1 + $0x28] sm:$0xff]
  %v59 = vld [vmem:[%s1 + $0x30] sm:$0xff]
  %v60 = vld [vmem:[%s1 + $0x38] sm:$0xff]
  %v61 = vld [vmem:[%s1 + $0x40] sm:$0xff]
  %v62 = vld [vmem:[%s1 + $0x48] sm:$0xff]
  %v63 = vld [vmem:[%s1 + $0x50] sm:$0xff]
  %v64 = vld [vmem:[%s1 + $0x58] sm:$0xff]
  %v65 = vld [vmem:[%s1 + $0x60] sm:$0xff]
  %v66 = vld [vmem:[%s1 + $0x68] sm:$0xff]
  %v67 = vld [vmem:[%s1 + $0x70] sm:$0xff]
  %v68 = vld [vmem:[%s1 + $0x78] sm:$0xff]
  %v69 = vld [vmem:[%s1 + $0x80] sm:$0xff]
  %v70 = vld [vmem:[%s1 + $0x88] sm:$0xff]
  %v71 = vld [vmem:[%s1 + $0x90] sm:$0xff]
  %v72 = vld [vmem:[%s1 + $0x98] sm:$0xff]
  %v73 = vld [vmem:[%s1 + $0xa0] sm:$0xff]
  %v74 = vld [vmem:[%s1 + $0xa8] sm:$0xff]
  %v75 = vld [vmem:[%s1 + $0xb0] sm:$0xff]
  %v76 = vld [vmem:[%s1 + $0xb8] sm:$0xff]
  %v77 = vld [vmem:[%s1 + $0xc0] sm:$0xff]
  %v78 = vld [vmem:[%s1 + $0xc8] sm:$0xff]
  %v79 = vld [vmem:[%s1 + $0xd0] sm:$0xff]
  %v80 = vld [vmem:[%s1 + $0xd8] sm:$0xff]
  %v81 = vld [vmem:[%s1 + $0xe0] sm:$0xff]
  %v82 = vld [vmem:[%s1 + $0xe8] sm:$0xff]
  %v83 = vld [vmem:[%s1 + $0xf0] sm:$0xff]
  %v84 = vld [vmem:[%s1 + $0xf8] sm:$0xff]
  %v85 = vld [vmem:[%s1 + $0x100] sm:$0xff]
  %v86 = vld [vmem:[%s1 + $0x108] sm:$0xff]
  %v87 = vld [vmem:[%s1 + $0x110] sm:$0xff]
  %v88 = vld [vmem:[%s1 + $0x118] sm:$0xff]
  %v89 = vld [vmem:[%s1 + $0x120] sm:$0xff]
  %v90 = vld [vmem:[%s1 + $0x128] sm:$0xff]
  %v91 = vld [vmem:[%s1 + $0x130] sm:$0xff]
  %v92 = vld [vmem:[%s1 + $0x138] sm:$0xff]
  %v93 = vld [vmem:[%s1 + $0x140] sm:$0xff]
  %v94 = vld [vmem:[%s1 + $0x148] sm:$0xff]
  %v95 = vld [vmem:[%s1 + $0x150] sm:$0xff]
  %v96 = vld [vmem:[%s1 + $0x158] sm:$0xff]
  %v97 = vld [vmem:[%s1 + $0x160] sm:$0xff]
  %v98 = vld [vmem:[%s1 + $0x168] sm:$0xff]
  %v99 = vld [vmem:[%s1 + $0x170] sm:$0xff]
  %v100 = vld [vmem:[%s1 + $0x178] sm:$0xff]
  %v101 = vld [vmem:[%s1 + $0x180] sm:$0xff]
  %v102 = vld [vmem:[%s1 + $0x188] sm:$0xff]
  %v103 = vld [vmem:[%s1 + $0x190] sm:$0xff]
  %v104 = vld [vmem:[%s1 + $0x198] sm:$0xff]
  %v105 = vld [vmem:[%s1 + $0x1a0] sm:$0xff]
  %v106 = vld [vmem:[%s1 + $0x1a8] sm:$0xff]
  %v107 = vld [vmem:[%s1 + $0x1b0] sm:$0xff]
  %v108 = vld [vmem:[%s1 + $0x1b8] sm:$0xff]
  %v109 = vld [vmem:[%s1 + $0x1c0] sm:$0xff]
  %v110 = vld [vmem:[%s1 + $0x1c8] sm:$0xff]
  %v111 = vld [vmem:[%s1 + $0x1d0] sm:$0xff]
  %v112 = vld [vmem:[%s1 + $0x1d8] sm:$0xff]
  %v113 = vld [vmem:[%s1 + $0x1e0] sm:$0xff]
  %v114 = vld [vmem:[%s1 + $0x1e8] sm:$0xff]
  %v115 = vld [vmem:[%s1 + $0x1f0] sm:$0xff]
  %v116 = vld [vmem:[%s1 + $0x1f8] sm:$0xff]
  %v117 = vld [vmem:[%s1 + $0x200] sm:$0xff]
  %v118 = vld [vmem:[%s1 + $0x208] sm:$0xff]
  %v119 = vld [vmem:[%s1 + $0x210] sm:$0xff]
  %v120 = vld [vmem:[%s1 + $0x218] sm:$0xff]
  %v121 = vld [vmem:[%s1 + $0x220] sm:$0xff]
  %v122 = vld [vmem:[%s1 + $0x228] sm:$0xff]
  %v123 = vld [vmem:[%s1 + $0x230] sm:$0xff]
  %v124 = vld [vmem:[%s1 + $0x238] sm:$0xff]
  %v125 = vld [vmem:[%s1 + $0x240] sm:$0xff]
  %v126 = vld [vmem:[%s1 + $0x248] sm:$0xff]
  %v127 = vld [vmem:[%s1 + $0x250] sm:$0xff]
  %v128 = vld [vmem:[%s1 + $0x258] sm:$0xff]
  %v129 = vld [vmem:[%s1 + $0x260] sm:$0xff]
  %v130 = vld [vmem:[%s1 + $0x268] sm:$0xff]
  %v131 = vld [vmem:[%s1 + $0x270] sm:$0xff]
  %v132 = vld [vmem:[%s1 + $0x278] sm:$0xff]
  %v133 = vld [vmem:[%s1 + $0x280] sm:$0xff]
  %v134 = vld [vmem:[%s1 + $0x288] sm:$0xff]
  %v135 = vld [vmem:[%s1 + $0x290] sm:$0xff]
  %v136 = vld [vmem:[%s1 + $0x298] sm:$0xff]
  %v137 = vld [vmem:[%s1 + $0x2a0] sm:$0xff]
  %v138 = vld [vmem:[%s1 + $0x2a8] sm:$0xff]
  %v139 = vld [vmem:[%s1 + $0x2b0] sm:$0xff]
  %v140 = vld [vmem:[%s1 + $0x2b8] sm:$0xff]
  %v141 = vld [vmem:[%s1 + $0x2c0] sm:$0xff]
  %v142 = vld [vmem:[%s1 + $0x2c8] sm:$0xff]
  %v143 = vld [vmem:[%s1 + $0x2d0] sm:$0xff]
  %v144 = vld [vmem:[%s1 + $0x2d8] sm:$0xff]
  %v145 = vld [vmem:[%s1 + $0x2e0] sm:$0xff]
  %v146 = vld [vmem:[%s1 + $0x2e8] sm:$0xff]
  %v147 = vld [vmem:[%s1 + $0x2f0] sm:$0xff]
  %v148 = vld [vmem:[%s1 + $0x2f8] sm:$0xff]
  %v149 = vld [vmem:[%s1 + $0x300] sm:$0xff]
  %v150 = vld [vmem:[%s1 + $0x308] sm:$0xff]
  %v151 = vld [vmem:[%s1 + $0x310] sm:$0xff]
  %v152 = vld [vmem:[%s1 + $0x318] sm:$0xff]
  %v153 = vld [vmem:[%s1 + $0x320] sm:$0xff]
  %v154 = vld [vmem:[%s1 + $0x328] sm:$0xff]
  %v155 = vld [vmem:[%s1 + $0x330] sm:$0xff]
  %v156 = vld [vmem:[%s1 + $0x338] sm:$0xff]
  %v157 = vld [vmem:[%s1 + $0x340] sm:$0xff]
  %v158 = vld [vmem:[%s1 + $0x348] sm:$0xff]
  %v159 = vld [vmem:[%s1 + $0x350] sm:$0xff]
  %v160 = vld [vmem:[%s1 + $0x358] sm:$0xff]
  %v161 = vld [vmem:[%s1 + $0x360] sm:$0xff]
  %v162 = vld [vmem:[%s1 + $0x368] sm:$0xff]
  %v163 = vld [vmem:[%s1 + $0x370] sm:$0xff]
  %v164 = vld [vmem:[%s1 + $0x378] sm:$0xff]
  %v165 = vld [vmem:[%s1 + $0x380] sm:$0xff]
  %v166 = vld [vmem:[%s1 + $0x388] sm:$0xff]
  %v167 = vld [vmem:[%s1 + $0x390] sm:$0xff]
  %v168 = vld [vmem:[%s1 + $0x398] sm:$0xff]
  %v169 = vld [vmem:[%s1 + $0x3a0] sm:$0xff]
  %v170 = vld [vmem:[%s1 + $0x3a8] sm:$0xff]
  %v171 = vld [vmem:[%s1 + $0x3b0] sm:$0xff]
  %v172 = vld [vmem:[%s1 + $0x3b8] sm:$0xff]
  %v173 = vld [vmem:[%s1 + $0x3c0] sm:$0xff]
  %v174 = vld [vmem:[%s1 + $0x3c8] sm:$0xff]
  %v175 = vld [vmem:[%s1 + $0x3d0] sm:$0xff]
  %v176 = vld [vmem:[%s1 + $0x3d8] sm:$0xff]
  %v177 = vld [vmem:[%s1 + $0x3e0] sm:$0xff]
  %v178 = vld [vmem:[%s1 + $0x3e8] sm:$0xff]
  %v179 = vld [vmem:[%s1 + $0x3f0] sm:$0xff]
  %v180 = vld [vmem:[%s1 + $0x3f8] sm:$0xff]
  %v181 = vld [vmem:[%s1 + $0x400] sm:$0xff]
  %v182 = vld [vmem:[%s1 + $0x408] sm:$0xff]
  %v183 = vld [vmem:[%s1 + $0x410] sm:$0xff]
  %v184 = vld [vmem:[%s1 + $0x418] sm:$0xff]
  %v185 = vld [vmem:[%s1 + $0x420] sm:$0xff]
  %v186 = vld [vmem:[%s1 + $0x428] sm:$0xff]
  %v187 = vld [vmem:[%s1 + $0x430] sm:$0xff]
  %v188 = vld [vmem:[%s1 + $0x438] sm:$0xff]
  %v189 = vld [vmem:[%s1 + $0x440] sm:$0xff]
  %v190 = vld [vmem:[%s1 + $0x448] sm:$0xff]
  %v191 = vld [vmem:[%s1 + $0x450] sm:$0xff]
  %v192 = vld [vmem:[%s1 + $0x458] sm:$0xff]
  %v193 = vld [vmem:[%s1 + $0x460] sm:$0xff]
  %v194 = vld [vmem:[%s1 + $0x468] sm:$0xff]
  %v195 = vld [vmem:[%s1 + $0x470] sm:$0xff]
  %v196 = vld [vmem:[%s1 + $0x478] sm:$0xff]
  %v197 = vld [vmem:[%s1 + $0x480] sm:$0xff]
  %v198 = vld [vmem:[%s1 + $0x488] sm:$0xff]
  %v199 = vld [vmem:[%s1 + $0x490] sm:$0xff]
  %v200 = vld [vmem:[%s1 + $0x498] sm:$0xff]
  %v201 = vld [vmem:[%s1 + $0x4a0] sm:$0xff]
  %v202 = vld [vmem:[%s1 + $0x4a8] sm:$0xff]
  %v203 = vld [vmem:[%s1 + $0x4b0] sm:$0xff]
  %v204 = vld [vmem:[%s1 + $0x4b8] sm:$0xff]
  %v205 = vld [vmem:[%s1 + $0x4c0] sm:$0xff]
  %v206 = vld [vmem:[%s1 + $0x4c8] sm:$0xff]
  %v207 = vld [vmem:[%s1 + $0x4d0] sm:$0xff]
  %v208 = vld [vmem:[%s1 + $0x4d8] sm:$0xff]
  %v209 = vld [vmem:[%s1 + $0x4e0] sm:$0xff]
  %v210 = vld [vmem:[%s1 + $0x4e8] sm:$0xff]
  %v211 = vld [vmem:[%s1 + $0x4f0] sm:$0xff]
  %v212 = vld [vmem:[%s1 + $0x4f8] sm:$0xff]
  %v213 = vld [vmem:[%s1 + $0x500] sm:$0xff]
  %v214 = vld [vmem:[%s1 + $0x508] sm:$0xff]
  %v215 = vld [vmem:[%s1 + $0x510] sm:$0xff]
  %v216 = vld [vmem:[%s1 + $0x518] sm:$0xff]
  %v217 = vld [vmem:[%s1 + $0x520] sm:$0xff]
  %v218 = vld [vmem:[%s1 + $0x528] sm:$0xff]
  %v219 = vld [vmem:[%s1 + $0x530] sm:$0xff]
  %v220 = vld [vmem:[%s1 + $0x538] sm:$0xff]
  %v221 = vld [vmem:[%s1 + $0x540] sm:$0xff]
  %v222 = vld [vmem:[%s1 + $0x548] sm:$0xff]
  %v223 = vld [vmem:[%s1 + $0x550] sm:$0xff]
  %v224 = vld [vmem:[%s1 + $0x558] sm:$0xff]
  %v225 = vld [vmem:[%s1 + $0x560] sm:$0xff]
  %v226 = vld [vmem:[%s1 + $0x568] sm:$0xff]
  %v227 = vld [vmem:[%s1 + $0x570] sm:$0xff]
  %v228 = vld [vmem:[%s1 + $0x578] sm:$0xff]
  %v229 = vld [vmem:[%s1 + $0x580] sm:$0xff]
  %v230 = vld [vmem:[%s1 + $0x588] sm:$0xff]
  %v231 = vld [vmem:[%s1 + $0x590] sm:$0xff]
  %v232 = vld [vmem:[%s1 + $0x598] sm:$0xff]
  %v233 = vld [vmem:[%s1 + $0x5a0] sm:$0xff]
  %v234 = vld [vmem:[%s1 + $0x5a8] sm:$0xff]
  %v235 = vld [vmem:[%s1 + $0x5b0] sm:$0xff]
  %v236 = vld [vmem:[%s1 + $0x5b8] sm:$0xff]
  %v237 = vld [vmem:[%s1 + $0x5c0] sm:$0xff]
  %v238 = vld [vmem:[%s1 + $0x5c8] sm:$0xff]
  %v239 = vld [vmem:[%s1 + $0x5d0] sm:$0xff]
  %v240 = vld [vmem:[%s1 + $0x5d8] sm:$0xff]
  %v241 = vld [vmem:[%s1 + $0x5e0] sm:$0xff]
  %v242 = vld [vmem:[%s1 + $0x5e8] sm:$0xff]
  %v243 = vld [vmem:[%s1 + $0x5f0] sm:$0xff]
  %v244 = vld [vmem:[%s1 + $0x5f8] sm:$0xff]
  %v245 = vld [vmem:[%s1 + $0x600] sm:$0xff]
  %v246 = vld [vmem:[%s1 + $0x608] sm:$0xff]
  %v247 = vld [vmem:[%s1 + $0x610] sm:$0xff]
  %v248 = vld [vmem:[%s1 + $0x618] sm:$0xff]
  %v249 = vld [vmem:[%s1 + $0x620] sm:$0xff]
  %v250 = vld [vmem:[%s1 + $0x628] sm:$0xff]
  %v251 = vld [vmem:[%s1 + $0x630] sm:$0xff]
  %v252 = vld [vmem:[%s1 + $0x638] sm:$0xff]
  %v253 = vld [vmem:[%s1 + $0x640] sm:$0xff]
  %v254 = vld [vmem:[%s1 + $0x648] sm:$0xff]
  %v255 = vld [vmem:[%s1 + $0x650] sm:$0xff]
  %v256 = vld [vmem:[%s1 + $0x658] sm:$0xff]
  %v257 = vld [vmem:[%s1 + $0x660] sm:$0xff]
  %v258 = vld [vmem:[%s1 + $0x668] sm:$0xff]
  %v259 = vld [vmem:[%s1 + $0x670] sm:$0xff]
  %v260 = vld [vmem:[%s1 + $0x678] sm:$0xff]
  %v261 = vld [vmem:[%s1 + $0x680] sm:$0xff]
  %v262 = vld [vmem:[%s1 + $0x688] sm:$0xff]
  %v263 = vld [vmem:[%s1 + $0x690] sm:$0xff]
  %v264 = vld [vmem:[%s1 + $0x698] sm:$0xff]
  %v265 = vld [vmem:[%s1 + $0x6a0] sm:$0xff]
  %v266 = vld [vmem:[%s1 + $0x6a8] sm:$0xff]
  %v267 = vld [vmem:[%s1 + $0x6b0] sm:$0xff]
  %v268 = vld [vmem:[%s1 + $0x6b8] sm:$0xff]
  %v269 = vld [vmem:[%s1 + $0x6c0] sm:$0xff]
  %v270 = vld [vmem:[%s1 + $0x6c8] sm:$0xff]
  %v271 = vld [vmem:[%s1 + $0x6d0] sm:$0xff]
  %v272 = vld [vmem:[%s1 + $0x6d8] sm:$0xff]
  %v273 = vld [vmem:[%s1 + $0x6e0] sm:$0xff]
  %v274 = vld [vmem:[%s1 + $0x6e8] sm:$0xff]
  %v275 = vld [vmem:[%s1 + $0x6f0] sm:$0xff]
  %v276 = vld [vmem:[%s1 + $0x6f8] sm:$0xff]
  %v277 = vld [vmem:[%s1 + $0x700] sm:$0xff]
  %v278 = vld [vmem:[%s1 + $0x708] sm:$0xff]
  %v279 = vld [vmem:[%s1 + $0x710] sm:$0xff]
  %v280 = vld [vmem:[%s1 + $0x718] sm:$0xff]
  %v281 = vld [vmem:[%s1 + $0x720] sm:$0xff]
  %v282 = vld [vmem:[%s1 + $0x728] sm:$0xff]
  %v283 = vld [vmem:[%s1 + $0x730] sm:$0xff]
  %v284 = vld [vmem:[%s1 + $0x738] sm:$0xff]
  %v285 = vld [vmem:[%s1 + $0x740] sm:$0xff]
  %v286 = vld [vmem:[%s1 + $0x748] sm:$0xff]
  %v287 = vld [vmem:[%s1 + $0x750] sm:$0xff]
  %v288 = vld [vmem:[%s1 + $0x758] sm:$0xff]
  %v289 = vld [vmem:[%s1 + $0x760] sm:$0xff]
  %v290 = vld [vmem:[%s1 + $0x768] sm:$0xff]
  %v291 = vld [vmem:[%s1 + $0x770] sm:$0xff]
  %v292 = vld [vmem:[%s1 + $0x778] sm:$0xff]
  %v293 = vld [vmem:[%s1 + $0x780] sm:$0xff]
  %v294 = vld [vmem:[%s1 + $0x788] sm:$0xff]
  %v295 = vld [vmem:[%s1 + $0x790] sm:$0xff]
  %v296 = vld [vmem:[%s1 + $0x798] sm:$0xff]
  %v297 = vld [vmem:[%s1 + $0x7a0] sm:$0xff]
  %v298 = vld [vmem:[%s1 + $0x7a8] sm:$0xff]
  %v299 = vld [vmem:[%s1 + $0x7b0] sm:$0xff]
  %v300 = vld [vmem:[%s1 + $0x7b8] sm:$0xff]
  %v301 = vld [vmem:[%s1 + $0x7c0] sm:$0xff]
  %v302 = vld [vmem:[%s1 + $0x7c8] sm:$0xff]
  %v303 = vld [vmem:[%s1 + $0x7d0] sm:$0xff]
  %v304 = vld [vmem:[%s1 + $0x7d8] sm:$0xff]
  %v305 = vld [vmem:[%s1 + $0x7e0] sm:$0xff]
  %v306 = vld [vmem:[%s1 + $0x7e8] sm:$0xff]
  %v307 = vld [vmem:[%s1 + $0x7f0] sm:$0xff]
  %v308 = vld [vmem:[%s1 + $0x7f8] sm:$0xff]
  %v309 = vld [vmem:[%s1 + $0x800] sm:$0xff]
  %v310 = vld [vmem:[%s1 + $0x808] sm:$0xff]
  %v311 = vld [vmem:[%s1 + $0x810] sm:$0xff]
  %v312 = vld [vmem:[%s1 + $0x818] sm:$0xff]
  %v313 = vld [vmem:[%s1 + $0x820] sm:$0xff]
  %v314 = vld [vmem:[%s1 + $0x828] sm:$0xff]
  %v315 = vld [vmem:[%s1 + $0x830] sm:$0xff]
  %v316 = vld [vmem:[%s1 + $0x838] sm:$0xff]
  %v317 = vld [vmem:[%s1 + $0x840] sm:$0xff]
  %v318 = vld [vmem:[%s1 + $0x848] sm:$0xff]
  %v319 = vld [vmem:[%s1 + $0x850] sm:$0xff]
  %v320 = vld [vmem:[%s1 + $0x858] sm:$0xff]
  %v321 = vld [vmem:[%s1 + $0x860] sm:$0xff]
  %v322 = vld [vmem:[%s1 + $0x868] sm:$0xff]
  %v323 = vld [vmem:[%s1 + $0x870] sm:$0xff]
  %v324 = vld [vmem:[%s1 + $0x878] sm:$0xff]
  %v325 = vld [vmem:[%s1 + $0x880] sm:$0xff]
  %v326 = vld [vmem:[%s1 + $0x888] sm:$0xff]
  %v327 = vld [vmem:[%s1 + $0x890] sm:$0xff]
  %v328 = vld [vmem:[%s1 + $0x898] sm:$0xff]
  %v329 = vld [vmem:[%s1 + $0x8a0] sm:$0xff]
  %v330 = vld [vmem:[%s1 + $0x8a8] sm:$0xff]
  %v331 = vld [vmem:[%s1 + $0x8b0] sm:$0xff]
  %v332 = vld [vmem:[%s1 + $0x8b8] sm:$0xff]
  %v333 = vld [vmem:[%s1 + $0x8c0] sm:$0xff]
  %v334 = vld [vmem:[%s1 + $0x8c8] sm:$0xff]
  %v335 = vld [vmem:[%s1 + $0x8d0] sm:$0xff]
  %v336 = vld [vmem:[%s1 + $0x8d8] sm:$0xff]
  %v337 = vld [vmem:[%s1 + $0x8e0] sm:$0xff]
  %v338 = vld [vmem:[%s1 + $0x8e8] sm:$0xff]
  %v339 = vld [vmem:[%s1 + $0x8f0] sm:$0xff]
  %v340 = vld [vmem:[%s1 + $0x8f8] sm:$0xff]
  %v341 = vld [vmem:[%s1 + $0x900] sm:$0xff]
  %v342 = vld [vmem:[%s1 + $0x908] sm:$0xff]
  %v343 = vld [vmem:[%s1 + $0x910] sm:$0xff]
  %v344 = vld [vmem:[%s1 + $0x918] sm:$0xff]
  %v345 = vld [vmem:[%s1 + $0x920] sm:$0xff]
  %v346 = vld [vmem:[%s1 + $0x928] sm:$0xff]
  %v347 = vld [vmem:[%s1 + $0x930] sm:$0xff]
  %v348 = vld [vmem:[%s1 + $0x938] sm:$0xff]
  %v349 = vld [vmem:[%s1 + $0x940] sm:$0xff]
  %v350 = vld [vmem:[%s1 + $0x948] sm:$0xff]
  %v351 = vld [vmem:[%s1 + $0x950] sm:$0xff]
  %v352 = vld [vmem:[%s1 + $0x958] sm:$0xff]
  %v353 = vld [vmem:[%s1 + $0x960] sm:$0xff]
  %v354 = vld [vmem:[%s1 + $0x968] sm:$0xff]
  %v355 = vld [vmem:[%s1 + $0x970] sm:$0xff]
  %v356 = vld [vmem:[%s1 + $0x978] sm:$0xff]
  %v357 = vld [vmem:[%s1 + $0x980] sm:$0xff]
  %v358 = vld [vmem:[%s1 + $0x988] sm:$0xff]
  %v359 = vld [vmem:[%s1 + $0x990] sm:$0xff]
  %v360 = vld [vmem:[%s1 + $0x998] sm:$0xff]
  %v361 = vld [vmem:[%s1 + $0x9a0] sm:$0xff]
  %v362 = vld [vmem:[%s1 + $0x9a8] sm:$0xff]
  %v363 = vld [vmem:[%s1 + $0x9b0] sm:$0xff]
  %v364 = vld [vmem:[%s1 + $0x9b8] sm:$0xff]
  %v365 = vld [vmem:[%s1 + $0x9c0] sm:$0xff]
  %v366 = vld [vmem:[%s1 + $0x9c8] sm:$0xff]
  %v367 = vld [vmem:[%s1 + $0x9d0] sm:$0xff]
  %v368 = vld [vmem:[%s1 + $0x9d8] sm:$0xff]
  %v369 = vld [vmem:[%s1 + $0x9e0] sm:$0xff]
  %v370 = vld [vmem:[%s1 + $0x9e8] sm:$0xff]
  %v371 = vld [vmem:[%s1 + $0x9f0] sm:$0xff]
  %v372 = vld [vmem:[%s1 + $0x9f8] sm:$0xff]
  %v373 = vld [vmem:[%s1 + $0xa00] sm:$0xff]
  %v374 = vld [vmem:[%s1 + $0xa08] sm:$0xff]
  %v375 = vld [vmem:[%s1 + $0xa10] sm:$0xff]
  %v376 = vld [vmem:[%s1 + $0xa18] sm:$0xff]
  %v377 = vld [vmem:[%s1 + $0xa20] sm:$0xff]
  %v378 = vld [vmem:[%s1 + $0xa28] sm:$0xff]
  %v379 = vld [vmem:[%s1 + $0xa30] sm:$0xff]
  %v380 = vld [vmem:[%s1 + $0xa38] sm:$0xff]
  %v381 = vld [vmem:[%s1 + $0xa40] sm:$0xff]
  %v382 = vld [vmem:[%s1 + $0xa48] sm:$0xff]
  %v383 = vld [vmem:[%s1 + $0xa50] sm:$0xff]
  %v384 = vld [vmem:[%s1 + $0xa58] sm:$0xff]
  %v385 = vld [vmem:[%s1 + $0xa60] sm:$0xff]
  %v386 = vld [vmem:[%s1 + $0xa68] sm:$0xff]
  %v387 = vld [vmem:[%s1 + $0xa70] sm:$0xff]
  %v388 = vld [vmem:[%s1 + $0xa78] sm:$0xff]
  %v389 = vld [vmem:[%s1 + $0xa80] sm:$0xff]
  %v390 = vld [vmem:[%s1 + $0xa88] sm:$0xff]
  %v391 = vld [vmem:[%s1 + $0xa90] sm:$0xff]
  %v392 = vld [vmem:[%s1 + $0xa98] sm:$0xff]
  %v393 = vld [vmem:[%s1 + $0xaa0] sm:$0xff]
  %v394 = vld [vmem:[%s1 + $0xaa8] sm:$0xff]
  %v395 = vld [vmem:[%s1 + $0xab0] sm:$0xff]
  %v396 = vld [vmem:[%s1 + $0xab8] sm:$0xff]
  %v397 = vld [vmem:[%s1 + $0xac0] sm:$0xff]
  %v398 = vld [vmem:[%s1 + $0xac8] sm:$0xff]
  %v399 = vld [vmem:[%s1 + $0xad0] sm:$0xff]
  %v400 = vld [vmem:[%s1 + $0xad8] sm:$0xff]
  %v401 = vld [vmem:[%s1 + $0xae0] sm:$0xff]
  %v402 = vld [vmem:[%s1 + $0xae8] sm:$0xff]
  %v403 = vld [vmem:[%s1 + $0xaf0] sm:$0xff]
  %v404 = vld [vmem:[%s1 + $0xaf8] sm:$0xff]
  %v405 = vld [vmem:[%s1 + $0xb00] sm:$0xff]
  %v406 = vld [vmem:[%s1 + $0xb08] sm:$0xff]
  %v407 = vld [vmem:[%s1 + $0xb10] sm:$0xff]
  %v408 = vld [vmem:[%s1 + $0xb18] sm:$0xff]
  %v409 = vld [vmem:[%s1 + $0xb20] sm:$0xff]
  %v410 = vld [vmem:[%s1 + $0xb28] sm:$0xff]
  %v411 = vld [vmem:[%s1 + $0xb30] sm:$0xff]
  %v412 = vld [vmem:[%s1 + $0xb38] sm:$0xff]
  %v413 = vld [vmem:[%s1 + $0xb40] sm:$0xff]
  %v414 = vld [vmem:[%s1 + $0xb48] sm:$0xff]
  %v415 = vld [vmem:[%s1 + $0xb50] sm:$0xff]
  %v416 = vld [vmem:[%s1 + $0xb58] sm:$0xff]
  %v417 = vld [vmem:[%s1 + $0xb60] sm:$0xff]
  %v418 = vld [vmem:[%s1 + $0xb68] sm:$0xff]
  %v419 = vld [vmem:[%s1 + $0xb70] sm:$0xff]
  %v420 = vld [vmem:[%s1 + $0xb78] sm:$0xff]
  %v421 = vld [vmem:[%s1 + $0xb80] sm:$0xff]
  %v422 = vld [vmem:[%s1 + $0xb88] sm:$0xff]
  %v423 = vld [vmem:[%s1 + $0xb90] sm:$0xff]
  %v424 = vld [vmem:[%s1 + $0xb98] sm:$0xff]
  %v425 = vld [vmem:[%s1 + $0xba0] sm:$0xff]
  %v426 = vld [vmem:[%s1 + $0xba8] sm:$0xff]
  %v427 = vld [vmem:[%s1 + $0xbb0] sm:$0xff]
  %v428 = vld [vmem:[%s1 + $0xbb8] sm:$0xff]
  %v429 = vld [vmem:[%s1 + $0xbc0] sm:$0xff]
  %v430 = vld [vmem:[%s1 + $0xbc8] sm:$0xff]
  %v431 = vld [vmem:[%s1 + $0xbd0] sm:$0xff]
  %v432 = vld [vmem:[%s1 + $0xbd8] sm:$0xff]
  %v433 = vld [vmem:[%s1 + $0xbe0] sm:$0xff]
  %v434 = vld [vmem:[%s1 + $0xbe8] sm:$0xff]
  %v435 = vld [vmem:[%s1 + $0xbf0] sm:$0xff]
  %v436 = vld [vmem:[%s1 + $0xbf8] sm:$0xff]
  %v437 = vld [vmem:[%s1 + $0xc00] sm:$0xff]
  %v438 = vld [vmem:[%s1 + $0xc08] sm:$0xff]
  %v439 = vld [vmem:[%s1 + $0xc10] sm:$0xff]
  %v440 = vld [vmem:[%s1 + $0xc18] sm:$0xff]
  %v441 = vld [vmem:[%s1 + $0xc20] sm:$0xff]
  %v442 = vld [vmem:[%s1 + $0xc28] sm:$0xff]
  %v443 = vld [vmem:[%s1 + $0xc30] sm:$0xff]
  %v444 = vld [vmem:[%s1 + $0xc38] sm:$0xff]
  %v445 = vld [vmem:[%s1 + $0xc40] sm:$0xff]
  %v446 = vld [vmem:[%s1 + $0xc48] sm:$0xff]
  %v447 = vld [vmem:[%s1 + $0xc50] sm:$0xff]
  %v448 = vld [vmem:[%s1 + $0xc58] sm:$0xff]
  %v449 = vld [vmem:[%s1 + $0xc60] sm:$0xff]
  %v450 = vld [vmem:[%s1 + $0xc68] sm:$0xff]
  %v451 = vld [vmem:[%s1 + $0xc70] sm:$0xff]
  %v452 = vld [vmem:[%s1 + $0xc78] sm:$0xff]
  %v453 = vld [vmem:[%s1 + $0xc80] sm:$0xff]
  %v454 = vld [vmem:[%s1 + $0xc88] sm:$0xff]
  %v455 = vld [vmem:[%s1 + $0xc90] sm:$0xff]
  %v456 = vld [vmem:[%s1 + $0xc98] sm:$0xff]
  %v457 = vld [vmem:[%s1 + $0xca0] sm:$0xff]
  %v458 = vld [vmem:[%s1 + $0xca8] sm:$0xff]
  %v459 = vld [vmem:[%s1 + $0xcb0] sm:$0xff]
  %v460 = vld [vmem:[%s1 + $0xcb8] sm:$0xff]
  %v461 = vld [vmem:[%s1 + $0xcc0] sm:$0xff]
  %v462 = vld [vmem:[%s1 + $0xcc8] sm:$0xff]
  %v463 = vld [vmem:[%s1 + $0xcd0] sm:$0xff]
  %v464 = vld [vmem:[%s1 + $0xcd8] sm:$0xff]
  %v465 = vld [vmem:[%s1 + $0xce0] sm:$0xff]
  %v466 = vld [vmem:[%s1 + $0xce8] sm:$0xff]
  %v467 = vld [vmem:[%s1 + $0xcf0] sm:$0xff]
  %v468 = vld [vmem:[%s1 + $0xcf8] sm:$0xff]
  %v469 = vld [vmem:[%s1 + $0xd00] sm:$0xff]
  %v470 = vld [vmem:[%s1 + $0xd08] sm:$0xff]
  %v471 = vld [vmem:[%s1 + $0xd10] sm:$0xff]
  %v472 = vld [vmem:[%s1 + $0xd18] sm:$0xff]
  %v473 = vld [vmem:[%s1 + $0xd20] sm:$0xff]
  %v474 = vld [vmem:[%s1 + $0xd28] sm:$0xff]
  %v475 = vld [vmem:[%s1 + $0xd30] sm:$0xff]
  %v476 = vld [vmem:[%s1 + $0xd38] sm:$0xff]
  %v477 = vld [vmem:[%s1 + $0xd40] sm:$0xff]
  %v478 = vld [vmem:[%s1 + $0xd48] sm:$0xff]
  %v479 = vld [vmem:[%s1 + $0xd50] sm:$0xff]
  %v480 = vld [vmem:[%s1 + $0xd58] sm:$0xff]
  %v481 = vld [vmem:[%s1 + $0xd60] sm:$0xff]
  %v482 = vld [vmem:[%s1 + $0xd68] sm:$0xff]
  %v483 = vld [vmem:[%s1 + $0xd70] sm:$0xff]
  %v484 = vld [vmem:[%s1 + $0xd78] sm:$0xff]
  %v485 = vld [vmem:[%s1 + $0xd80] sm:$0xff]
  %v486 = vld [vmem:[%s1 + $0xd88] sm:$0xff]
  %v487 = vld [vmem:[%s1 + $0xd90] sm:$0xff]
  %v488 = vld [vmem:[%s1 + $0xd98] sm:$0xff]
  %v489 = vld [vmem:[%s1 + $0xda0] sm:$0xff]
  %v490 = vld [vmem:[%s1 + $0xda8] sm:$0xff]
  %v491 = vld [vmem:[%s1 + $0xdb0] sm:$0xff]
  %v492 = vld [vmem:[%s1 + $0xdb8] sm:$0xff]
  %v493 = vld [vmem:[%s1 + $0xdc0] sm:$0xff]
  %v494 = vld [vmem:[%s1 + $0xdc8] sm:$0xff]
  %v495 = vld [vmem:[%s1 + $0xdd0] sm:$0xff]
  %v496 = vld [vmem:[%s1 + $0xdd8] sm:$0xff]
  %v497 = vld [vmem:[%s1 + $0xde0] sm:$0xff]
  %v498 = vld [vmem:[%s1 + $0xde8] sm:$0xff]
  %v499 = vld [vmem:[%s1 + $0xdf0] sm:$0xff]
  %v500 = vld [vmem:[%s1 + $0xdf8] sm:$0xff]
  %v501 = vld [vmem:[%s1 + $0xe00] sm:$0xff]
  %v502 = vld [vmem:[%s1 + $0xe08] sm:$0xff]
  %v503 = vld [vmem:[%s1 + $0xe10] sm:$0xff]
  %v504 = vld [vmem:[%s1 + $0xe18] sm:$0xff]
  %v505 = vld [vmem:[%s1 + $0xe20] sm:$0xff]
  %v506 = vld [vmem:[%s1 + $0xe28] sm:$0xff]
  %v507 = vld [vmem:[%s1 + $0xe30] sm:$0xff]
  %v508 = vld [vmem:[%s1 + $0xe38] sm:$0xff]
  %v509 = vld [vmem:[%s1 + $0xe40] sm:$0xff]
  %v510 = vld [vmem:[%s1 + $0xe48] sm:$0xff]
  %v511 = vld [vmem:[%s1 + $0xe50] sm:$0xff]
  %v512 = vld [vmem:[%s1 + $0xe58] sm:$0xff]
  %v513 = vld [vmem:[%s1 + $0xe60] sm:$0xff]
  %v514 = vld [vmem:[%s1 + $0xe68] sm:$0xff]
  %v515 = vld [vmem:[%s1 + $0xe70] sm:$0xff]
  %v516 = vld [vmem:[%s1 + $0xe78] sm:$0xff]
  %v517 = vld [vmem:[%s1 + $0xe80] sm:$0xff]
  %v518 = vld [vmem:[%s1 + $0xe88] sm:$0xff]
  %v519 = vld [vmem:[%s1 + $0xe90] sm:$0xff]
  %v520 = vld [vmem:[%s1 + $0xe98] sm:$0xff]
  %v521 = vld [vmem:[%s1 + $0xea0] sm:$0xff]
  %v522 = vld [vmem:[%s1 + $0xea8] sm:$0xff]
  %v523 = vld [vmem:[%s1 + $0xeb0] sm:$0xff]
  %v524 = vld [vmem:[%s1 + $0xeb8] sm:$0xff]
  %v525 = vld [vmem:[%s1 + $0xec0] sm:$0xff]
  %v526 = vld [vmem:[%s1 + $0xec8] sm:$0xff]
  %v527 = vld [vmem:[%s1 + $0xed0] sm:$0xff]
  %v528 = vld [vmem:[%s1 + $0xed8] sm:$0xff]
  %v529 = vld [vmem:[%s1 + $0xee0] sm:$0xff]
  %v530 = vld [vmem:[%s1 + $0xee8] sm:$0xff]
  %v531 = vld [vmem:[%s1 + $0xef0] sm:$0xff]
  %v532 = vld [vmem:[%s1 + $0xef8] sm:$0xff]
  %v533 = vld [vmem:[%s1 + $0xf00] sm:$0xff]
  %v534 = vld [vmem:[%s1 + $0xf08] sm:$0xff]
  %v535 = vld [vmem:[%s1 + $0xf10] sm:$0xff]
  %v536 = vld [vmem:[%s1 + $0xf18] sm:$0xff]
  %v537 = vld [vmem:[%s1 + $0xf20] sm:$0xff]
  %v538 = vld [vmem:[%s1 + $0xf28] sm:$0xff]
  %v539 = vld [vmem:[%s1 + $0xf30] sm:$0xff]
  %v540 = vld [vmem:[%s1 + $0xf38] sm:$0xff]
  %v541 = vld [vmem:[%s1 + $0xf40] sm:$0xff]
  %v542 = vld [vmem:[%s1 + $0xf48] sm:$0xff]
  %v543 = vld [vmem:[%s1 + $0xf50] sm:$0xff]
  %v544 = vld [vmem:[%s1 + $0xf58] sm:$0xff]
  %v545 = vld [vmem:[%s1 + $0xf60] sm:$0xff]
  %v546 = vld [vmem:[%s1 + $0xf68] sm:$0xff]
  %v547 = vld [vmem:[%s1 + $0xf70] sm:$0xff]
  %v548 = vld [vmem:[%s1 + $0xf78] sm:$0xff]
  %v549 = vld [vmem:[%s1 + $0xf80] sm:$0xff]
  %v550 = vld [vmem:[%s1 + $0xf88] sm:$0xff]
  %v551 = vld [vmem:[%s1 + $0xf90] sm:$0xff]
  %v552 = vld [vmem:[%s1 + $0xf98] sm:$0xff]
  %v553 = vld [vmem:[%s1 + $0xfa0] sm:$0xff]
  %v554 = vld [vmem:[%s1 + $0xfa8] sm:$0xff]
  %v555 = vld [vmem:[%s1 + $0xfb0] sm:$0xff]
  %v556 = vld [vmem:[%s1 + $0xfb8] sm:$0xff]
  %v557 = vld [vmem:[%s1 + $0xfc0] sm:$0xff]
  %v558 = vld [vmem:[%s1 + $0xfc8] sm:$0xff]
  %v559 = vld [vmem:[%s1 + $0xfd0] sm:$0xff]
  %v560 = vld [vmem:[%s1 + $0xfd8] sm:$0xff]
  %v561 = vld [vmem:[%s1 + $0xfe0] sm:$0xff]
  %v562 = vld [vmem:[%s1 + $0xfe8] sm:$0xff]
  %v563 = vld [vmem:[%s1 + $0xff0] sm:$0xff]
  %v564 = vld [vmem:[%s1 + $0xff8] sm:$0xff]
  %v565 = vld [vmem:[%s1 + $0x1000] sm:$0xff]
  %v566 = vld [vmem:[%s1 + $0x1008] sm:$0xff]
  %v567 = vld [vmem:[%s1 + $0x1010] sm:$0xff]
  %v568 = vld [vmem:[%s1 + $0x1018] sm:$0xff]
  %v569 = vld [vmem:[%s1 + $0x1020] sm:$0xff]
  %v570 = vld [vmem:[%s1 + $0x1028] sm:$0xff]
  %v571 = vld [vmem:[%s1 + $0x1030] sm:$0xff]
  %v572 = vld [vmem:[%s1 + $0x1038] sm:$0xff]
  %v573 = vld [vmem:[%s1 + $0x1040] sm:$0xff]
  %v574 = vld [vmem:[%s1 + $0x1048] sm:$0xff]
  %v575 = vld [vmem:[%s1 + $0x1050] sm:$0xff]
  %v576 = vld [vmem:[%s1 + $0x1058] sm:$0xff]
  %v577 = vld [vmem:[%s1 + $0x1060] sm:$0xff]
  %v578 = vld [vmem:[%s1 + $0x1068] sm:$0xff]
  %v579 = vld [vmem:[%s1 + $0x1070] sm:$0xff]
  %v580 = vld [vmem:[%s1 + $0x1078] sm:$0xff]
  %v581 = vld [vmem:[%s1 + $0x1080] sm:$0xff]
  %v582 = vld [vmem:[%s1 + $0x1088] sm:$0xff]
  %v583 = vld [vmem:[%s1 + $0x1090] sm:$0xff]
  %v584 = vld [vmem:[%s1 + $0x1098] sm:$0xff]
  %v585 = vld [vmem:[%s1 + $0x10a0] sm:$0xff]
  %v586 = vld [vmem:[%s1 + $0x10a8] sm:$0xff]
  %v587 = vld [vmem:[%s1 + $0x10b0] sm:$0xff]
  %v588 = vld [vmem:[%s1 + $0x10b8] sm:$0xff]
  %v589 = vld [vmem:[%s1 + $0x10c0] sm:$0xff]
  %v590 = vld [vmem:[%s1 + $0x10c8] sm:$0xff]
  %v591 = vld [vmem:[%s1 + $0x10d0] sm:$0xff]
  %v592 = vld [vmem:[%s1 + $0x10d8] sm:$0xff]
  %v593 = vld [vmem:[%s1 + $0x10e0] sm:$0xff]
  %v594 = vld [vmem:[%s1 + $0x10e8] sm:$0xff]
  %v595 = vld [vmem:[%s1 + $0x10f0] sm:$0xff]
  %v596 = vld [vmem:[%s1 + $0x10f8] sm:$0xff]
  %v597 = vld [vmem:[%s1 + $0x1100] sm:$0xff]
  %v598 = vld [vmem:[%s1 + $0x1108] sm:$0xff]
  %v599 = vld [vmem:[%s1 + $0x1110] sm:$0xff]
  %v600 = vld [vmem:[%s1 + $0x1118] sm:$0xff]
  %v601 = vld [vmem:[%s1 + $0x1120] sm:$0xff]
  %v602 = vld [vmem:[%s1 + $0x1128] sm:$0xff]
  %v603 = vld [vmem:[%s1 + $0x1130] sm:$0xff]
  %v604 = vld [vmem:[%s1 + $0x1138] sm:$0xff]
  %v605 = vld [vmem:[%s1 + $0x1140] sm:$0xff]
  %v606 = vld [vmem:[%s1 + $0x1148] sm:$0xff]
  %v607 = vld [vmem:[%s1 + $0x1150] sm:$0xff]
  %v608 = vld [vmem:[%s1 + $0x1158] sm:$0xff]
  %v609 = vld [vmem:[%s1 + $0x1160] sm:$0xff]
  %v610 = vld [vmem:[%s1 + $0x1168] sm:$0xff]
  %v611 = vld [vmem:[%s1 + $0x1170] sm:$0xff]
  %v612 = vld [vmem:[%s1 + $0x1178] sm:$0xff]
  %v613 = vld [vmem:[%s1 + $0x1180] sm:$0xff]
  %v614 = vld [vmem:[%s1 + $0x1188] sm:$0xff]
  %v615 = vld [vmem:[%s1 + $0x1190] sm:$0xff]
  %v616 = vld [vmem:[%s1 + $0x1198] sm:$0xff]
  %v617 = vld [vmem:[%s1 + $0x11a0] sm:$0xff]
  %v618 = vld [vmem:[%s1 + $0x11a8] sm:$0xff]
  %v619 = vld [vmem:[%s1 + $0x11b0] sm:$0xff]
  %v620 = vld [vmem:[%s1 + $0x11b8] sm:$0xff]
  %v621 = vld [vmem:[%s1 + $0x11c0] sm:$0xff]
  %v622 = vld [vmem:[%s1 + $0x11c8] sm:$0xff]
  %v623 = vld [vmem:[%s1 + $0x11d0] sm:$0xff]
  %v624 = vld [vmem:[%s1 + $0x11d8] sm:$0xff]
  %v625 = vld [vmem:[%s1 + $0x11e0] sm:$0xff]
  %v626 = vld [vmem:[%s1 + $0x11e8] sm:$0xff]
  %v627 = vld [vmem:[%s1 + $0x11f0] sm:$0xff]
  %v628 = vld [vmem:[%s1 + $0x11f8] sm:$0xff]
  %v629 = vld [vmem:[%s1 + $0x1200] sm:$0xff]
  %v630 = vld [vmem:[%s1 + $0x1208] sm:$0xff]
  %v631 = vld [vmem:[%s1 + $0x1210] sm:$0xff]
  %v632 = vld [vmem:[%s1 + $0x1218] sm:$0xff]
  %v633 = vld [vmem:[%s1 + $0x1220] sm:$0xff]
  %v634 = vld [vmem:[%s1 + $0x1228] sm:$0xff]
  %v635 = vld [vmem:[%s1 + $0x1230] sm:$0xff]
  %v636 = vld [vmem:[%s1 + $0x1238] sm:$0xff]
  %v637 = vld [vmem:[%s1 + $0x1240] sm:$0xff]
  %v638 = vld [vmem:[%s1 + $0x1248] sm:$0xff]
  %v639 = vld [vmem:[%s1 + $0x1250] sm:$0xff]
  %v640 = vld [vmem:[%s1 + $0x1258] sm:$0xff]
  %v641 = vld [vmem:[%s1 + $0x1260] sm:$0xff]
  %v642 = vld [vmem:[%s1 + $0x1268] sm:$0xff]
  %v643 = vld [vmem:[%s1 + $0x1270] sm:$0xff]
  %v644 = vld [vmem:[%s1 + $0x1278] sm:$0xff]
  %v645 = vld [vmem:[%s1 + $0x1280] sm:$0xff]
  %v646 = vld [vmem:[%s1 + $0x1288] sm:$0xff]
  %v647 = vld [vmem:[%s1 + $0x1290] sm:$0xff]
  %v648 = vld [vmem:[%s1 + $0x1298] sm:$0xff]
  %v649 = vld [vmem:[%s1 + $0x12a0] sm:$0xff]
  %v650 = vld [vmem:[%s1 + $0x12a8] sm:$0xff]
  %v651 = vld [vmem:[%s1 + $0x12b0] sm:$0xff]
  %v652 = vld [vmem:[%s1 + $0x12b8] sm:$0xff]
  %v653 = vld [vmem:[%s1 + $0x12c0] sm:$0xff]
  %v654 = vld [vmem:[%s1 + $0x12c8] sm:$0xff]
  %v655 = vld [vmem:[%s1 + $0x12d0] sm:$0xff]
  %v656 = vld [vmem:[%s1 + $0x12d8] sm:$0xff]
  %v657 = vld [vmem:[%s1 + $0x12e0] sm:$0xff]
  %v658 = vld [vmem:[%s1 + $0x12e8] sm:$0xff]
  %v659 = vld [vmem:[%s1 + $0x12f0] sm:$0xff]
  %v660 = vld [vmem:[%s1 + $0x12f8] sm:$0xff]
  %v661 = vld [vmem:[%s1 + $0x1300] sm:$0xff]
  %v662 = vld [vmem:[%s1 + $0x1308] sm:$0xff]
  %v663 = vld [vmem:[%s1 + $0x1310] sm:$0xff]
  %v664 = vld [vmem:[%s1 + $0x1318] sm:$0xff]
  %v665 = vld [vmem:[%s1 + $0x1320] sm:$0xff]
  %v666 = vld [vmem:[%s1 + $0x1328] sm:$0xff]
  %v667 = vld [vmem:[%s1 + $0x1330] sm:$0xff]
  %v668 = vld [vmem:[%s1 + $0x1338] sm:$0xff]
  %v669 = vld [vmem:[%s1 + $0x1340] sm:$0xff]
  %v670 = vld [vmem:[%s1 + $0x1348] sm:$0xff]
  %v671 = vld [vmem:[%s1 + $0x1350] sm:$0xff]
  %v672 = vld [vmem:[%s1 + $0x1358] sm:$0xff]
  %v673 = vld [vmem:[%s1 + $0x1360] sm:$0xff]
  %v674 = vld [vmem:[%s1 + $0x1368] sm:$0xff]
  %v675 = vld [vmem:[%s1 + $0x1370] sm:$0xff]
  %v676 = vld [vmem:[%s1 + $0x1378] sm:$0xff]
  %v677 = vld [vmem:[%s1 + $0x1380] sm:$0xff]
  %v678 = vld [vmem:[%s1 + $0x1388] sm:$0xff]
  %v679 = vld [vmem:[%s1 + $0x1390] sm:$0xff]
  %v680 = vld [vmem:[%s1 + $0x1398] sm:$0xff]
  %v681 = vld [vmem:[%s1 + $0x13a0] sm:$0xff]
  %v682 = vld [vmem:[%s1 + $0x13a8] sm:$0xff]
  %v683 = vld [vmem:[%s1 + $0x13b0] sm:$0xff]
  %v684 = vld [vmem:[%s1 + $0x13b8] sm:$0xff]
  %v685 = vld [vmem:[%s1 + $0x13c0] sm:$0xff]
  %v686 = vld [vmem:[%s1 + $0x13c8] sm:$0xff]
  %v687 = vld [vmem:[%s1 + $0x13d0] sm:$0xff]
  %v688 = vld [vmem:[%s1 + $0x13d8] sm:$0xff]
  %v689 = vld [vmem:[%s1 + $0x13e0] sm:$0xff]
  %v690 = vld [vmem:[%s1 + $0x13e8] sm:$0xff]
  %v691 = vld [vmem:[%s1 + $0x13f0] sm:$0xff]
  %v692 = vld [vmem:[%s1 + $0x13f8] sm:$0xff]
  %v693 = vld [vmem:[%s1 + $0x1400] sm:$0xff]
  %v694 = vld [vmem:[%s1 + $0x1408] sm:$0xff]
  %v695 = vld [vmem:[%s1 + $0x1410] sm:$0xff]
  %v696 = vld [vmem:[%s1 + $0x1418] sm:$0xff]
  %v697 = vld [vmem:[%s1 + $0x1420] sm:$0xff]
  %v698 = vld [vmem:[%s1 + $0x1428] sm:$0xff]
  %v699 = vld [vmem:[%s1 + $0x1430] sm:$0xff]
  %v700 = vld [vmem:[%s1 + $0x1438] sm:$0xff]
  %v701 = vld [vmem:[%s1 + $0x1440] sm:$0xff]
  %v702 = vld [vmem:[%s1 + $0x1448] sm:$0xff]
  %v703 = vld [vmem:[%s1 + $0x1450] sm:$0xff]
  %v704 = vld [vmem:[%s1 + $0x1458] sm:$0xff]
  %v705 = vld [vmem:[%s1 + $0x1460] sm:$0xff]
  %v706 = vld [vmem:[%s1 + $0x1468] sm:$0xff]
  %v707 = vld [vmem:[%s1 + $0x1470] sm:$0xff]
  %v708 = vld [vmem:[%s1 + $0x1478] sm:$0xff]
  %v709 = vld [vmem:[%s1 + $0x1480] sm:$0xff]
  %v710 = vld [vmem:[%s1 + $0x1488] sm:$0xff]
  %v711 = vld [vmem:[%s1 + $0x1490] sm:$0xff]
  %v712 = vld [vmem:[%s1 + $0x1498] sm:$0xff]
  %v713 = vld [vmem:[%s1 + $0x14a0] sm:$0xff]
  %v714 = vld [vmem:[%s1 + $0x14a8] sm:$0xff]
  %v715 = vld [vmem:[%s1 + $0x14b0] sm:$0xff]
  %v716 = vld [vmem:[%s1 + $0x14b8] sm:$0xff]
  %v717 = vld [vmem:[%s1 + $0x14c0] sm:$0xff]
  %v718 = vld [vmem:[%s1 + $0x14c8] sm:$0xff]
  %v719 = vld [vmem:[%s1 + $0x14d0] sm:$0xff]
  %v720 = vld [vmem:[%s1 + $0x14d8] sm:$0xff]
  %v721 = vld [vmem:[%s1 + $0x14e0] sm:$0xff]
  %v722 = vld [vmem:[%s1 + $0x14e8] sm:$0xff]
  %v723 = vld [vmem:[%s1 + $0x14f0] sm:$0xff]
  %v724 = vld [vmem:[%s1 + $0x14f8] sm:$0xff]
  %v725 = vld [vmem:[%s1 + $0x1500] sm:$0xff]
  %v726 = vld [vmem:[%s1 + $0x1508] sm:$0xff]
  %v727 = vld [vmem:[%s1 + $0x1510] sm:$0xff]
  %v728 = vld [vmem:[%s1 + $0x1518] sm:$0xff]
  %v729 = vld [vmem:[%s1 + $0x1520] sm:$0xff]
  %v730 = vld [vmem:[%s1 + $0x1528] sm:$0xff]
  %v731 = vld [vmem:[%s1 + $0x1530] sm:$0xff]
  %v732 = vld [vmem:[%s1 + $0x1538] sm:$0xff]
  %v733 = vld [vmem:[%s1 + $0x1540] sm:$0xff]
  %v734 = vld [vmem:[%s1 + $0x1548] sm:$0xff]
  %v735 = vld [vmem:[%s1 + $0x1550] sm:$0xff]
  %v736 = vld [vmem:[%s1 + $0x1558] sm:$0xff]
  %v737 = vld [vmem:[%s1 + $0x1560] sm:$0xff]
  %v738 = vld [vmem:[%s1 + $0x1568] sm:$0xff]
  %v739 = vld [vmem:[%s1 + $0x1570] sm:$0xff]
  %v740 = vld [vmem:[%s1 + $0x1578] sm:$0xff]
  %v741 = vld [vmem:[%s1 + $0x1580] sm:$0xff]
  %v742 = vld [vmem:[%s1 + $0x1588] sm:$0xff]
  %v743 = vld [vmem:[%s1 + $0x1590] sm:$0xff]
  %v744 = vld [vmem:[%s1 + $0x1598] sm:$0xff]
  %v745 = vld [vmem:[%s1 + $0x15a0] sm:$0xff]
  %v746 = vld [vmem:[%s1 + $0x15a8] sm:$0xff]
  %v747 = vld [vmem:[%s1 + $0x15b0] sm:$0xff]
  %v748 = vld [vmem:[%s1 + $0x15b8] sm:$0xff]
  %v749 = vld [vmem:[%s1 + $0x15c0] sm:$0xff]
  %v750 = vld [vmem:[%s1 + $0x15c8] sm:$0xff]
  %v751 = vld [vmem:[%s1 + $0x15d0] sm:$0xff]
  %v752 = vld [vmem:[%s1 + $0x15d8] sm:$0xff]
  %v753 = vld [vmem:[%s1 + $0x15e0] sm:$0xff]
  %v754 = vld [vmem:[%s1 + $0x15e8] sm:$0xff]
  %v755 = vld [vmem:[%s1 + $0x15f0] sm:$0xff]
  %v756 = vld [vmem:[%s1 + $0x15f8] sm:$0xff]
  %v757 = vld [vmem:[%s1 + $0x1600] sm:$0xff]
  %v758 = vld [vmem:[%s1 + $0x1608] sm:$0xff]
  %v759 = vld [vmem:[%s1 + $0x1610] sm:$0xff]
  %v760 = vld [vmem:[%s1 + $0x1618] sm:$0xff]
  %v761 = vld [vmem:[%s1 + $0x1620] sm:$0xff]
  %v762 = vld [vmem:[%s1 + $0x1628] sm:$0xff]
  %v763 = vld [vmem:[%s1 + $0x1630] sm:$0xff]
  %v764 = vld [vmem:[%s1 + $0x1638] sm:$0xff]
  %v765 = vld [vmem:[%s1 + $0x1640] sm:$0xff]
  %v766 = vld [vmem:[%s1 + $0x1648] sm:$0xff]
  %v767 = vld [vmem:[%s1 + $0x1650] sm:$0xff]
  %v768 = vld [vmem:[%s1 + $0x1658] sm:$0xff]
  %v769 = vld [vmem:[%s1 + $0x1660] sm:$0xff]
  %v770 = vld [vmem:[%s1 + $0x1668] sm:$0xff]
  %v771 = vld [vmem:[%s1 + $0x1670] sm:$0xff]
  %v772 = vld [vmem:[%s1 + $0x1678] sm:$0xff]
  %v773 = vld [vmem:[%s1 + $0x1680] sm:$0xff]
  %v774 = vld [vmem:[%s1 + $0x1688] sm:$0xff]
  %v775 = vld [vmem:[%s1 + $0x1690] sm:$0xff]
  %v776 = vld [vmem:[%s1 + $0x1698] sm:$0xff]
  %v777 = vld [vmem:[%s1 + $0x16a0] sm:$0xff]
  %v778 = vld [vmem:[%s1 + $0x16a8] sm:$0xff]
  %v779 = vld [vmem:[%s1 + $0x16b0] sm:$0xff]
  %v780 = vld [vmem:[%s1 + $0x16b8] sm:$0xff]
  %v781 = vld [vmem:[%s1 + $0x16c0] sm:$0xff]
  %v782 = vld [vmem:[%s1 + $0x16c8] sm:$0xff]
  %v783 = vld [vmem:[%s1 + $0x16d0] sm:$0xff]
  %v784 = vld [vmem:[%s1 + $0x16d8] sm:$0xff]
  %v785 = vld [vmem:[%s1 + $0x16e0] sm:$0xff]
  %v786 = vld [vmem:[%s1 + $0x16e8] sm:$0xff]
  %v787 = vld [vmem:[%s1 + $0x16f0] sm:$0xff]
  %v788 = vld [vmem:[%s1 + $0x16f8] sm:$0xff]
  %v789 = vld [vmem:[%s1 + $0x1700] sm:$0xff]
  %v790 = vld [vmem:[%s1 + $0x1708] sm:$0xff]
  %v791 = vld [vmem:[%s1 + $0x1710] sm:$0xff]
  %v792 = vld [vmem:[%s1 + $0x1718] sm:$0xff]
  %v793 = vld [vmem:[%s1 + $0x1720] sm:$0xff]
  %v794 = vld [vmem:[%s1 + $0x1728] sm:$0xff]
  %v795 = vld [vmem:[%s1 + $0x1730] sm:$0xff]
  %v796 = vld [vmem:[%s1 + $0x1738] sm:$0xff]
  %v797 = vld [vmem:[%s1 + $0x1740] sm:$0xff]
  %v798 = vld [vmem:[%s1 + $0x1748] sm:$0xff]
  %v799 = vld [vmem:[%s1 + $0x1750] sm:$0xff]
  %v800 = vld [vmem:[%s1 + $0x1758] sm:$0xff]
  %v801 = vld [vmem:[%s1 + $0x1760] sm:$0xff]
  %v802 = vld [vmem:[%s1 + $0x1768] sm:$0xff]
  %v803 = vld [vmem:[%s1 + $0x1770] sm:$0xff]
  %v804 = vld [vmem:[%s1 + $0x1778] sm:$0xff]
  %v805 = vld [vmem:[%s1 + $0x1780] sm:$0xff]
  %v806 = vld [vmem:[%s1 + $0x1788] sm:$0xff]
  %v807 = vld [vmem:[%s1 + $0x1790] sm:$0xff]
  %v808 = vld [vmem:[%s1 + $0x1798] sm:$0xff]
  %v809 = vld [vmem:[%s1 + $0x17a0] sm:$0xff]
  %v810 = vld [vmem:[%s1 + $0x17a8] sm:$0xff]
  %v811 = vld [vmem:[%s1 + $0x17b0] sm:$0xff]
  %v812 = vld [vmem:[%s1 + $0x17b8] sm:$0xff]
  %v813 = vld [vmem:[%s1 + $0x17c0] sm:$0xff]
  %v814 = vld [vmem:[%s1 + $0x17c8] sm:$0xff]
  %v815 = vld [vmem:[%s1 + $0x17d0] sm:$0xff]
  %v816 = vld [vmem:[%s1 + $0x17d8] sm:$0xff]
  %v817 = vld [vmem:[%s1 + $0x17e0] sm:$0xff]
  %v818 = vld [vmem:[%s1 + $0x17e8] sm:$0xff]
  %v819 = vld [vmem:[%s1 + $0x17f0] sm:$0xff]
  %v820 = vld [vmem:[%s1 + $0x17f8] sm:$0xff]
  %v821 = vld [vmem:[%s1 + $0x1800] sm:$0xff]
  %v822 = vld [vmem:[%s1 + $0x1808] sm:$0xff]
  %v823 = vld [vmem:[%s1 + $0x1810] sm:$0xff]
  %v824 = vld [vmem:[%s1 + $0x1818] sm:$0xff]
  %v825 = vld [vmem:[%s1 + $0x1820] sm:$0xff]
  %v826 = vld [vmem:[%s1 + $0x1828] sm:$0xff]
  %v827 = vld [vmem:[%s1 + $0x1830] sm:$0xff]
  %v828 = vld [vmem:[%s1 + $0x1838] sm:$0xff]
  %v829 = vld [vmem:[%s1 + $0x1840] sm:$0xff]
  %v830 = vld [vmem:[%s1 + $0x1848] sm:$0xff]
  %v831 = vld [vmem:[%s1 + $0x1850] sm:$0xff]
  %v832 = vld [vmem:[%s1 + $0x1858] sm:$0xff]
  %v833 = vld [vmem:[%s1 + $0x1860] sm:$0xff]
  %v834 = vld [vmem:[%s1 + $0x1868] sm:$0xff]
  %v835 = vld [vmem:[%s1 + $0x1870] sm:$0xff]
  %v836 = vld [vmem:[%s1 + $0x1878] sm:$0xff]
  %v837 = vld [vmem:[%s1 + $0x1880] sm:$0xff]
  %v838 = vld [vmem:[%s1 + $0x1888] sm:$0xff]
  %v839 = vld [vmem:[%s1 + $0x1890] sm:$0xff]
  %v840 = vld [vmem:[%s1 + $0x1898] sm:$0xff]
  %v841 = vld [vmem:[%s1 + $0x18a0] sm:$0xff]
  %v842 = vld [vmem:[%s1 + $0x18a8] sm:$0xff]
  %v843 = vld [vmem:[%s1 + $0x18b0] sm:$0xff]
  %v844 = vld [vmem:[%s1 + $0x18b8] sm:$0xff]
  %v845 = vld [vmem:[%s1 + $0x18c0] sm:$0xff]
  %v846 = vld [vmem:[%s1 + $0x18c8] sm:$0xff]
  %v847 = vld [vmem:[%s1 + $0x18d0] sm:$0xff]
  %v848 = vld [vmem:[%s1 + $0x18d8] sm:$0xff]
  %v849 = vld [vmem:[%s1 + $0x18e0] sm:$0xff]
  %v850 = vld [vmem:[%s1 + $0x18e8] sm:$0xff]
  %v851 = vld [vmem:[%s1 + $0x18f0] sm:$0xff]
  %v852 = vld [vmem:[%s1 + $0x18f8] sm:$0xff]
  %v853 = vld [vmem:[%s1 + $0x1900] sm:$0xff]
  %v854 = vld [vmem:[%s1 + $0x1908] sm:$0xff]
  %v855 = vld [vmem:[%s1 + $0x1910] sm:$0xff]
  %v856 = vld [vmem:[%s1 + $0x1918] sm:$0xff]
  %v857 = vld [vmem:[%s1 + $0x1920] sm:$0xff]
  %v858 = vld [vmem:[%s1 + $0x1928] sm:$0xff]
  %v859 = vld [vmem:[%s1 + $0x1930] sm:$0xff]
  %v860 = vld [vmem:[%s1 + $0x1938] sm:$0xff]
  %v861 = vld [vmem:[%s1 + $0x1940] sm:$0xff]
  %v862 = vld [vmem:[%s1 + $0x1948] sm:$0xff]
  %v863 = vld [vmem:[%s1 + $0x1950] sm:$0xff]
  %v864 = vld [vmem:[%s1 + $0x1958] sm:$0xff]
  %v865 = vld [vmem:[%s1 + $0x1960] sm:$0xff]
  %v866 = vld [vmem:[%s1 + $0x1968] sm:$0xff]
  %v867 = vld [vmem:[%s1 + $0x1970] sm:$0xff]
  %v868 = vld [vmem:[%s1 + $0x1978] sm:$0xff]
  %v869 = vld [vmem:[%s1 + $0x1980] sm:$0xff]
  %v870 = vld [vmem:[%s1 + $0x1988] sm:$0xff]
  %v871 = vld [vmem:[%s1 + $0x1990] sm:$0xff]
  %v872 = vld [vmem:[%s1 + $0x1998] sm:$0xff]
  %v873 = vld [vmem:[%s1 + $0x19a0] sm:$0xff]
  %v874 = vld [vmem:[%s1 + $0x19a8] sm:$0xff]
  %v875 = vld [vmem:[%s1 + $0x19b0] sm:$0xff]
  %v876 = vld [vmem:[%s1 + $0x19b8] sm:$0xff]
  %v877 = vld [vmem:[%s1 + $0x19c0] sm:$0xff]
  %v878 = vld [vmem:[%s1 + $0x19c8] sm:$0xff]
  %v879 = vld [vmem:[%s1 + $0x19d0] sm:$0xff]
  %v880 = vld [vmem:[%s1 + $0x19d8] sm:$0xff]
  %v881 = vld [vmem:[%s1 + $0x19e0] sm:$0xff]
  %v882 = vld [vmem:[%s1 + $0x19e8] sm:$0xff]
  %v883 = vld [vmem:[%s1 + $0x19f0] sm:$0xff]
  %v884 = vld [vmem:[%s1 + $0x19f8] sm:$0xff]
  %v885 = vld [vmem:[%s1 + $0x1a00] sm:$0xff]
  %v886 = vld [vmem:[%s1 + $0x1a08] sm:$0xff]
  %v887 = vld [vmem:[%s1 + $0x1a10] sm:$0xff]
  %v888 = vld [vmem:[%s1 + $0x1a18] sm:$0xff]
  %v889 = vld [vmem:[%s1 + $0x1a20] sm:$0xff]
  %v890 = vld [vmem:[%s1 + $0x1a28] sm:$0xff]
  %v891 = vld [vmem:[%s1 + $0x1a30] sm:$0xff]
  %v892 = vld [vmem:[%s1 + $0x1a38] sm:$0xff]
  %v893 = vld [vmem:[%s1 + $0x1a40] sm:$0xff]
  %v894 = vld [vmem:[%s1 + $0x1a48] sm:$0xff]
  %v895 = vld [vmem:[%s1 + $0x1a50] sm:$0xff]
  %v896 = vld [vmem:[%s1 + $0x1a58] sm:$0xff]
  %v897 = vld [vmem:[%s1 + $0x1a60] sm:$0xff]
  %v898 = vld [vmem:[%s1 + $0x1a68] sm:$0xff]
  %v899 = vld [vmem:[%s1 + $0x1a70] sm:$0xff]
  %v900 = vld [vmem:[%s1 + $0x1a78] sm:$0xff]
  %v901 = vld [vmem:[%s1 + $0x1a80] sm:$0xff]
  %v902 = vld [vmem:[%s1 + $0x1a88] sm:$0xff]
  %v903 = vld [vmem:[%s1 + $0x1a90] sm:$0xff]
  %v904 = vld [vmem:[%s1 + $0x1a98] sm:$0xff]
  %v905 = vld [vmem:[%s1 + $0x1aa0] sm:$0xff]
  %v906 = vld [vmem:[%s1 + $0x1aa8] sm:$0xff]
  %v907 = vld [vmem:[%s1 + $0x1ab0] sm:$0xff]
  %v908 = vld [vmem:[%s1 + $0x1ab8] sm:$0xff]
  %v909 = vld [vmem:[%s1 + $0x1ac0] sm:$0xff]
  %v910 = vld [vmem:[%s1 + $0x1ac8] sm:$0xff]
  %v911 = vld [vmem:[%s1 + $0x1ad0] sm:$0xff]
  %v912 = vld [vmem:[%s1 + $0x1ad8] sm:$0xff]
  %v913 = vld [vmem:[%s1 + $0x1ae0] sm:$0xff]
  %v914 = vld [vmem:[%s1 + $0x1ae8] sm:$0xff]
  %v915 = vld [vmem:[%s1 + $0x1af0] sm:$0xff]
  %v916 = vld [vmem:[%s1 + $0x1af8] sm:$0xff]
  %v917 = vld [vmem:[%s1 + $0x1b00] sm:$0xff]
  %v918 = vld [vmem:[%s1 + $0x1b08] sm:$0xff]
  %v919 = vld [vmem:[%s1 + $0x1b10] sm:$0xff]
  %v920 = vld [vmem:[%s1 + $0x1b18] sm:$0xff]
  %v921 = vld [vmem:[%s1 + $0x1b20] sm:$0xff]
  %v922 = vld [vmem:[%s1 + $0x1b28] sm:$0xff]
  %v923 = vld [vmem:[%s1 + $0x1b30] sm:$0xff]
  %v924 = vld [vmem:[%s1 + $0x1b38] sm:$0xff]
  %v925 = vld [vmem:[%s1 + $0x1b40] sm:$0xff]
  %v926 = vld [vmem:[%s1 + $0x1b48] sm:$0xff]
  %v927 = vld [vmem:[%s1 + $0x1b50] sm:$0xff]
  %v928 = vld [vmem:[%s1 + $0x1b58] sm:$0xff]
  %v929 = vld [vmem:[%s1 + $0x1b60] sm:$0xff]
  %v930 = vld [vmem:[%s1 + $0x1b68] sm:$0xff]
  %v931 = vld [vmem:[%s1 + $0x1b70] sm:$0xff]
  %v932 = vld [vmem:[%s1 + $0x1b78] sm:$0xff]
  %v933 = vld [vmem:[%s1 + $0x1b80] sm:$0xff]
  %v934 = vld [vmem:[%s1 + $0x1b88] sm:$0xff]
  %v935 = vld [vmem:[%s1 + $0x1b90] sm:$0xff]
  %v936 = vld [vmem:[%s1 + $0x1b98] sm:$0xff]
  %v937 = vld [vmem:[%s1 + $0x1ba0] sm:$0xff]
  %v938 = vld [vmem:[%s1 + $0x1ba8] sm:$0xff]
  %v939 = vld [vmem:[%s1 + $0x1bb0] sm:$0xff]
  %v940 = vld [vmem:[%s1 + $0x1bb8] sm:$0xff]
  %v941 = vld [vmem:[%s1 + $0x1bc0] sm:$0xff]
  %v942 = vld [vmem:[%s1 + $0x1bc8] sm:$0xff]
  %v943 = vld [vmem:[%s1 + $0x1bd0] sm:$0xff]
  %v944 = vld [vmem:[%s1 + $0x1bd8] sm:$0xff]
  %v945 = vld [vmem:[%s1 + $0x1be0] sm:$0xff]
  %v946 = vld [vmem:[%s1 + $0x1be8] sm:$0xff]
  %v947 = vld [vmem:[%s1 + $0x1bf0] sm:$0xff]
  %v948 = vld [vmem:[%s1 + $0x1bf8] sm:$0xff]
  %v949 = vld [vmem:[%s1 + $0x1c00] sm:$0xff]
  %v950 = vld [vmem:[%s1 + $0x1c08] sm:$0xff]
  %v951 = vld [vmem:[%s1 + $0x1c10] sm:$0xff]
  %v952 = vld [vmem:[%s1 + $0x1c18] sm:$0xff]
  %v953 = vld [vmem:[%s1 + $0x1c20] sm:$0xff]
  %v954 = vld [vmem:[%s1 + $0x1c28] sm:$0xff]
  %v955 = vld [vmem:[%s1 + $0x1c30] sm:$0xff]
  %v956 = vld [vmem:[%s1 + $0x1c38] sm:$0xff]
  %v957 = vld [vmem:[%s1 + $0x1c40] sm:$0xff]
  %v958 = vld [vmem:[%s1 + $0x1c48] sm:$0xff]
  %v959 = vld [vmem:[%s1 + $0x1c50] sm:$0xff]
  %v960 = vld [vmem:[%s1 + $0x1c58] sm:$0xff]
  %v961 = vld [vmem:[%s1 + $0x1c60] sm:$0xff]
  %v962 = vld [vmem:[%s1 + $0x1c68] sm:$0xff]
  %v963 = vld [vmem:[%s1 + $0x1c70] sm:$0xff]
  %v964 = vld [vmem:[%s1 + $0x1c78] sm:$0xff]
  %v965 = vld [vmem:[%s1 + $0x1c80] sm:$0xff]
  %v966 = vld [vmem:[%s1 + $0x1c88] sm:$0xff]
  %v967 = vld [vmem:[%s1 + $0x1c90] sm:$0xff]
  %v968 = vld [vmem:[%s1 + $0x1c98] sm:$0xff]
  %v969 = vld [vmem:[%s1 + $0x1ca0] sm:$0xff]
  %v970 = vld [vmem:[%s1 + $0x1ca8] sm:$0xff]
  %v971 = vld [vmem:[%s1 + $0x1cb0] sm:$0xff]
  %v972 = vld [vmem:[%s1 + $0x1cb8] sm:$0xff]
  %v973 = vld [vmem:[%s1 + $0x1cc0] sm:$0xff]
  %v974 = vld [vmem:[%s1 + $0x1cc8] sm:$0xff]
  %v975 = vld [vmem:[%s1 + $0x1cd0] sm:$0xff]
  %v976 = vld [vmem:[%s1 + $0x1cd8] sm:$0xff]
  %v977 = vld [vmem:[%s1 + $0x1ce0] sm:$0xff]
  %v978 = vld [vmem:[%s1 + $0x1ce8] sm:$0xff]
  %v979 = vld [vmem:[%s1 + $0x1cf0] sm:$0xff]
  %v980 = vld [vmem:[%s1 + $0x1cf8] sm:$0xff]
  %v981 = vld [vmem:[%s1 + $0x1d00] sm:$0xff]
  %v982 = vld [vmem:[%s1 + $0x1d08] sm:$0xff]
  %v983 = vld [vmem:[%s1 + $0x1d10] sm:$0xff]
  %v984 = vld [vmem:[%s1 + $0x1d18] sm:$0xff]
  %v985 = vld [vmem:[%s1 + $0x1d20] sm:$0xff]
  %v986 = vld [vmem:[%s1 + $0x1d28] sm:$0xff]
  %v987 = vld [vmem:[%s1 + $0x1d30] sm:$0xff]
  %v988 = vld [vmem:[%s1 + $0x1d38] sm:$0xff]
  %v989 = vld [vmem:[%s1 + $0x1d40] sm:$0xff]
  %v990 = vld [vmem:[%s1 + $0x1d48] sm:$0xff]
  %v991 = vld [vmem:[%s1 + $0x1d50] sm:$0xff]
  %v992 = vld [vmem:[%s1 + $0x1d58] sm:$0xff]
  %v993 = vld [vmem:[%s1 + $0x1d60] sm:$0xff]
  %v994 = vld [vmem:[%s1 + $0x1d68] sm:$0xff]
  %v995 = vld [vmem:[%s1 + $0x1d70] sm:$0xff]
  %v996 = vld [vmem:[%s1 + $0x1d78] sm:$0xff]
  %v997 = vld [vmem:[%s1 + $0x1d80] sm:$0xff]
  %v998 = vld [vmem:[%s1 + $0x1d88] sm:$0xff]
  %v999 = vld [vmem:[%s1 + $0x1d90] sm:$0xff]
  %v1000 = vld [vmem:[%s1 + $0x1d98] sm:$0xff]
  %v1001 = vld [vmem:[%s1 + $0x1da0] sm:$0xff]
  %v1002 = vld [vmem:[%s1 + $0x1da8] sm:$0xff]
  %v1003 = vld [vmem:[%s1 + $0x1db0] sm:$0xff]
  %v1004 = vld [vmem:[%s1 + $0x1db8] sm:$0xff]
  %v1005 = vld [vmem:[%s1 + $0x1dc0] sm:$0xff]
  %v1006 = vld [vmem:[%s1 + $0x1dc8] sm:$0xff]
  %v1007 = vld [vmem:[%s1 + $0x1dd0] sm:$0xff]
  %v1008 = vld [vmem:[%s1 + $0x1dd8] sm:$0xff]
  %v1009 = vld [vmem:[%s1 + $0x1de0] sm:$0xff]
  %v1010 = vld [vmem:[%s1 + $0x1de8] sm:$0xff]
  %v1011 = vld [vmem:[%s1 + $0x1df0] sm:$0xff]
  %v1012 = vld [vmem:[%s1 + $0x1df8] sm:$0xff]
  %v1013 = vld [vmem:[%s1 + $0x1e00] sm:$0xff]
  %v1014 = vld [vmem:[%s1 + $0x1e08] sm:$0xff]
  %v1015 = vld [vmem:[%s1 + $0x1e10] sm:$0xff]
  %v1016 = vld [vmem:[%s1 + $0x1e18] sm:$0xff]
  %v1017 = vld [vmem:[%s1 + $0x1e20] sm:$0xff]
  %v1018 = vld [vmem:[%s1 + $0x1e28] sm:$0xff]
  %v1019 = vld [vmem:[%s1 + $0x1e30] sm:$0xff]
  %v1020 = vld [vmem:[%s1 + $0x1e38] sm:$0xff]
  %v1021 = vld [vmem:[%s1 + $0x1e40] sm:$0xff]
  %v1022 = vld [vmem:[%s1 + $0x1e48] sm:$0xff]
  %v1023 = vld [vmem:[%s1 + $0x1e50] sm:$0xff]
  %v1024 = vld [vmem:[%s1 + $0x1e58] sm:$0xff]
  %v1025 = vld [vmem:[%s1 + $0x1e60] sm:$0xff]
  %v1026 = vld [vmem:[%s1 + $0x1e68] sm:$0xff]
  %v1027 = vld [vmem:[%s1 + $0x1e70] sm:$0xff]
  %v1028 = vld [vmem:[%s1 + $0x1e78] sm:$0xff]
  %v1029 = vld [vmem:[%s1 + $0x1e80] sm:$0xff]
  %v1030 = vld [vmem:[%s1 + $0x1e88] sm:$0xff]
  %v1031 = vld [vmem:[%s1 + $0x1e90] sm:$0xff]
  %v1032 = vld [vmem:[%s1 + $0x1e98] sm:$0xff]
  %v1033 = vld [vmem:[%s1 + $0x1ea0] sm:$0xff]
  %v1034 = vld [vmem:[%s1 + $0x1ea8] sm:$0xff]
  %v1035 = vld [vmem:[%s1 + $0x1eb0] sm:$0xff]
  %v1036 = vld [vmem:[%s1 + $0x1eb8] sm:$0xff]
  %v1037 = vld [vmem:[%s1 + $0x1ec0] sm:$0xff]
  %v1038 = vld [vmem:[%s1 + $0x1ec8] sm:$0xff]
  %v1039 = vld [vmem:[%s1 + $0x1ed0] sm:$0xff]
  %v1040 = vld [vmem:[%s1 + $0x1ed8] sm:$0xff]
  %v1041 = vld [vmem:[%s1 + $0x1ee0] sm:$0xff]
  %v1042 = vld [vmem:[%s1 + $0x1ee8] sm:$0xff]
  %v1043 = vld [vmem:[%s1 + $0x1ef0] sm:$0xff]
  %v1044 = vld [vmem:[%s1 + $0x1ef8] sm:$0xff]
  %v1045 = vld [vmem:[%s1 + $0x1f00] sm:$0xff]
  %v1046 = vld [vmem:[%s1 + $0x1f08] sm:$0xff]
  %v1047 = vld [vmem:[%s1 + $0x1f10] sm:$0xff]
  %v1048 = vld [vmem:[%s1 + $0x1f18] sm:$0xff]
  %v1049 = vld [vmem:[%s1 + $0x1f20] sm:$0xff]
  %v1050 = vld [vmem:[%s1 + $0x1f28] sm:$0xff]
  %v1051 = vld [vmem:[%s1 + $0x1f30] sm:$0xff]
  %v1052 = vld [vmem:[%s1 + $0x1f38] sm:$0xff]
  %v1053 = vld [vmem:[%s1 + $0x1f40] sm:$0xff]
  %v1054 = vld [vmem:[%s1 + $0x1f48] sm:$0xff]
  %v1055 = vld [vmem:[%s1 + $0x1f50] sm:$0xff]
  %v1056 = vld [vmem:[%s1 + $0x1f58] sm:$0xff]
  %v1057 = vld [vmem:[%s1 + $0x1f60] sm:$0xff]
  %v1058 = vld [vmem:[%s1 + $0x1f68] sm:$0xff]
  %v1059 = vld [vmem:[%s1 + $0x1f70] sm:$0xff]
  %v1060 = vld [vmem:[%s1 + $0x1f78] sm:$0xff]
  %v1061 = vld [vmem:[%s1 + $0x1f80] sm:$0xff]
  %v1062 = vld [vmem:[%s1 + $0x1f88] sm:$0xff]
  %v1063 = vld [vmem:[%s1 + $0x1f90] sm:$0xff]
  %v1064 = vld [vmem:[%s1 + $0x1f98] sm:$0xff]
  %v1065 = vld [vmem:[%s1 + $0x1fa0] sm:$0xff]
  %v1066 = vld [vmem:[%s1 + $0x1fa8] sm:$0xff]
  %v1067 = vld [vmem:[%s1 + $0x1fb0] sm:$0xff]
  %v1068 = vld [vmem:[%s1 + $0x1fb8] sm:$0xff]
  %v1069 = vld [vmem:[%s1 + $0x1fc0] sm:$0xff]
  %v1070 = vld [vmem:[%s1 + $0x1fc8] sm:$0xff]
  %v1071 = vld [vmem:[%s1 + $0x1fd0] sm:$0xff]
  %v1072 = vld [vmem:[%s1 + $0x1fd8] sm:$0xff]
  %v1073 = vld [vmem:[%s1 + $0x1fe0] sm:$0xff]
  %v1074 = vld [vmem:[%s1 + $0x1fe8] sm:$0xff]
  %v1075 = vld [vmem:[%s1 + $0x1ff0] sm:$0xff]
  %v1076 = vld [vmem:[%s1 + $0x1ff8] sm:$0xff]
  %v1077 = vld [vmem:[%s1 + $0x2000] sm:$0xff]
  %v1078 = vld [vmem:[%s1 + $0x2008] sm:$0xff]
  %v1079 = vld [vmem:[%s1 + $0x2010] sm:$0xff]
  %v1080 = vld [vmem:[%s1 + $0x2018] sm:$0xff]
  %v1081 = vld [vmem:[%s1 + $0x2020] sm:$0xff]
  %v1082 = vld [vmem:[%s1 + $0x2028] sm:$0xff]
  %v1083 = vld [vmem:[%s1 + $0x2030] sm:$0xff]
  %v1084 = vld [vmem:[%s1 + $0x2038] sm:$0xff]
  %v1085 = vld [vmem:[%s1 + $0x2040] sm:$0xff]
  %v1086 = vld [vmem:[%s1 + $0x2048] sm:$0xff]
  %v1087 = vld [vmem:[%s1 + $0x2050] sm:$0xff]
  %v1088 = vld [vmem:[%s1 + $0x2058] sm:$0xff]
  %v1089 = vld [vmem:[%s1 + $0x2060] sm:$0xff]
  %v1090 = vld [vmem:[%s1 + $0x2068] sm:$0xff]
  %v1091 = vld [vmem:[%s1 + $0x2070] sm:$0xff]
  %v1092 = vld [vmem:[%s1 + $0x2078] sm:$0xff]
  %v1093 = vld [vmem:[%s1 + $0x2080] sm:$0xff]
  %v1094 = vld [vmem:[%s1 + $0x2088] sm:$0xff]
  %v1095 = vld [vmem:[%s1 + $0x2090] sm:$0xff]
  %v1096 = vld [vmem:[%s1 + $0x2098] sm:$0xff]
  %v1097 = vld [vmem:[%s1 + $0x20a0] sm:$0xff]
  %v1098 = vld [vmem:[%s1 + $0x20a8] sm:$0xff]
  %v1099 = vld [vmem:[%s1 + $0x20b0] sm:$0xff]
  %v1100 = vld [vmem:[%s1 + $0x20b8] sm:$0xff]
  %v1101 = vld [vmem:[%s1 + $0x20c0] sm:$0xff]
  %v1102 = vld [vmem:[%s1 + $0x20c8] sm:$0xff]
  %v1103 = vld [vmem:[%s1 + $0x20d0] sm:$0xff]
  %v1104 = vld [vmem:[%s1 + $0x20d8] sm:$0xff]
  %v1105 = vld [vmem:[%s1 + $0x20e0] sm:$0xff]
  %v1106 = vld [vmem:[%s1 + $0x20e8] sm:$0xff]
  %v1107 = vld [vmem:[%s1 + $0x20f0] sm:$0xff]
  %v1108 = vld [vmem:[%s1 + $0x20f8] sm:$0xff]
  %v1109 = vld [vmem:[%s1 + $0x2100] sm:$0xff]
  %v1110 = vld [vmem:[%s1 + $0x2108] sm:$0xff]
  %v1111 = vld [vmem:[%s1 + $0x2110] sm:$0xff]
  %v1112 = vld [vmem:[%s1 + $0x2118] sm:$0xff]
  %v1113 = vld [vmem:[%s1 + $0x2120] sm:$0xff]
  %v1114 = vld [vmem:[%s1 + $0x2128] sm:$0xff]
  %v1115 = vld [vmem:[%s1 + $0x2130] sm:$0xff]
  %v1116 = vld [vmem:[%s1 + $0x2138] sm:$0xff]
  %v1117 = vld [vmem:[%s1 + $0x2140] sm:$0xff]
  %v1118 = vld [vmem:[%s1 + $0x2148] sm:$0xff]
  %v1119 = vld [vmem:[%s1 + $0x2150] sm:$0xff]
  %v1120 = vld [vmem:[%s1 + $0x2158] sm:$0xff]
  %v1121 = vld [vmem:[%s1 + $0x2160] sm:$0xff]
  %v1122 = vld [vmem:[%s1 + $0x2168] sm:$0xff]
  %v1123 = vld [vmem:[%s1 + $0x2170] sm:$0xff]
  %v1124 = vld [vmem:[%s1 + $0x2178] sm:$0xff]
  %v1125 = vld [vmem:[%s1 + $0x2180] sm:$0xff]
  %v1126 = vld [vmem:[%s1 + $0x2188] sm:$0xff]
  %v1127 = vld [vmem:[%s1 + $0x2190] sm:$0xff]
  %v1128 = vld [vmem:[%s1 + $0x2198] sm:$0xff]
  %v1129 = vld [vmem:[%s1 + $0x21a0] sm:$0xff]
  %v1130 = vld [vmem:[%s1 + $0x21a8] sm:$0xff]
  %v1131 = vld [vmem:[%s1 + $0x21b0] sm:$0xff]
  %v1132 = vld [vmem:[%s1 + $0x21b8] sm:$0xff]
  %v1133 = vld [vmem:[%s1 + $0x21c0] sm:$0xff]
  %v1134 = vld [vmem:[%s1 + $0x21c8] sm:$0xff]
  %v1135 = vld [vmem:[%s1 + $0x21d0] sm:$0xff]
  %v1136 = vld [vmem:[%s1 + $0x21d8] sm:$0xff]
  %v1137 = vld [vmem:[%s1 + $0x21e0] sm:$0xff]
  %v1138 = vld [vmem:[%s1 + $0x21e8] sm:$0xff]
  %v1139 = vld [vmem:[%s1 + $0x21f0] sm:$0xff]
  %v1140 = vld [vmem:[%s1 + $0x21f8] sm:$0xff]
  %v1141 = vld [vmem:[%s1 + $0x2200] sm:$0xff]
  %v1142 = vld [vmem:[%s1 + $0x2208] sm:$0xff]
  %v1143 = vld [vmem:[%s1 + $0x2210] sm:$0xff]
  %v1144 = vld [vmem:[%s1 + $0x2218] sm:$0xff]
  %v1145 = vld [vmem:[%s1 + $0x2220] sm:$0xff]
  %v1146 = vld [vmem:[%s1 + $0x2228] sm:$0xff]
  %v1147 = vld [vmem:[%s1 + $0x2230] sm:$0xff]
  %v1148 = vld [vmem:[%s1 + $0x2238] sm:$0xff]
  %v1149 = vld [vmem:[%s1 + $0x2240] sm:$0xff]
  %v1150 = vld [vmem:[%s1 + $0x2248] sm:$0xff]
  %v1151 = vld [vmem:[%s1 + $0x2250] sm:$0xff]
  %v1152 = vld [vmem:[%s1 + $0x2258] sm:$0xff]
  %v1153 = vld [vmem:[%s1 + $0x2260] sm:$0xff]
  %v1154 = vld [vmem:[%s1 + $0x2268] sm:$0xff]
  %v1155 = vld [vmem:[%s1 + $0x2270] sm:$0xff]
  %v1156 = vld [vmem:[%s1 + $0x2278] sm:$0xff]
  %v1157 = vld [vmem:[%s1 + $0x2280] sm:$0xff]
  %v1158 = vld [vmem:[%s1 + $0x2288] sm:$0xff]
  %v1159 = vld [vmem:[%s1 + $0x2290] sm:$0xff]
  %v1160 = vld [vmem:[%s1 + $0x2298] sm:$0xff]
  %v1161 = vld [vmem:[%s1 + $0x22a0] sm:$0xff]
  %v1162 = vld [vmem:[%s1 + $0x22a8] sm:$0xff]
  %v1163 = vld [vmem:[%s1 + $0x22b0] sm:$0xff]
  %v1164 = vld [vmem:[%s1 + $0x22b8] sm:$0xff]
  %v1165 = vld [vmem:[%s1 + $0x22c0] sm:$0xff]
  %v1166 = vld [vmem:[%s1 + $0x22c8] sm:$0xff]
  %v1167 = vld [vmem:[%s1 + $0x22d0] sm:$0xff]
  %v1168 = vld [vmem:[%s1 + $0x22d8] sm:$0xff]
  %v1169 = vld [vmem:[%s1 + $0x22e0] sm:$0xff]
  %v1170 = vld [vmem:[%s1 + $0x22e8] sm:$0xff]
  %v1171 = vld [vmem:[%s1 + $0x22f0] sm:$0xff]
  %v1172 = vld [vmem:[%s1 + $0x22f8] sm:$0xff]
  %v1173 = vld [vmem:[%s1 + $0x2300] sm:$0xff]
  %v1174 = vld [vmem:[%s1 + $0x2308] sm:$0xff]
  %v1175 = vld [vmem:[%s1 + $0x2310] sm:$0xff]
  %v1176 = vld [vmem:[%s1 + $0x2318] sm:$0xff]
  %v1177 = vld [vmem:[%s1 + $0x2320] sm:$0xff]
  %v1178 = vld [vmem:[%s1 + $0x2328] sm:$0xff]
  %v1179 = vld [vmem:[%s1 + $0x2330] sm:$0xff]
  %v1180 = vld [vmem:[%s1 + $0x2338] sm:$0xff]
  %v1181 = vld [vmem:[%s1 + $0x2340] sm:$0xff]
  %v1182 = vld [vmem:[%s1 + $0x2348] sm:$0xff]
  %v1183 = vld [vmem:[%s1 + $0x2350] sm:$0xff]
  %v1184 = vld [vmem:[%s1 + $0x2358] sm:$0xff]
  %v1185 = vld [vmem:[%s1 + $0x2360] sm:$0xff]
  %v1186 = vld [vmem:[%s1 + $0x2368] sm:$0xff]
  %v1187 = vld [vmem:[%s1 + $0x2370] sm:$0xff]
  %v1188 = vld [vmem:[%s1 + $0x2378] sm:$0xff]
  %v1189 = vld [vmem:[%s1 + $0x2380] sm:$0xff]
  %v1190 = vld [vmem:[%s1 + $0x2388] sm:$0xff]
  %v1191 = vld [vmem:[%s1 + $0x2390] sm:$0xff]
  %v1192 = vld [vmem:[%s1 + $0x2398] sm:$0xff]
  %v1193 = vld [vmem:[%s1 + $0x23a0] sm:$0xff]
  %v1194 = vld [vmem:[%s1 + $0x23a8] sm:$0xff]
  %v1195 = vld [vmem:[%s1 + $0x23b0] sm:$0xff]
  %v1196 = vld [vmem:[%s1 + $0x23b8] sm:$0xff]
  %v1197 = vld [vmem:[%s1 + $0x23c0] sm:$0xff]
  %v1198 = vld [vmem:[%s1 + $0x23c8] sm:$0xff]
  %v1199 = vld [vmem:[%s1 + $0x23d0] sm:$0xff]
  %v1200 = vld [vmem:[%s1 + $0x23d8] sm:$0xff]
  %v1201 = vld [vmem:[%s1 + $0x23e0] sm:$0xff]
  %v1202 = vld [vmem:[%s1 + $0x23e8] sm:$0xff]
  %v1203 = vld [vmem:[%s1 + $0x23f0] sm:$0xff]
  %v1204 = vld [vmem:[%s1 + $0x23f8] sm:$0xff]
  %v1205 = vld [vmem:[%s1 + $0x2400] sm:$0xff]
  %v1206 = vld [vmem:[%s1 + $0x2408] sm:$0xff]
  %v1207 = vld [vmem:[%s1 + $0x2410] sm:$0xff]
  %v1208 = vld [vmem:[%s1 + $0x2418] sm:$0xff]
  %v1209 = vld [vmem:[%s1 + $0x2420] sm:$0xff]
  %v1210 = vld [vmem:[%s1 + $0x2428] sm:$0xff]
  %v1211 = vld [vmem:[%s1 + $0x2430] sm:$0xff]
  %v1212 = vld [vmem:[%s1 + $0x2438] sm:$0xff]
  %v1213 = vld [vmem:[%s1 + $0x2440] sm:$0xff]
  %v1214 = vld [vmem:[%s1 + $0x2448] sm:$0xff]
  %v1215 = vld [vmem:[%s1 + $0x2450] sm:$0xff]
  %v1216 = vld [vmem:[%s1 + $0x2458] sm:$0xff]
  %v1217 = vld [vmem:[%s1 + $0x2460] sm:$0xff]
  %v1218 = vld [vmem:[%s1 + $0x2468] sm:$0xff]
  %v1219 = vld [vmem:[%s1 + $0x2470] sm:$0xff]
  %v1220 = vld [vmem:[%s1 + $0x2478] sm:$0xff]
  %v1221 = vld [vmem:[%s1 + $0x2480] sm:$0xff]
  %v1222 = vld [vmem:[%s1 + $0x2488] sm:$0xff]
  %v1223 = vld [vmem:[%s1 + $0x2490] sm:$0xff]
  %v1224 = vld [vmem:[%s1 + $0x2498] sm:$0xff]
  %v1225 = vld [vmem:[%s1 + $0x24a0] sm:$0xff]
  %v1226 = vld [vmem:[%s1 + $0x24a8] sm:$0xff]
  %v1227 = vld [vmem:[%s1 + $0x24b0] sm:$0xff]
  %v1228 = vld [vmem:[%s1 + $0x24b8] sm:$0xff]
  %v1229 = vld [vmem:[%s1 + $0x24c0] sm:$0xff]
  %v1230 = vld [vmem:[%s1 + $0x24c8] sm:$0xff]
  %v1231 = vld [vmem:[%s1 + $0x24d0] sm:$0xff]
  %v1232 = vld [vmem:[%s1 + $0x24d8] sm:$0xff]
  %v1233 = vld [vmem:[%s1 + $0x24e0] sm:$0xff]
  %v1234 = vld [vmem:[%s1 + $0x24e8] sm:$0xff]
  %v1235 = vld [vmem:[%s1 + $0x24f0] sm:$0xff]
  %v1236 = vld [vmem:[%s1 + $0x24f8] sm:$0xff]
  %v1237 = vld [vmem:[%s1 + $0x2500] sm:$0xff]
  %v1238 = vld [vmem:[%s1 + $0x2508] sm:$0xff]
  %v1239 = vld [vmem:[%s1 + $0x2510] sm:$0xff]
  %v1240 = vld [vmem:[%s1 + $0x2518] sm:$0xff]
  %v1241 = vld [vmem:[%s1 + $0x2520] sm:$0xff]
  %v1242 = vld [vmem:[%s1 + $0x2528] sm:$0xff]
  %v1243 = vld [vmem:[%s1 + $0x2530] sm:$0xff]
  %v1244 = vld [vmem:[%s1 + $0x2538] sm:$0xff]
  %v1245 = vld [vmem:[%s1 + $0x2540] sm:$0xff]
  %v1246 = vld [vmem:[%s1 + $0x2548] sm:$0xff]
  %v1247 = vld [vmem:[%s1 + $0x2550] sm:$0xff]
  %v1248 = vld [vmem:[%s1 + $0x2558] sm:$0xff]
  %v1249 = vld [vmem:[%s1 + $0x2560] sm:$0xff]
  %v1250 = vld [vmem:[%s1 + $0x2568] sm:$0xff]
  %v1251 = vld [vmem:[%s1 + $0x2570] sm:$0xff]
  %v1252 = vld [vmem:[%s1 + $0x2578] sm:$0xff]
  %v1253 = vld [vmem:[%s1 + $0x2580] sm:$0xff]
  %v1254 = vld [vmem:[%s1 + $0x2588] sm:$0xff]
  %v1255 = vld [vmem:[%s1 + $0x2590] sm:$0xff]
  %v1256 = vld [vmem:[%s1 + $0x2598] sm:$0xff]
  %v1257 = vld [vmem:[%s1 + $0x25a0] sm:$0xff]
  %v1258 = vld [vmem:[%s1 + $0x25a8] sm:$0xff]
  %v1259 = vld [vmem:[%s1 + $0x25b0] sm:$0xff]
  %v1260 = vld [vmem:[%s1 + $0x25b8] sm:$0xff]
  %v1261 = vld [vmem:[%s1 + $0x25c0] sm:$0xff]
  %v1262 = vld [vmem:[%s1 + $0x25c8] sm:$0xff]
  %v1263 = vld [vmem:[%s1 + $0x25d0] sm:$0xff]
  %v1264 = vld [vmem:[%s1 + $0x25d8] sm:$0xff]
  %v1265 = vld [vmem:[%s1 + $0x25e0] sm:$0xff]
  %v1266 = vld [vmem:[%s1 + $0x25e8] sm:$0xff]
  %v1267 = vld [vmem:[%s1 + $0x25f0] sm:$0xff]
  %v1268 = vld [vmem:[%s1 + $0x25f8] sm:$0xff]
  %v1269 = vld [vmem:[%s1 + $0x2600] sm:$0xff]
  %v1270 = vld [vmem:[%s1 + $0x2608] sm:$0xff]
  %v1271 = vld [vmem:[%s1 + $0x2610] sm:$0xff]
  %v1272 = vld [vmem:[%s1 + $0x2618] sm:$0xff]
  %v1273 = vld [vmem:[%s1 + $0x2620] sm:$0xff]
  %v1274 = vld [vmem:[%s1 + $0x2628] sm:$0xff]
  %v1275 = vld [vmem:[%s1 + $0x2630] sm:$0xff]
  %v1276 = vld [vmem:[%s1 + $0x2638] sm:$0xff]
  %v1277 = vld [vmem:[%s1 + $0x2640] sm:$0xff]
  %v1278 = vld [vmem:[%s1 + $0x2648] sm:$0xff]
  %v1279 = vld [vmem:[%s1 + $0x2650] sm:$0xff]
  %v1280 = vld [vmem:[%s1 + $0x2658] sm:$0xff]
  %v1281 = vld [vmem:[%s1 + $0x2660] sm:$0xff]
  %v1282 = vld [vmem:[%s1 + $0x2668] sm:$0xff]
  %v1283 = vld [vmem:[%s1 + $0x2670] sm:$0xff]
  %v1284 = vld [vmem:[%s1 + $0x2678] sm:$0xff]
  %v1285 = vld [vmem:[%s1 + $0x2680] sm:$0xff]
  %v1286 = vld [vmem:[%s1 + $0x2688] sm:$0xff]
  %v1287 = vld [vmem:[%s1 + $0x2690] sm:$0xff]
  %v1288 = vld [vmem:[%s1 + $0x2698] sm:$0xff]
  %v1289 = vld [vmem:[%s1 + $0x26a0] sm:$0xff]
  %v1290 = vld [vmem:[%s1 + $0x26a8] sm:$0xff]
  %v1291 = vld [vmem:[%s1 + $0x26b0] sm:$0xff]
  %v1292 = vld [vmem:[%s1 + $0x26b8] sm:$0xff]
  %v1293 = vld [vmem:[%s1 + $0x26c0] sm:$0xff]
  %v1294 = vld [vmem:[%s1 + $0x26c8] sm:$0xff]
  %v1295 = vld [vmem:[%s1 + $0x26d0] sm:$0xff]
  %v1296 = vld [vmem:[%s1 + $0x26d8] sm:$0xff]
  %v1297 = vld [vmem:[%s1 + $0x26e0] sm:$0xff]
  %v1298 = vld [vmem:[%s1 + $0x26e8] sm:$0xff]
  %v1299 = vld [vmem:[%s1 + $0x26f0] sm:$0xff]
  %v1300 = vld [vmem:[%s1 + $0x26f8] sm:$0xff]
  %v1301 = vld [vmem:[%s1 + $0x2700] sm:$0xff]
  %v1302 = vld [vmem:[%s1 + $0x2708] sm:$0xff]
  %v1303 = vld [vmem:[%s1 + $0x2710] sm:$0xff]
  %v1304 = vld [vmem:[%s1 + $0x2718] sm:$0xff]
  %v1305 = vld [vmem:[%s1 + $0x2720] sm:$0xff]
  %v1306 = vld [vmem:[%s1 + $0x2728] sm:$0xff]
  %v1307 = vld [vmem:[%s1 + $0x2730] sm:$0xff]
  %v1308 = vld [vmem:[%s1 + $0x2738] sm:$0xff]
  %v1309 = vld [vmem:[%s1 + $0x2740] sm:$0xff]
  %v1310 = vld [vmem:[%s1 + $0x2748] sm:$0xff]
  %v1311 = vld [vmem:[%s1 + $0x2750] sm:$0xff]
  %v1312 = vld [vmem:[%s1 + $0x2758] sm:$0xff]
  %v1313 = vld [vmem:[%s1 + $0x2760] sm:$0xff]
  %v1314 = vld [vmem:[%s1 + $0x2768] sm:$0xff]
  %v1315 = vld [vmem:[%s1 + $0x2770] sm:$0xff]
  %v1316 = vld [vmem:[%s1 + $0x2778] sm:$0xff]
  %v1317 = vld [vmem:[%s1 + $0x2780] sm:$0xff]
  %v1318 = vld [vmem:[%s1 + $0x2788] sm:$0xff]
  %v1319 = vld [vmem:[%s1 + $0x2790] sm:$0xff]
  %v1320 = vld [vmem:[%s1 + $0x2798] sm:$0xff]
  %v1321 = vld [vmem:[%s1 + $0x27a0] sm:$0xff]
  %v1322 = vld [vmem:[%s1 + $0x27a8] sm:$0xff]
  %v1323 = vld [vmem:[%s1 + $0x27b0] sm:$0xff]
  %v1324 = vld [vmem:[%s1 + $0x27b8] sm:$0xff]
  %v1325 = vld [vmem:[%s1 + $0x27c0] sm:$0xff]
  %v1326 = vld [vmem:[%s1 + $0x27c8] sm:$0xff]
  %v1327 = vld [vmem:[%s1 + $0x27d0] sm:$0xff]
  %v1328 = vld [vmem:[%s1 + $0x27d8] sm:$0xff]
  %v1329 = vld [vmem:[%s1 + $0x27e0] sm:$0xff]
  %v1330 = vld [vmem:[%s1 + $0x27e8] sm:$0xff]
  %v1331 = vld [vmem:[%s1 + $0x27f0] sm:$0xff]
  %v1332 = vld [vmem:[%s1 + $0x27f8] sm:$0xff]
  %v1333 = vld [vmem:[%s1 + $0x2800] sm:$0xff]
  %v1334 = vld [vmem:[%s1 + $0x2808] sm:$0xff]
  %v1335 = vld [vmem:[%s1 + $0x2810] sm:$0xff]
  %v1336 = vld [vmem:[%s1 + $0x2818] sm:$0xff]
  %v1337 = vld [vmem:[%s1 + $0x2820] sm:$0xff]
  %v1338 = vld [vmem:[%s1 + $0x2828] sm:$0xff]
  %v1339 = vld [vmem:[%s1 + $0x2830] sm:$0xff]
  %v1340 = vld [vmem:[%s1 + $0x2838] sm:$0xff]
  %v1341 = vld [vmem:[%s1 + $0x2840] sm:$0xff]
  %v1342 = vld [vmem:[%s1 + $0x2848] sm:$0xff]
  %v1343 = vld [vmem:[%s1 + $0x2850] sm:$0xff]
  %v1344 = vld [vmem:[%s1 + $0x2858] sm:$0xff]
  %v1345 = vld [vmem:[%s1 + $0x2860] sm:$0xff]
  %v1346 = vld [vmem:[%s1 + $0x2868] sm:$0xff]
  %v1347 = vld [vmem:[%s1 + $0x2870] sm:$0xff]
  %v1348 = vld [vmem:[%s1 + $0x2878] sm:$0xff]
  %v1349 = vld [vmem:[%s1 + $0x2880] sm:$0xff]
  %v1350 = vld [vmem:[%s1 + $0x2888] sm:$0xff]
  %v1351 = vld [vmem:[%s1 + $0x2890] sm:$0xff]
  %v1352 = vld [vmem:[%s1 + $0x2898] sm:$0xff]
  %v1353 = vld [vmem:[%s1 + $0x28a0] sm:$0xff]
  %v1354 = vld [vmem:[%s1 + $0x28a8] sm:$0xff]
  %v1355 = vld [vmem:[%s1 + $0x28b0] sm:$0xff]
  %v1356 = vld [vmem:[%s1 + $0x28b8] sm:$0xff]
  %v1357 = vld [vmem:[%s1 + $0x28c0] sm:$0xff]
  %v1358 = vld [vmem:[%s1 + $0x28c8] sm:$0xff]
  %v1359 = vld [vmem:[%s1 + $0x28d0] sm:$0xff]
  %v1360 = vld [vmem:[%s1 + $0x28d8] sm:$0xff]
  %v1361 = vld [vmem:[%s1 + $0x28e0] sm:$0xff]
  %v1362 = vld [vmem:[%s1 + $0x28e8] sm:$0xff]
  %v1363 = vld [vmem:[%s1 + $0x28f0] sm:$0xff]
  %v1364 = vld [vmem:[%s1 + $0x28f8] sm:$0xff]
  %v1365 = vld [vmem:[%s1 + $0x2900] sm:$0xff]
  %v1366 = vld [vmem:[%s1 + $0x2908] sm:$0xff]
  %v1367 = vld [vmem:[%s1 + $0x2910] sm:$0xff]
  %v1368 = vld [vmem:[%s1 + $0x2918] sm:$0xff]
  %v1369 = vld [vmem:[%s1 + $0x2920] sm:$0xff]
  %v1370 = vld [vmem:[%s1 + $0x2928] sm:$0xff]
  %v1371 = vld [vmem:[%s1 + $0x2930] sm:$0xff]
  %v1372 = vld [vmem:[%s1 + $0x2938] sm:$0xff]
  %v1373 = vld [vmem:[%s1 + $0x2940] sm:$0xff]
  %v1374 = vld [vmem:[%s1 + $0x2948] sm:$0xff]
  %v1375 = vld [vmem:[%s1 + $0x2950] sm:$0xff]
  %v1376 = vld [vmem:[%s1 + $0x2958] sm:$0xff]
  %v1377 = vld [vmem:[%s1 + $0x2960] sm:$0xff]
  %v1378 = vld [vmem:[%s1 + $0x2968] sm:$0xff]
  %v1379 = vld [vmem:[%s1 + $0x2970] sm:$0xff]
  %v1380 = vld [vmem:[%s1 + $0x2978] sm:$0xff]
  %v1381 = vld [vmem:[%s1 + $0x2980] sm:$0xff]
  %v1382 = vld [vmem:[%s1 + $0x2988] sm:$0xff]
  %v1383 = vld [vmem:[%s1 + $0x2990] sm:$0xff]
  %v1384 = vld [vmem:[%s1 + $0x2998] sm:$0xff]
  %v1385 = vld [vmem:[%s1 + $0x29a0] sm:$0xff]
  %v1386 = vld [vmem:[%s1 + $0x29a8] sm:$0xff]
  %v1387 = vld [vmem:[%s1 + $0x29b0] sm:$0xff]
  %v1388 = vld [vmem:[%s1 + $0x29b8] sm:$0xff]
  %v1389 = vld [vmem:[%s1 + $0x29c0] sm:$0xff]
  %v1390 = vld [vmem:[%s1 + $0x29c8] sm:$0xff]
  %v1391 = vld [vmem:[%s1 + $0x29d0] sm:$0xff]
  %v1392 = vld [vmem:[%s1 + $0x29d8] sm:$0xff]
  %v1393 = vld [vmem:[%s1 + $0x29e0] sm:$0xff]
  %v1394 = vld [vmem:[%s1 + $0x29e8] sm:$0xff]
  %v1395 = vld [vmem:[%s1 + $0x29f0] sm:$0xff]
  %v1396 = vld [vmem:[%s1 + $0x29f8] sm:$0xff]
  %v1397 = vld [vmem:[%s1 + $0x2a00] sm:$0xff]
  %v1398 = vld [vmem:[%s1 + $0x2a08] sm:$0xff]
  %v1399 = vld [vmem:[%s1 + $0x2a10] sm:$0xff]
  %v1400 = vld [vmem:[%s1 + $0x2a18] sm:$0xff]
  %v1401 = vld [vmem:[%s1 + $0x2a20] sm:$0xff]
  %v1402 = vld [vmem:[%s1 + $0x2a28] sm:$0xff]
  %v1403 = vld [vmem:[%s1 + $0x2a30] sm:$0xff]
  %v1404 = vld [vmem:[%s1 + $0x2a38] sm:$0xff]
  %v1405 = vld [vmem:[%s1 + $0x2a40] sm:$0xff]
  %v1406 = vld [vmem:[%s1 + $0x2a48] sm:$0xff]
  %v1407 = vld [vmem:[%s1 + $0x2a50] sm:$0xff]
  %v1408 = vld [vmem:[%s1 + $0x2a58] sm:$0xff]
  %v1409 = vld [vmem:[%s1 + $0x2a60] sm:$0xff]
  %v1410 = vld [vmem:[%s1 + $0x2a68] sm:$0xff]
  %v1411 = vld [vmem:[%s1 + $0x2a70] sm:$0xff]
  %v1412 = vld [vmem:[%s1 + $0x2a78] sm:$0xff]
  %v1413 = vld [vmem:[%s1 + $0x2a80] sm:$0xff]
  %v1414 = vld [vmem:[%s1 + $0x2a88] sm:$0xff]
  %v1415 = vld [vmem:[%s1 + $0x2a90] sm:$0xff]
  %v1416 = vld [vmem:[%s1 + $0x2a98] sm:$0xff]
  %v1417 = vld [vmem:[%s1 + $0x2aa0] sm:$0xff]
  %v1418 = vld [vmem:[%s1 + $0x2aa8] sm:$0xff]
  %v1419 = vld [vmem:[%s1 + $0x2ab0] sm:$0xff]
  %v1420 = vld [vmem:[%s1 + $0x2ab8] sm:$0xff]
  %v1421 = vld [vmem:[%s1 + $0x2ac0] sm:$0xff]
  %v1422 = vld [vmem:[%s1 + $0x2ac8] sm:$0xff]
  %v1423 = vld [vmem:[%s1 + $0x2ad0] sm:$0xff]
  %v1424 = vld [vmem:[%s1 + $0x2ad8] sm:$0xff]
  %v1425 = vld [vmem:[%s1 + $0x2ae0] sm:$0xff]
  %v1426 = vld [vmem:[%s1 + $0x2ae8] sm:$0xff]
  %v1427 = vld [vmem:[%s1 + $0x2af0] sm:$0xff]
  %v1428 = vld [vmem:[%s1 + $0x2af8] sm:$0xff]
  %v1429 = vld [vmem:[%s1 + $0x2b00] sm:$0xff]
  %v1430 = vld [vmem:[%s1 + $0x2b08] sm:$0xff]
  %v1431 = vld [vmem:[%s1 + $0x2b10] sm:$0xff]
  %v1432 = vld [vmem:[%s1 + $0x2b18] sm:$0xff]
  %v1433 = vld [vmem:[%s1 + $0x2b20] sm:$0xff]
  %v1434 = vld [vmem:[%s1 + $0x2b28] sm:$0xff]
  %v1435 = vld [vmem:[%s1 + $0x2b30] sm:$0xff]
  %v1436 = vld [vmem:[%s1 + $0x2b38] sm:$0xff]
  %v1437 = vld [vmem:[%s1 + $0x2b40] sm:$0xff]
  %v1438 = vld [vmem:[%s1 + $0x2b48] sm:$0xff]
  %v1439 = vld [vmem:[%s1 + $0x2b50] sm:$0xff]
  %v1440 = vld [vmem:[%s1 + $0x2b58] sm:$0xff]
  %v1441 = vld [vmem:[%s1 + $0x2b60] sm:$0xff]
  %v1442 = vld [vmem:[%s1 + $0x2b68] sm:$0xff]
  %v1443 = vld [vmem:[%s1 + $0x2b70] sm:$0xff]
  %v1444 = vld [vmem:[%s1 + $0x2b78] sm:$0xff]
  %v1445 = vld [vmem:[%s1 + $0x2b80] sm:$0xff]
  %v1446 = vld [vmem:[%s1 + $0x2b88] sm:$0xff]
  %v1447 = vld [vmem:[%s1 + $0x2b90] sm:$0xff]
  %v1448 = vld [vmem:[%s1 + $0x2b98] sm:$0xff]
  %v1449 = vld [vmem:[%s1 + $0x2ba0] sm:$0xff]
  %v1450 = vld [vmem:[%s1 + $0x2ba8] sm:$0xff]
  %v1451 = vld [vmem:[%s1 + $0x2bb0] sm:$0xff]
  %v1452 = vld [vmem:[%s1 + $0x2bb8] sm:$0xff]
  %v1453 = vld [vmem:[%s1 + $0x2bc0] sm:$0xff]
  %v1454 = vld [vmem:[%s1 + $0x2bc8] sm:$0xff]
  %v1455 = vld [vmem:[%s1 + $0x2bd0] sm:$0xff]
  %v1456 = vld [vmem:[%s1 + $0x2bd8] sm:$0xff]
  %v1457 = vld [vmem:[%s1 + $0x2be0] sm:$0xff]
  %v1458 = vld [vmem:[%s1 + $0x2be8] sm:$0xff]
  %v1459 = vld [vmem:[%s1 + $0x2bf0] sm:$0xff]
  %v1460 = vld [vmem:[%s1 + $0x2bf8] sm:$0xff]
  %v1461 = vld [vmem:[%s1 + $0x2c00] sm:$0xff]
  %v1462 = vld [vmem:[%s1 + $0x2c08] sm:$0xff]
  %v1463 = vld [vmem:[%s1 + $0x2c10] sm:$0xff]
  %v1464 = vld [vmem:[%s1 + $0x2c18] sm:$0xff]
  %v1465 = vld [vmem:[%s1 + $0x2c20] sm:$0xff]
  %v1466 = vld [vmem:[%s1 + $0x2c28] sm:$0xff]
  %v1467 = vld [vmem:[%s1 + $0x2c30] sm:$0xff]
  %v1468 = vld [vmem:[%s1 + $0x2c38] sm:$0xff]
  %v1469 = vld [vmem:[%s1 + $0x2c40] sm:$0xff]
  %v1470 = vld [vmem:[%s1 + $0x2c48] sm:$0xff]
  %v1471 = vld [vmem:[%s1 + $0x2c50] sm:$0xff]
  %v1472 = vld [vmem:[%s1 + $0x2c58] sm:$0xff]
  %v1473 = vld [vmem:[%s1 + $0x2c60] sm:$0xff]
  %v1474 = vld [vmem:[%s1 + $0x2c68] sm:$0xff]
  %v1475 = vld [vmem:[%s1 + $0x2c70] sm:$0xff]
  %v1476 = vld [vmem:[%s1 + $0x2c78] sm:$0xff]
  %v1477 = vld [vmem:[%s1 + $0x2c80] sm:$0xff]
  %v1478 = vld [vmem:[%s1 + $0x2c88] sm:$0xff]
  %v1479 = vld [vmem:[%s1 + $0x2c90] sm:$0xff]
  %v1480 = vld [vmem:[%s1 + $0x2c98] sm:$0xff]
  %v1481 = vld [vmem:[%s1 + $0x2ca0] sm:$0xff]
  %v1482 = vld [vmem:[%s1 + $0x2ca8] sm:$0xff]
  %v1483 = vld [vmem:[%s1 + $0x2cb0] sm:$0xff]
  %v1484 = vld [vmem:[%s1 + $0x2cb8] sm:$0xff]
  %v1485 = vld [vmem:[%s1 + $0x2cc0] sm:$0xff]
  %v1486 = vld [vmem:[%s1 + $0x2cc8] sm:$0xff]
  %v1487 = vld [vmem:[%s1 + $0x2cd0] sm:$0xff]
  %v1488 = vld [vmem:[%s1 + $0x2cd8] sm:$0xff]
  %v1489 = vld [vmem:[%s1 + $0x2ce0] sm:$0xff]
  %v1490 = vld [vmem:[%s1 + $0x2ce8] sm:$0xff]
  %v1491 = vld [vmem:[%s1 + $0x2cf0] sm:$0xff]
  %v1492 = vld [vmem:[%s1 + $0x2cf8] sm:$0xff]
  %v1493 = vld [vmem:[%s1 + $0x2d00] sm:$0xff]
  %v1494 = vld [vmem:[%s1 + $0x2d08] sm:$0xff]
  %v1495 = vld [vmem:[%s1 + $0x2d10] sm:$0xff]
  %v1496 = vld [vmem:[%s1 + $0x2d18] sm:$0xff]
  %v1497 = vld [vmem:[%s1 + $0x2d20] sm:$0xff]
  %v1498 = vld [vmem:[%s1 + $0x2d28] sm:$0xff]
  %v1499 = vld [vmem:[%s1 + $0x2d30] sm:$0xff]
  %v1500 = vld [vmem:[%s1 + $0x2d38] sm:$0xff]
  %v1501 = vld [vmem:[%s1 + $0x2d40] sm:$0xff]
  %v1502 = vld [vmem:[%s1 + $0x2d48] sm:$0xff]
  %v1503 = vld [vmem:[%s1 + $0x2d50] sm:$0xff]
  %v1504 = vld [vmem:[%s1 + $0x2d58] sm:$0xff]
  %v1505 = vld [vmem:[%s1 + $0x2d60] sm:$0xff]
  %v1506 = vld [vmem:[%s1 + $0x2d68] sm:$0xff]
  %v1507 = vld [vmem:[%s1 + $0x2d70] sm:$0xff]
  %v1508 = vld [vmem:[%s1 + $0x2d78] sm:$0xff]
  %v1509 = vld [vmem:[%s1 + $0x2d80] sm:$0xff]
  %v1510 = vld [vmem:[%s1 + $0x2d88] sm:$0xff]
  %v1511 = vld [vmem:[%s1 + $0x2d90] sm:$0xff]
  %v1512 = vld [vmem:[%s1 + $0x2d98] sm:$0xff]
  %v1513 = vld [vmem:[%s1 + $0x2da0] sm:$0xff]
  %v1514 = vld [vmem:[%s1 + $0x2da8] sm:$0xff]
  %v1515 = vld [vmem:[%s1 + $0x2db0] sm:$0xff]
  %v1516 = vld [vmem:[%s1 + $0x2db8] sm:$0xff]
  %v1517 = vld [vmem:[%s1 + $0x2dc0] sm:$0xff]
  %v1518 = vld [vmem:[%s1 + $0x2dc8] sm:$0xff]
  %v1519 = vld [vmem:[%s1 + $0x2dd0] sm:$0xff]
  %v1520 = vld [vmem:[%s1 + $0x2dd8] sm:$0xff]
  %v1521 = vld [vmem:[%s1 + $0x2de0] sm:$0xff]
  %v1522 = vld [vmem:[%s1 + $0x2de8] sm:$0xff]
  %v1523 = vld [vmem:[%s1 + $0x2df0] sm:$0xff]
  %v1524 = vld [vmem:[%s1 + $0x2df8] sm:$0xff]
  %v1525 = vld [vmem:[%s1 + $0x2e00] sm:$0xff]
  %v1526 = vld [vmem:[%s1 + $0x2e08] sm:$0xff]
  %v1527 = vld [vmem:[%s1 + $0x2e10] sm:$0xff]
  %v1528 = vld [vmem:[%s1 + $0x2e18] sm:$0xff]
  %v1529 = vld [vmem:[%s1 + $0x2e20] sm:$0xff]
  %v1530 = vld [vmem:[%s1 + $0x2e28] sm:$0xff]
  %v1531 = vld [vmem:[%s1 + $0x2e30] sm:$0xff]
  %v1532 = vld [vmem:[%s1 + $0x2e38] sm:$0xff]
  %v1533 = vld [vmem:[%s1 + $0x2e40] sm:$0xff]
  %v1534 = vld [vmem:[%s1 + $0x2e48] sm:$0xff]
  %v1535 = vld [vmem:[%s1 + $0x2e50] sm:$0xff]
  %v1536 = vld [vmem:[%s1 + $0x2e58] sm:$0xff]
  %v1537 = vld [vmem:[%s1 + $0x2e60] sm:$0xff]
  %v1538 = vld [vmem:[%s1 + $0x2e68] sm:$0xff]
  %v1539 = vld [vmem:[%s1 + $0x2e70] sm:$0xff]
  %v1540 = vld [vmem:[%s1 + $0x2e78] sm:$0xff]
  %v1541 = vld [vmem:[%s1 + $0x2e80] sm:$0xff]
  %v1542 = vld [vmem:[%s1 + $0x2e88] sm:$0xff]
  %v1543 = vld [vmem:[%s1 + $0x2e90] sm:$0xff]
  %v1544 = vld [vmem:[%s1 + $0x2e98] sm:$0xff]
  %v1545 = vld [vmem:[%s1 + $0x2ea0] sm:$0xff]
  %v1546 = vld [vmem:[%s1 + $0x2ea8] sm:$0xff]
  %v1547 = vld [vmem:[%s1 + $0x2eb0] sm:$0xff]
  %v1548 = vld [vmem:[%s1 + $0x2eb8] sm:$0xff]
  %v1549 = vld [vmem:[%s1 + $0x2ec0] sm:$0xff]
  %v1550 = vld [vmem:[%s1 + $0x2ec8] sm:$0xff]
  %v1551 = vld [vmem:[%s1 + $0x2ed0] sm:$0xff]
  %v1552 = vld [vmem:[%s1 + $0x2ed8] sm:$0xff]
  %v1553 = vld [vmem:[%s1 + $0x2ee0] sm:$0xff]
  %v1554 = vld [vmem:[%s1 + $0x2ee8] sm:$0xff]
  %v1555 = vld [vmem:[%s1 + $0x2ef0] sm:$0xff]
  %v1556 = vld [vmem:[%s1 + $0x2ef8] sm:$0xff]
  %v1557 = vld [vmem:[%s1 + $0x2f00] sm:$0xff]
  %v1558 = vld [vmem:[%s1 + $0x2f08] sm:$0xff]
  %v1559 = vld [vmem:[%s1 + $0x2f10] sm:$0xff]
  %v1560 = vld [vmem:[%s1 + $0x2f18] sm:$0xff]
  %v1561 = vld [vmem:[%s1 + $0x2f20] sm:$0xff]
  %v1562 = vld [vmem:[%s1 + $0x2f28] sm:$0xff]
  %v1563 = vld [vmem:[%s1 + $0x2f30] sm:$0xff]
  %v1564 = vld [vmem:[%s1 + $0x2f38] sm:$0xff]
  %v1565 = vld [vmem:[%s1 + $0x2f40] sm:$0xff]
  %v1566 = vld [vmem:[%s1 + $0x2f48] sm:$0xff]
  %v1567 = vld [vmem:[%s1 + $0x2f50] sm:$0xff]
  %v1568 = vld [vmem:[%s1 + $0x2f58] sm:$0xff]
  %v1569 = vld [vmem:[%s1 + $0x2f60] sm:$0xff]
  %v1570 = vld [vmem:[%s1 + $0x2f68] sm:$0xff]
  %v1571 = vld [vmem:[%s1 + $0x2f70] sm:$0xff]
  %v1572 = vld [vmem:[%s1 + $0x2f78] sm:$0xff]
  %v1573 = vld [vmem:[%s1 + $0x2f80] sm:$0xff]
  %v1574 = vld [vmem:[%s1 + $0x2f88] sm:$0xff]
  %v1575 = vld [vmem:[%s1 + $0x2f90] sm:$0xff]
  %v1576 = vld [vmem:[%s1 + $0x2f98] sm:$0xff]
  %v1577 = vld [vmem:[%s1 + $0x2fa0] sm:$0xff]
  %v1578 = vld [vmem:[%s1 + $0x2fa8] sm:$0xff]
  %v1579 = vld [vmem:[%s1 + $0x2fb0] sm:$0xff]
  %v1580 = vld [vmem:[%s1 + $0x2fb8] sm:$0xff]
  %v1581 = vld [vmem:[%s1 + $0x2fc0] sm:$0xff]
  %v1582 = vld [vmem:[%s1 + $0x2fc8] sm:$0xff]
  %v1583 = vld [vmem:[%s1 + $0x2fd0] sm:$0xff]
  %v1584 = vld [vmem:[%s1 + $0x2fd8] sm:$0xff]
  %v1585 = vld [vmem:[%s1 + $0x2fe0] sm:$0xff]
  %v1586 = vld [vmem:[%s1 + $0x2fe8] sm:$0xff]
  %v1587 = vld [vmem:[%s1 + $0x2ff0] sm:$0xff]
  %v1588 = vld [vmem:[%s1 + $0x2ff8] sm:$0xff]
  %v1589 = vld [vmem:[%s1 + $0x3000] sm:$0xff]
  %v1590 = vld [vmem:[%s1 + $0x3008] sm:$0xff]
  %v1591 = vld [vmem:[%s1 + $0x3010] sm:$0xff]
  %v1592 = vld [vmem:[%s1 + $0x3018] sm:$0xff]
  %v1593 = vld [vmem:[%s1 + $0x3020] sm:$0xff]
  %v1594 = vld [vmem:[%s1 + $0x3028] sm:$0xff]
  %v1595 = vld [vmem:[%s1 + $0x3030] sm:$0xff]
  %v1596 = vld [vmem:[%s1 + $0x3038] sm:$0xff]
  %v1597 = vld [vmem:[%s1 + $0x3040] sm:$0xff]
  %v1598 = vld [vmem:[%s1 + $0x3048] sm:$0xff]
  %v1599 = vld [vmem:[%s1 + $0x3050] sm:$0xff]
  %v1600 = vld [vmem:[%s1 + $0x3058] sm:$0xff]
  %v1601 = vld [vmem:[%s1 + $0x3060] sm:$0xff]
  %v1602 = vld [vmem:[%s1 + $0x3068] sm:$0xff]
  %v1603 = vld [vmem:[%s1 + $0x3070] sm:$0xff]
  %v1604 = vld [vmem:[%s1 + $0x3078] sm:$0xff]
  %v1605 = vld [vmem:[%s1 + $0x3080] sm:$0xff]
  %v1606 = vld [vmem:[%s1 + $0x3088] sm:$0xff]
  %v1607 = vld [vmem:[%s1 + $0x3090] sm:$0xff]
  %v1608 = vld [vmem:[%s1 + $0x3098] sm:$0xff]
  %v1609 = vld [vmem:[%s1 + $0x30a0] sm:$0xff]
  %v1610 = vld [vmem:[%s1 + $0x30a8] sm:$0xff]
  %v1611 = vld [vmem:[%s1 + $0x30b0] sm:$0xff]
  %v1612 = vld [vmem:[%s1 + $0x30b8] sm:$0xff]
  %v1613 = vld [vmem:[%s1 + $0x30c0] sm:$0xff]
  %v1614 = vld [vmem:[%s1 + $0x30c8] sm:$0xff]
  %v1615 = vld [vmem:[%s1 + $0x30d0] sm:$0xff]
  %v1616 = vld [vmem:[%s1 + $0x30d8] sm:$0xff]
  %v1617 = vld [vmem:[%s1 + $0x30e0] sm:$0xff]
  %v1618 = vld [vmem:[%s1 + $0x30e8] sm:$0xff]
  %v1619 = vld [vmem:[%s1 + $0x30f0] sm:$0xff]
  %v1620 = vld [vmem:[%s1 + $0x30f8] sm:$0xff]
  %v1621 = vld [vmem:[%s1 + $0x3100] sm:$0xff]
  %v1622 = vld [vmem:[%s1 + $0x3108] sm:$0xff]
  %v1623 = vld [vmem:[%s1 + $0x3110] sm:$0xff]
  %v1624 = vld [vmem:[%s1 + $0x3118] sm:$0xff]
  %v1625 = vld [vmem:[%s1 + $0x3120] sm:$0xff]
  %v1626 = vld [vmem:[%s1 + $0x3128] sm:$0xff]
  %v1627 = vld [vmem:[%s1 + $0x3130] sm:$0xff]
  %v1628 = vld [vmem:[%s1 + $0x3138] sm:$0xff]
  %v1629 = vld [vmem:[%s1 + $0x3140] sm:$0xff]
  %v1630 = vld [vmem:[%s1 + $0x3148] sm:$0xff]
  %v1631 = vld [vmem:[%s1 + $0x3150] sm:$0xff]
  %v1632 = vld [vmem:[%s1 + $0x3158] sm:$0xff]
  %v1633 = vld [vmem:[%s1 + $0x3160] sm:$0xff]
  %v1634 = vld [vmem:[%s1 + $0x3168] sm:$0xff]
  %v1635 = vld [vmem:[%s1 + $0x3170] sm:$0xff]
  %v1636 = vld [vmem:[%s1 + $0x3178] sm:$0xff]
  %v1637 = vld [vmem:[%s1 + $0x3180] sm:$0xff]
  %v1638 = vld [vmem:[%s1 + $0x3188] sm:$0xff]
  %v1639 = vld [vmem:[%s1 + $0x3190] sm:$0xff]
  %v1640 = vld [vmem:[%s1 + $0x3198] sm:$0xff]
  %v1641 = vld [vmem:[%s1 + $0x31a0] sm:$0xff]
  %v1642 = vld [vmem:[%s1 + $0x31a8] sm:$0xff]
  %v1643 = vld [vmem:[%s1 + $0x31b0] sm:$0xff]
  %v1644 = vld [vmem:[%s1 + $0x31b8] sm:$0xff]
  %v1645 = vld [vmem:[%s1 + $0x31c0] sm:$0xff]
  %v1646 = vld [vmem:[%s1 + $0x31c8] sm:$0xff]
  %v1647 = vld [vmem:[%s1 + $0x31d0] sm:$0xff]
  %v1648 = vld [vmem:[%s1 + $0x31d8] sm:$0xff]
  %v1649 = vld [vmem:[%s1 + $0x31e0] sm:$0xff]
  %v1650 = vld [vmem:[%s1 + $0x31e8] sm:$0xff]
  %v1651 = vld [vmem:[%s1 + $0x31f0] sm:$0xff]
  %v1652 = vld [vmem:[%s1 + $0x31f8] sm:$0xff]
  %v1653 = vld [vmem:[%s1 + $0x3200] sm:$0xff]
  %v1654 = vld [vmem:[%s1 + $0x3208] sm:$0xff]
  %v1655 = vld [vmem:[%s1 + $0x3210] sm:$0xff]
  %v1656 = vld [vmem:[%s1 + $0x3218] sm:$0xff]
  %v1657 = vld [vmem:[%s1 + $0x3220] sm:$0xff]
  %v1658 = vld [vmem:[%s1 + $0x3228] sm:$0xff]
  %v1659 = vld [vmem:[%s1 + $0x3230] sm:$0xff]
  %v1660 = vld [vmem:[%s1 + $0x3238] sm:$0xff]
  %v1661 = vld [vmem:[%s1 + $0x3240] sm:$0xff]
  %v1662 = vld [vmem:[%s1 + $0x3248] sm:$0xff]
  %v1663 = vld [vmem:[%s1 + $0x3250] sm:$0xff]
  %v1664 = vld [vmem:[%s1 + $0x3258] sm:$0xff]
  %v1665 = vld [vmem:[%s1 + $0x3260] sm:$0xff]
  %v1666 = vld [vmem:[%s1 + $0x3268] sm:$0xff]
  %v1667 = vld [vmem:[%s1 + $0x3270] sm:$0xff]
  %v1668 = vld [vmem:[%s1 + $0x3278] sm:$0xff]
  %v1669 = vld [vmem:[%s1 + $0x3280] sm:$0xff]
  %v1670 = vld [vmem:[%s1 + $0x3288] sm:$0xff]
  %v1671 = vld [vmem:[%s1 + $0x3290] sm:$0xff]
  %v1672 = vld [vmem:[%s1 + $0x3298] sm:$0xff]
  %v1673 = vld [vmem:[%s1 + $0x32a0] sm:$0xff]
  %v1674 = vld [vmem:[%s1 + $0x32a8] sm:$0xff]
  %v1675 = vld [vmem:[%s1 + $0x32b0] sm:$0xff]
  %v1676 = vld [vmem:[%s1 + $0x32b8] sm:$0xff]
  %v1677 = vld [vmem:[%s1 + $0x32c0] sm:$0xff]
  %v1678 = vld [vmem:[%s1 + $0x32c8] sm:$0xff]
  %v1679 = vld [vmem:[%s1 + $0x32d0] sm:$0xff]
  %v1680 = vld [vmem:[%s1 + $0x32d8] sm:$0xff]
  %v1681 = vld [vmem:[%s1 + $0x32e0] sm:$0xff]
  %v1682 = vld [vmem:[%s1 + $0x32e8] sm:$0xff]
  %v1683 = vld [vmem:[%s1 + $0x32f0] sm:$0xff]
  %v1684 = vld [vmem:[%s1 + $0x32f8] sm:$0xff]
  %v1685 = vld [vmem:[%s1 + $0x3300] sm:$0xff]
  %v1686 = vld [vmem:[%s1 + $0x3308] sm:$0xff]
  %v1687 = vld [vmem:[%s1 + $0x3310] sm:$0xff]
  %v1688 = vld [vmem:[%s1 + $0x3318] sm:$0xff]
  %v1689 = vld [vmem:[%s1 + $0x3320] sm:$0xff]
  %v1690 = vld [vmem:[%s1 + $0x3328] sm:$0xff]
  %v1691 = vld [vmem:[%s1 + $0x3330] sm:$0xff]
  %v1692 = vld [vmem:[%s1 + $0x3338] sm:$0xff]
  %v1693 = vld [vmem:[%s1 + $0x3340] sm:$0xff]
  %v1694 = vld [vmem:[%s1 + $0x3348] sm:$0xff]
  %v1695 = vld [vmem:[%s1 + $0x3350] sm:$0xff]
  %v1696 = vld [vmem:[%s1 + $0x3358] sm:$0xff]
  %v1697 = vld [vmem:[%s1 + $0x3360] sm:$0xff]
  %v1698 = vld [vmem:[%s1 + $0x3368] sm:$0xff]
  %v1699 = vld [vmem:[%s1 + $0x3370] sm:$0xff]
  %v1700 = vld [vmem:[%s1 + $0x3378] sm:$0xff]
  %v1701 = vld [vmem:[%s1 + $0x3380] sm:$0xff]
  %v1702 = vld [vmem:[%s1 + $0x3388] sm:$0xff]
  %v1703 = vld [vmem:[%s1 + $0x3390] sm:$0xff]
  %v1704 = vld [vmem:[%s1 + $0x3398] sm:$0xff]
  %v1705 = vld [vmem:[%s1 + $0x33a0] sm:$0xff]
  %v1706 = vld [vmem:[%s1 + $0x33a8] sm:$0xff]
  %v1707 = vld [vmem:[%s1 + $0x33b0] sm:$0xff]
  %v1708 = vld [vmem:[%s1 + $0x33b8] sm:$0xff]
  %v1709 = vld [vmem:[%s1 + $0x33c0] sm:$0xff]
  %v1710 = vld [vmem:[%s1 + $0x33c8] sm:$0xff]
  %v1711 = vld [vmem:[%s1 + $0x33d0] sm:$0xff]
  %v1712 = vld [vmem:[%s1 + $0x33d8] sm:$0xff]
  %v1713 = vld [vmem:[%s1 + $0x33e0] sm:$0xff]
  %v1714 = vld [vmem:[%s1 + $0x33e8] sm:$0xff]
  %v1715 = vld [vmem:[%s1 + $0x33f0] sm:$0xff]
  %v1716 = vld [vmem:[%s1 + $0x33f8] sm:$0xff]
  %v1717 = vld [vmem:[%s1 + $0x3400] sm:$0xff]
  %v1718 = vld [vmem:[%s1 + $0x3408] sm:$0xff]
  %v1719 = vld [vmem:[%s1 + $0x3410] sm:$0xff]
  %v1720 = vld [vmem:[%s1 + $0x3418] sm:$0xff]
  %v1721 = vld [vmem:[%s1 + $0x3420] sm:$0xff]
  %v1722 = vld [vmem:[%s1 + $0x3428] sm:$0xff]
  %v1723 = vld [vmem:[%s1 + $0x3430] sm:$0xff]
  %v1724 = vld [vmem:[%s1 + $0x3438] sm:$0xff]
  %v1725 = vld [vmem:[%s1 + $0x3440] sm:$0xff]
  %v1726 = vld [vmem:[%s1 + $0x3448] sm:$0xff]
  %v1727 = vld [vmem:[%s1 + $0x3450] sm:$0xff]
  %v1728 = vld [vmem:[%s1 + $0x3458] sm:$0xff]
  %v1729 = vld [vmem:[%s1 + $0x3460] sm:$0xff]
  %v1730 = vld [vmem:[%s1 + $0x3468] sm:$0xff]
  %v1731 = vld [vmem:[%s1 + $0x3470] sm:$0xff]
  %v1732 = vld [vmem:[%s1 + $0x3478] sm:$0xff]
  %v1733 = vld [vmem:[%s1 + $0x3480] sm:$0xff]
  %v1734 = vld [vmem:[%s1 + $0x3488] sm:$0xff]
  %v1735 = vld [vmem:[%s1 + $0x3490] sm:$0xff]
  %v1736 = vld [vmem:[%s1 + $0x3498] sm:$0xff]
  %v1737 = vld [vmem:[%s1 + $0x34a0] sm:$0xff]
  %v1738 = vld [vmem:[%s1 + $0x34a8] sm:$0xff]
  %v1739 = vld [vmem:[%s1 + $0x34b0] sm:$0xff]
  %v1740 = vld [vmem:[%s1 + $0x34b8] sm:$0xff]
  %v1741 = vld [vmem:[%s1 + $0x34c0] sm:$0xff]
  %v1742 = vld [vmem:[%s1 + $0x34c8] sm:$0xff]
  %v1743 = vld [vmem:[%s1 + $0x34d0] sm:$0xff]
  %v1744 = vld [vmem:[%s1 + $0x34d8] sm:$0xff]
  %v1745 = vld [vmem:[%s1 + $0x34e0] sm:$0xff]
  %v1746 = vld [vmem:[%s1 + $0x34e8] sm:$0xff]
  %v1747 = vld [vmem:[%s1 + $0x34f0] sm:$0xff]
  %v1748 = vld [vmem:[%s1 + $0x34f8] sm:$0xff]
  %v1749 = vld [vmem:[%s1 + $0x3500] sm:$0xff]
  %v1750 = vld [vmem:[%s1 + $0x3508] sm:$0xff]
  %v1751 = vld [vmem:[%s1 + $0x3510] sm:$0xff]
  %v1752 = vld [vmem:[%s1 + $0x3518] sm:$0xff]
  %v1753 = vld [vmem:[%s1 + $0x3520] sm:$0xff]
  %v1754 = vld [vmem:[%s1 + $0x3528] sm:$0xff]
  %v1755 = vld [vmem:[%s1 + $0x3530] sm:$0xff]
  %v1756 = vld [vmem:[%s1 + $0x3538] sm:$0xff]
  %v1757 = vld [vmem:[%s1 + $0x3540] sm:$0xff]
  %v1758 = vld [vmem:[%s1 + $0x3548] sm:$0xff]
  %v1759 = vld [vmem:[%s1 + $0x3550] sm:$0xff]
  %v1760 = vld [vmem:[%s1 + $0x3558] sm:$0xff]
  %v1761 = vld [vmem:[%s1 + $0x3560] sm:$0xff]
  %v1762 = vld [vmem:[%s1 + $0x3568] sm:$0xff]
  %v1763 = vld [vmem:[%s1 + $0x3570] sm:$0xff]
  %v1764 = vld [vmem:[%s1 + $0x3578] sm:$0xff]
  %v1765 = vld [vmem:[%s1 + $0x3580] sm:$0xff]
  %v1766 = vld [vmem:[%s1 + $0x3588] sm:$0xff]
  %v1767 = vld [vmem:[%s1 + $0x3590] sm:$0xff]
  %v1768 = vld [vmem:[%s1 + $0x3598] sm:$0xff]
  %v1769 = vld [vmem:[%s1 + $0x35a0] sm:$0xff]
  %v1770 = vld [vmem:[%s1 + $0x35a8] sm:$0xff]
  %v1771 = vld [vmem:[%s1 + $0x35b0] sm:$0xff]
  %v1772 = vld [vmem:[%s1 + $0x35b8] sm:$0xff]
  %v1773 = vld [vmem:[%s1 + $0x35c0] sm:$0xff]
  %v1774 = vld [vmem:[%s1 + $0x35c8] sm:$0xff]
  %v1775 = vld [vmem:[%s1 + $0x35d0] sm:$0xff]
  %v1776 = vld [vmem:[%s1 + $0x35d8] sm:$0xff]
  %v1777 = vld [vmem:[%s1 + $0x35e0] sm:$0xff]
  %v1778 = vld [vmem:[%s1 + $0x35e8] sm:$0xff]
  %v1779 = vld [vmem:[%s1 + $0x35f0] sm:$0xff]
  %v1780 = vld [vmem:[%s1 + $0x35f8] sm:$0xff]
  %v1781 = vld [vmem:[%s1 + $0x3600] sm:$0xff]
  %v1782 = vld [vmem:[%s1 + $0x3608] sm:$0xff]
  %v1783 = vld [vmem:[%s1 + $0x3610] sm:$0xff]
  %v1784 = vld [vmem:[%s1 + $0x3618] sm:$0xff]
  %v1785 = vld [vmem:[%s1 + $0x3620] sm:$0xff]
  %v1786 = vld [vmem:[%s1 + $0x3628] sm:$0xff]
  %v1787 = vld [vmem:[%s1 + $0x3630] sm:$0xff]
  %v1788 = vld [vmem:[%s1 + $0x3638] sm:$0xff]
  %v1789 = vld [vmem:[%s1 + $0x3640] sm:$0xff]
  %v1790 = vld [vmem:[%s1 + $0x3648] sm:$0xff]
  %v1791 = vld [vmem:[%s1 + $0x3650] sm:$0xff]
  %v1792 = vld [vmem:[%s1 + $0x3658] sm:$0xff]
  %v1793 = vld [vmem:[%s1 + $0x3660] sm:$0xff]
  %v1794 = vld [vmem:[%s1 + $0x3668] sm:$0xff]
  %v1795 = vld [vmem:[%s1 + $0x3670] sm:$0xff]
  %v1796 = vld [vmem:[%s1 + $0x3678] sm:$0xff]
  %v1797 = vld [vmem:[%s1 + $0x3680] sm:$0xff]
  %v1798 = vld [vmem:[%s1 + $0x3688] sm:$0xff]
  %v1799 = vld [vmem:[%s1 + $0x3690] sm:$0xff]
  %v1800 = vld [vmem:[%s1 + $0x3698] sm:$0xff]
  %v1801 = vld [vmem:[%s1 + $0x36a0] sm:$0xff]
  %v1802 = vld [vmem:[%s1 + $0x36a8] sm:$0xff]
  %v1803 = vld [vmem:[%s1 + $0x36b0] sm:$0xff]
  %v1804 = vld [vmem:[%s1 + $0x36b8] sm:$0xff]
  %v1805 = vld [vmem:[%s1 + $0x36c0] sm:$0xff]
  %v1806 = vld [vmem:[%s1 + $0x36c8] sm:$0xff]
  %v1807 = vld [vmem:[%s1 + $0x36d0] sm:$0xff]
  %v1808 = vld [vmem:[%s1 + $0x36d8] sm:$0xff]
  %v1809 = vld [vmem:[%s1 + $0x36e0] sm:$0xff]
  %v1810 = vld [vmem:[%s1 + $0x36e8] sm:$0xff]
  %v1811 = vld [vmem:[%s1 + $0x36f0] sm:$0xff]
  %v1812 = vld [vmem:[%s1 + $0x36f8] sm:$0xff]
  %v1813 = vld [vmem:[%s1 + $0x3700] sm:$0xff]
  %v1814 = vld [vmem:[%s1 + $0x3708] sm:$0xff]
  %v1815 = vld [vmem:[%s1 + $0x3710] sm:$0xff]
  %v1816 = vld [vmem:[%s1 + $0x3718] sm:$0xff]
  %v1817 = vld [vmem:[%s1 + $0x3720] sm:$0xff]
  %v1818 = vld [vmem:[%s1 + $0x3728] sm:$0xff]
  %v1819 = vld [vmem:[%s1 + $0x3730] sm:$0xff]
  %v1820 = vld [vmem:[%s1 + $0x3738] sm:$0xff]
  %v1821 = vld [vmem:[%s1 + $0x3740] sm:$0xff]
  %v1822 = vld [vmem:[%s1 + $0x3748] sm:$0xff]
  %v1823 = vld [vmem:[%s1 + $0x3750] sm:$0xff]
  %v1824 = vld [vmem:[%s1 + $0x3758] sm:$0xff]
  %v1825 = vld [vmem:[%s1 + $0x3760] sm:$0xff]
  %v1826 = vld [vmem:[%s1 + $0x3768] sm:$0xff]
  %v1827 = vld [vmem:[%s1 + $0x3770] sm:$0xff]
  %v1828 = vld [vmem:[%s1 + $0x3778] sm:$0xff]
  %v1829 = vld [vmem:[%s1 + $0x3780] sm:$0xff]
  %v1830 = vld [vmem:[%s1 + $0x3788] sm:$0xff]
  %v1831 = vld [vmem:[%s1 + $0x3790] sm:$0xff]
  %v1832 = vld [vmem:[%s1 + $0x3798] sm:$0xff]
  %v1833 = vld [vmem:[%s1 + $0x37a0] sm:$0xff]
  %v1834 = vld [vmem:[%s1 + $0x37a8] sm:$0xff]
  %v1835 = vld [vmem:[%s1 + $0x37b0] sm:$0xff]
  %v1836 = vld [vmem:[%s1 + $0x37b8] sm:$0xff]
  %v1837 = vld [vmem:[%s1 + $0x37c0] sm:$0xff]
  %v1838 = vld [vmem:[%s1 + $0x37c8] sm:$0xff]
  %v1839 = vld [vmem:[%s1 + $0x37d0] sm:$0xff]
  %v1840 = vld [vmem:[%s1 + $0x37d8] sm:$0xff]
  %v1841 = vld [vmem:[%s1 + $0x37e0] sm:$0xff]
  %v1842 = vld [vmem:[%s1 + $0x37e8] sm:$0xff]
  %v1843 = vld [vmem:[%s1 + $0x37f0] sm:$0xff]
  %v1844 = vld [vmem:[%s1 + $0x37f8] sm:$0xff]
  %v1845 = vld [vmem:[%s1 + $0x3800] sm:$0xff]
  %v1846 = vld [vmem:[%s1 + $0x3808] sm:$0xff]
  %v1847 = vld [vmem:[%s1 + $0x3810] sm:$0xff]
  %v1848 = vld [vmem:[%s1 + $0x3818] sm:$0xff]
  %v1849 = vld [vmem:[%s1 + $0x3820] sm:$0xff]
  %v1850 = vld [vmem:[%s1 + $0x3828] sm:$0xff]
  %v1851 = vld [vmem:[%s1 + $0x3830] sm:$0xff]
  %v1852 = vld [vmem:[%s1 + $0x3838] sm:$0xff]
  %v1853 = vld [vmem:[%s1 + $0x3840] sm:$0xff]
  %v1854 = vld [vmem:[%s1 + $0x3848] sm:$0xff]
  %v1855 = vld [vmem:[%s1 + $0x3850] sm:$0xff]
  %v1856 = vld [vmem:[%s1 + $0x3858] sm:$0xff]
  %v1857 = vld [vmem:[%s1 + $0x3860] sm:$0xff]
  %v1858 = vld [vmem:[%s1 + $0x3868] sm:$0xff]
  %v1859 = vld [vmem:[%s1 + $0x3870] sm:$0xff]
  %v1860 = vld [vmem:[%s1 + $0x3878] sm:$0xff]
  %v1861 = vld [vmem:[%s1 + $0x3880] sm:$0xff]
  %v1862 = vld [vmem:[%s1 + $0x3888] sm:$0xff]
  %v1863 = vld [vmem:[%s1 + $0x3890] sm:$0xff]
  %v1864 = vld [vmem:[%s1 + $0x3898] sm:$0xff]
  %v1865 = vld [vmem:[%s1 + $0x38a0] sm:$0xff]
  %v1866 = vld [vmem:[%s1 + $0x38a8] sm:$0xff]
  %v1867 = vld [vmem:[%s1 + $0x38b0] sm:$0xff]
  %v1868 = vld [vmem:[%s1 + $0x38b8] sm:$0xff]
  %v1869 = vld [vmem:[%s1 + $0x38c0] sm:$0xff]
  %v1870 = vld [vmem:[%s1 + $0x38c8] sm:$0xff]
  %v1871 = vld [vmem:[%s1 + $0x38d0] sm:$0xff]
  %v1872 = vld [vmem:[%s1 + $0x38d8] sm:$0xff]
  %v1873 = vld [vmem:[%s1 + $0x38e0] sm:$0xff]
  %v1874 = vld [vmem:[%s1 + $0x38e8] sm:$0xff]
  %v1875 = vld [vmem:[%s1 + $0x38f0] sm:$0xff]
  %v1876 = vld [vmem:[%s1 + $0x38f8] sm:$0xff]
  %v1877 = vld [vmem:[%s1 + $0x3900] sm:$0xff]
  %v1878 = vld [vmem:[%s1 + $0x3908] sm:$0xff]
  %v1879 = vld [vmem:[%s1 + $0x3910] sm:$0xff]
  %v1880 = vld [vmem:[%s1 + $0x3918] sm:$0xff]
  %v1881 = vld [vmem:[%s1 + $0x3920] sm:$0xff]
  %v1882 = vld [vmem:[%s1 + $0x3928] sm:$0xff]
  %v1883 = vld [vmem:[%s1 + $0x3930] sm:$0xff]
  %v1884 = vld [vmem:[%s1 + $0x3938] sm:$0xff]
  %v1885 = vld [vmem:[%s1 + $0x3940] sm:$0xff]
  %v1886 = vld [vmem:[%s1 + $0x3948] sm:$0xff]
  %v1887 = vld [vmem:[%s1 + $0x3950] sm:$0xff]
  %v1888 = vld [vmem:[%s1 + $0x3958] sm:$0xff]
  %v1889 = vld [vmem:[%s1 + $0x3960] sm:$0xff]
  %v1890 = vld [vmem:[%s1 + $0x3968] sm:$0xff]
  %v1891 = vld [vmem:[%s1 + $0x3970] sm:$0xff]
  %v1892 = vld [vmem:[%s1 + $0x3978] sm:$0xff]
  %v1893 = vld [vmem:[%s1 + $0x3980] sm:$0xff]
  %v1894 = vld [vmem:[%s1 + $0x3988] sm:$0xff]
  %v1895 = vld [vmem:[%s1 + $0x3990] sm:$0xff]
  %v1896 = vld [vmem:[%s1 + $0x3998] sm:$0xff]
  %v1897 = vld [vmem:[%s1 + $0x39a0] sm:$0xff]
  %v1898 = vld [vmem:[%s1 + $0x39a8] sm:$0xff]
  %v1899 = vld [vmem:[%s1 + $0x39b0] sm:$0xff]
  %v1900 = vld [vmem:[%s1 + $0x39b8] sm:$0xff]
  %v1901 = vld [vmem:[%s1 + $0x39c0] sm:$0xff]
  %v1902 = vld [vmem:[%s1 + $0x39c8] sm:$0xff]
  %v1903 = vld [vmem:[%s1 + $0x39d0] sm:$0xff]
  %v1904 = vld [vmem:[%s1 + $0x39d8] sm:$0xff]
  %v1905 = vld [vmem:[%s1 + $0x39e0] sm:$0xff]
  %v1906 = vld [vmem:[%s1 + $0x39e8] sm:$0xff]
  %v1907 = vld [vmem:[%s1 + $0x39f0] sm:$0xff]
  %v1908 = vld [vmem:[%s1 + $0x39f8] sm:$0xff]
  %v1909 = vld [vmem:[%s1 + $0x3a00] sm:$0xff]
  %v1910 = vld [vmem:[%s1 + $0x3a08] sm:$0xff]
  %v1911 = vld [vmem:[%s1 + $0x3a10] sm:$0xff]
  %v1912 = vld [vmem:[%s1 + $0x3a18] sm:$0xff]
  %v1913 = vld [vmem:[%s1 + $0x3a20] sm:$0xff]
  %v1914 = vld [vmem:[%s1 + $0x3a28] sm:$0xff]
  %v1915 = vld [vmem:[%s1 + $0x3a30] sm:$0xff]
  %v1916 = vld [vmem:[%s1 + $0x3a38] sm:$0xff]
  %v1917 = vld [vmem:[%s1 + $0x3a40] sm:$0xff]
  %v1918 = vld [vmem:[%s1 + $0x3a48] sm:$0xff]
  %v1919 = vld [vmem:[%s1 + $0x3a50] sm:$0xff]
  %v1920 = vld [vmem:[%s1 + $0x3a58] sm:$0xff]
  %v1921 = vld [vmem:[%s1 + $0x3a60] sm:$0xff]
  %v1922 = vld [vmem:[%s1 + $0x3a68] sm:$0xff]
  %v1923 = vld [vmem:[%s1 + $0x3a70] sm:$0xff]
  %v1924 = vld [vmem:[%s1 + $0x3a78] sm:$0xff]
  %v1925 = vld [vmem:[%s1 + $0x3a80] sm:$0xff]
  %v1926 = vld [vmem:[%s1 + $0x3a88] sm:$0xff]
  %v1927 = vld [vmem:[%s1 + $0x3a90] sm:$0xff]
  %v1928 = vld [vmem:[%s1 + $0x3a98] sm:$0xff]
  %v1929 = vld [vmem:[%s1 + $0x3aa0] sm:$0xff]
  %v1930 = vld [vmem:[%s1 + $0x3aa8] sm:$0xff]
  %v1931 = vld [vmem:[%s1 + $0x3ab0] sm:$0xff]
  %v1932 = vld [vmem:[%s1 + $0x3ab8] sm:$0xff]
  %v1933 = vld [vmem:[%s1 + $0x3ac0] sm:$0xff]
  %v1934 = vld [vmem:[%s1 + $0x3ac8] sm:$0xff]
  %v1935 = vld [vmem:[%s1 + $0x3ad0] sm:$0xff]
  %v1936 = vld [vmem:[%s1 + $0x3ad8] sm:$0xff]
  %v1937 = vld [vmem:[%s1 + $0x3ae0] sm:$0xff]
  %v1938 = vld [vmem:[%s1 + $0x3ae8] sm:$0xff]
  %v1939 = vld [vmem:[%s1 + $0x3af0] sm:$0xff]
  %v1940 = vld [vmem:[%s1 + $0x3af8] sm:$0xff]
  %v1941 = vld [vmem:[%s1 + $0x3b00] sm:$0xff]
  %v1942 = vld [vmem:[%s1 + $0x3b08] sm:$0xff]
  %v1943 = vld [vmem:[%s1 + $0x3b10] sm:$0xff]
  %v1944 = vld [vmem:[%s1 + $0x3b18] sm:$0xff]
  %v1945 = vld [vmem:[%s1 + $0x3b20] sm:$0xff]
  %v1946 = vld [vmem:[%s1 + $0x3b28] sm:$0xff]
  %v1947 = vld [vmem:[%s1 + $0x3b30] sm:$0xff]
  %v1948 = vld [vmem:[%s1 + $0x3b38] sm:$0xff]
  %v1949 = vld [vmem:[%s1 + $0x3b40] sm:$0xff]
  %v1950 = vld [vmem:[%s1 + $0x3b48] sm:$0xff]
  %v1951 = vld [vmem:[%s1 + $0x3b50] sm:$0xff]
  %v1952 = vld [vmem:[%s1 + $0x3b58] sm:$0xff]
  %v1953 = vld [vmem:[%s1 + $0x3b60] sm:$0xff]
  %v1954 = vld [vmem:[%s1 + $0x3b68] sm:$0xff]
  %v1955 = vld [vmem:[%s1 + $0x3b70] sm:$0xff]
  %v1956 = vld [vmem:[%s1 + $0x3b78] sm:$0xff]
  %v1957 = vld [vmem:[%s1 + $0x3b80] sm:$0xff]
  %v1958 = vld [vmem:[%s1 + $0x3b88] sm:$0xff]
  %v1959 = vld [vmem:[%s1 + $0x3b90] sm:$0xff]
  %v1960 = vld [vmem:[%s1 + $0x3b98] sm:$0xff]
  %v1961 = vld [vmem:[%s1 + $0x3ba0] sm:$0xff]
  %v1962 = vld [vmem:[%s1 + $0x3ba8] sm:$0xff]
  %v1963 = vld [vmem:[%s1 + $0x3bb0] sm:$0xff]
  %v1964 = vld [vmem:[%s1 + $0x3bb8] sm:$0xff]
  %v1965 = vld [vmem:[%s1 + $0x3bc0] sm:$0xff]
  %v1966 = vld [vmem:[%s1 + $0x3bc8] sm:$0xff]
  %v1967 = vld [vmem:[%s1 + $0x3bd0] sm:$0xff]
  %v1968 = vld [vmem:[%s1 + $0x3bd8] sm:$0xff]
  %v1969 = vld [vmem:[%s1 + $0x3be0] sm:$0xff]
  %v1970 = vld [vmem:[%s1 + $0x3be8] sm:$0xff]
  %v1971 = vld [vmem:[%s1 + $0x3bf0] sm:$0xff]
  %v1972 = vld [vmem:[%s1 + $0x3bf8] sm:$0xff]
  %v1973 = vld [vmem:[%s1 + $0x3c00] sm:$0xff]
  %v1974 = vld [vmem:[%s1 + $0x3c08] sm:$0xff]
  %v1975 = vld [vmem:[%s1 + $0x3c10] sm:$0xff]
  %v1976 = vld [vmem:[%s1 + $0x3c18] sm:$0xff]
  %v1977 = vld [vmem:[%s1 + $0x3c20] sm:$0xff]
  %v1978 = vld [vmem:[%s1 + $0x3c28] sm:$0xff]
  %v1979 = vld [vmem:[%s1 + $0x3c30] sm:$0xff]
  %v1980 = vld [vmem:[%s1 + $0x3c38] sm:$0xff]
  %v1981 = vld [vmem:[%s1 + $0x3c40] sm:$0xff]
  %v1982 = vld [vmem:[%s1 + $0x3c48] sm:$0xff]
  %v1983 = vld [vmem:[%s1 + $0x3c50] sm:$0xff]
  %v1984 = vld [vmem:[%s1 + $0x3c58] sm:$0xff]
  %v1985 = vld [vmem:[%s1 + $0x3c60] sm:$0xff]
  %v1986 = vld [vmem:[%s1 + $0x3c68] sm:$0xff]
  %v1987 = vld [vmem:[%s1 + $0x3c70] sm:$0xff]
  %v1988 = vld [vmem:[%s1 + $0x3c78] sm:$0xff]
  %v1989 = vld [vmem:[%s1 + $0x3c80] sm:$0xff]
  %v1990 = vld [vmem:[%s1 + $0x3c88] sm:$0xff]
  %v1991 = vld [vmem:[%s1 + $0x3c90] sm:$0xff]
  %v1992 = vld [vmem:[%s1 + $0x3c98] sm:$0xff]
  %v1993 = vld [vmem:[%s1 + $0x3ca0] sm:$0xff]
  %v1994 = vld [vmem:[%s1 + $0x3ca8] sm:$0xff]
  %v1995 = vld [vmem:[%s1 + $0x3cb0] sm:$0xff]
  %v1996 = vld [vmem:[%s1 + $0x3cb8] sm:$0xff]
  %v1997 = vld [vmem:[%s1 + $0x3cc0] sm:$0xff]
  %v1998 = vld [vmem:[%s1 + $0x3cc8] sm:$0xff]
  %v1999 = vld [vmem:[%s1 + $0x3cd0] sm:$0xff]
  %v2000 = vld [vmem:[%s1 + $0x3cd8] sm:$0xff]
  %v2001 = vld [vmem:[%s1 + $0x3ce0] sm:$0xff]
  %v2002 = vld [vmem:[%s1 + $0x3ce8] sm:$0xff]
  %v2003 = vld [vmem:[%s1 + $0x3cf0] sm:$0xff]
  %v2004 = vld [vmem:[%s1 + $0x3cf8] sm:$0xff]
  %v2005 = vld [vmem:[%s1 + $0x3d00] sm:$0xff]
  %v2006 = vld [vmem:[%s1 + $0x3d08] sm:$0xff]
  %v2007 = vld [vmem:[%s1 + $0x3d10] sm:$0xff]
  %v2008 = vld [vmem:[%s1 + $0x3d18] sm:$0xff]
  %v2009 = vld [vmem:[%s1 + $0x3d20] sm:$0xff]
  %v2010 = vld [vmem:[%s1 + $0x3d28] sm:$0xff]
  %v2011 = vld [vmem:[%s1 + $0x3d30] sm:$0xff]
  %v2012 = vld [vmem:[%s1 + $0x3d38] sm:$0xff]
  %v2013 = vld [vmem:[%s1 + $0x3d40] sm:$0xff]
  %v2014 = vld [vmem:[%s1 + $0x3d48] sm:$0xff]
  %v2015 = vld [vmem:[%s1 + $0x3d50] sm:$0xff]
  %v2016 = vld [vmem:[%s1 + $0x3d58] sm:$0xff]
  %v2017 = vld [vmem:[%s1 + $0x3d60] sm:$0xff]
  %v2018 = vld [vmem:[%s1 + $0x3d68] sm:$0xff]
  %v2019 = vld [vmem:[%s1 + $0x3d70] sm:$0xff]
  %v2020 = vld [vmem:[%s1 + $0x3d78] sm:$0xff]
  %v2021 = vld [vmem:[%s1 + $0x3d80] sm:$0xff]
  %v2022 = vld [vmem:[%s1 + $0x3d88] sm:$0xff]
  %v2023 = vld [vmem:[%s1 + $0x3d90] sm:$0xff]
  %v2024 = vld [vmem:[%s1 + $0x3d98] sm:$0xff]
  %v2025 = vld [vmem:[%s1 + $0x3da0] sm:$0xff]
  %v2026 = vld [vmem:[%s1 + $0x3da8] sm:$0xff]
  %v2027 = vld [vmem:[%s1 + $0x3db0] sm:$0xff]
  %v2028 = vld [vmem:[%s1 + $0x3db8] sm:$0xff]
  %v2029 = vld [vmem:[%s1 + $0x3dc0] sm:$0xff]
  %v2030 = vld [vmem:[%s1 + $0x3dc8] sm:$0xff]
  %v2031 = vld [vmem:[%s1 + $0x3dd0] sm:$0xff]
  %v2032 = vld [vmem:[%s1 + $0x3dd8] sm:$0xff]
  %v2033 = vld [vmem:[%s1 + $0x3de0] sm:$0xff]
  %v2034 = vld [vmem:[%s1 + $0x3de8] sm:$0xff]
  %v2035 = vld [vmem:[%s1 + $0x3df0] sm:$0xff]
  %v2036 = vld [vmem:[%s1 + $0x3df8] sm:$0xff]
  %v2037 = vld [vmem:[%s1 + $0x3e00] sm:$0xff]
  %v2038 = vld [vmem:[%s1 + $0x3e08] sm:$0xff]
  %v2039 = vld [vmem:[%s1 + $0x3e10] sm:$0xff]
  %v2040 = vld [vmem:[%s1 + $0x3e18] sm:$0xff]
  %v2041 = vld [vmem:[%s1 + $0x3e20] sm:$0xff]
  %v2042 = vld [vmem:[%s1 + $0x3e28] sm:$0xff]
  %v2043 = vld [vmem:[%s1 + $0x3e30] sm:$0xff]
  %v2044 = vld [vmem:[%s1 + $0x3e38] sm:$0xff]
  %v2045 = vld [vmem:[%s1 + $0x3e40] sm:$0xff]
  %v2046 = vld [vmem:[%s1 + $0x3e48] sm:$0xff]
  %v2047 = vld [vmem:[%s1 + $0x3e50] sm:$0xff]
  %v2048 = vld [vmem:[%s1 + $0x3e58] sm:$0xff]
  %v2049 = vld [vmem:[%s1 + $0x3e60] sm:$0xff]
  %v2050 = vld [vmem:[%s1 + $0x3e68] sm:$0xff]
  %v2051 = vld [vmem:[%s1 + $0x3e70] sm:$0xff]
  %v2052 = vld [vmem:[%s1 + $0x3e78] sm:$0xff]
  %v2053 = vld [vmem:[%s1 + $0x3e80] sm:$0xff]
  %v2054 = vld [vmem:[%s1 + $0x3e88] sm:$0xff]
  %v2055 = vld [vmem:[%s1 + $0x3e90] sm:$0xff]
  %v2056 = vld [vmem:[%s1 + $0x3e98] sm:$0xff]
  %v2057 = vld [vmem:[%s1 + $0x3ea0] sm:$0xff]
  %v2058 = vld [vmem:[%s1 + $0x3ea8] sm:$0xff]
  %v2059 = vld [vmem:[%s1 + $0x3eb0] sm:$0xff]
  %v2060 = vld [vmem:[%s1 + $0x3eb8] sm:$0xff]
  %v2061 = vld [vmem:[%s1 + $0x3ec0] sm:$0xff]
  %v2062 = vld [vmem:[%s1 + $0x3ec8] sm:$0xff]
  %v2063 = vld [vmem:[%s1 + $0x3ed0] sm:$0xff]
  %v2064 = vld [vmem:[%s1 + $0x3ed8] sm:$0xff]
  %v2065 = vld [vmem:[%s1 + $0x3ee0] sm:$0xff]
  %v2066 = vld [vmem:[%s1 + $0x3ee8] sm:$0xff]
  %v2067 = vld [vmem:[%s1 + $0x3ef0] sm:$0xff]
  %v2068 = vld [vmem:[%s1 + $0x3ef8] sm:$0xff]
  %v2069 = vld [vmem:[%s1 + $0x3f00] sm:$0xff]
  %v2070 = vld [vmem:[%s1 + $0x3f08] sm:$0xff]
  %v2071 = vld [vmem:[%s1 + $0x3f10] sm:$0xff]
  %v2072 = vld [vmem:[%s1 + $0x3f18] sm:$0xff]
  %v2073 = vld [vmem:[%s1 + $0x3f20] sm:$0xff]
  %v2074 = vld [vmem:[%s1 + $0x3f28] sm:$0xff]
  %v2075 = vld [vmem:[%s1 + $0x3f30] sm:$0xff]
  %v2076 = vld [vmem:[%s1 + $0x3f38] sm:$0xff]
  %v2077 = vld [vmem:[%s1 + $0x3f40] sm:$0xff]
  %v2078 = vld [vmem:[%s1 + $0x3f48] sm:$0xff]
  %v2079 = vld [vmem:[%s1 + $0x3f50] sm:$0xff]
  %v2080 = vld [vmem:[%s1 + $0x3f58] sm:$0xff]
  %v2081 = vld [vmem:[%s1 + $0x3f60] sm:$0xff]
  %v2082 = vld [vmem:[%s1 + $0x3f68] sm:$0xff]
  %v2083 = vld [vmem:[%s1 + $0x3f70] sm:$0xff]
  %v2084 = vld [vmem:[%s1 + $0x3f78] sm:$0xff]
  %v2085 = vld [vmem:[%s1 + $0x3f80] sm:$0xff]
  %v2086 = vld [vmem:[%s1 + $0x3f88] sm:$0xff]
  %v2087 = vld [vmem:[%s1 + $0x3f90] sm:$0xff]
  %v2088 = vld [vmem:[%s1 + $0x3f98] sm:$0xff]
  %v2089 = vld [vmem:[%s1 + $0x3fa0] sm:$0xff]
  %v2090 = vld [vmem:[%s1 + $0x3fa8] sm:$0xff]
  %v2091 = vld [vmem:[%s1 + $0x3fb0] sm:$0xff]
  %v2092 = vld [vmem:[%s1 + $0x3fb8] sm:$0xff]
  %v2093 = vld [vmem:[%s1 + $0x3fc0] sm:$0xff]
  %v2094 = vld [vmem:[%s1 + $0x3fc8] sm:$0xff]
  %v2095 = vld [vmem:[%s1 + $0x3fd0] sm:$0xff]
  %v2096 = vld [vmem:[%s1 + $0x3fd8] sm:$0xff]
  %v2097 = vld [vmem:[%s1 + $0x3fe0] sm:$0xff]
  %v2098 = vld [vmem:[%s1 + $0x3fe8] sm:$0xff]
  %v2099 = vld [vmem:[%s1 + $0x3ff0] sm:$0xff]
  %v2100 = vld [vmem:[%s1 + $0x3ff8] sm:$0xff]
  %v2101 = vld [vmem:[%s1 + $0x4000] sm:$0xff]
  %v2102 = vld [vmem:[%s1 + $0x4008] sm:$0xff]
  %v2103 = vld [vmem:[%s1 + $0x4010] sm:$0xff]
  %v2104 = vld [vmem:[%s1 + $0x4018] sm:$0xff]
  %v2105 = vld [vmem:[%s1 + $0x4020] sm:$0xff]
  %v2106 = vld [vmem:[%s1 + $0x4028] sm:$0xff]
  %v2107 = vld [vmem:[%s1 + $0x4030] sm:$0xff]
  %v2108 = vld [vmem:[%s1 + $0x4038] sm:$0xff]
  %v2109 = vld [vmem:[%s1 + $0x4040] sm:$0xff]
  %v2110 = vld [vmem:[%s1 + $0x4048] sm:$0xff]
  %v2111 = vld [vmem:[%s1 + $0x4050] sm:$0xff]
  %v2112 = vld [vmem:[%s1 + $0x4058] sm:$0xff]
  %v2113 = vld [vmem:[%s1 + $0x4060] sm:$0xff]
  %v2114 = vld [vmem:[%s1 + $0x4068] sm:$0xff]
  %v2115 = vld [vmem:[%s1 + $0x4070] sm:$0xff]
  %v2116 = vld [vmem:[%s1 + $0x4078] sm:$0xff]
  %v2117 = vld [vmem:[%s1 + $0x4080] sm:$0xff]
  %v2118 = vld [vmem:[%s1 + $0x4088] sm:$0xff]
  %v2119 = vld [vmem:[%s1 + $0x4090] sm:$0xff]
  %v2120 = vld [vmem:[%s1 + $0x4098] sm:$0xff]
  %v2121 = vld [vmem:[%s1 + $0x40a0] sm:$0xff]
  %v2122 = vld [vmem:[%s1 + $0x40a8] sm:$0xff]
  %v2123 = vld [vmem:[%s1 + $0x40b0] sm:$0xff]
  %v2124 = vld [vmem:[%s1 + $0x40b8] sm:$0xff]
  %v2125 = vld [vmem:[%s1 + $0x40c0] sm:$0xff]
  %v2126 = vld [vmem:[%s1 + $0x40c8] sm:$0xff]
  %v2127 = vld [vmem:[%s1 + $0x40d0] sm:$0xff]
  %v2128 = vld [vmem:[%s1 + $0x40d8] sm:$0xff]
  %v2129 = vld [vmem:[%s1 + $0x40e0] sm:$0xff]
  %v2130 = vld [vmem:[%s1 + $0x40e8] sm:$0xff]
  %v2131 = vld [vmem:[%s1 + $0x40f0] sm:$0xff]
  %v2132 = vld [vmem:[%s1 + $0x40f8] sm:$0xff]
  %v2133 = vld [vmem:[%s1 + $0x4100] sm:$0xff]
  %v2134 = vld [vmem:[%s1 + $0x4108] sm:$0xff]
  %v2135 = vld [vmem:[%s1 + $0x4110] sm:$0xff]
  %v2136 = vld [vmem:[%s1 + $0x4118] sm:$0xff]
  %v2137 = vld [vmem:[%s1 + $0x4120] sm:$0xff]
  %v2138 = vld [vmem:[%s1 + $0x4128] sm:$0xff]
  %v2139 = vld [vmem:[%s1 + $0x4130] sm:$0xff]
  %v2140 = vld [vmem:[%s1 + $0x4138] sm:$0xff]
  %v2141 = vld [vmem:[%s1 + $0x4140] sm:$0xff]
  %v2142 = vld [vmem:[%s1 + $0x4148] sm:$0xff]
  %v2143 = vld [vmem:[%s1 + $0x4150] sm:$0xff]
  %v2144 = vld [vmem:[%s1 + $0x4158] sm:$0xff]
  %v2145 = vld [vmem:[%s1 + $0x4160] sm:$0xff]
  %v2146 = vld [vmem:[%s1 + $0x4168] sm:$0xff]
  %v2147 = vld [vmem:[%s1 + $0x4170] sm:$0xff]
  %v2148 = vld [vmem:[%s1 + $0x4178] sm:$0xff]
  %v2149 = vld [vmem:[%s1 + $0x4180] sm:$0xff]
  %v2150 = vld [vmem:[%s1 + $0x4188] sm:$0xff]
  %v2151 = vld [vmem:[%s1 + $0x4190] sm:$0xff]
  %v2152 = vld [vmem:[%s1 + $0x4198] sm:$0xff]
  %v2153 = vld [vmem:[%s1 + $0x41a0] sm:$0xff]
  %v2154 = vld [vmem:[%s1 + $0x41a8] sm:$0xff]
  %v2155 = vld [vmem:[%s1 + $0x41b0] sm:$0xff]
  %v2156 = vld [vmem:[%s1 + $0x41b8] sm:$0xff]
  %v2157 = vld [vmem:[%s1 + $0x41c0] sm:$0xff]
  %v2158 = vld [vmem:[%s1 + $0x41c8] sm:$0xff]
  %v2159 = vld [vmem:[%s1 + $0x41d0] sm:$0xff]
  %v2160 = vld [vmem:[%s1 + $0x41d8] sm:$0xff]
  %v2161 = vld [vmem:[%s1 + $0x41e0] sm:$0xff]
  %v2162 = vld [vmem:[%s1 + $0x41e8] sm:$0xff]
  %v2163 = vld [vmem:[%s1 + $0x41f0] sm:$0xff]
  %v2164 = vld [vmem:[%s1 + $0x41f8] sm:$0xff]
  %v2165 = vld [vmem:[%s1 + $0x4200] sm:$0xff]
  %v2166 = vld [vmem:[%s1 + $0x4208] sm:$0xff]
  %v2167 = vld [vmem:[%s1 + $0x4210] sm:$0xff]
  %v2168 = vld [vmem:[%s1 + $0x4218] sm:$0xff]
  %v2169 = vld [vmem:[%s1 + $0x4220] sm:$0xff]
  %v2170 = vld [vmem:[%s1 + $0x4228] sm:$0xff]
  %v2171 = vld [vmem:[%s1 + $0x4230] sm:$0xff]
  %v2172 = vld [vmem:[%s1 + $0x4238] sm:$0xff]
  %v2173 = vld [vmem:[%s1 + $0x4240] sm:$0xff]
  %v2174 = vld [vmem:[%s1 + $0x4248] sm:$0xff]
  %v2175 = vld [vmem:[%s1 + $0x4250] sm:$0xff]
  %v2176 = vld [vmem:[%s1 + $0x4258] sm:$0xff]
  %v2177 = vld [vmem:[%s1 + $0x4260] sm:$0xff]
  %v2178 = vld [vmem:[%s1 + $0x4268] sm:$0xff]
  %v2179 = vld [vmem:[%s1 + $0x4270] sm:$0xff]
  %v2180 = vld [vmem:[%s1 + $0x4278] sm:$0xff]
  %v2181 = vld [vmem:[%s1 + $0x4280] sm:$0xff]
  %v2182 = vld [vmem:[%s1 + $0x4288] sm:$0xff]
  %v2183 = vld [vmem:[%s1 + $0x4290] sm:$0xff]
  %v2184 = vld [vmem:[%s1 + $0x4298] sm:$0xff]
  %v2185 = vld [vmem:[%s1 + $0x42a0] sm:$0xff]
  %v2186 = vld [vmem:[%s1 + $0x42a8] sm:$0xff]
  %v2187 = vld [vmem:[%s1 + $0x42b0] sm:$0xff]
  %v2188 = vld [vmem:[%s1 + $0x42b8] sm:$0xff]
  %v2189 = vld [vmem:[%s1 + $0x42c0] sm:$0xff]
  %v2190 = vld [vmem:[%s1 + $0x42c8] sm:$0xff]
  %v2191 = vld [vmem:[%s1 + $0x42d0] sm:$0xff]
  %v2192 = vld [vmem:[%s1 + $0x42d8] sm:$0xff]
  %v2193 = vld [vmem:[%s1 + $0x42e0] sm:$0xff]
  %v2194 = vld [vmem:[%s1 + $0x42e8] sm:$0xff]
  %v2195 = vld [vmem:[%s1 + $0x42f0] sm:$0xff]
  %v2196 = vld [vmem:[%s1 + $0x42f8] sm:$0xff]
  %v2197 = vld [vmem:[%s1 + $0x4300] sm:$0xff]
  %v2198 = vld [vmem:[%s1 + $0x4308] sm:$0xff]
  %v2199 = vld [vmem:[%s1 + $0x4310] sm:$0xff]
  %v2200 = vld [vmem:[%s1 + $0x4318] sm:$0xff]
  %v2201 = vld [vmem:[%s1 + $0x4320] sm:$0xff]
  %v2202 = vld [vmem:[%s1 + $0x4328] sm:$0xff]
  %v2203 = vld [vmem:[%s1 + $0x4330] sm:$0xff]
  %v2204 = vld [vmem:[%s1 + $0x4338] sm:$0xff]
  %v2205 = vld [vmem:[%s1 + $0x4340] sm:$0xff]
  %v2206 = vld [vmem:[%s1 + $0x4348] sm:$0xff]
  %v2207 = vld [vmem:[%s1 + $0x4350] sm:$0xff]
  %v2208 = vld [vmem:[%s1 + $0x4358] sm:$0xff]
  %v2209 = vld [vmem:[%s1 + $0x4360] sm:$0xff]
  %v2210 = vld [vmem:[%s1 + $0x4368] sm:$0xff]
  %v2211 = vld [vmem:[%s1 + $0x4370] sm:$0xff]
  %v2212 = vld [vmem:[%s1 + $0x4378] sm:$0xff]
  %v2213 = vld [vmem:[%s1 + $0x4380] sm:$0xff]
  %v2214 = vld [vmem:[%s1 + $0x4388] sm:$0xff]
  %v2215 = vld [vmem:[%s1 + $0x4390] sm:$0xff]
  %v2216 = vld [vmem:[%s1 + $0x4398] sm:$0xff]
  %v2217 = vld [vmem:[%s1 + $0x43a0] sm:$0xff]
  %v2218 = vld [vmem:[%s1 + $0x43a8] sm:$0xff]
  %v2219 = vld [vmem:[%s1 + $0x43b0] sm:$0xff]
  %v2220 = vld [vmem:[%s1 + $0x43b8] sm:$0xff]
  %v2221 = vld [vmem:[%s1 + $0x43c0] sm:$0xff]
  %v2222 = vld [vmem:[%s1 + $0x43c8] sm:$0xff]
  %v2223 = vld [vmem:[%s1 + $0x43d0] sm:$0xff]
  %v2224 = vld [vmem:[%s1 + $0x43d8] sm:$0xff]
  %v2225 = vld [vmem:[%s1 + $0x43e0] sm:$0xff]
  %v2226 = vld [vmem:[%s1 + $0x43e8] sm:$0xff]
  %v2227 = vld [vmem:[%s1 + $0x43f0] sm:$0xff]
  %v2228 = vld [vmem:[%s1 + $0x43f8] sm:$0xff]
  %v2229 = vld [vmem:[%s1 + $0x4400] sm:$0xff]
  %v2230 = vld [vmem:[%s1 + $0x4408] sm:$0xff]
  %v2231 = vld [vmem:[%s1 + $0x4410] sm:$0xff]
  %v2232 = vld [vmem:[%s1 + $0x4418] sm:$0xff]
  %v2233 = vld [vmem:[%s1 + $0x4420] sm:$0xff]
  %v2234 = vld [vmem:[%s1 + $0x4428] sm:$0xff]
  %v2235 = vld [vmem:[%s1 + $0x4430] sm:$0xff]
  %v2236 = vld [vmem:[%s1 + $0x4438] sm:$0xff]
  %v2237 = vld [vmem:[%s1 + $0x4440] sm:$0xff]
  %v2238 = vld [vmem:[%s1 + $0x4448] sm:$0xff]
  %v2239 = vld [vmem:[%s1 + $0x4450] sm:$0xff]
  %v2240 = vld [vmem:[%s1 + $0x4458] sm:$0xff]
  %v2241 = vld [vmem:[%s1 + $0x4460] sm:$0xff]
  %v2242 = vld [vmem:[%s1 + $0x4468] sm:$0xff]
  %v2243 = vld [vmem:[%s1 + $0x4470] sm:$0xff]
  %v2244 = vld [vmem:[%s1 + $0x4478] sm:$0xff]
  %v2245 = vld [vmem:[%s1 + $0x4480] sm:$0xff]
  %v2246 = vld [vmem:[%s1 + $0x4488] sm:$0xff]
  %v2247 = vld [vmem:[%s1 + $0x4490] sm:$0xff]
  %v2248 = vld [vmem:[%s1 + $0x4498] sm:$0xff]
  %v2249 = vld [vmem:[%s1 + $0x44a0] sm:$0xff]
  %v2250 = vld [vmem:[%s1 + $0x44a8] sm:$0xff]
  %v2251 = vld [vmem:[%s1 + $0x44b0] sm:$0xff]
  %v2252 = vld [vmem:[%s1 + $0x44b8] sm:$0xff]
  %v2253 = vld [vmem:[%s1 + $0x44c0] sm:$0xff]
  %v2254 = vld [vmem:[%s1 + $0x44c8] sm:$0xff]
  %v2255 = vld [vmem:[%s1 + $0x44d0] sm:$0xff]
  %v2256 = vld [vmem:[%s1 + $0x44d8] sm:$0xff]
  %v2257 = vld [vmem:[%s1 + $0x44e0] sm:$0xff]
  %v2258 = vld [vmem:[%s1 + $0x44e8] sm:$0xff]
  %v2259 = vld [vmem:[%s1 + $0x44f0] sm:$0xff]
  %v2260 = vld [vmem:[%s1 + $0x44f8] sm:$0xff]
  %v2261 = vld [vmem:[%s1 + $0x4500] sm:$0xff]
  %v2262 = vld [vmem:[%s1 + $0x4508] sm:$0xff]
  %v2263 = vld [vmem:[%s1 + $0x4510] sm:$0xff]
  %v2264 = vld [vmem:[%s1 + $0x4518] sm:$0xff]
  %v2265 = vld [vmem:[%s1 + $0x4520] sm:$0xff]
  %v2266 = vld [vmem:[%s1 + $0x4528] sm:$0xff]
  %v2267 = vld [vmem:[%s1 + $0x4530] sm:$0xff]
  %v2268 = vld [vmem:[%s1 + $0x4538] sm:$0xff]
  %v2269 = vld [vmem:[%s1 + $0x4540] sm:$0xff]
  %v2270 = vld [vmem:[%s1 + $0x4548] sm:$0xff]
  %v2271 = vld [vmem:[%s1 + $0x4550] sm:$0xff]
  %v2272 = vld [vmem:[%s1 + $0x4558] sm:$0xff]
  %v2273 = vld [vmem:[%s1 + $0x4560] sm:$0xff]
  %v2274 = vld [vmem:[%s1 + $0x4568] sm:$0xff]
  %v2275 = vld [vmem:[%s1 + $0x4570] sm:$0xff]
  %v2276 = vld [vmem:[%s1 + $0x4578] sm:$0xff]
  %v2277 = vld [vmem:[%s1 + $0x4580] sm:$0xff]
  %v2278 = vld [vmem:[%s1 + $0x4588] sm:$0xff]
  %v2279 = vld [vmem:[%s1 + $0x4590] sm:$0xff]
  %v2280 = vld [vmem:[%s1 + $0x4598] sm:$0xff]
  %v2281 = vld [vmem:[%s1 + $0x45a0] sm:$0xff]
  %v2282 = vld [vmem:[%s1 + $0x45a8] sm:$0xff]
  %v2283 = vld [vmem:[%s1 + $0x45b0] sm:$0xff]
  %v2284 = vld [vmem:[%s1 + $0x45b8] sm:$0xff]
  %v2285 = vld [vmem:[%s1 + $0x45c0] sm:$0xff]
  %v2286 = vld [vmem:[%s1 + $0x45c8] sm:$0xff]
  %v2287 = vld [vmem:[%s1 + $0x45d0] sm:$0xff]
  %v2288 = vld [vmem:[%s1 + $0x45d8] sm:$0xff]
  %v2289 = vld [vmem:[%s1 + $0x45e0] sm:$0xff]
  %v2290 = vld [vmem:[%s1 + $0x45e8] sm:$0xff]
  %v2291 = vld [vmem:[%s1 + $0x45f0] sm:$0xff]
  %v2292 = vld [vmem:[%s1 + $0x45f8] sm:$0xff]
  %v2293 = vld [vmem:[%s1 + $0x4600] sm:$0xff]
  %v2294 = vld [vmem:[%s1 + $0x4608] sm:$0xff]
  %v2295 = vld [vmem:[%s1 + $0x4610] sm:$0xff]
  %v2296 = vld [vmem:[%s1 + $0x4618] sm:$0xff]
  %v2297 = vld [vmem:[%s1 + $0x4620] sm:$0xff]
  %v2298 = vld [vmem:[%s1 + $0x4628] sm:$0xff]
  %v2299 = vld [vmem:[%s1 + $0x4630] sm:$0xff]
  %v2300 = vld [vmem:[%s1 + $0x4638] sm:$0xff]
  %v2301 = vld [vmem:[%s1 + $0x4640] sm:$0xff]
  %v2302 = vld [vmem:[%s1 + $0x4648] sm:$0xff]
  %v2303 = vld [vmem:[%s1 + $0x4650] sm:$0xff]
  %v2304 = vld [vmem:[%s1 + $0x4658] sm:$0xff]
  %v2305 = vld [vmem:[%s1 + $0x4660] sm:$0xff]
  %v2306 = vld [vmem:[%s1 + $0x4668] sm:$0xff]
  %v2307 = vld [vmem:[%s1 + $0x4670] sm:$0xff]
  %v2308 = vld [vmem:[%s1 + $0x4678] sm:$0xff]
  %v2309 = vld [vmem:[%s1 + $0x4680] sm:$0xff]
  %v2310 = vld [vmem:[%s1 + $0x4688] sm:$0xff]
  %v2311 = vld [vmem:[%s1 + $0x4690] sm:$0xff]
  %v2312 = vld [vmem:[%s1 + $0x4698] sm:$0xff]
  %v2313 = vld [vmem:[%s1 + $0x46a0] sm:$0xff]
  %v2314 = vld [vmem:[%s1 + $0x46a8] sm:$0xff]
  %v2315 = vld [vmem:[%s1 + $0x46b0] sm:$0xff]
  %v2316 = vld [vmem:[%s1 + $0x46b8] sm:$0xff]
  %v2317 = vld [vmem:[%s1 + $0x46c0] sm:$0xff]
  %v2318 = vld [vmem:[%s1 + $0x46c8] sm:$0xff]
  %v2319 = vld [vmem:[%s1 + $0x46d0] sm:$0xff]
  %v2320 = vld [vmem:[%s1 + $0x46d8] sm:$0xff]
  %v2321 = vld [vmem:[%s1 + $0x46e0] sm:$0xff]
  %v2322 = vld [vmem:[%s1 + $0x46e8] sm:$0xff]
  %v2323 = vld [vmem:[%s1 + $0x46f0] sm:$0xff]
  %v2324 = vld [vmem:[%s1 + $0x46f8] sm:$0xff]
  %v2325 = vld [vmem:[%s1 + $0x4700] sm:$0xff]
  %v2326 = vld [vmem:[%s1 + $0x4708] sm:$0xff]
  %v2327 = vld [vmem:[%s1 + $0x4710] sm:$0xff]
  %v2328 = vld [vmem:[%s1 + $0x4718] sm:$0xff]
  %v2329 = vld [vmem:[%s1 + $0x4720] sm:$0xff]
  %v2330 = vld [vmem:[%s1 + $0x4728] sm:$0xff]
  %v2331 = vld [vmem:[%s1 + $0x4730] sm:$0xff]
  %v2332 = vld [vmem:[%s1 + $0x4738] sm:$0xff]
  %v2333 = vld [vmem:[%s1 + $0x4740] sm:$0xff]
  %v2334 = vld [vmem:[%s1 + $0x4748] sm:$0xff]
  %v2335 = vld [vmem:[%s1 + $0x4750] sm:$0xff]
  %v2336 = vld [vmem:[%s1 + $0x4758] sm:$0xff]
  %v2337 = vld [vmem:[%s1 + $0x4760] sm:$0xff]
  %v2338 = vld [vmem:[%s1 + $0x4768] sm:$0xff]
  %v2339 = vld [vmem:[%s1 + $0x4770] sm:$0xff]
  %v2340 = vld [vmem:[%s1 + $0x4778] sm:$0xff]
  %v2341 = vld [vmem:[%s1 + $0x4780] sm:$0xff]
  %v2342 = vld [vmem:[%s1 + $0x4788] sm:$0xff]
  %v2343 = vld [vmem:[%s1 + $0x4790] sm:$0xff]
  %v2344 = vld [vmem:[%s1 + $0x4798] sm:$0xff]
  %v2345 = vld [vmem:[%s1 + $0x47a0] sm:$0xff]
  %v2346 = vld [vmem:[%s1 + $0x47a8] sm:$0xff]
  %v2347 = vld [vmem:[%s1 + $0x47b0] sm:$0xff]
  %v2348 = vld [vmem:[%s1 + $0x47b8] sm:$0xff]
  %v2349 = vld [vmem:[%s1 + $0x47c0] sm:$0xff]
  %v2350 = vld [vmem:[%s1 + $0x47c8] sm:$0xff]
  %v2351 = vld [vmem:[%s1 + $0x47d0] sm:$0xff]
  %v2352 = vld [vmem:[%s1 + $0x47d8] sm:$0xff]
  %v2353 = vld [vmem:[%s1 + $0x47e0] sm:$0xff]
  %v2354 = vld [vmem:[%s1 + $0x47e8] sm:$0xff]
  %v2355 = vld [vmem:[%s1 + $0x47f0] sm:$0xff]
  %v2356 = vld [vmem:[%s1 + $0x47f8] sm:$0xff]
  %v2357 = vld [vmem:[%s1 + $0x4800] sm:$0xff]
  %v2358 = vld [vmem:[%s1 + $0x4808] sm:$0xff]
  %v2359 = vld [vmem:[%s1 + $0x4810] sm:$0xff]
  %v2360 = vld [vmem:[%s1 + $0x4818] sm:$0xff]
  %v2361 = vld [vmem:[%s1 + $0x4820] sm:$0xff]
  %v2362 = vld [vmem:[%s1 + $0x4828] sm:$0xff]
  %v2363 = vld [vmem:[%s1 + $0x4830] sm:$0xff]
  %v2364 = vld [vmem:[%s1 + $0x4838] sm:$0xff]
  %v2365 = vld [vmem:[%s1 + $0x4840] sm:$0xff]
  %v2366 = vld [vmem:[%s1 + $0x4848] sm:$0xff]
  %v2367 = vld [vmem:[%s1 + $0x4850] sm:$0xff]
  %v2368 = vld [vmem:[%s1 + $0x4858] sm:$0xff]
  %v2369 = vld [vmem:[%s1 + $0x4860] sm:$0xff]
  %v2370 = vld [vmem:[%s1 + $0x4868] sm:$0xff]
  %v2371 = vld [vmem:[%s1 + $0x4870] sm:$0xff]
  %v2372 = vld [vmem:[%s1 + $0x4878] sm:$0xff]
  %v2373 = vld [vmem:[%s1 + $0x4880] sm:$0xff]
  %v2374 = vld [vmem:[%s1 + $0x4888] sm:$0xff]
  %v2375 = vld [vmem:[%s1 + $0x4890] sm:$0xff]
  %v2376 = vld [vmem:[%s1 + $0x4898] sm:$0xff]
  %v2377 = vld [vmem:[%s1 + $0x48a0] sm:$0xff]
  %v2378 = vld [vmem:[%s1 + $0x48a8] sm:$0xff]
  %v2379 = vld [vmem:[%s1 + $0x48b0] sm:$0xff]
  %v2380 = vld [vmem:[%s1 + $0x48b8] sm:$0xff]
  %v2381 = vld [vmem:[%s1 + $0x48c0] sm:$0xff]
  %v2382 = vld [vmem:[%s1 + $0x48c8] sm:$0xff]
  %v2383 = vld [vmem:[%s1 + $0x48d0] sm:$0xff]
  %v2384 = vld [vmem:[%s1 + $0x48d8] sm:$0xff]
  %v2385 = vld [vmem:[%s1 + $0x48e0] sm:$0xff]
  %v2386 = vld [vmem:[%s1 + $0x48e8] sm:$0xff]
  %v2387 = vld [vmem:[%s1 + $0x48f0] sm:$0xff]
  %v2388 = vld [vmem:[%s1 + $0x48f8] sm:$0xff]
  %v2389 = vld [vmem:[%s1 + $0x4900] sm:$0xff]
  %v2390 = vld [vmem:[%s1 + $0x4908] sm:$0xff]
  %v2391 = vld [vmem:[%s1 + $0x4910] sm:$0xff]
  %v2392 = vld [vmem:[%s1 + $0x4918] sm:$0xff]
  %v2393 = vld [vmem:[%s1 + $0x4920] sm:$0xff]
  %v2394 = vld [vmem:[%s1 + $0x4928] sm:$0xff]
  %v2395 = vld [vmem:[%s1 + $0x4930] sm:$0xff]
  %v2396 = vld [vmem:[%s1 + $0x4938] sm:$0xff]
  %v2397 = vld [vmem:[%s1 + $0x4940] sm:$0xff]
  %v2398 = vld [vmem:[%s1 + $0x4948] sm:$0xff]
  %v2399 = vld [vmem:[%s1 + $0x4950] sm:$0xff]
  %v2400 = vld [vmem:[%s1 + $0x4958] sm:$0xff]
  %v2401 = vld [vmem:[%s1 + $0x4960] sm:$0xff]
  %v2402 = vld [vmem:[%s1 + $0x4968] sm:$0xff]
  %v2403 = vld [vmem:[%s1 + $0x4970] sm:$0xff]
  %v2404 = vld [vmem:[%s1 + $0x4978] sm:$0xff]
  %v2405 = vld [vmem:[%s1 + $0x4980] sm:$0xff]
  %v2406 = vld [vmem:[%s1 + $0x4988] sm:$0xff]
  %v2407 = vld [vmem:[%s1 + $0x4990] sm:$0xff]
  %v2408 = vld [vmem:[%s1 + $0x4998] sm:$0xff]
  %v2409 = vld [vmem:[%s1 + $0x49a0] sm:$0xff]
  %v2410 = vld [vmem:[%s1 + $0x49a8] sm:$0xff]
  %v2411 = vld [vmem:[%s1 + $0x49b0] sm:$0xff]
  %v2412 = vld [vmem:[%s1 + $0x49b8] sm:$0xff]
  %v2413 = vld [vmem:[%s1 + $0x49c0] sm:$0xff]
  %v2414 = vld [vmem:[%s1 + $0x49c8] sm:$0xff]
  %v2415 = vld [vmem:[%s1 + $0x49d0] sm:$0xff]
  %v2416 = vld [vmem:[%s1 + $0x49d8] sm:$0xff]
  %v2417 = vld [vmem:[%s1 + $0x49e0] sm:$0xff]
  %v2418 = vld [vmem:[%s1 + $0x49e8] sm:$0xff]
  %v2419 = vld [vmem:[%s1 + $0x49f0] sm:$0xff]
  %v2420 = vld [vmem:[%s1 + $0x49f8] sm:$0xff]
  %v2421 = vld [vmem:[%s1 + $0x4a00] sm:$0xff]
  %v2422 = vld [vmem:[%s1 + $0x4a08] sm:$0xff]
  %v2423 = vld [vmem:[%s1 + $0x4a10] sm:$0xff]
  %v2424 = vld [vmem:[%s1 + $0x4a18] sm:$0xff]
  %v2425 = vld [vmem:[%s1 + $0x4a20] sm:$0xff]
  %v2426 = vld [vmem:[%s1 + $0x4a28] sm:$0xff]
  %v2427 = vld [vmem:[%s1 + $0x4a30] sm:$0xff]
  %v2428 = vld [vmem:[%s1 + $0x4a38] sm:$0xff]
  %v2429 = vld [vmem:[%s1 + $0x4a40] sm:$0xff]
  %v2430 = vld [vmem:[%s1 + $0x4a48] sm:$0xff]
  %v2431 = vld [vmem:[%s1 + $0x4a50] sm:$0xff]
  %v2432 = vld [vmem:[%s1 + $0x4a58] sm:$0xff]
  %v2433 = vld [vmem:[%s1 + $0x4a60] sm:$0xff]
  %v2434 = vld [vmem:[%s1 + $0x4a68] sm:$0xff]
  %v2435 = vld [vmem:[%s1 + $0x4a70] sm:$0xff]
  %v2436 = vld [vmem:[%s1 + $0x4a78] sm:$0xff]
  %v2437 = vld [vmem:[%s1 + $0x4a80] sm:$0xff]
  %v2438 = vld [vmem:[%s1 + $0x4a88] sm:$0xff]
  %v2439 = vld [vmem:[%s1 + $0x4a90] sm:$0xff]
  %v2440 = vld [vmem:[%s1 + $0x4a98] sm:$0xff]
  %v2441 = vld [vmem:[%s1 + $0x4aa0] sm:$0xff]
  %v2442 = vld [vmem:[%s1 + $0x4aa8] sm:$0xff]
  %v2443 = vld [vmem:[%s1 + $0x4ab0] sm:$0xff]
  %v2444 = vld [vmem:[%s1 + $0x4ab8] sm:$0xff]
  %v2445 = vld [vmem:[%s1 + $0x4ac0] sm:$0xff]
  %v2446 = vld [vmem:[%s1 + $0x4ac8] sm:$0xff]
  %v2447 = vld [vmem:[%s1 + $0x4ad0] sm:$0xff]
  %v2448 = vld [vmem:[%s1 + $0x4ad8] sm:$0xff]
  %v2449 = vld [vmem:[%s1 + $0x4ae0] sm:$0xff]
  %v2450 = vld [vmem:[%s1 + $0x4ae8] sm:$0xff]
  %v2451 = vld [vmem:[%s1 + $0x4af0] sm:$0xff]
  %v2452 = vld [vmem:[%s1 + $0x4af8] sm:$0xff]
  %v2453 = vld [vmem:[%s1 + $0x4b00] sm:$0xff]
  %v2454 = vld [vmem:[%s1 + $0x4b08] sm:$0xff]
  %v2455 = vld [vmem:[%s1 + $0x4b10] sm:$0xff]
  %v2456 = vld [vmem:[%s1 + $0x4b18] sm:$0xff]
  %v2457 = vld [vmem:[%s1 + $0x4b20] sm:$0xff]
  %v2458 = vld [vmem:[%s1 + $0x4b28] sm:$0xff]
  %v2459 = vld [vmem:[%s1 + $0x4b30] sm:$0xff]
  %v2460 = vld [vmem:[%s1 + $0x4b38] sm:$0xff]
  %v2461 = vld [vmem:[%s1 + $0x4b40] sm:$0xff]
  %v2462 = vld [vmem:[%s1 + $0x4b48] sm:$0xff]
  %v2463 = vld [vmem:[%s1 + $0x4b50] sm:$0xff]
  %v2464 = vld [vmem:[%s1 + $0x4b58] sm:$0xff]
  %v2465 = vld [vmem:[%s1 + $0x4b60] sm:$0xff]
  %v2466 = vld [vmem:[%s1 + $0x4b68] sm:$0xff]
  %v2467 = vld [vmem:[%s1 + $0x4b70] sm:$0xff]
  %v2468 = vld [vmem:[%s1 + $0x4b78] sm:$0xff]
  %v2469 = vld [vmem:[%s1 + $0x4b80] sm:$0xff]
  %v2470 = vld [vmem:[%s1 + $0x4b88] sm:$0xff]
  %v2471 = vld [vmem:[%s1 + $0x4b90] sm:$0xff]
  %v2472 = vld [vmem:[%s1 + $0x4b98] sm:$0xff]
  %v2473 = vld [vmem:[%s1 + $0x4ba0] sm:$0xff]
  %v2474 = vld [vmem:[%s1 + $0x4ba8] sm:$0xff]
  %v2475 = vld [vmem:[%s1 + $0x4bb0] sm:$0xff]
  %v2476 = vld [vmem:[%s1 + $0x4bb8] sm:$0xff]
  %v2477 = vld [vmem:[%s1 + $0x4bc0] sm:$0xff]
  %v2478 = vld [vmem:[%s1 + $0x4bc8] sm:$0xff]
  %v2479 = vld [vmem:[%s1 + $0x4bd0] sm:$0xff]
  %v2480 = vld [vmem:[%s1 + $0x4bd8] sm:$0xff]
  %v2481 = vld [vmem:[%s1 + $0x4be0] sm:$0xff]
  %v2482 = vld [vmem:[%s1 + $0x4be8] sm:$0xff]
  %v2483 = vld [vmem:[%s1 + $0x4bf0] sm:$0xff]
  %v2484 = vld [vmem:[%s1 + $0x4bf8] sm:$0xff]
  %v2485 = vld [vmem:[%s1 + $0x4c00] sm:$0xff]
  %v2486 = vld [vmem:[%s1 + $0x4c08] sm:$0xff]
  %v2487 = vld [vmem:[%s1 + $0x4c10] sm:$0xff]
  %v2488 = vld [vmem:[%s1 + $0x4c18] sm:$0xff]
  %v2489 = vld [vmem:[%s1 + $0x4c20] sm:$0xff]
  %v2490 = vld [vmem:[%s1 + $0x4c28] sm:$0xff]
  %v2491 = vld [vmem:[%s1 + $0x4c30] sm:$0xff]
  %v2492 = vld [vmem:[%s1 + $0x4c38] sm:$0xff]
  %v2493 = vld [vmem:[%s1 + $0x4c40] sm:$0xff]
  %v2494 = vld [vmem:[%s1 + $0x4c48] sm:$0xff]
  %v2495 = vld [vmem:[%s1 + $0x4c50] sm:$0xff]
  %v2496 = vld [vmem:[%s1 + $0x4c58] sm:$0xff]
  %v2497 = vld [vmem:[%s1 + $0x4c60] sm:$0xff]
  %v2498 = vld [vmem:[%s1 + $0x4c68] sm:$0xff]
  %v2499 = vld [vmem:[%s1 + $0x4c70] sm:$0xff]
  %v2500 = vld [vmem:[%s1 + $0x4c78] sm:$0xff]
  %v2501 = vld [vmem:[%s1 + $0x4c80] sm:$0xff]
  %v2502 = vld [vmem:[%s1 + $0x4c88] sm:$0xff]
  %v2503 = vld [vmem:[%s1 + $0x4c90] sm:$0xff]
  %v2504 = vld [vmem:[%s1 + $0x4c98] sm:$0xff]
  %v2505 = vld [vmem:[%s1 + $0x4ca0] sm:$0xff]
  %v2506 = vld [vmem:[%s1 + $0x4ca8] sm:$0xff]
  %v2507 = vld [vmem:[%s1 + $0x4cb0] sm:$0xff]
  %v2508 = vld [vmem:[%s1 + $0x4cb8] sm:$0xff]
  %v2509 = vld [vmem:[%s1 + $0x4cc0] sm:$0xff]
  %v2510 = vld [vmem:[%s1 + $0x4cc8] sm:$0xff]
  %v2511 = vld [vmem:[%s1 + $0x4cd0] sm:$0xff]
  %v2512 = vld [vmem:[%s1 + $0x4cd8] sm:$0xff]
  %v2513 = vld [vmem:[%s1 + $0x4ce0] sm:$0xff]
  %v2514 = vld [vmem:[%s1 + $0x4ce8] sm:$0xff]
  %v2515 = vld [vmem:[%s1 + $0x4cf0] sm:$0xff]
  %v2516 = vld [vmem:[%s1 + $0x4cf8] sm:$0xff]
  %v2517 = vld [vmem:[%s1 + $0x4d00] sm:$0xff]
  %v2518 = vld [vmem:[%s1 + $0x4d08] sm:$0xff]
  %v2519 = vld [vmem:[%s1 + $0x4d10] sm:$0xff]
  %v2520 = vld [vmem:[%s1 + $0x4d18] sm:$0xff]
  %v2521 = vld [vmem:[%s1 + $0x4d20] sm:$0xff]
  %v2522 = vld [vmem:[%s1 + $0x4d28] sm:$0xff]
  %v2523 = vld [vmem:[%s1 + $0x4d30] sm:$0xff]
  %v2524 = vld [vmem:[%s1 + $0x4d38] sm:$0xff]
  %v2525 = vld [vmem:[%s1 + $0x4d40] sm:$0xff]
  %v2526 = vld [vmem:[%s1 + $0x4d48] sm:$0xff]
  %v2527 = vld [vmem:[%s1 + $0x4d50] sm:$0xff]
  %v2528 = vld [vmem:[%s1 + $0x4d58] sm:$0xff]
  %v2529 = vld [vmem:[%s1 + $0x4d60] sm:$0xff]
  %v2530 = vld [vmem:[%s1 + $0x4d68] sm:$0xff]
  %v2531 = vld [vmem:[%s1 + $0x4d70] sm:$0xff]
  %v2532 = vld [vmem:[%s1 + $0x4d78] sm:$0xff]
  %v2533 = vld [vmem:[%s1 + $0x4d80] sm:$0xff]
  %v2534 = vld [vmem:[%s1 + $0x4d88] sm:$0xff]
  %v2535 = vld [vmem:[%s1 + $0x4d90] sm:$0xff]
  %v2536 = vld [vmem:[%s1 + $0x4d98] sm:$0xff]
  %v2537 = vld [vmem:[%s1 + $0x4da0] sm:$0xff]
  %v2538 = vld [vmem:[%s1 + $0x4da8] sm:$0xff]
  %v2539 = vld [vmem:[%s1 + $0x4db0] sm:$0xff]
  %v2540 = vld [vmem:[%s1 + $0x4db8] sm:$0xff]
  %v2541 = vld [vmem:[%s1 + $0x4dc0] sm:$0xff]
  %v2542 = vld [vmem:[%s1 + $0x4dc8] sm:$0xff]
  %v2543 = vld [vmem:[%s1 + $0x4dd0] sm:$0xff]
  %v2544 = vld [vmem:[%s1 + $0x4dd8] sm:$0xff]
  %v2545 = vld [vmem:[%s1 + $0x4de0] sm:$0xff]
  %v2546 = vld [vmem:[%s1 + $0x4de8] sm:$0xff]
  %v2547 = vld [vmem:[%s1 + $0x4df0] sm:$0xff]
  %v2548 = vld [vmem:[%s1 + $0x4df8] sm:$0xff]
  %v2549 = vld [vmem:[%s1 + $0x4e00] sm:$0xff]
  %v2550 = vld [vmem:[%s1 + $0x4e08] sm:$0xff]
  %v2551 = vld [vmem:[%s1 + $0x4e10] sm:$0xff]
  %v2552 = vld [vmem:[%s1 + $0x4e18] sm:$0xff]
  %v2553 = vld [vmem:[%s1 + $0x4e20] sm:$0xff]
  %v2554 = vld [vmem:[%s1 + $0x4e28] sm:$0xff]
  %v2555 = vld [vmem:[%s1 + $0x4e30] sm:$0xff]
  %v2556 = vld [vmem:[%s1 + $0x4e38] sm:$0xff]
  %v2557 = vld [vmem:[%s1 + $0x4e40] sm:$0xff]
  %v2558 = vld [vmem:[%s1 + $0x4e48] sm:$0xff]
  %v2559 = vld [vmem:[%s1 + $0x4e50] sm:$0xff]
  %v2560 = vld [vmem:[%s1 + $0x4e58] sm:$0xff]
  %v2561 = vld [vmem:[%s1 + $0x4e60] sm:$0xff]
  %v2562 = vld [vmem:[%s1 + $0x4e68] sm:$0xff]
  %v2563 = vld [vmem:[%s1 + $0x4e70] sm:$0xff]
  %v2564 = vld [vmem:[%s1 + $0x4e78] sm:$0xff]
  %v2565 = vld [vmem:[%s1 + $0x4e80] sm:$0xff]
  %v2566 = vld [vmem:[%s1 + $0x4e88] sm:$0xff]
  %v2567 = vld [vmem:[%s1 + $0x4e90] sm:$0xff]
  %v2568 = vld [vmem:[%s1 + $0x4e98] sm:$0xff]
  %v2569 = vld [vmem:[%s1 + $0x4ea0] sm:$0xff]
  %v2570 = vld [vmem:[%s1 + $0x4ea8] sm:$0xff]
  %v2571 = vld [vmem:[%s1 + $0x4eb0] sm:$0xff]
  %v2572 = vld [vmem:[%s1 + $0x4eb8] sm:$0xff]
  %v2573 = vld [vmem:[%s1 + $0x4ec0] sm:$0xff]
  %v2574 = vld [vmem:[%s1 + $0x4ec8] sm:$0xff]
  %v2575 = vld [vmem:[%s1 + $0x4ed0] sm:$0xff]
  %v2576 = vld [vmem:[%s1 + $0x4ed8] sm:$0xff]
  %v2577 = vld [vmem:[%s1 + $0x4ee0] sm:$0xff]
  %v2578 = vld [vmem:[%s1 + $0x4ee8] sm:$0xff]
  %v2579 = vld [vmem:[%s1 + $0x4ef0] sm:$0xff]
  %v2580 = vld [vmem:[%s1 + $0x4ef8] sm:$0xff]
  %v2581 = vld [vmem:[%s1 + $0x4f00] sm:$0xff]
  %v2582 = vld [vmem:[%s1 + $0x4f08] sm:$0xff]
  %v2583 = vld [vmem:[%s1 + $0x4f10] sm:$0xff]
  %v2584 = vld [vmem:[%s1 + $0x4f18] sm:$0xff]
  %v2585 = vld [vmem:[%s1 + $0x4f20] sm:$0xff]
  %v2586 = vld [vmem:[%s1 + $0x4f28] sm:$0xff]
  %v2587 = vld [vmem:[%s1 + $0x4f30] sm:$0xff]
  %v2588 = vld [vmem:[%s1 + $0x4f38] sm:$0xff]
  %v2589 = vld [vmem:[%s1 + $0x4f40] sm:$0xff]
  %v2590 = vld [vmem:[%s1 + $0x4f48] sm:$0xff]
  %v2591 = vld [vmem:[%s1 + $0x4f50] sm:$0xff]
  %v2592 = vld [vmem:[%s1 + $0x4f58] sm:$0xff]
  %v2593 = vld [vmem:[%s1 + $0x4f60] sm:$0xff]
  %v2594 = vld [vmem:[%s1 + $0x4f68] sm:$0xff]
  %v2595 = vld [vmem:[%s1 + $0x4f70] sm:$0xff]
  %v2596 = vld [vmem:[%s1 + $0x4f78] sm:$0xff]
  %v2597 = vld [vmem:[%s1 + $0x4f80] sm:$0xff]
  %v2598 = vld [vmem:[%s1 + $0x4f88] sm:$0xff]
  %v2599 = vld [vmem:[%s1 + $0x4f90] sm:$0xff]
  %v2600 = vld [vmem:[%s1 + $0x4f98] sm:$0xff]
  %v2601 = vld [vmem:[%s1 + $0x4fa0] sm:$0xff]
  %v2602 = vld [vmem:[%s1 + $0x4fa8] sm:$0xff]
  %v2603 = vld [vmem:[%s1 + $0x4fb0] sm:$0xff]
  %v2604 = vld [vmem:[%s1 + $0x4fb8] sm:$0xff]
  %v2605 = vld [vmem:[%s1 + $0x4fc0] sm:$0xff]
  %v2606 = vld [vmem:[%s1 + $0x4fc8] sm:$0xff]
  %v2607 = vld [vmem:[%s1 + $0x4fd0] sm:$0xff]
  %v2608 = vld [vmem:[%s1 + $0x4fd8] sm:$0xff]
  %v2609 = vld [vmem:[%s1 + $0x4fe0] sm:$0xff]
  %v2610 = vld [vmem:[%s1 + $0x4fe8] sm:$0xff]
  %v2611 = vld [vmem:[%s1 + $0x4ff0] sm:$0xff]
  %v2612 = vld [vmem:[%s1 + $0x4ff8] sm:$0xff]
  %v2613 = vld [vmem:[%s1 + $0x5000] sm:$0xff]
  %v2614 = vld [vmem:[%s1 + $0x5008] sm:$0xff]
  %v2615 = vld [vmem:[%s1 + $0x5010] sm:$0xff]
  %v2616 = vld [vmem:[%s1 + $0x5018] sm:$0xff]
  %v2617 = vld [vmem:[%s1 + $0x5020] sm:$0xff]
  %v2618 = vld [vmem:[%s1 + $0x5028] sm:$0xff]
  %v2619 = vld [vmem:[%s1 + $0x5030] sm:$0xff]
  %v2620 = vld [vmem:[%s1 + $0x5038] sm:$0xff]
  %v2621 = vld [vmem:[%s1 + $0x5040] sm:$0xff]
  %v2622 = vld [vmem:[%s1 + $0x5048] sm:$0xff]
  %v2623 = vld [vmem:[%s1 + $0x5050] sm:$0xff]
  %v2624 = vld [vmem:[%s1 + $0x5058] sm:$0xff]
  %v2625 = vld [vmem:[%s1 + $0x5060] sm:$0xff]
  %v2626 = vld [vmem:[%s1 + $0x5068] sm:$0xff]
  %v2627 = vld [vmem:[%s1 + $0x5070] sm:$0xff]
  %v2628 = vld [vmem:[%s1 + $0x5078] sm:$0xff]
  %v2629 = vld [vmem:[%s1 + $0x5080] sm:$0xff]
  %v2630 = vld [vmem:[%s1 + $0x5088] sm:$0xff]
  %v2631 = vld [vmem:[%s1 + $0x5090] sm:$0xff]
  %v2632 = vld [vmem:[%s1 + $0x5098] sm:$0xff]
  %v2633 = vld [vmem:[%s1 + $0x50a0] sm:$0xff]
  %v2634 = vld [vmem:[%s1 + $0x50a8] sm:$0xff]
  %v2635 = vld [vmem:[%s1 + $0x50b0] sm:$0xff]
  %v2636 = vld [vmem:[%s1 + $0x50b8] sm:$0xff]
  %v2637 = vld [vmem:[%s1 + $0x50c0] sm:$0xff]
  %v2638 = vld [vmem:[%s1 + $0x50c8] sm:$0xff]
  %v2639 = vld [vmem:[%s1 + $0x50d0] sm:$0xff]
  %v2640 = vld [vmem:[%s1 + $0x50d8] sm:$0xff]
  %v2641 = vld [vmem:[%s1 + $0x50e0] sm:$0xff]
  %v2642 = vld [vmem:[%s1 + $0x50e8] sm:$0xff]
  %v2643 = vld [vmem:[%s1 + $0x50f0] sm:$0xff]
  %v2644 = vld [vmem:[%s1 + $0x50f8] sm:$0xff]
  %v2645 = vld [vmem:[%s1 + $0x5100] sm:$0xff]
  %v2646 = vld [vmem:[%s1 + $0x5108] sm:$0xff]
  %v2647 = vld [vmem:[%s1 + $0x5110] sm:$0xff]
  %v2648 = vld [vmem:[%s1 + $0x5118] sm:$0xff]
  %v2649 = vld [vmem:[%s1 + $0x5120] sm:$0xff]
  %v2650 = vld [vmem:[%s1 + $0x5128] sm:$0xff]
  %v2651 = vld [vmem:[%s1 + $0x5130] sm:$0xff]
  %v2652 = vld [vmem:[%s1 + $0x5138] sm:$0xff]
  %v2653 = vld [vmem:[%s1 + $0x5140] sm:$0xff]
  %v2654 = vld [vmem:[%s1 + $0x5148] sm:$0xff]
  %v2655 = vld [vmem:[%s1 + $0x5150] sm:$0xff]
  %v2656 = vld [vmem:[%s1 + $0x5158] sm:$0xff]
  %v2657 = vld [vmem:[%s1 + $0x5160] sm:$0xff]
  %v2658 = vld [vmem:[%s1 + $0x5168] sm:$0xff]
  %v2659 = vld [vmem:[%s1 + $0x5170] sm:$0xff]
  %v2660 = vld [vmem:[%s1 + $0x5178] sm:$0xff]
  %v2661 = vld [vmem:[%s1 + $0x5180] sm:$0xff]
  %v2662 = vld [vmem:[%s1 + $0x5188] sm:$0xff]
  %v2663 = vld [vmem:[%s1 + $0x5190] sm:$0xff]
  %v2664 = vld [vmem:[%s1 + $0x5198] sm:$0xff]
  %v2665 = vld [vmem:[%s1 + $0x51a0] sm:$0xff]
  %v2666 = vld [vmem:[%s1 + $0x51a8] sm:$0xff]
  %v2667 = vld [vmem:[%s1 + $0x51b0] sm:$0xff]
  %v2668 = vld [vmem:[%s1 + $0x51b8] sm:$0xff]
  %v2669 = vld [vmem:[%s1 + $0x51c0] sm:$0xff]
  %v2670 = vld [vmem:[%s1 + $0x51c8] sm:$0xff]
  %v2671 = vld [vmem:[%s1 + $0x51d0] sm:$0xff]
  %v2672 = vld [vmem:[%s1 + $0x51d8] sm:$0xff]
  %v2673 = vld [vmem:[%s1 + $0x51e0] sm:$0xff]
  %v2674 = vld [vmem:[%s1 + $0x51e8] sm:$0xff]
  %v2675 = vld [vmem:[%s1 + $0x51f0] sm:$0xff]
  %v2676 = vld [vmem:[%s1 + $0x51f8] sm:$0xff]
  %v2677 = vld [vmem:[%s1 + $0x5200] sm:$0xff]
  %v2678 = vld [vmem:[%s1 + $0x5208] sm:$0xff]
  %v2679 = vld [vmem:[%s1 + $0x5210] sm:$0xff]
  %v2680 = vld [vmem:[%s1 + $0x5218] sm:$0xff]
  %v2681 = vld [vmem:[%s1 + $0x5220] sm:$0xff]
  %v2682 = vld [vmem:[%s1 + $0x5228] sm:$0xff]
  %v2683 = vld [vmem:[%s1 + $0x5230] sm:$0xff]
  %v2684 = vld [vmem:[%s1 + $0x5238] sm:$0xff]
  %v2685 = vld [vmem:[%s1 + $0x5240] sm:$0xff]
  %v2686 = vld [vmem:[%s1 + $0x5248] sm:$0xff]
  %v2687 = vld [vmem:[%s1 + $0x5250] sm:$0xff]
  %v2688 = vld [vmem:[%s1 + $0x5258] sm:$0xff]
  %v2689 = vld [vmem:[%s1 + $0x5260] sm:$0xff]
  %v2690 = vld [vmem:[%s1 + $0x5268] sm:$0xff]
  %v2691 = vld [vmem:[%s1 + $0x5270] sm:$0xff]
  %v2692 = vld [vmem:[%s1 + $0x5278] sm:$0xff]
  %v2693 = vld [vmem:[%s1 + $0x5280] sm:$0xff]
  %v2694 = vld [vmem:[%s1 + $0x5288] sm:$0xff]
  %v2695 = vld [vmem:[%s1 + $0x5290] sm:$0xff]
  %v2696 = vld [vmem:[%s1 + $0x5298] sm:$0xff]
  %v2697 = vld [vmem:[%s1 + $0x52a0] sm:$0xff]
  %v2698 = vld [vmem:[%s1 + $0x52a8] sm:$0xff]
  %v2699 = vld [vmem:[%s1 + $0x52b0] sm:$0xff]
  %v2700 = vld [vmem:[%s1 + $0x52b8] sm:$0xff]
  %v2701 = vld [vmem:[%s1 + $0x52c0] sm:$0xff]
  %v2702 = vld [vmem:[%s1 + $0x52c8] sm:$0xff]
  %v2703 = vld [vmem:[%s1 + $0x52d0] sm:$0xff]
  %v2704 = vld [vmem:[%s1 + $0x52d8] sm:$0xff]
  %v2705 = vld [vmem:[%s1 + $0x52e0] sm:$0xff]
  %v2706 = vld [vmem:[%s1 + $0x52e8] sm:$0xff]
  %v2707 = vld [vmem:[%s1 + $0x52f0] sm:$0xff]
  %v2708 = vld [vmem:[%s1 + $0x52f8] sm:$0xff]
  %v2709 = vld [vmem:[%s1 + $0x5300] sm:$0xff]
  %v2710 = vld [vmem:[%s1 + $0x5308] sm:$0xff]
  %v2711 = vld [vmem:[%s1 + $0x5310] sm:$0xff]
  %v2712 = vld [vmem:[%s1 + $0x5318] sm:$0xff]
  %v2713 = vld [vmem:[%s1 + $0x5320] sm:$0xff]
  %v2714 = vld [vmem:[%s1 + $0x5328] sm:$0xff]
  %v2715 = vld [vmem:[%s1 + $0x5330] sm:$0xff]
  %v2716 = vld [vmem:[%s1 + $0x5338] sm:$0xff]
  %v2717 = vld [vmem:[%s1 + $0x5340] sm:$0xff]
  %v2718 = vld [vmem:[%s1 + $0x5348] sm:$0xff]
  %v2719 = vld [vmem:[%s1 + $0x5350] sm:$0xff]
  %v2720 = vld [vmem:[%s1 + $0x5358] sm:$0xff]
  %v2721 = vld [vmem:[%s1 + $0x5360] sm:$0xff]
  %v2722 = vld [vmem:[%s1 + $0x5368] sm:$0xff]
  %v2723 = vld [vmem:[%s1 + $0x5370] sm:$0xff]
  %v2724 = vld [vmem:[%s1 + $0x5378] sm:$0xff]
  %v2725 = vld [vmem:[%s1 + $0x5380] sm:$0xff]
  %v2726 = vld [vmem:[%s1 + $0x5388] sm:$0xff]
  %v2727 = vld [vmem:[%s1 + $0x5390] sm:$0xff]
  %v2728 = vld [vmem:[%s1 + $0x5398] sm:$0xff]
  %v2729 = vld [vmem:[%s1 + $0x53a0] sm:$0xff]
  %v2730 = vld [vmem:[%s1 + $0x53a8] sm:$0xff]
  %v2731 = vld [vmem:[%s1 + $0x53b0] sm:$0xff]
  %v2732 = vld [vmem:[%s1 + $0x53b8] sm:$0xff]
  %v2733 = vld [vmem:[%s1 + $0x53c0] sm:$0xff]
  %v2734 = vld [vmem:[%s1 + $0x53c8] sm:$0xff]
  %v2735 = vld [vmem:[%s1 + $0x53d0] sm:$0xff]
  %v2736 = vld [vmem:[%s1 + $0x53d8] sm:$0xff]
  %v2737 = vld [vmem:[%s1 + $0x53e0] sm:$0xff]
  %v2738 = vld [vmem:[%s1 + $0x53e8] sm:$0xff]
  %v2739 = vld [vmem:[%s1 + $0x53f0] sm:$0xff]
  %v2740 = vld [vmem:[%s1 + $0x53f8] sm:$0xff]
  %v2741 = vld [vmem:[%s1 + $0x5400] sm:$0xff]
  %v2742 = vld [vmem:[%s1 + $0x5408] sm:$0xff]
  %v2743 = vld [vmem:[%s1 + $0x5410] sm:$0xff]
  %v2744 = vld [vmem:[%s1 + $0x5418] sm:$0xff]
  %v2745 = vld [vmem:[%s1 + $0x5420] sm:$0xff]
  %v2746 = vld [vmem:[%s1 + $0x5428] sm:$0xff]
  %v2747 = vld [vmem:[%s1 + $0x5430] sm:$0xff]
  %v2748 = vld [vmem:[%s1 + $0x5438] sm:$0xff]
  %v2749 = vld [vmem:[%s1 + $0x5440] sm:$0xff]
  %v2750 = vld [vmem:[%s1 + $0x5448] sm:$0xff]
  %v2751 = vld [vmem:[%s1 + $0x5450] sm:$0xff]
  %v2752 = vld [vmem:[%s1 + $0x5458] sm:$0xff]
  %v2753 = vld [vmem:[%s1 + $0x5460] sm:$0xff]
  %v2754 = vld [vmem:[%s1 + $0x5468] sm:$0xff]
  %v2755 = vld [vmem:[%s1 + $0x5470] sm:$0xff]
  %v2756 = vld [vmem:[%s1 + $0x5478] sm:$0xff]
  %v2757 = vld [vmem:[%s1 + $0x5480] sm:$0xff]
  %v2758 = vld [vmem:[%s1 + $0x5488] sm:$0xff]
  %v2759 = vld [vmem:[%s1 + $0x5490] sm:$0xff]
  %v2760 = vld [vmem:[%s1 + $0x5498] sm:$0xff]
  %v2761 = vld [vmem:[%s1 + $0x54a0] sm:$0xff]
  %v2762 = vld [vmem:[%s1 + $0x54a8] sm:$0xff]
  %v2763 = vld [vmem:[%s1 + $0x54b0] sm:$0xff]
  %v2764 = vld [vmem:[%s1 + $0x54b8] sm:$0xff]
  %v2765 = vld [vmem:[%s1 + $0x54c0] sm:$0xff]
  %v2766 = vld [vmem:[%s1 + $0x54c8] sm:$0xff]
  %v2767 = vld [vmem:[%s1 + $0x54d0] sm:$0xff]
  %v2768 = vld [vmem:[%s1 + $0x54d8] sm:$0xff]
  %v2769 = vld [vmem:[%s1 + $0x54e0] sm:$0xff]
  %v2770 = vld [vmem:[%s1 + $0x54e8] sm:$0xff]
  %v2771 = vld [vmem:[%s1 + $0x54f0] sm:$0xff]
  %v2772 = vld [vmem:[%s1 + $0x54f8] sm:$0xff]
  %v2773 = vld [vmem:[%s1 + $0x5500] sm:$0xff]
  %v2774 = vld [vmem:[%s1 + $0x5508] sm:$0xff]
  %v2775 = vld [vmem:[%s1 + $0x5510] sm:$0xff]
  %v2776 = vld [vmem:[%s1 + $0x5518] sm:$0xff]
  %v2777 = vld [vmem:[%s1 + $0x5520] sm:$0xff]
  %v2778 = vld [vmem:[%s1 + $0x5528] sm:$0xff]
  %v2779 = vld [vmem:[%s1 + $0x5530] sm:$0xff]
  %v2780 = vld [vmem:[%s1 + $0x5538] sm:$0xff]
  %v2781 = vld [vmem:[%s1 + $0x5540] sm:$0xff]
  %v2782 = vld [vmem:[%s1 + $0x5548] sm:$0xff]
  %v2783 = vld [vmem:[%s1 + $0x5550] sm:$0xff]
  %v2784 = vld [vmem:[%s1 + $0x5558] sm:$0xff]
  %v2785 = vld [vmem:[%s1 + $0x5560] sm:$0xff]
  %v2786 = vld [vmem:[%s1 + $0x5568] sm:$0xff]
  %v2787 = vld [vmem:[%s1 + $0x5570] sm:$0xff]
  %v2788 = vld [vmem:[%s1 + $0x5578] sm:$0xff]
  %v2789 = vld [vmem:[%s1 + $0x5580] sm:$0xff]
  %v2790 = vld [vmem:[%s1 + $0x5588] sm:$0xff]
  %v2791 = vld [vmem:[%s1 + $0x5590] sm:$0xff]
  %v2792 = vld [vmem:[%s1 + $0x5598] sm:$0xff]
  %v2793 = vld [vmem:[%s1 + $0x55a0] sm:$0xff]
  %v2794 = vld [vmem:[%s1 + $0x55a8] sm:$0xff]
  %v2795 = vld [vmem:[%s1 + $0x55b0] sm:$0xff]
  %v2796 = vld [vmem:[%s1 + $0x55b8] sm:$0xff]
  %v2797 = vld [vmem:[%s1 + $0x55c0] sm:$0xff]
  %v2798 = vld [vmem:[%s1 + $0x55c8] sm:$0xff]
  %v2799 = vld [vmem:[%s1 + $0x55d0] sm:$0xff]
  %v2800 = vld [vmem:[%s1 + $0x55d8] sm:$0xff]
  %v2801 = vld [vmem:[%s1 + $0x55e0] sm:$0xff]
  %v2802 = vld [vmem:[%s1 + $0x55e8] sm:$0xff]
  %v2803 = vld [vmem:[%s1 + $0x55f0] sm:$0xff]
  %v2804 = vld [vmem:[%s1 + $0x55f8] sm:$0xff]
  %v2805 = vld [vmem:[%s1 + $0x5600] sm:$0xff]
  %v2806 = vld [vmem:[%s1 + $0x5608] sm:$0xff]
  %v2807 = vld [vmem:[%s1 + $0x5610] sm:$0xff]
  %v2808 = vld [vmem:[%s1 + $0x5618] sm:$0xff]
  %v2809 = vld [vmem:[%s1 + $0x5620] sm:$0xff]
  %v2810 = vld [vmem:[%s1 + $0x5628] sm:$0xff]
  %v2811 = vld [vmem:[%s1 + $0x5630] sm:$0xff]
  %v2812 = vld [vmem:[%s1 + $0x5638] sm:$0xff]
  %v2813 = vld [vmem:[%s1 + $0x5640] sm:$0xff]
  %v2814 = vld [vmem:[%s1 + $0x5648] sm:$0xff]
  %v2815 = vld [vmem:[%s1 + $0x5650] sm:$0xff]
  %v2816 = vld [vmem:[%s1 + $0x5658] sm:$0xff]
  %v2817 = vld [vmem:[%s1 + $0x5660] sm:$0xff]
  %v2818 = vld [vmem:[%s1 + $0x5668] sm:$0xff]
  %v2819 = vld [vmem:[%s1 + $0x5670] sm:$0xff]
  %v2820 = vld [vmem:[%s1 + $0x5678] sm:$0xff]
  %v2821 = vld [vmem:[%s1 + $0x5680] sm:$0xff]
  %v2822 = vld [vmem:[%s1 + $0x5688] sm:$0xff]
  %v2823 = vld [vmem:[%s1 + $0x5690] sm:$0xff]
  %v2824 = vld [vmem:[%s1 + $0x5698] sm:$0xff]
  %v2825 = vld [vmem:[%s1 + $0x56a0] sm:$0xff]
  %v2826 = vld [vmem:[%s1 + $0x56a8] sm:$0xff]
  %v2827 = vld [vmem:[%s1 + $0x56b0] sm:$0xff]
  %v2828 = vld [vmem:[%s1 + $0x56b8] sm:$0xff]
  %v2829 = vld [vmem:[%s1 + $0x56c0] sm:$0xff]
  %v2830 = vld [vmem:[%s1 + $0x56c8] sm:$0xff]
  %v2831 = vld [vmem:[%s1 + $0x56d0] sm:$0xff]
  %v2832 = vld [vmem:[%s1 + $0x56d8] sm:$0xff]
  %v2833 = vld [vmem:[%s1 + $0x56e0] sm:$0xff]
  %v2834 = vld [vmem:[%s1 + $0x56e8] sm:$0xff]
  %v2835 = vld [vmem:[%s1 + $0x56f0] sm:$0xff]
  %v2836 = vld [vmem:[%s1 + $0x56f8] sm:$0xff]
  %v2837 = vld [vmem:[%s1 + $0x5700] sm:$0xff]
  %v2838 = vld [vmem:[%s1 + $0x5708] sm:$0xff]
  %v2839 = vld [vmem:[%s1 + $0x5710] sm:$0xff]
  %v2840 = vld [vmem:[%s1 + $0x5718] sm:$0xff]
  %v2841 = vld [vmem:[%s1 + $0x5720] sm:$0xff]
  %v2842 = vld [vmem:[%s1 + $0x5728] sm:$0xff]
  %v2843 = vld [vmem:[%s1 + $0x5730] sm:$0xff]
  %v2844 = vld [vmem:[%s1 + $0x5738] sm:$0xff]
  %v2845 = vld [vmem:[%s1 + $0x5740] sm:$0xff]
  %v2846 = vld [vmem:[%s1 + $0x5748] sm:$0xff]
  %v2847 = vld [vmem:[%s1 + $0x5750] sm:$0xff]
  %v2848 = vld [vmem:[%s1 + $0x5758] sm:$0xff]
  %v2849 = vld [vmem:[%s1 + $0x5760] sm:$0xff]
  %v2850 = vld [vmem:[%s1 + $0x5768] sm:$0xff]
  %v2851 = vld [vmem:[%s1 + $0x5770] sm:$0xff]
  %v2852 = vld [vmem:[%s1 + $0x5778] sm:$0xff]
  %v2853 = vld [vmem:[%s1 + $0x5780] sm:$0xff]
  %v2854 = vld [vmem:[%s1 + $0x5788] sm:$0xff]
  %v2855 = vld [vmem:[%s1 + $0x5790] sm:$0xff]
  %v2856 = vld [vmem:[%s1 + $0x5798] sm:$0xff]
  %v2857 = vld [vmem:[%s1 + $0x57a0] sm:$0xff]
  %v2858 = vld [vmem:[%s1 + $0x57a8] sm:$0xff]
  %v2859 = vld [vmem:[%s1 + $0x57b0] sm:$0xff]
  %v2860 = vld [vmem:[%s1 + $0x57b8] sm:$0xff]
  %v2861 = vld [vmem:[%s1 + $0x57c0] sm:$0xff]
  %v2862 = vld [vmem:[%s1 + $0x57c8] sm:$0xff]
  %v2863 = vld [vmem:[%s1 + $0x57d0] sm:$0xff]
  %v2864 = vld [vmem:[%s1 + $0x57d8] sm:$0xff]
  %v2865 = vld [vmem:[%s1 + $0x57e0] sm:$0xff]
  %v2866 = vld [vmem:[%s1 + $0x57e8] sm:$0xff]
  %v2867 = vld [vmem:[%s1 + $0x57f0] sm:$0xff]
  %v2868 = vld [vmem:[%s1 + $0x57f8] sm:$0xff]
  %v2869 = vld [vmem:[%s1 + $0x5800] sm:$0xff]
  %v2870 = vld [vmem:[%s1 + $0x5808] sm:$0xff]
  %v2871 = vld [vmem:[%s1 + $0x5810] sm:$0xff]
  %v2872 = vld [vmem:[%s1 + $0x5818] sm:$0xff]
  %v2873 = vld [vmem:[%s1 + $0x5820] sm:$0xff]
  %v2874 = vld [vmem:[%s1 + $0x5828] sm:$0xff]
  %v2875 = vld [vmem:[%s1 + $0x5830] sm:$0xff]
  %v2876 = vld [vmem:[%s1 + $0x5838] sm:$0xff]
  %v2877 = vld [vmem:[%s1 + $0x5840] sm:$0xff]
  %v2878 = vld [vmem:[%s1 + $0x5848] sm:$0xff]
  %v2879 = vld [vmem:[%s1 + $0x5850] sm:$0xff]
  %v2880 = vld [vmem:[%s1 + $0x5858] sm:$0xff]
  %v2881 = vld [vmem:[%s1 + $0x5860] sm:$0xff]
  %v2882 = vld [vmem:[%s1 + $0x5868] sm:$0xff]
  %v2883 = vld [vmem:[%s1 + $0x5870] sm:$0xff]
  %v2884 = vld [vmem:[%s1 + $0x5878] sm:$0xff]
  %v2885 = vld [vmem:[%s1 + $0x5880] sm:$0xff]
  %v2886 = vld [vmem:[%s1 + $0x5888] sm:$0xff]
  %v2887 = vld [vmem:[%s1 + $0x5890] sm:$0xff]
  %v2888 = vld [vmem:[%s1 + $0x5898] sm:$0xff]
  %v2889 = vld [vmem:[%s1 + $0x58a0] sm:$0xff]
  %v2890 = vld [vmem:[%s1 + $0x58a8] sm:$0xff]
  %v2891 = vld [vmem:[%s1 + $0x58b0] sm:$0xff]
  %v2892 = vld [vmem:[%s1 + $0x58b8] sm:$0xff]
  %v2893 = vld [vmem:[%s1 + $0x58c0] sm:$0xff]
  %v2894 = vld [vmem:[%s1 + $0x58c8] sm:$0xff]
  %v2895 = vld [vmem:[%s1 + $0x58d0] sm:$0xff]
  %v2896 = vld [vmem:[%s1 + $0x58d8] sm:$0xff]
  %v2897 = vld [vmem:[%s1 + $0x58e0] sm:$0xff]
  %v2898 = vld [vmem:[%s1 + $0x58e8] sm:$0xff]
  %v2899 = vld [vmem:[%s1 + $0x58f0] sm:$0xff]
  %v2900 = vld [vmem:[%s1 + $0x58f8] sm:$0xff]
  %v2901 = vld [vmem:[%s1 + $0x5900] sm:$0xff]
  %v2902 = vld [vmem:[%s1 + $0x5908] sm:$0xff]
  %v2903 = vld [vmem:[%s1 + $0x5910] sm:$0xff]
  %v2904 = vld [vmem:[%s1 + $0x5918] sm:$0xff]
  %v2905 = vld [vmem:[%s1 + $0x5920] sm:$0xff]
  %v2906 = vld [vmem:[%s1 + $0x5928] sm:$0xff]
  %v2907 = vld [vmem:[%s1 + $0x5930] sm:$0xff]
  %v2908 = vld [vmem:[%s1 + $0x5938] sm:$0xff]
  %v2909 = vld [vmem:[%s1 + $0x5940] sm:$0xff]
  %v2910 = vld [vmem:[%s1 + $0x5948] sm:$0xff]
  %v2911 = vld [vmem:[%s1 + $0x5950] sm:$0xff]
  %v2912 = vld [vmem:[%s1 + $0x5958] sm:$0xff]
  %v2913 = vld [vmem:[%s1 + $0x5960] sm:$0xff]
  %v2914 = vld [vmem:[%s1 + $0x5968] sm:$0xff]
  %v2915 = vld [vmem:[%s1 + $0x5970] sm:$0xff]
  %v2916 = vld [vmem:[%s1 + $0x5978] sm:$0xff]
  %v2917 = vld [vmem:[%s1 + $0x5980] sm:$0xff]
  %v2918 = vld [vmem:[%s1 + $0x5988] sm:$0xff]
  %v2919 = vld [vmem:[%s1 + $0x5990] sm:$0xff]
  %v2920 = vld [vmem:[%s1 + $0x5998] sm:$0xff]
  %v2921 = vld [vmem:[%s1 + $0x59a0] sm:$0xff]
  %v2922 = vld [vmem:[%s1 + $0x59a8] sm:$0xff]
  %v2923 = vld [vmem:[%s1 + $0x59b0] sm:$0xff]
  %v2924 = vld [vmem:[%s1 + $0x59b8] sm:$0xff]
  %v2925 = vld [vmem:[%s1 + $0x59c0] sm:$0xff]
  %v2926 = vld [vmem:[%s1 + $0x59c8] sm:$0xff]
  %v2927 = vld [vmem:[%s1 + $0x59d0] sm:$0xff]
  %v2928 = vld [vmem:[%s1 + $0x59d8] sm:$0xff]
  %v2929 = vld [vmem:[%s1 + $0x59e0] sm:$0xff]
  %v2930 = vld [vmem:[%s1 + $0x59e8] sm:$0xff]
  %v2931 = vld [vmem:[%s1 + $0x59f0] sm:$0xff]
  %v2932 = vld [vmem:[%s1 + $0x59f8] sm:$0xff]
  %v2933 = vld [vmem:[%s1 + $0x5a00] sm:$0xff]
  %v2934 = vld [vmem:[%s1 + $0x5a08] sm:$0xff]
  %v2935 = vld [vmem:[%s1 + $0x5a10] sm:$0xff]
  %v2936 = vld [vmem:[%s1 + $0x5a18] sm:$0xff]
  %v2937 = vld [vmem:[%s1 + $0x5a20] sm:$0xff]
  %v2938 = vld [vmem:[%s1 + $0x5a28] sm:$0xff]
  %v2939 = vld [vmem:[%s1 + $0x5a30] sm:$0xff]
  %v2940 = vld [vmem:[%s1 + $0x5a38] sm:$0xff]
  %v2941 = vld [vmem:[%s1 + $0x5a40] sm:$0xff]
  %v2942 = vld [vmem:[%s1 + $0x5a48] sm:$0xff]
  %v2943 = vld [vmem:[%s1 + $0x5a50] sm:$0xff]
  %v2944 = vld [vmem:[%s1 + $0x5a58] sm:$0xff]
  %v2945 = vld [vmem:[%s1 + $0x5a60] sm:$0xff]
  %v2946 = vld [vmem:[%s1 + $0x5a68] sm:$0xff]
  %v2947 = vld [vmem:[%s1 + $0x5a70] sm:$0xff]
  %v2948 = vld [vmem:[%s1 + $0x5a78] sm:$0xff]
  %v2949 = vld [vmem:[%s1 + $0x5a80] sm:$0xff]
  %v2950 = vld [vmem:[%s1 + $0x5a88] sm:$0xff]
  %v2951 = vld [vmem:[%s1 + $0x5a90] sm:$0xff]
  %v2952 = vld [vmem:[%s1 + $0x5a98] sm:$0xff]
  %v2953 = vld [vmem:[%s1 + $0x5aa0] sm:$0xff]
  %v2954 = vld [vmem:[%s1 + $0x5aa8] sm:$0xff]
  %v2955 = vld [vmem:[%s1 + $0x5ab0] sm:$0xff]
  %v2956 = vld [vmem:[%s1 + $0x5ab8] sm:$0xff]
  %v2957 = vld [vmem:[%s1 + $0x5ac0] sm:$0xff]
  %v2958 = vld [vmem:[%s1 + $0x5ac8] sm:$0xff]
  %v2959 = vld [vmem:[%s1 + $0x5ad0] sm:$0xff]
  %v2960 = vld [vmem:[%s1 + $0x5ad8] sm:$0xff]
  %v2961 = vld [vmem:[%s1 + $0x5ae0] sm:$0xff]
  %v2962 = vld [vmem:[%s1 + $0x5ae8] sm:$0xff]
  %v2963 = vld [vmem:[%s1 + $0x5af0] sm:$0xff]
  %v2964 = vld [vmem:[%s1 + $0x5af8] sm:$0xff]
  %v2965 = vld [vmem:[%s1 + $0x5b00] sm:$0xff]
  %v2966 = vld [vmem:[%s1 + $0x5b08] sm:$0xff]
  %v2967 = vld [vmem:[%s1 + $0x5b10] sm:$0xff]
  %v2968 = vld [vmem:[%s1 + $0x5b18] sm:$0xff]
  %v2969 = vld [vmem:[%s1 + $0x5b20] sm:$0xff]
  %v2970 = vld [vmem:[%s1 + $0x5b28] sm:$0xff]
  %v2971 = vld [vmem:[%s1 + $0x5b30] sm:$0xff]
  %v2972 = vld [vmem:[%s1 + $0x5b38] sm:$0xff]
  %v2973 = vld [vmem:[%s1 + $0x5b40] sm:$0xff]
  %v2974 = vld [vmem:[%s1 + $0x5b48] sm:$0xff]
  %v2975 = vld [vmem:[%s1 + $0x5b50] sm:$0xff]
  %v2976 = vld [vmem:[%s1 + $0x5b58] sm:$0xff]
  %v2977 = vld [vmem:[%s1 + $0x5b60] sm:$0xff]
  %v2978 = vld [vmem:[%s1 + $0x5b68] sm:$0xff]
  %v2979 = vld [vmem:[%s1 + $0x5b70] sm:$0xff]
  %v2980 = vld [vmem:[%s1 + $0x5b78] sm:$0xff]
  %v2981 = vld [vmem:[%s1 + $0x5b80] sm:$0xff]
  %v2982 = vld [vmem:[%s1 + $0x5b88] sm:$0xff]
  %v2983 = vld [vmem:[%s1 + $0x5b90] sm:$0xff]
  %v2984 = vld [vmem:[%s1 + $0x5b98] sm:$0xff]
  %v2985 = vld [vmem:[%s1 + $0x5ba0] sm:$0xff]
  %v2986 = vld [vmem:[%s1 + $0x5ba8] sm:$0xff]
  %v2987 = vld [vmem:[%s1 + $0x5bb0] sm:$0xff]
  %v2988 = vld [vmem:[%s1 + $0x5bb8] sm:$0xff]
  %v2989 = vld [vmem:[%s1 + $0x5bc0] sm:$0xff]
  %v2990 = vld [vmem:[%s1 + $0x5bc8] sm:$0xff]
  %v2991 = vld [vmem:[%s1 + $0x5bd0] sm:$0xff]
  %v2992 = vld [vmem:[%s1 + $0x5bd8] sm:$0xff]
  %v2993 = vld [vmem:[%s1 + $0x5be0] sm:$0xff]
  %v2994 = vld [vmem:[%s1 + $0x5be8] sm:$0xff]
  %v2995 = vld [vmem:[%s1 + $0x5bf0] sm:$0xff]
  %v2996 = vld [vmem:[%s1 + $0x5bf8] sm:$0xff]
  %v2997 = vld [vmem:[%s1 + $0x5c00] sm:$0xff]
  %v2998 = vld [vmem:[%s1 + $0x5c08] sm:$0xff]
  %v2999 = vld [vmem:[%s1 + $0x5c10] sm:$0xff]
  %v3000 = vld [vmem:[%s1 + $0x5c18] sm:$0xff]
  %v3001 = vld [vmem:[%s1 + $0x5c20] sm:$0xff]
  %v3002 = vld [vmem:[%s1 + $0x5c28] sm:$0xff]
  %v3003 = vld [vmem:[%s1 + $0x5c30] sm:$0xff]
  %v3004 = vld [vmem:[%s1 + $0x5c38] sm:$0xff]
  %v3005 = vld [vmem:[%s1 + $0x5c40] sm:$0xff]
  %v3006 = vld [vmem:[%s1 + $0x5c48] sm:$0xff]
  %v3007 = vld [vmem:[%s1 + $0x5c50] sm:$0xff]
  %v3008 = vld [vmem:[%s1 + $0x5c58] sm:$0xff]
  %v3009 = vld [vmem:[%s1 + $0x5c60] sm:$0xff]
  %v3010 = vld [vmem:[%s1 + $0x5c68] sm:$0xff]
  %v3011 = vld [vmem:[%s1 + $0x5c70] sm:$0xff]
  %v3012 = vld [vmem:[%s1 + $0x5c78] sm:$0xff]
  %v3013 = vld [vmem:[%s1 + $0x5c80] sm:$0xff]
  %v3014 = vld [vmem:[%s1 + $0x5c88] sm:$0xff]
  %v3015 = vld [vmem:[%s1 + $0x5c90] sm:$0xff]
  %v3016 = vld [vmem:[%s1 + $0x5c98] sm:$0xff]
  %v3017 = vld [vmem:[%s1 + $0x5ca0] sm:$0xff]
  %v3018 = vld [vmem:[%s1 + $0x5ca8] sm:$0xff]
  %v3019 = vld [vmem:[%s1 + $0x5cb0] sm:$0xff]
  %v3020 = vld [vmem:[%s1 + $0x5cb8] sm:$0xff]
  %v3021 = vld [vmem:[%s1 + $0x5cc0] sm:$0xff]
  %v3022 = vld [vmem:[%s1 + $0x5cc8] sm:$0xff]
  %v3023 = vld [vmem:[%s1 + $0x5cd0] sm:$0xff]
  %v3024 = vld [vmem:[%s1 + $0x5cd8] sm:$0xff]
  %v3025 = vld [vmem:[%s1 + $0x5ce0] sm:$0xff]
  %v3026 = vld [vmem:[%s1 + $0x5ce8] sm:$0xff]
  %v3027 = vld [vmem:[%s1 + $0x5cf0] sm:$0xff]
  %v3028 = vld [vmem:[%s1 + $0x5cf8] sm:$0xff]
  %v3029 = vld [vmem:[%s1 + $0x5d00] sm:$0xff]
  %v3030 = vld [vmem:[%s1 + $0x5d08] sm:$0xff]
  %v3031 = vld [vmem:[%s1 + $0x5d10] sm:$0xff]
  %v3032 = vld [vmem:[%s1 + $0x5d18] sm:$0xff]
  %v3033 = vld [vmem:[%s1 + $0x5d20] sm:$0xff]
  %v3034 = vld [vmem:[%s1 + $0x5d28] sm:$0xff]
  %v3035 = vld [vmem:[%s1 + $0x5d30] sm:$0xff]
  %v3036 = vld [vmem:[%s1 + $0x5d38] sm:$0xff]
  %v3037 = vld [vmem:[%s1 + $0x5d40] sm:$0xff]
  %v3038 = vld [vmem:[%s1 + $0x5d48] sm:$0xff]
  %v3039 = vld [vmem:[%s1 + $0x5d50] sm:$0xff]
  %v3040 = vld [vmem:[%s1 + $0x5d58] sm:$0xff]
  %v3041 = vld [vmem:[%s1 + $0x5d60] sm:$0xff]
  %v3042 = vld [vmem:[%s1 + $0x5d68] sm:$0xff]
  %v3043 = vld [vmem:[%s1 + $0x5d70] sm:$0xff]
  %v3044 = vld [vmem:[%s1 + $0x5d78] sm:$0xff]
  %v3045 = vld [vmem:[%s1 + $0x5d80] sm:$0xff]
  %v3046 = vld [vmem:[%s1 + $0x5d88] sm:$0xff]
  %v3047 = vld [vmem:[%s1 + $0x5d90] sm:$0xff]
  %v3048 = vld [vmem:[%s1 + $0x5d98] sm:$0xff]
  %v3049 = vld [vmem:[%s1 + $0x5da0] sm:$0xff]
  %v3050 = vld [vmem:[%s1 + $0x5da8] sm:$0xff]
  %v3051 = vld [vmem:[%s1 + $0x5db0] sm:$0xff]
  %v3052 = vld [vmem:[%s1 + $0x5db8] sm:$0xff]
  %v3053 = vld [vmem:[%s1 + $0x5dc0] sm:$0xff]
  %v3054 = vld [vmem:[%s1 + $0x5dc8] sm:$0xff]
  %v3055 = vld [vmem:[%s1 + $0x5dd0] sm:$0xff]
  %v3056 = vld [vmem:[%s1 + $0x5dd8] sm:$0xff]
  %v3057 = vld [vmem:[%s1 + $0x5de0] sm:$0xff]
  %v3058 = vld [vmem:[%s1 + $0x5de8] sm:$0xff]
  %v3059 = vld [vmem:[%s1 + $0x5df0] sm:$0xff]
  %v3060 = vld [vmem:[%s1 + $0x5df8] sm:$0xff]
  %v3061 = vld [vmem:[%s1 + $0x5e00] sm:$0xff]
  %v3062 = vld [vmem:[%s1 + $0x5e08] sm:$0xff]
  %v3063 = vld [vmem:[%s1 + $0x5e10] sm:$0xff]
  %v3064 = vld [vmem:[%s1 + $0x5e18] sm:$0xff]
  %v3065 = vld [vmem:[%s1 + $0x5e20] sm:$0xff]
  %v3066 = vld [vmem:[%s1 + $0x5e28] sm:$0xff]
  %v3067 = vld [vmem:[%s1 + $0x5e30] sm:$0xff]
  %v3068 = vld [vmem:[%s1 + $0x5e38] sm:$0xff]
  %v3069 = vld [vmem:[%s1 + $0x5e40] sm:$0xff]
  %v3070 = vld [vmem:[%s1 + $0x5e48] sm:$0xff]
  %v3071 = vld [vmem:[%s1 + $0x5e50] sm:$0xff]
  %v3072 = vld [vmem:[%s1 + $0x5e58] sm:$0xff]
  %v3073 = vld [vmem:[%s1 + $0x5e60] sm:$0xff]
  %v3074 = vld [vmem:[%s1 + $0x5e68] sm:$0xff]
  %v3075 = vld [vmem:[%s1 + $0x5e70] sm:$0xff]
  %v3076 = vld [vmem:[%s1 + $0x5e78] sm:$0xff]
  %v3077 = vld [vmem:[%s1 + $0x5e80] sm:$0xff]
  %v3078 = vld [vmem:[%s1 + $0x5e88] sm:$0xff]
  %v3079 = vld [vmem:[%s1 + $0x5e90] sm:$0xff]
  %v3080 = vld [vmem:[%s1 + $0x5e98] sm:$0xff]
  %v3081 = vld [vmem:[%s1 + $0x5ea0] sm:$0xff]
  %v3082 = vld [vmem:[%s1 + $0x5ea8] sm:$0xff]
  %v3083 = vld [vmem:[%s1 + $0x5eb0] sm:$0xff]
  %v3084 = vld [vmem:[%s1 + $0x5eb8] sm:$0xff]
  %v3085 = vld [vmem:[%s1 + $0x5ec0] sm:$0xff]
  %v3086 = vld [vmem:[%s1 + $0x5ec8] sm:$0xff]
  %v3087 = vld [vmem:[%s1 + $0x5ed0] sm:$0xff]
  %v3088 = vld [vmem:[%s1 + $0x5ed8] sm:$0xff]
  %v3089 = vld [vmem:[%s1 + $0x5ee0] sm:$0xff]
  %v3090 = vld [vmem:[%s1 + $0x5ee8] sm:$0xff]
  %v3091 = vld [vmem:[%s1 + $0x5ef0] sm:$0xff]
  %v3092 = vld [vmem:[%s1 + $0x5ef8] sm:$0xff]
  %v3093 = vld [vmem:[%s1 + $0x5f00] sm:$0xff]
  %v3094 = vld [vmem:[%s1 + $0x5f08] sm:$0xff]
  %v3095 = vld [vmem:[%s1 + $0x5f10] sm:$0xff]
  %v3096 = vld [vmem:[%s1 + $0x5f18] sm:$0xff]
  %v3097 = vld [vmem:[%s1 + $0x5f20] sm:$0xff]
  %v3098 = vld [vmem:[%s1 + $0x5f28] sm:$0xff]
  %v3099 = vld [vmem:[%s1 + $0x5f30] sm:$0xff]
  %v3100 = vld [vmem:[%s1 + $0x5f38] sm:$0xff]
  %v3101 = vld [vmem:[%s1 + $0x5f40] sm:$0xff]
  %v3102 = vld [vmem:[%s1 + $0x5f48] sm:$0xff]
  %v3103 = vld [vmem:[%s1 + $0x5f50] sm:$0xff]
  %v3104 = vld [vmem:[%s1 + $0x5f58] sm:$0xff]
  %v3105 = vld [vmem:[%s1 + $0x5f60] sm:$0xff]
  %v3106 = vld [vmem:[%s1 + $0x5f68] sm:$0xff]
  %v3107 = vld [vmem:[%s1 + $0x5f70] sm:$0xff]
  %v3108 = vld [vmem:[%s1 + $0x5f78] sm:$0xff]
  %v3109 = vld [vmem:[%s1 + $0x5f80] sm:$0xff]
  %v3110 = vld [vmem:[%s1 + $0x5f88] sm:$0xff]
  %v3111 = vld [vmem:[%s1 + $0x5f90] sm:$0xff]
  %v3112 = vld [vmem:[%s1 + $0x5f98] sm:$0xff]
  %v3113 = vld [vmem:[%s1 + $0x5fa0] sm:$0xff]
  %v3114 = vld [vmem:[%s1 + $0x5fa8] sm:$0xff]
  %v3115 = vld [vmem:[%s1 + $0x5fb0] sm:$0xff]
  %v3116 = vld [vmem:[%s1 + $0x5fb8] sm:$0xff]
  %v3117 = vld [vmem:[%s1 + $0x5fc0] sm:$0xff]
  %v3118 = vld [vmem:[%s1 + $0x5fc8] sm:$0xff]
  %v3119 = vld [vmem:[%s1 + $0x5fd0] sm:$0xff]
  %v3120 = vld [vmem:[%s1 + $0x5fd8] sm:$0xff]
  %v3121 = vld [vmem:[%s1 + $0x5fe0] sm:$0xff]
  %v3122 = vld [vmem:[%s1 + $0x5fe8] sm:$0xff]
  %v3123 = vld [vmem:[%s1 + $0x5ff0] sm:$0xff]
  %v3124 = vld [vmem:[%s1 + $0x5ff8] sm:$0xff]
  %v3125 = vld [vmem:[%s1 + $0x6000] sm:$0xff]
  %v3126 = vld [vmem:[%s1 + $0x6008] sm:$0xff]
  %v3127 = vld [vmem:[%s1 + $0x6010] sm:$0xff]
  %v3128 = vld [vmem:[%s1 + $0x6018] sm:$0xff]
  %v3129 = vld [vmem:[%s1 + $0x6020] sm:$0xff]
  %v3130 = vld [vmem:[%s1 + $0x6028] sm:$0xff]
  %v3131 = vld [vmem:[%s1 + $0x6030] sm:$0xff]
  %v3132 = vld [vmem:[%s1 + $0x6038] sm:$0xff]
  %v3133 = vld [vmem:[%s1 + $0x6040] sm:$0xff]
  %v3134 = vld [vmem:[%s1 + $0x6048] sm:$0xff]
  %v3135 = vld [vmem:[%s1 + $0x6050] sm:$0xff]
  %v3136 = vld [vmem:[%s1 + $0x6058] sm:$0xff]
  %v3137 = vld [vmem:[%s1 + $0x6060] sm:$0xff]
  %v3138 = vld [vmem:[%s1 + $0x6068] sm:$0xff]
  %v3139 = vld [vmem:[%s1 + $0x6070] sm:$0xff]
  %v3140 = vld [vmem:[%s1 + $0x6078] sm:$0xff]
  %v3141 = vld [vmem:[%s1 + $0x6080] sm:$0xff]
  %v3142 = vld [vmem:[%s1 + $0x6088] sm:$0xff]
  %v3143 = vld [vmem:[%s1 + $0x6090] sm:$0xff]
  %v3144 = vld [vmem:[%s1 + $0x6098] sm:$0xff]
  %v3145 = vld [vmem:[%s1 + $0x60a0] sm:$0xff]
  %v3146 = vld [vmem:[%s1 + $0x60a8] sm:$0xff]
  %v3147 = vld [vmem:[%s1 + $0x60b0] sm:$0xff]
  %v3148 = vld [vmem:[%s1 + $0x60b8] sm:$0xff]
  %v3149 = vld [vmem:[%s1 + $0x60c0] sm:$0xff]
  %v3150 = vld [vmem:[%s1 + $0x60c8] sm:$0xff]
  %v3151 = vld [vmem:[%s1 + $0x60d0] sm:$0xff]
  %v3152 = vld [vmem:[%s1 + $0x60d8] sm:$0xff]
  %v3153 = vld [vmem:[%s1 + $0x60e0] sm:$0xff]
  %v3154 = vld [vmem:[%s1 + $0x60e8] sm:$0xff]
  %v3155 = vld [vmem:[%s1 + $0x60f0] sm:$0xff]
  %v3156 = vld [vmem:[%s1 + $0x60f8] sm:$0xff]
  %v3157 = vld [vmem:[%s1 + $0x6100] sm:$0xff]
  %v3158 = vld [vmem:[%s1 + $0x6108] sm:$0xff]
  %v3159 = vld [vmem:[%s1 + $0x6110] sm:$0xff]
  %v3160 = vld [vmem:[%s1 + $0x6118] sm:$0xff]
  %v3161 = vld [vmem:[%s1 + $0x6120] sm:$0xff]
  %v3162 = vld [vmem:[%s1 + $0x6128] sm:$0xff]
  %v3163 = vld [vmem:[%s1 + $0x6130] sm:$0xff]
  %v3164 = vld [vmem:[%s1 + $0x6138] sm:$0xff]
  %v3165 = vld [vmem:[%s1 + $0x6140] sm:$0xff]
  %v3166 = vld [vmem:[%s1 + $0x6148] sm:$0xff]
  %v3167 = vld [vmem:[%s1 + $0x6150] sm:$0xff]
  %v3168 = vld [vmem:[%s1 + $0x6158] sm:$0xff]
  %v3169 = vld [vmem:[%s1 + $0x6160] sm:$0xff]
  %v3170 = vld [vmem:[%s1 + $0x6168] sm:$0xff]
  %v3171 = vld [vmem:[%s1 + $0x6170] sm:$0xff]
  %v3172 = vld [vmem:[%s1 + $0x6178] sm:$0xff]
  %v3173 = vld [vmem:[%s1 + $0x6180] sm:$0xff]
  %v3174 = vld [vmem:[%s1 + $0x6188] sm:$0xff]
  %v3175 = vld [vmem:[%s1 + $0x6190] sm:$0xff]
  %v3176 = vld [vmem:[%s1 + $0x6198] sm:$0xff]
  %v3177 = vld [vmem:[%s1 + $0x61a0] sm:$0xff]
  %v3178 = vld [vmem:[%s1 + $0x61a8] sm:$0xff]
  %v3179 = vld [vmem:[%s1 + $0x61b0] sm:$0xff]
  %v3180 = vld [vmem:[%s1 + $0x61b8] sm:$0xff]
  %v3181 = vld [vmem:[%s1 + $0x61c0] sm:$0xff]
  %v3182 = vld [vmem:[%s1 + $0x61c8] sm:$0xff]
  %v3183 = vld [vmem:[%s1 + $0x61d0] sm:$0xff]
  %v3184 = vld [vmem:[%s1 + $0x61d8] sm:$0xff]
  %v3185 = vld [vmem:[%s1 + $0x61e0] sm:$0xff]
  %v3186 = vld [vmem:[%s1 + $0x61e8] sm:$0xff]
  %v3187 = vld [vmem:[%s1 + $0x61f0] sm:$0xff]
  %v3188 = vld [vmem:[%s1 + $0x61f8] sm:$0xff]
  %v3189 = vld [vmem:[%s2] sm:$0xff]
  %v3191 = vlaneseq
  %v3192 = vshrl.u32 %v3191, 7
  %v3193 = vsub.s32 0, %v3192
  %v3194 = vrot.slane %v3189, %v3193
  %v3195 = vlaneseq
  %v3196 = vshrl.u32 %v3195, 7
  %v3197 = vsub.s32 1, %v3196
  %v3198 = vrot.slane %v3189, %v3197
  %v3199 = vlaneseq
  %v3200 = vshrl.u32 %v3199, 7
  %v3201 = vsub.s32 2, %v3200
  %v3202 = vrot.slane %v3189, %v3201
  %v3203 = vlaneseq
  %v3204 = vshrl.u32 %v3203, 7
  %v3205 = vsub.s32 3, %v3204
  %v3206 = vrot.slane %v3189, %v3205
  %v3207 = vlaneseq
  %v3208 = vshrl.u32 %v3207, 7
  %v3209 = vsub.s32 4, %v3208
  %v3210 = vrot.slane %v3189, %v3209
  %v3211 = vlaneseq
  %v3212 = vshrl.u32 %v3211, 7
  %v3213 = vsub.s32 5, %v3212
  %v3214 = vrot.slane %v3189, %v3213
  %v3215 = vlaneseq
  %v3216 = vshrl.u32 %v3215, 7
  %v3217 = vsub.s32 6, %v3216
  %v3218 = vrot.slane %v3189, %v3217
  %v3219 = vlaneseq
  %v3220 = vshrl.u32 %v3219, 7
  %v3221 = vsub.s32 7, %v3220
  %v3222 = vrot.slane %v3189, %v3221
  %vm3231 = vcmask 523264
  %v3233 = vsel %vm3231, %v52, 0
  %3235 = vmatprep.subr.mxu0 %v54
  %3236 = vmatpush1.msra.mxu0 %v53
  %3237 = vmatprep.subr.mxu0 %v62
  %3238 = vmatpush1.msra.mxu0 %v61
  %3239 = vmatprep.subr.mxu0 %v70
  %3240 = vmatpush1.msra.mxu0 %v69
  %3241 = vmatprep.subr.mxu0 %v78
  %3242 = vmatpush1.msra.mxu0 %v77
  %3243 = vmatprep.subr.mxu0 %v86
  %3244 = vmatpush1.msra.mxu0 %v85
  %3245 = vmatprep.subr.mxu0 %v94
  %3246 = vmatpush1.msra.mxu0 %v93
  %3247 = vmatprep.subr.mxu0 %v102
  %3248 = vmatpush1.msra.mxu0 %v101
  %3249 = vmatprep.subr.mxu0 %v110
  %3250 = vmatpush1.msra.mxu0 %v109
  %3251 = vmatprep.subr.mxu0 %v118
  %3252 = vmatpush1.msra.mxu0 %v117
  %3253 = vmatprep.subr.mxu0 %v126
  %3254 = vmatpush1.msra.mxu0 %v125
  %3255 = vmatprep.subr.mxu0 %v134
  %3256 = vmatpush1.msra.mxu0 %v133
  %3257 = vmatprep.subr.mxu0 %v142
  %3258 = vmatpush1.msra.mxu0 %v141
  %3259 = vmatprep.subr.mxu0 %v150
  %3260 = vmatpush1.msra.mxu0 %v149
  %3261 = vmatprep.subr.mxu0 %v158
  %3262 = vmatpush1.msra.mxu0 %v157
  %3263 = vmatprep.subr.mxu0 %v166
  %3264 = vmatpush1.msra.mxu0 %v165
  %3265 = vmatprep.subr.mxu0 %v174
  %3266 = vmatpush1.msra.mxu0 %v173
  %3267 = vmatprep.subr.mxu0 %v182
  %3268 = vmatpush1.msra.mxu0 %v181
  %3269 = vmatprep.subr.mxu0 %v190
  %3270 = vmatpush1.msra.mxu0 %v189
  %3271 = vmatprep.subr.mxu0 %v198
  %3272 = vmatpush1.msra.mxu0 %v197
  %3273 = vmatprep.subr.mxu0 %v206
  %3274 = vmatpush1.msra.mxu0 %v205
  %3275 = vmatprep.subr.mxu0 %v214
  %3276 = vmatpush1.msra.mxu0 %v213
  %3277 = vmatprep.subr.mxu0 %v222
  %3278 = vmatpush1.msra.mxu0 %v221
  %3279 = vmatprep.subr.mxu0 %v230
  %3280 = vmatpush1.msra.mxu0 %v229
  %3281 = vmatprep.subr.mxu0 %v238
  %3282 = vmatpush1.msra.mxu0 %v237
  %3283 = vmatprep.subr.mxu0 %v246
  %3284 = vmatpush1.msra.mxu0 %v245
  %3285 = vmatprep.subr.mxu0 %v254
  %3286 = vmatpush1.msra.mxu0 %v253
  %3287 = vmatprep.subr.mxu0 %v262
  %3288 = vmatpush1.msra.mxu0 %v261
  %3289 = vmatprep.subr.mxu0 %v270
  %3290 = vmatpush1.msra.mxu0 %v269
  %3291 = vmatprep.subr.mxu0 %v278
  %3292 = vmatpush1.msra.mxu0 %v277
  %3293 = vmatprep.subr.mxu0 %v286
  %3294 = vmatpush1.msra.mxu0 %v285
  %3295 = vmatprep.subr.mxu0 %v294
  %3296 = vmatpush1.msra.mxu0 %v293
  %3297 = vmatprep.subr.mxu0 %v302
  %3298 = vmatpush1.msra.mxu0 %v301
  %3299 = vmatprep.mubr.f32.mxu0 %v29
  %3300 = vmatmul.mubr.f32.gmra.mrb[0].mxu0 %v28
  %v3301 = vpop.f32.mrb[0].mxu0
  %v3302 = vadd.f32 %v3194, %v3301
  %v3303 = vpop.f32.mrb[0].mxu0
  %v3304 = vadd.f32 %v3198, %v3303
  %3305 = vdwg.mxu0
  %3306 = vmatprep.subr.mxu0 %v310
  %3307 = vmatpush1.msra.mxu0 %v309
  %3308 = vmatprep.subr.mxu0 %v318
  %3309 = vmatpush1.msra.mxu0 %v317
  %3310 = vmatprep.subr.mxu0 %v326
  %3311 = vmatpush1.msra.mxu0 %v325
  %3312 = vmatprep.subr.mxu0 %v334
  %3313 = vmatpush1.msra.mxu0 %v333
  %3314 = vmatprep.subr.mxu0 %v342
  %3315 = vmatpush1.msra.mxu0 %v341
  %3316 = vmatprep.subr.mxu0 %v350
  %3317 = vmatpush1.msra.mxu0 %v349
  %3318 = vmatprep.subr.mxu0 %v358
  %3319 = vmatpush1.msra.mxu0 %v357
  %3320 = vmatprep.subr.mxu0 %v366
  %3321 = vmatpush1.msra.mxu0 %v365
  %3322 = vmatprep.subr.mxu0 %v374
  %3323 = vmatpush1.msra.mxu0 %v373
  %3324 = vmatprep.subr.mxu0 %v382
  %3325 = vmatpush1.msra.mxu0 %v381
  %3326 = vmatprep.subr.mxu0 %v390
  %3327 = vmatpush1.msra.mxu0 %v389
  %3328 = vmatprep.subr.mxu0 %v398
  %3329 = vmatpush1.msra.mxu0 %v397
  %3330 = vmatprep.subr.mxu0 %v406
  %3331 = vmatpush1.msra.mxu0 %v405
  %3332 = vmatprep.subr.mxu0 %v414
  %3333 = vmatpush1.msra.mxu0 %v413
  %3334 = vmatprep.subr.mxu0 %v422
  %3335 = vmatpush1.msra.mxu0 %v421
  %3336 = vmatprep.subr.mxu0 %v430
  %3337 = vmatpush1.msra.mxu0 %v429
  %3338 = vmatprep.subr.mxu0 %v438
  %3339 = vmatpush1.msra.mxu0 %v437
  %3340 = vmatprep.subr.mxu0 %v446
  %3341 = vmatpush1.msra.mxu0 %v445
  %3342 = vmatprep.subr.mxu0 %v454
  %3343 = vmatpush1.msra.mxu0 %v453
  %3344 = vmatprep.subr.mxu0 %v462
  %3345 = vmatpush1.msra.mxu0 %v461
  %3346 = vmatprep.subr.mxu0 %v470
  %3347 = vmatpush1.msra.mxu0 %v469
  %3348 = vmatprep.subr.mxu0 %v478
  %3349 = vmatpush1.msra.mxu0 %v477
  %3350 = vmatprep.subr.mxu0 %v486
  %3351 = vmatpush1.msra.mxu0 %v485
  %3352 = vmatprep.subr.mxu0 %v494
  %3353 = vmatpush1.msra.mxu0 %v493
  %3354 = vmatprep.subr.mxu0 %v502
  %3355 = vmatpush1.msra.mxu0 %v501
  %3356 = vmatprep.subr.mxu0 %v510
  %3357 = vmatpush1.msra.mxu0 %v509
  %3358 = vmatprep.subr.mxu0 %v518
  %3359 = vmatpush1.msra.mxu0 %v517
  %3360 = vmatprep.subr.mxu0 %v526
  %3361 = vmatpush1.msra.mxu0 %v525
  %3362 = vmatprep.subr.mxu0 %v534
  %3363 = vmatpush1.msra.mxu0 %v533
  %3364 = vmatprep.subr.mxu0 %v542
  %3365 = vmatpush1.msra.mxu0 %v541
  %3366 = vmatprep.subr.mxu0 %v550
  %3367 = vmatpush1.msra.mxu0 %v549
  %3368 = vmatprep.subr.mxu0 %v558
  %3369 = vmatpush1.msra.mxu0 %v557
  %3370 = vmatprep.mubr.f32.mxu0 %v31
  %3371 = vmatmul.mubr.f32.gmra.mrb[0].mxu0 %v30
  %v3372 = vpop.f32.mrb[0].mxu0
  %v3373 = vadd.f32 %v3302, %v3372
  %v3374 = vpop.f32.mrb[0].mxu0
  %v3375 = vadd.f32 %v3304, %v3374
  %3376 = vdwg.mxu0
  %3377 = vmatprep.subr.mxu0 %v566
  %3378 = vmatpush1.msra.mxu0 %v565
  %3379 = vmatprep.subr.mxu0 %v574
  %3380 = vmatpush1.msra.mxu0 %v573
  %3381 = vmatprep.subr.mxu0 %v582
  %3382 = vmatpush1.msra.mxu0 %v581
  %3383 = vmatprep.subr.mxu0 %v590
  %3384 = vmatpush1.msra.mxu0 %v589
  %3385 = vmatprep.subr.mxu0 %v598
  %3386 = vmatpush1.msra.mxu0 %v597
  %3387 = vmatprep.subr.mxu0 %v606
  %3388 = vmatpush1.msra.mxu0 %v605
  %3389 = vmatprep.subr.mxu0 %v614
  %3390 = vmatpush1.msra.mxu0 %v613
  %3391 = vmatprep.subr.mxu0 %v622
  %3392 = vmatpush1.msra.mxu0 %v621
  %3393 = vmatprep.subr.mxu0 %v630
  %3394 = vmatpush1.msra.mxu0 %v629
  %3395 = vmatprep.subr.mxu0 %v638
  %3396 = vmatpush1.msra.mxu0 %v637
  %3397 = vmatprep.subr.mxu0 %v646
  %3398 = vmatpush1.msra.mxu0 %v645
  %3399 = vmatprep.subr.mxu0 %v654
  %3400 = vmatpush1.msra.mxu0 %v653
  %3401 = vmatprep.subr.mxu0 %v662
  %3402 = vmatpush1.msra.mxu0 %v661
  %3403 = vmatprep.subr.mxu0 %v670
  %3404 = vmatpush1.msra.mxu0 %v669
  %3405 = vmatprep.subr.mxu0 %v678
  %3406 = vmatpush1.msra.mxu0 %v677
  %3407 = vmatprep.subr.mxu0 %v686
  %3408 = vmatpush1.msra.mxu0 %v685
  %3409 = vmatprep.subr.mxu0 %v694
  %3410 = vmatpush1.msra.mxu0 %v693
  %3411 = vmatprep.subr.mxu0 %v702
  %3412 = vmatpush1.msra.mxu0 %v701
  %3413 = vmatprep.subr.mxu0 %v710
  %3414 = vmatpush1.msra.mxu0 %v709
  %3415 = vmatprep.subr.mxu0 %v718
  %3416 = vmatpush1.msra.mxu0 %v717
  %3417 = vmatprep.subr.mxu0 %v726
  %3418 = vmatpush1.msra.mxu0 %v725
  %3419 = vmatprep.subr.mxu0 %v734
  %3420 = vmatpush1.msra.mxu0 %v733
  %3421 = vmatprep.subr.mxu0 %v742
  %3422 = vmatpush1.msra.mxu0 %v741
  %3423 = vmatprep.subr.mxu0 %v750
  %3424 = vmatpush1.msra.mxu0 %v749
  %3425 = vmatprep.subr.mxu0 %v758
  %3426 = vmatpush1.msra.mxu0 %v757
  %3427 = vmatprep.subr.mxu0 %v766
  %3428 = vmatpush1.msra.mxu0 %v765
  %3429 = vmatprep.subr.mxu0 %v774
  %3430 = vmatpush1.msra.mxu0 %v773
  %3431 = vmatprep.subr.mxu0 %v782
  %3432 = vmatpush1.msra.mxu0 %v781
  %3433 = vmatprep.subr.mxu0 %v790
  %3434 = vmatpush1.msra.mxu0 %v789
  %3435 = vmatprep.subr.mxu0 %v798
  %3436 = vmatpush1.msra.mxu0 %v797
  %3437 = vmatprep.subr.mxu0 %v806
  %3438 = vmatpush1.msra.mxu0 %v805
  %3439 = vmatprep.subr.mxu0 %v814
  %3440 = vmatpush1.msra.mxu0 %v813
  %3441 = vmatprep.mubr.f32.mxu0 %v33
  %3442 = vmatmul.mubr.f32.gmra.mrb[0].mxu0 %v32
  %v3443 = vpop.f32.mrb[0].mxu0
  %v3444 = vadd.f32 %v3373, %v3443
  %v3445 = vpop.f32.mrb[0].mxu0
  %v3446 = vadd.f32 %v3375, %v3445
  %3447 = vdwg.mxu0
  %3448 = vmatprep.subr.mxu0 %v822
  %3449 = vmatpush1.msra.mxu0 %v821
  %3450 = vmatprep.subr.mxu0 %v830
  %3451 = vmatpush1.msra.mxu0 %v829
  %3452 = vmatprep.subr.mxu0 %v838
  %3453 = vmatpush1.msra.mxu0 %v837
  %3454 = vmatprep.subr.mxu0 %v846
  %3455 = vmatpush1.msra.mxu0 %v845
  %3456 = vmatprep.subr.mxu0 %v854
  %3457 = vmatpush1.msra.mxu0 %v853
  %3458 = vmatprep.subr.mxu0 %v862
  %3459 = vmatpush1.msra.mxu0 %v861
  %3460 = vmatprep.subr.mxu0 %v870
  %3461 = vmatpush1.msra.mxu0 %v869
  %3462 = vmatprep.subr.mxu0 %v878
  %3463 = vmatpush1.msra.mxu0 %v877
  %3464 = vmatprep.subr.mxu0 %v886
  %3465 = vmatpush1.msra.mxu0 %v885
  %3466 = vmatprep.subr.mxu0 %v894
  %3467 = vmatpush1.msra.mxu0 %v893
  %3468 = vmatprep.subr.mxu0 %v902
  %3469 = vmatpush1.msra.mxu0 %v901
  %3470 = vmatprep.subr.mxu0 %v910
  %3471 = vmatpush1.msra.mxu0 %v909
  %3472 = vmatprep.subr.mxu0 %v918
  %3473 = vmatpush1.msra.mxu0 %v917
  %3474 = vmatprep.subr.mxu0 %v926
  %3475 = vmatpush1.msra.mxu0 %v925
  %3476 = vmatprep.subr.mxu0 %v934
  %3477 = vmatpush1.msra.mxu0 %v933
  %3478 = vmatprep.subr.mxu0 %v942
  %3479 = vmatpush1.msra.mxu0 %v941
  %3480 = vmatprep.subr.mxu0 %v950
  %3481 = vmatpush1.msra.mxu0 %v949
  %3482 = vmatprep.subr.mxu0 %v958
  %3483 = vmatpush1.msra.mxu0 %v957
  %3484 = vmatprep.subr.mxu0 %v966
  %3485 = vmatpush1.msra.mxu0 %v965
  %3486 = vmatprep.subr.mxu0 %v974
  %3487 = vmatpush1.msra.mxu0 %v973
  %3488 = vmatprep.subr.mxu0 %v982
  %3489 = vmatpush1.msra.mxu0 %v981
  %3490 = vmatprep.subr.mxu0 %v990
  %3491 = vmatpush1.msra.mxu0 %v989
  %3492 = vmatprep.subr.mxu0 %v998
  %3493 = vmatpush1.msra.mxu0 %v997
  %3494 = vmatprep.subr.mxu0 %v1006
  %3495 = vmatpush1.msra.mxu0 %v1005
  %3496 = vmatprep.subr.mxu0 %v1014
  %3497 = vmatpush1.msra.mxu0 %v1013
  %3498 = vmatprep.subr.mxu0 %v1022
  %3499 = vmatpush1.msra.mxu0 %v1021
  %3500 = vmatprep.subr.mxu0 %v1030
  %3501 = vmatpush1.msra.mxu0 %v1029
  %3502 = vmatprep.subr.mxu0 %v1038
  %3503 = vmatpush1.msra.mxu0 %v1037
  %3504 = vmatprep.subr.mxu0 %v1046
  %3505 = vmatpush1.msra.mxu0 %v1045
  %3506 = vmatprep.subr.mxu0 %v1054
  %3507 = vmatpush1.msra.mxu0 %v1053
  %3508 = vmatprep.subr.mxu0 %v1062
  %3509 = vmatpush1.msra.mxu0 %v1061
  %3510 = vmatprep.subr.mxu0 %v1070
  %3511 = vmatpush1.msra.mxu0 %v1069
  %3512 = vmatprep.mubr.f32.mxu0 %v35
  %3513 = vmatmul.mubr.f32.gmra.mrb[0].mxu0 %v34
  %v3514 = vpop.f32.mrb[0].mxu0
  %v3515 = vadd.f32 %v3444, %v3514
  %v3516 = vpop.f32.mrb[0].mxu0
  %v3517 = vadd.f32 %v3446, %v3516
  %3518 = vdwg.mxu0
  %3519 = vmatprep.subr.mxu0 %v1078
  %3520 = vmatpush1.msra.mxu0 %v1077
  %3521 = vmatprep.subr.mxu0 %v1086
  %3522 = vmatpush1.msra.mxu0 %v1085
  %3523 = vmatprep.subr.mxu0 %v1094
  %3524 = vmatpush1.msra.mxu0 %v1093
  %3525 = vmatprep.subr.mxu0 %v1102
  %3526 = vmatpush1.msra.mxu0 %v1101
  %3527 = vmatprep.subr.mxu0 %v1110
  %3528 = vmatpush1.msra.mxu0 %v1109
  %3529 = vmatprep.subr.mxu0 %v1118
  %3530 = vmatpush1.msra.mxu0 %v1117
  %3531 = vmatprep.subr.mxu0 %v1126
  %3532 = vmatpush1.msra.mxu0 %v1125
  %3533 = vmatprep.subr.mxu0 %v1134
  %3534 = vmatpush1.msra.mxu0 %v1133
  %3535 = vmatprep.subr.mxu0 %v1142
  %3536 = vmatpush1.msra.mxu0 %v1141
  %3537 = vmatprep.subr.mxu0 %v1150
  %3538 = vmatpush1.msra.mxu0 %v1149
  %3539 = vmatprep.subr.mxu0 %v1158
  %3540 = vmatpush1.msra.mxu0 %v1157
  %3541 = vmatprep.subr.mxu0 %v1166
  %3542 = vmatpush1.msra.mxu0 %v1165
  %3543 = vmatprep.subr.mxu0 %v1174
  %3544 = vmatpush1.msra.mxu0 %v1173
  %3545 = vmatprep.subr.mxu0 %v1182
  %3546 = vmatpush1.msra.mxu0 %v1181
  %3547 = vmatprep.subr.mxu0 %v1190
  %3548 = vmatpush1.msra.mxu0 %v1189
  %3549 = vmatprep.subr.mxu0 %v1198
  %3550 = vmatpush1.msra.mxu0 %v1197
  %3551 = vmatprep.subr.mxu0 %v1206
  %3552 = vmatpush1.msra.mxu0 %v1205
  %3553 = vmatprep.subr.mxu0 %v1214
  %3554 = vmatpush1.msra.mxu0 %v1213
  %3555 = vmatprep.subr.mxu0 %v1222
  %3556 = vmatpush1.msra.mxu0 %v1221
  %3557 = vmatprep.subr.mxu0 %v1230
  %3558 = vmatpush1.msra.mxu0 %v1229
  %3559 = vmatprep.subr.mxu0 %v1238
  %3560 = vmatpush1.msra.mxu0 %v1237
  %3561 = vmatprep.subr.mxu0 %v1246
  %3562 = vmatpush1.msra.mxu0 %v1245
  %3563 = vmatprep.subr.mxu0 %v1254
  %3564 = vmatpush1.msra.mxu0 %v1253
  %3565 = vmatprep.subr.mxu0 %v1262
  %3566 = vmatpush1.msra.mxu0 %v1261
  %3567 = vmatprep.subr.mxu0 %v1270
  %3568 = vmatpush1.msra.mxu0 %v1269
  %3569 = vmatprep.subr.mxu0 %v1278
  %3570 = vmatpush1.msra.mxu0 %v1277
  %3571 = vmatprep.subr.mxu0 %v1286
  %3572 = vmatpush1.msra.mxu0 %v1285
  %3573 = vmatprep.subr.mxu0 %v1294
  %3574 = vmatpush1.msra.mxu0 %v1293
  %3575 = vmatprep.subr.mxu0 %v1302
  %3576 = vmatpush1.msra.mxu0 %v1301
  %3577 = vmatprep.subr.mxu0 %v1310
  %3578 = vmatpush1.msra.mxu0 %v1309
  %3579 = vmatprep.subr.mxu0 %v1318
  %3580 = vmatpush1.msra.mxu0 %v1317
  %3581 = vmatprep.subr.mxu0 %v1326
  %3582 = vmatpush1.msra.mxu0 %v1325
  %3583 = vmatprep.mubr.f32.mxu0 %v37
  %3584 = vmatmul.mubr.f32.gmra.mrb[0].mxu0 %v36
  %v3585 = vpop.f32.mrb[0].mxu0
  %v3586 = vadd.f32 %v3515, %v3585
  %v3587 = vpop.f32.mrb[0].mxu0
  %v3588 = vadd.f32 %v3517, %v3587
  %3589 = vdwg.mxu0
  %3590 = vmatprep.subr.mxu0 %v1334
  %3591 = vmatpush1.msra.mxu0 %v1333
  %3592 = vmatprep.subr.mxu0 %v1342
  %3593 = vmatpush1.msra.mxu0 %v1341
  %3594 = vmatprep.subr.mxu0 %v1350
  %3595 = vmatpush1.msra.mxu0 %v1349
  %3596 = vmatprep.subr.mxu0 %v1358
  %3597 = vmatpush1.msra.mxu0 %v1357
  %3598 = vmatprep.subr.mxu0 %v1366
  %3599 = vmatpush1.msra.mxu0 %v1365
  %3600 = vmatprep.subr.mxu0 %v1374
  %3601 = vmatpush1.msra.mxu0 %v1373
  %3602 = vmatprep.subr.mxu0 %v1382
  %3603 = vmatpush1.msra.mxu0 %v1381
  %3604 = vmatprep.subr.mxu0 %v1390
  %3605 = vmatpush1.msra.mxu0 %v1389
  %3606 = vmatprep.subr.mxu0 %v1398
  %3607 = vmatpush1.msra.mxu0 %v1397
  %3608 = vmatprep.subr.mxu0 %v1406
  %3609 = vmatpush1.msra.mxu0 %v1405
  %3610 = vmatprep.subr.mxu0 %v1414
  %3611 = vmatpush1.msra.mxu0 %v1413
  %3612 = vmatprep.subr.mxu0 %v1422
  %3613 = vmatpush1.msra.mxu0 %v1421
  %3614 = vmatprep.subr.mxu0 %v1430
  %3615 = vmatpush1.msra.mxu0 %v1429
  %3616 = vmatprep.subr.mxu0 %v1438
  %3617 = vmatpush1.msra.mxu0 %v1437
  %3618 = vmatprep.subr.mxu0 %v1446
  %3619 = vmatpush1.msra.mxu0 %v1445
  %3620 = vmatprep.subr.mxu0 %v1454
  %3621 = vmatpush1.msra.mxu0 %v1453
  %3622 = vmatprep.subr.mxu0 %v1462
  %3623 = vmatpush1.msra.mxu0 %v1461
  %3624 = vmatprep.subr.mxu0 %v1470
  %3625 = vmatpush1.msra.mxu0 %v1469
  %3626 = vmatprep.subr.mxu0 %v1478
  %3627 = vmatpush1.msra.mxu0 %v1477
  %3628 = vmatprep.subr.mxu0 %v1486
  %3629 = vmatpush1.msra.mxu0 %v1485
  %3630 = vmatprep.subr.mxu0 %v1494
  %3631 = vmatpush1.msra.mxu0 %v1493
  %3632 = vmatprep.subr.mxu0 %v1502
  %3633 = vmatpush1.msra.mxu0 %v1501
  %3634 = vmatprep.subr.mxu0 %v1510
  %3635 = vmatpush1.msra.mxu0 %v1509
  %3636 = vmatprep.subr.mxu0 %v1518
  %3637 = vmatpush1.msra.mxu0 %v1517
  %3638 = vmatprep.subr.mxu0 %v1526
  %3639 = vmatpush1.msra.mxu0 %v1525
  %3640 = vmatprep.subr.mxu0 %v1534
  %3641 = vmatpush1.msra.mxu0 %v1533
  %3642 = vmatprep.subr.mxu0 %v1542
  %3643 = vmatpush1.msra.mxu0 %v1541
  %3644 = vmatprep.subr.mxu0 %v1550
  %3645 = vmatpush1.msra.mxu0 %v1549
  %3646 = vmatprep.subr.mxu0 %v1558
  %3647 = vmatpush1.msra.mxu0 %v1557
  %3648 = vmatprep.subr.mxu0 %v1566
  %3649 = vmatpush1.msra.mxu0 %v1565
  %3650 = vmatprep.subr.mxu0 %v1574
  %3651 = vmatpush1.msra.mxu0 %v1573
  %3652 = vmatprep.subr.mxu0 %v1582
  %3653 = vmatpush1.msra.mxu0 %v1581
  %3654 = vmatprep.mubr.f32.mxu0 %v39
  %3655 = vmatmul.mubr.f32.gmra.mrb[0].mxu0 %v38
  %v3656 = vpop.f32.mrb[0].mxu0
  %v3657 = vadd.f32 %v3586, %v3656
  %v3658 = vpop.f32.mrb[0].mxu0
  %v3659 = vadd.f32 %v3588, %v3658
  %3660 = vdwg.mxu0
  %3661 = vmatprep.subr.mxu0 %v1590
  %3662 = vmatpush1.msra.mxu0 %v1589
  %3663 = vmatprep.subr.mxu0 %v1598
  %3664 = vmatpush1.msra.mxu0 %v1597
  %3665 = vmatprep.subr.mxu0 %v1606
  %3666 = vmatpush1.msra.mxu0 %v1605
  %3667 = vmatprep.subr.mxu0 %v1614
  %3668 = vmatpush1.msra.mxu0 %v1613
  %3669 = vmatprep.subr.mxu0 %v1622
  %3670 = vmatpush1.msra.mxu0 %v1621
  %3671 = vmatprep.subr.mxu0 %v1630
  %3672 = vmatpush1.msra.mxu0 %v1629
  %3673 = vmatprep.subr.mxu0 %v1638
  %3674 = vmatpush1.msra.mxu0 %v1637
  %3675 = vmatprep.subr.mxu0 %v1646
  %3676 = vmatpush1.msra.mxu0 %v1645
  %3677 = vmatprep.subr.mxu0 %v1654
  %3678 = vmatpush1.msra.mxu0 %v1653
  %3679 = vmatprep.subr.mxu0 %v1662
  %3680 = vmatpush1.msra.mxu0 %v1661
  %3681 = vmatprep.subr.mxu0 %v1670
  %3682 = vmatpush1.msra.mxu0 %v1669
  %3683 = vmatprep.subr.mxu0 %v1678
  %3684 = vmatpush1.msra.mxu0 %v1677
  %3685 = vmatprep.subr.mxu0 %v1686
  %3686 = vmatpush1.msra.mxu0 %v1685
  %3687 = vmatprep.subr.mxu0 %v1694
  %3688 = vmatpush1.msra.mxu0 %v1693
  %3689 = vmatprep.subr.mxu0 %v1702
  %3690 = vmatpush1.msra.mxu0 %v1701
  %3691 = vmatprep.subr.mxu0 %v1710
  %3692 = vmatpush1.msra.mxu0 %v1709
  %3693 = vmatprep.subr.mxu0 %v1718
  %3694 = vmatpush1.msra.mxu0 %v1717
  %3695 = vmatprep.subr.mxu0 %v1726
  %3696 = vmatpush1.msra.mxu0 %v1725
  %3697 = vmatprep.subr.mxu0 %v1734
  %3698 = vmatpush1.msra.mxu0 %v1733
  %3699 = vmatprep.subr.mxu0 %v1742
  %3700 = vmatpush1.msra.mxu0 %v1741
  %3701 = vmatprep.subr.mxu0 %v1750
  %3702 = vmatpush1.msra.mxu0 %v1749
  %3703 = vmatprep.subr.mxu0 %v1758
  %3704 = vmatpush1.msra.mxu0 %v1757
  %3705 = vmatprep.subr.mxu0 %v1766
  %3706 = vmatpush1.msra.mxu0 %v1765
  %3707 = vmatprep.subr.mxu0 %v1774
  %3708 = vmatpush1.msra.mxu0 %v1773
  %3709 = vmatprep.subr.mxu0 %v1782
  %3710 = vmatpush1.msra.mxu0 %v1781
  %3711 = vmatprep.subr.mxu0 %v1790
  %3712 = vmatpush1.msra.mxu0 %v1789
  %3713 = vmatprep.subr.mxu0 %v1798
  %3714 = vmatpush1.msra.mxu0 %v1797
  %3715 = vmatprep.subr.mxu0 %v1806
  %3716 = vmatpush1.msra.mxu0 %v1805
  %3717 = vmatprep.subr.mxu0 %v1814
  %3718 = vmatpush1.msra.mxu0 %v1813
  %3719 = vmatprep.subr.mxu0 %v1822
  %3720 = vmatpush1.msra.mxu0 %v1821
  %3721 = vmatprep.subr.mxu0 %v1830
  %3722 = vmatpush1.msra.mxu0 %v1829
  %3723 = vmatprep.subr.mxu0 %v1838
  %3724 = vmatpush1.msra.mxu0 %v1837
  %3725 = vmatprep.mubr.f32.mxu0 %v41
  %3726 = vmatmul.mubr.f32.gmra.mrb[0].mxu0 %v40
  %v3727 = vpop.f32.mrb[0].mxu0
  %v3728 = vadd.f32 %v3657, %v3727
  %v3729 = vpop.f32.mrb[0].mxu0
  %v3730 = vadd.f32 %v3659, %v3729
  %3731 = vdwg.mxu0
  %3732 = vmatprep.subr.mxu0 %v1846
  %3733 = vmatpush1.msra.mxu0 %v1845
  %3734 = vmatprep.subr.mxu0 %v1854
  %3735 = vmatpush1.msra.mxu0 %v1853
  %3736 = vmatprep.subr.mxu0 %v1862
  %3737 = vmatpush1.msra.mxu0 %v1861
  %3738 = vmatprep.subr.mxu0 %v1870
  %3739 = vmatpush1.msra.mxu0 %v1869
  %3740 = vmatprep.subr.mxu0 %v1878
  %3741 = vmatpush1.msra.mxu0 %v1877
  %3742 = vmatprep.subr.mxu0 %v1886
  %3743 = vmatpush1.msra.mxu0 %v1885
  %3744 = vmatprep.subr.mxu0 %v1894
  %3745 = vmatpush1.msra.mxu0 %v1893
  %3746 = vmatprep.subr.mxu0 %v1902
  %3747 = vmatpush1.msra.mxu0 %v1901
  %3748 = vmatprep.subr.mxu0 %v1910
  %3749 = vmatpush1.msra.mxu0 %v1909
  %3750 = vmatprep.subr.mxu0 %v1918
  %3751 = vmatpush1.msra.mxu0 %v1917
  %3752 = vmatprep.subr.mxu0 %v1926
  %3753 = vmatpush1.msra.mxu0 %v1925
  %3754 = vmatprep.subr.mxu0 %v1934
  %3755 = vmatpush1.msra.mxu0 %v1933
  %3756 = vmatprep.subr.mxu0 %v1942
  %3757 = vmatpush1.msra.mxu0 %v1941
  %3758 = vmatprep.subr.mxu0 %v1950
  %3759 = vmatpush1.msra.mxu0 %v1949
  %3760 = vmatprep.subr.mxu0 %v1958
  %3761 = vmatpush1.msra.mxu0 %v1957
  %3762 = vmatprep.subr.mxu0 %v1966
  %3763 = vmatpush1.msra.mxu0 %v1965
  %3764 = vmatprep.subr.mxu0 %v1974
  %3765 = vmatpush1.msra.mxu0 %v1973
  %3766 = vmatprep.subr.mxu0 %v1982
  %3767 = vmatpush1.msra.mxu0 %v1981
  %3768 = vmatprep.subr.mxu0 %v1990
  %3769 = vmatpush1.msra.mxu0 %v1989
  %3770 = vmatprep.subr.mxu0 %v1998
  %3771 = vmatpush1.msra.mxu0 %v1997
  %3772 = vmatprep.subr.mxu0 %v2006
  %3773 = vmatpush1.msra.mxu0 %v2005
  %3774 = vmatprep.subr.mxu0 %v2014
  %3775 = vmatpush1.msra.mxu0 %v2013
  %3776 = vmatprep.subr.mxu0 %v2022
  %3777 = vmatpush1.msra.mxu0 %v2021
  %3778 = vmatprep.subr.mxu0 %v2030
  %3779 = vmatpush1.msra.mxu0 %v2029
  %3780 = vmatprep.subr.mxu0 %v2038
  %3781 = vmatpush1.msra.mxu0 %v2037
  %3782 = vmatprep.subr.mxu0 %v2046
  %3783 = vmatpush1.msra.mxu0 %v2045
  %3784 = vmatprep.subr.mxu0 %v2054
  %3785 = vmatpush1.msra.mxu0 %v2053
  %3786 = vmatprep.subr.mxu0 %v2062
  %3787 = vmatpush1.msra.mxu0 %v2061
  %3788 = vmatprep.subr.mxu0 %v2070
  %3789 = vmatpush1.msra.mxu0 %v2069
  %3790 = vmatprep.subr.mxu0 %v2078
  %3791 = vmatpush1.msra.mxu0 %v2077
  %3792 = vmatprep.subr.mxu0 %v2086
  %3793 = vmatpush1.msra.mxu0 %v2085
  %3794 = vmatprep.subr.mxu0 %v2094
  %3795 = vmatpush1.msra.mxu0 %v2093
  %3796 = vmatprep.mubr.f32.mxu0 %v43
  %3797 = vmatmul.mubr.f32.gmra.mrb[0].mxu0 %v42
  %v3798 = vpop.f32.mrb[0].mxu0
  %v3799 = vadd.f32 %v3728, %v3798
  %v3800 = vpop.f32.mrb[0].mxu0
  %v3801 = vadd.f32 %v3730, %v3800
  %3802 = vdwg.mxu0
  %3803 = vmatprep.subr.mxu0 %v2102
  %3804 = vmatpush1.msra.mxu0 %v2101
  %3805 = vmatprep.subr.mxu0 %v2110
  %3806 = vmatpush1.msra.mxu0 %v2109
  %3807 = vmatprep.subr.mxu0 %v2118
  %3808 = vmatpush1.msra.mxu0 %v2117
  %3809 = vmatprep.subr.mxu0 %v2126
  %3810 = vmatpush1.msra.mxu0 %v2125
  %3811 = vmatprep.subr.mxu0 %v2134
  %3812 = vmatpush1.msra.mxu0 %v2133
  %3813 = vmatprep.subr.mxu0 %v2142
  %3814 = vmatpush1.msra.mxu0 %v2141
  %3815 = vmatprep.subr.mxu0 %v2150
  %3816 = vmatpush1.msra.mxu0 %v2149
  %3817 = vmatprep.subr.mxu0 %v2158
  %3818 = vmatpush1.msra.mxu0 %v2157
  %3819 = vmatprep.subr.mxu0 %v2166
  %3820 = vmatpush1.msra.mxu0 %v2165
  %3821 = vmatprep.subr.mxu0 %v2174
  %3822 = vmatpush1.msra.mxu0 %v2173
  %3823 = vmatprep.subr.mxu0 %v2182
  %3824 = vmatpush1.msra.mxu0 %v2181
  %3825 = vmatprep.subr.mxu0 %v2190
  %3826 = vmatpush1.msra.mxu0 %v2189
  %3827 = vmatprep.subr.mxu0 %v2198
  %3828 = vmatpush1.msra.mxu0 %v2197
  %3829 = vmatprep.subr.mxu0 %v2206
  %3830 = vmatpush1.msra.mxu0 %v2205
  %3831 = vmatprep.subr.mxu0 %v2214
  %3832 = vmatpush1.msra.mxu0 %v2213
  %3833 = vmatprep.subr.mxu0 %v2222
  %3834 = vmatpush1.msra.mxu0 %v2221
  %3835 = vmatprep.subr.mxu0 %v2230
  %3836 = vmatpush1.msra.mxu0 %v2229
  %3837 = vmatprep.subr.mxu0 %v2238
  %3838 = vmatpush1.msra.mxu0 %v2237
  %3839 = vmatprep.subr.mxu0 %v2246
  %3840 = vmatpush1.msra.mxu0 %v2245
  %3841 = vmatprep.subr.mxu0 %v2254
  %3842 = vmatpush1.msra.mxu0 %v2253
  %3843 = vmatprep.subr.mxu0 %v2262
  %3844 = vmatpush1.msra.mxu0 %v2261
  %3845 = vmatprep.subr.mxu0 %v2270
  %3846 = vmatpush1.msra.mxu0 %v2269
  %3847 = vmatprep.subr.mxu0 %v2278
  %3848 = vmatpush1.msra.mxu0 %v2277
  %3849 = vmatprep.subr.mxu0 %v2286
  %3850 = vmatpush1.msra.mxu0 %v2285
  %3851 = vmatprep.subr.mxu0 %v2294
  %3852 = vmatpush1.msra.mxu0 %v2293
  %3853 = vmatprep.subr.mxu0 %v2302
  %3854 = vmatpush1.msra.mxu0 %v2301
  %3855 = vmatprep.subr.mxu0 %v2310
  %3856 = vmatpush1.msra.mxu0 %v2309
  %3857 = vmatprep.subr.mxu0 %v2318
  %3858 = vmatpush1.msra.mxu0 %v2317
  %3859 = vmatprep.subr.mxu0 %v2326
  %3860 = vmatpush1.msra.mxu0 %v2325
  %3861 = vmatprep.subr.mxu0 %v2334
  %3862 = vmatpush1.msra.mxu0 %v2333
  %3863 = vmatprep.subr.mxu0 %v2342
  %3864 = vmatpush1.msra.mxu0 %v2341
  %3865 = vmatprep.subr.mxu0 %v2350
  %3866 = vmatpush1.msra.mxu0 %v2349
  %3867 = vmatprep.mubr.f32.mxu0 %v45
  %3868 = vmatmul.mubr.f32.gmra.mrb[0].mxu0 %v44
  %v3869 = vpop.f32.mrb[0].mxu0
  %v3870 = vadd.f32 %v3799, %v3869
  %v3871 = vpop.f32.mrb[0].mxu0
  %v3872 = vadd.f32 %v3801, %v3871
  %3873 = vdwg.mxu0
  %3874 = vmatprep.subr.mxu0 %v2358
  %3875 = vmatpush1.msra.mxu0 %v2357
  %3876 = vmatprep.subr.mxu0 %v2366
  %3877 = vmatpush1.msra.mxu0 %v2365
  %3878 = vmatprep.subr.mxu0 %v2374
  %3879 = vmatpush1.msra.mxu0 %v2373
  %3880 = vmatprep.subr.mxu0 %v2382
  %3881 = vmatpush1.msra.mxu0 %v2381
  %3882 = vmatprep.subr.mxu0 %v2390
  %3883 = vmatpush1.msra.mxu0 %v2389
  %3884 = vmatprep.subr.mxu0 %v2398
  %3885 = vmatpush1.msra.mxu0 %v2397
  %3886 = vmatprep.subr.mxu0 %v2406
  %3887 = vmatpush1.msra.mxu0 %v2405
  %3888 = vmatprep.subr.mxu0 %v2414
  %3889 = vmatpush1.msra.mxu0 %v2413
  %3890 = vmatprep.subr.mxu0 %v2422
  %3891 = vmatpush1.msra.mxu0 %v2421
  %3892 = vmatprep.subr.mxu0 %v2430
  %3893 = vmatpush1.msra.mxu0 %v2429
  %3894 = vmatprep.subr.mxu0 %v2438
  %3895 = vmatpush1.msra.mxu0 %v2437
  %3896 = vmatprep.subr.mxu0 %v2446
  %3897 = vmatpush1.msra.mxu0 %v2445
  %3898 = vmatprep.subr.mxu0 %v2454
  %3899 = vmatpush1.msra.mxu0 %v2453
  %3900 = vmatprep.subr.mxu0 %v2462
  %3901 = vmatpush1.msra.mxu0 %v2461
  %3902 = vmatprep.subr.mxu0 %v2470
  %3903 = vmatpush1.msra.mxu0 %v2469
  %3904 = vmatprep.subr.mxu0 %v2478
  %3905 = vmatpush1.msra.mxu0 %v2477
  %3906 = vmatprep.subr.mxu0 %v2486
  %3907 = vmatpush1.msra.mxu0 %v2485
  %3908 = vmatprep.subr.mxu0 %v2494
  %3909 = vmatpush1.msra.mxu0 %v2493
  %3910 = vmatprep.subr.mxu0 %v2502
  %3911 = vmatpush1.msra.mxu0 %v2501
  %3912 = vmatprep.subr.mxu0 %v2510
  %3913 = vmatpush1.msra.mxu0 %v2509
  %3914 = vmatprep.subr.mxu0 %v2518
  %3915 = vmatpush1.msra.mxu0 %v2517
  %3916 = vmatprep.subr.mxu0 %v2526
  %3917 = vmatpush1.msra.mxu0 %v2525
  %3918 = vmatprep.subr.mxu0 %v2534
  %3919 = vmatpush1.msra.mxu0 %v2533
  %3920 = vmatprep.subr.mxu0 %v2542
  %3921 = vmatpush1.msra.mxu0 %v2541
  %3922 = vmatprep.subr.mxu0 %v2550
  %3923 = vmatpush1.msra.mxu0 %v2549
  %3924 = vmatprep.subr.mxu0 %v2558
  %3925 = vmatpush1.msra.mxu0 %v2557
  %3926 = vmatprep.subr.mxu0 %v2566
  %3927 = vmatpush1.msra.mxu0 %v2565
  %3928 = vmatprep.subr.mxu0 %v2574
  %3929 = vmatpush1.msra.mxu0 %v2573
  %3930 = vmatprep.subr.mxu0 %v2582
  %3931 = vmatpush1.msra.mxu0 %v2581
  %3932 = vmatprep.subr.mxu0 %v2590
  %3933 = vmatpush1.msra.mxu0 %v2589
  %3934 = vmatprep.subr.mxu0 %v2598
  %3935 = vmatpush1.msra.mxu0 %v2597
  %3936 = vmatprep.subr.mxu0 %v2606
  %3937 = vmatpush1.msra.mxu0 %v2605
  %3938 = vmatprep.mubr.f32.mxu0 %v47
  %3939 = vmatmul.mubr.f32.gmra.mrb[0].mxu0 %v46
  %v3940 = vpop.f32.mrb[0].mxu0
  %v3941 = vadd.f32 %v3870, %v3940
  %v3942 = vpop.f32.mrb[0].mxu0
  %v3943 = vadd.f32 %v3872, %v3942
  %3944 = vdwg.mxu0
  %3945 = vmatprep.subr.mxu0 %v2614
  %3946 = vmatpush1.msra.mxu0 %v2613
  %3947 = vmatprep.subr.mxu0 %v2622
  %3948 = vmatpush1.msra.mxu0 %v2621
  %3949 = vmatprep.subr.mxu0 %v2630
  %3950 = vmatpush1.msra.mxu0 %v2629
  %3951 = vmatprep.subr.mxu0 %v2638
  %3952 = vmatpush1.msra.mxu0 %v2637
  %3953 = vmatprep.subr.mxu0 %v2646
  %3954 = vmatpush1.msra.mxu0 %v2645
  %3955 = vmatprep.subr.mxu0 %v2654
  %3956 = vmatpush1.msra.mxu0 %v2653
  %3957 = vmatprep.subr.mxu0 %v2662
  %3958 = vmatpush1.msra.mxu0 %v2661
  %3959 = vmatprep.subr.mxu0 %v2670
  %3960 = vmatpush1.msra.mxu0 %v2669
  %3961 = vmatprep.subr.mxu0 %v2678
  %3962 = vmatpush1.msra.mxu0 %v2677
  %3963 = vmatprep.subr.mxu0 %v2686
  %3964 = vmatpush1.msra.mxu0 %v2685
  %3965 = vmatprep.subr.mxu0 %v2694
  %3966 = vmatpush1.msra.mxu0 %v2693
  %3967 = vmatprep.subr.mxu0 %v2702
  %3968 = vmatpush1.msra.mxu0 %v2701
  %3969 = vmatprep.subr.mxu0 %v2710
  %3970 = vmatpush1.msra.mxu0 %v2709
  %3971 = vmatprep.subr.mxu0 %v2718
  %3972 = vmatpush1.msra.mxu0 %v2717
  %3973 = vmatprep.subr.mxu0 %v2726
  %3974 = vmatpush1.msra.mxu0 %v2725
  %3975 = vmatprep.subr.mxu0 %v2734
  %3976 = vmatpush1.msra.mxu0 %v2733
  %3977 = vmatprep.subr.mxu0 %v2742
  %3978 = vmatpush1.msra.mxu0 %v2741
  %3979 = vmatprep.subr.mxu0 %v2750
  %3980 = vmatpush1.msra.mxu0 %v2749
  %3981 = vmatprep.subr.mxu0 %v2758
  %3982 = vmatpush1.msra.mxu0 %v2757
  %3983 = vmatprep.subr.mxu0 %v2766
  %3984 = vmatpush1.msra.mxu0 %v2765
  %3985 = vmatprep.subr.mxu0 %v2774
  %3986 = vmatpush1.msra.mxu0 %v2773
  %3987 = vmatprep.subr.mxu0 %v2782
  %3988 = vmatpush1.msra.mxu0 %v2781
  %3989 = vmatprep.subr.mxu0 %v2790
  %3990 = vmatpush1.msra.mxu0 %v2789
  %3991 = vmatprep.subr.mxu0 %v2798
  %3992 = vmatpush1.msra.mxu0 %v2797
  %3993 = vmatprep.subr.mxu0 %v2806
  %3994 = vmatpush1.msra.mxu0 %v2805
  %3995 = vmatprep.subr.mxu0 %v2814
  %3996 = vmatpush1.msra.mxu0 %v2813
  %3997 = vmatprep.subr.mxu0 %v2822
  %3998 = vmatpush1.msra.mxu0 %v2821
  %3999 = vmatprep.subr.mxu0 %v2830
  %4000 = vmatpush1.msra.mxu0 %v2829
  %4001 = vmatprep.subr.mxu0 %v2838
  %4002 = vmatpush1.msra.mxu0 %v2837
  %4003 = vmatprep.subr.mxu0 %v2846
  %4004 = vmatpush1.msra.mxu0 %v2845
  %4005 = vmatprep.subr.mxu0 %v2854
  %4006 = vmatpush1.msra.mxu0 %v2853
  %4007 = vmatprep.subr.mxu0 %v2862
  %4008 = vmatpush1.msra.mxu0 %v2861
  %4009 = vmatprep.mubr.f32.mxu0 %v49
  %4010 = vmatmul.mubr.f32.gmra.mrb[0].mxu0 %v48
  %v4011 = vpop.f32.mrb[0].mxu0
  %v4012 = vadd.f32 %v3941, %v4011
  %v4013 = vpop.f32.mrb[0].mxu0
  %v4014 = vadd.f32 %v3943, %v4013
  %4015 = vdwg.mxu0
  %4016 = vmatprep.subr.mxu0 %v2870
  %4017 = vmatpush1.msra.mxu0 %v2869
  %4018 = vmatprep.subr.mxu0 %v2878
  %4019 = vmatpush1.msra.mxu0 %v2877
  %4020 = vmatprep.subr.mxu0 %v2886
  %4021 = vmatpush1.msra.mxu0 %v2885
  %4022 = vmatprep.subr.mxu0 %v2894
  %4023 = vmatpush1.msra.mxu0 %v2893
  %4024 = vmatprep.subr.mxu0 %v2902
  %4025 = vmatpush1.msra.mxu0 %v2901
  %4026 = vmatprep.subr.mxu0 %v2910
  %4027 = vmatpush1.msra.mxu0 %v2909
  %4028 = vmatprep.subr.mxu0 %v2918
  %4029 = vmatpush1.msra.mxu0 %v2917
  %4030 = vmatprep.subr.mxu0 %v2926
  %4031 = vmatpush1.msra.mxu0 %v2925
  %4032 = vmatprep.subr.mxu0 %v2934
  %4033 = vmatpush1.msra.mxu0 %v2933
  %4034 = vmatprep.subr.mxu0 %v2942
  %4035 = vmatpush1.msra.mxu0 %v2941
  %4036 = vmatprep.subr.mxu0 %v2950
  %4037 = vmatpush1.msra.mxu0 %v2949
  %4038 = vmatprep.subr.mxu0 %v2958
  %4039 = vmatpush1.msra.mxu0 %v2957
  %4040 = vmatprep.subr.mxu0 %v2966
  %4041 = vmatpush1.msra.mxu0 %v2965
  %4042 = vmatprep.subr.mxu0 %v2974
  %4043 = vmatpush1.msra.mxu0 %v2973
  %4044 = vmatprep.subr.mxu0 %v2982
  %4045 = vmatpush1.msra.mxu0 %v2981
  %4046 = vmatprep.subr.mxu0 %v2990
  %4047 = vmatpush1.msra.mxu0 %v2989
  %4048 = vmatprep.subr.mxu0 %v2998
  %4049 = vmatpush1.msra.mxu0 %v2997
  %4050 = vmatprep.subr.mxu0 %v3006
  %4051 = vmatpush1.msra.mxu0 %v3005
  %4052 = vmatprep.subr.mxu0 %v3014
  %4053 = vmatpush1.msra.mxu0 %v3013
  %4054 = vmatprep.subr.mxu0 %v3022
  %4055 = vmatpush1.msra.mxu0 %v3021
  %4056 = vmatprep.subr.mxu0 %v3030
  %4057 = vmatpush1.msra.mxu0 %v3029
  %4058 = vmatprep.subr.mxu0 %v3038
  %4059 = vmatpush1.msra.mxu0 %v3037
  %4060 = vmatprep.subr.mxu0 %v3046
  %4061 = vmatpush1.msra.mxu0 %v3045
  %4062 = vmatprep.subr.mxu0 %v3054
  %4063 = vmatpush1.msra.mxu0 %v3053
  %4064 = vmatprep.subr.mxu0 %v3062
  %4065 = vmatpush1.msra.mxu0 %v3061
  %4066 = vmatprep.subr.mxu0 %v3070
  %4067 = vmatpush1.msra.mxu0 %v3069
  %4068 = vmatprep.subr.mxu0 %v3078
  %4069 = vmatpush1.msra.mxu0 %v3077
  %4070 = vmatprep.subr.mxu0 %v3086
  %4071 = vmatpush1.msra.mxu0 %v3085
  %4072 = vmatprep.subr.mxu0 %v3094
  %4073 = vmatpush1.msra.mxu0 %v3093
  %4074 = vmatprep.subr.mxu0 %v3102
  %4075 = vmatpush1.msra.mxu0 %v3101
  %4076 = vmatprep.subr.mxu0 %v3110
  %4077 = vmatpush1.msra.mxu0 %v3109
  %4078 = vmatprep.subr.mxu0 %v3118
  %4079 = vmatpush1.msra.mxu0 %v3117
  %4080 = vmatprep.mubr.f32.mxu0 %v51
  %4081 = vmatmul.mubr.f32.gmra.mrb[0].mxu0 %v50
  %v4082 = vpop.f32.mrb[0].mxu0
  %v4083 = vadd.f32 %v4012, %v4082
  %v4084 = vpop.f32.mrb[0].mxu0
  %v4085 = vadd.f32 %v4014, %v4084
  %4086 = vdwg.mxu0
  %4087 = vmatprep.subr.mxu0 %v3126
  %4088 = vmatpush1.msra.mxu0 %v3125
  %4089 = vmatprep.subr.mxu0 %v3134
  %4090 = vmatpush1.msra.mxu0 %v3133
  %4091 = vmatprep.subr.mxu0 %v3142
  %4092 = vmatpush1.msra.mxu0 %v3141
  %4093 = vmatprep.subr.mxu0 %v3150
  %4094 = vmatpush1.msra.mxu0 %v3149
  %4095 = vmatprep.subr.mxu0 %v3158
  %4096 = vmatpush1.msra.mxu0 %v3157
  %4097 = vmatprep.subr.mxu0 %v3166
  %4098 = vmatpush1.msra.mxu0 %v3165
  %4099 = vmatprep.subr.mxu0 %v3174
  %4100 = vmatpush1.msra.mxu0 %v3173
  %4101 = vmatprep.subr.mxu0 %v3182
  %4102 = vmatpush1.msra.mxu0 %v3181
  %4103 = vmatprep.subr.mxu0 0.0
  %4104 = vmatpush1.msra.mxu0 0.0
  %4105 = vmatprep.subr.mxu0 0.0
  %4106 = vmatpush1.msra.mxu0 0.0
  %4107 = vmatprep.subr.mxu0 0.0
  %4108 = vmatpush1.msra.mxu0 0.0
  %4109 = vmatprep.subr.mxu0 0.0
  %4110 = vmatpush1.msra.mxu0 0.0
  %4111 = vmatprep.subr.mxu0 0.0
  %4112 = vmatpush1.msra.mxu0 0.0
  %4113 = vmatprep.subr.mxu0 0.0
  %4114 = vmatpush1.msra.mxu0 0.0
  %4115 = vmatprep.subr.mxu0 0.0
  %4116 = vmatpush1.msra.mxu0 0.0
  %4117 = vmatprep.subr.mxu0 0.0
  %4118 = vmatpush1.msra.mxu0 0.0
  %4119 = vmatprep.subr.mxu0 0.0
  %4120 = vmatpush1.msra.mxu0 0.0
  %4121 = vmatprep.subr.mxu0 0.0
  %4122 = vmatpush1.msra.mxu0 0.0
  %4123 = vmatprep.subr.mxu0 0.0
  %4124 = vmatpush1.msra.mxu0 0.0
  %4125 = vmatprep.subr.mxu0 0.0
  %4126 = vmatpush1.msra.mxu0 0.0
  %4127 = vmatprep.subr.mxu0 0.0
  %4128 = vmatpush1.msra.mxu0 0.0
  %4129 = vmatprep.subr.mxu0 0.0
  %4130 = vmatpush1.msra.mxu0 0.0
  %4131 = vmatprep.subr.mxu0 0.0
  %4132 = vmatpush1.msra.mxu0 0.0
  %4133 = vmatprep.subr.mxu0 0.0
  %4134 = vmatpush1.msra.mxu0 0.0
  %4135 = vmatprep.subr.mxu0 0.0
  %4136 = vmatpush1.msra.mxu0 0.0
  %4137 = vmatprep.subr.mxu0 0.0
  %4138 = vmatpush1.msra.mxu0 0.0
  %4139 = vmatprep.subr.mxu0 0.0
  %4140 = vmatpush1.msra.mxu0 0.0
  %4141 = vmatprep.subr.mxu0 0.0
  %4142 = vmatpush1.msra.mxu0 0.0
  %4143 = vmatprep.subr.mxu0 0.0
  %4144 = vmatpush1.msra.mxu0 0.0
  %4145 = vmatprep.subr.mxu0 0.0
  %4146 = vmatpush1.msra.mxu0 0.0
  %4147 = vmatprep.subr.mxu0 0.0
  %4148 = vmatpush1.msra.mxu0 0.0
  %4149 = vmatprep.subr.mxu0 0.0
  %4150 = vmatpush1.msra.mxu0 0.0
  %4151 = vmatprep.mubr.f32.mxu0 0.0
  %4152 = vmatmul.mubr.f32.gmra.mrb[0].mxu0 %v3233
  %v4153 = vpop.f32.mrb[0].mxu0
  %v4154 = vadd.f32 %v4083, %v4153
  %v4155 = vpop.f32.mrb[0].mxu0
  %v4156 = vadd.f32 %v4085, %v4155
  %4157 = vdwg.mxu0
  %4158 = vmatprep.subr.mxu0 %v56
  %4159 = vmatpush1.msra.mxu0 %v55
  %4160 = vmatprep.subr.mxu0 %v64
  %4161 = vmatpush1.msra.mxu0 %v63
  %4162 = vmatprep.subr.mxu0 %v72
  %4163 = vmatpush1.msra.mxu0 %v71
  %4164 = vmatprep.subr.mxu0 %v80
  %4165 = vmatpush1.msra.mxu0 %v79
  %4166 = vmatprep.subr.mxu0 %v88
  %4167 = vmatpush1.msra.mxu0 %v87
  %4168 = vmatprep.subr.mxu0 %v96
  %4169 = vmatpush1.msra.mxu0 %v95
  %4170 = vmatprep.subr.mxu0 %v104
  %4171 = vmatpush1.msra.mxu0 %v103
  %4172 = vmatprep.subr.mxu0 %v112
  %4173 = vmatpush1.msra.mxu0 %v111
  %4174 = vmatprep.subr.mxu0 %v120
  %4175 = vmatpush1.msra.mxu0 %v119
  %4176 = vmatprep.subr.mxu0 %v128
  %4177 = vmatpush1.msra.mxu0 %v127
  %4178 = vmatprep.subr.mxu0 %v136
  %4179 = vmatpush1.msra.mxu0 %v135
  %4180 = vmatprep.subr.mxu0 %v144
  %4181 = vmatpush1.msra.mxu0 %v143
  %4182 = vmatprep.subr.mxu0 %v152
  %4183 = vmatpush1.msra.mxu0 %v151
  %4184 = vmatprep.subr.mxu0 %v160
  %4185 = vmatpush1.msra.mxu0 %v159
  %4186 = vmatprep.subr.mxu0 %v168
  %4187 = vmatpush1.msra.mxu0 %v167
  %4188 = vmatprep.subr.mxu0 %v176
  %4189 = vmatpush1.msra.mxu0 %v175
  %4190 = vmatprep.subr.mxu0 %v184
  %4191 = vmatpush1.msra.mxu0 %v183
  %4192 = vmatprep.subr.mxu0 %v192
  %4193 = vmatpush1.msra.mxu0 %v191
  %4194 = vmatprep.subr.mxu0 %v200
  %4195 = vmatpush1.msra.mxu0 %v199
  %4196 = vmatprep.subr.mxu0 %v208
  %4197 = vmatpush1.msra.mxu0 %v207
  %4198 = vmatprep.subr.mxu0 %v216
  %4199 = vmatpush1.msra.mxu0 %v215
  %4200 = vmatprep.subr.mxu0 %v224
  %4201 = vmatpush1.msra.mxu0 %v223
  %4202 = vmatprep.subr.mxu0 %v232
  %4203 = vmatpush1.msra.mxu0 %v231
  %4204 = vmatprep.subr.mxu0 %v240
  %4205 = vmatpush1.msra.mxu0 %v239
  %4206 = vmatprep.subr.mxu0 %v248
  %4207 = vmatpush1.msra.mxu0 %v247
  %4208 = vmatprep.subr.mxu0 %v256
  %4209 = vmatpush1.msra.mxu0 %v255
  %4210 = vmatprep.subr.mxu0 %v264
  %4211 = vmatpush1.msra.mxu0 %v263
  %4212 = vmatprep.subr.mxu0 %v272
  %4213 = vmatpush1.msra.mxu0 %v271
  %4214 = vmatprep.subr.mxu0 %v280
  %4215 = vmatpush1.msra.mxu0 %v279
  %4216 = vmatprep.subr.mxu0 %v288
  %4217 = vmatpush1.msra.mxu0 %v287
  %4218 = vmatprep.subr.mxu0 %v296
  %4219 = vmatpush1.msra.mxu0 %v295
  %4220 = vmatprep.subr.mxu0 %v304
  %4221 = vmatpush1.msra.mxu0 %v303
  %4222 = vmatprep.mubr.f32.mxu0 %v29
  %4223 = vmatmul.mubr.f32.gmra.mrb[0].mxu0 %v28
  %v4224 = vpop.f32.mrb[0].mxu0
  %v4225 = vadd.f32 %v3202, %v4224
  %v4226 = vpop.f32.mrb[0].mxu0
  %v4227 = vadd.f32 %v3206, %v4226
  %4228 = vdwg.mxu0
  %4229 = vmatprep.subr.mxu0 %v312
  %4230 = vmatpush1.msra.mxu0 %v311
  %4231 = vmatprep.subr.mxu0 %v320
  %4232 = vmatpush1.msra.mxu0 %v319
  %4233 = vmatprep.subr.mxu0 %v328
  %4234 = vmatpush1.msra.mxu0 %v327
  %4235 = vmatprep.subr.mxu0 %v336
  %4236 = vmatpush1.msra.mxu0 %v335
  %4237 = vmatprep.subr.mxu0 %v344
  %4238 = vmatpush1.msra.mxu0 %v343
  %4239 = vmatprep.subr.mxu0 %v352
  %4240 = vmatpush1.msra.mxu0 %v351
  %4241 = vmatprep.subr.mxu0 %v360
  %4242 = vmatpush1.msra.mxu0 %v359
  %4243 = vmatprep.subr.mxu0 %v368
  %4244 = vmatpush1.msra.mxu0 %v367
  %4245 = vmatprep.subr.mxu0 %v376
  %4246 = vmatpush1.msra.mxu0 %v375
  %4247 = vmatprep.subr.mxu0 %v384
  %4248 = vmatpush1.msra.mxu0 %v383
  %4249 = vmatprep.subr.mxu0 %v392
  %4250 = vmatpush1.msra.mxu0 %v391
  %4251 = vmatprep.subr.mxu0 %v400
  %4252 = vmatpush1.msra.mxu0 %v399
  %4253 = vmatprep.subr.mxu0 %v408
  %4254 = vmatpush1.msra.mxu0 %v407
  %4255 = vmatprep.subr.mxu0 %v416
  %4256 = vmatpush1.msra.mxu0 %v415
  %4257 = vmatprep.subr.mxu0 %v424
  %4258 = vmatpush1.msra.mxu0 %v423
  %4259 = vmatprep.subr.mxu0 %v432
  %4260 = vmatpush1.msra.mxu0 %v431
  %4261 = vmatprep.subr.mxu0 %v440
  %4262 = vmatpush1.msra.mxu0 %v439
  %4263 = vmatprep.subr.mxu0 %v448
  %4264 = vmatpush1.msra.mxu0 %v447
  %4265 = vmatprep.subr.mxu0 %v456
  %4266 = vmatpush1.msra.mxu0 %v455
  %4267 = vmatprep.subr.mxu0 %v464
  %4268 = vmatpush1.msra.mxu0 %v463
  %4269 = vmatprep.subr.mxu0 %v472
  %4270 = vmatpush1.msra.mxu0 %v471
  %4271 = vmatprep.subr.mxu0 %v480
  %4272 = vmatpush1.msra.mxu0 %v479
  %4273 = vmatprep.subr.mxu0 %v488
  %4274 = vmatpush1.msra.mxu0 %v487
  %4275 = vmatprep.subr.mxu0 %v496
  %4276 = vmatpush1.msra.mxu0 %v495
  %4277 = vmatprep.subr.mxu0 %v504
  %4278 = vmatpush1.msra.mxu0 %v503
  %4279 = vmatprep.subr.mxu0 %v512
  %4280 = vmatpush1.msra.mxu0 %v511
  %4281 = vmatprep.subr.mxu0 %v520
  %4282 = vmatpush1.msra.mxu0 %v519
  %4283 = vmatprep.subr.mxu0 %v528
  %4284 = vmatpush1.msra.mxu0 %v527
  %4285 = vmatprep.subr.mxu0 %v536
  %4286 = vmatpush1.msra.mxu0 %v535
  %4287 = vmatprep.subr.mxu0 %v544
  %4288 = vmatpush1.msra.mxu0 %v543
  %4289 = vmatprep.subr.mxu0 %v552
  %4290 = vmatpush1.msra.mxu0 %v551
  %4291 = vmatprep.subr.mxu0 %v560
  %4292 = vmatpush1.msra.mxu0 %v559
  %4293 = vmatprep.mubr.f32.mxu0 %v31
  %4294 = vmatmul.mubr.f32.gmra.mrb[0].mxu0 %v30
  %v4295 = vpop.f32.mrb[0].mxu0
  %v4296 = vadd.f32 %v4225, %v4295
  %v4297 = vpop.f32.mrb[0].mxu0
  %v4298 = vadd.f32 %v4227, %v4297
  %4299 = vdwg.mxu0
  %4300 = vmatprep.subr.mxu0 %v568
  %4301 = vmatpush1.msra.mxu0 %v567
  %4302 = vmatprep.subr.mxu0 %v576
  %4303 = vmatpush1.msra.mxu0 %v575
  %4304 = vmatprep.subr.mxu0 %v584
  %4305 = vmatpush1.msra.mxu0 %v583
  %4306 = vmatprep.subr.mxu0 %v592
  %4307 = vmatpush1.msra.mxu0 %v591
  %4308 = vmatprep.subr.mxu0 %v600
  %4309 = vmatpush1.msra.mxu0 %v599
  %4310 = vmatprep.subr.mxu0 %v608
  %4311 = vmatpush1.msra.mxu0 %v607
  %4312 = vmatprep.subr.mxu0 %v616
  %4313 = vmatpush1.msra.mxu0 %v615
  %4314 = vmatprep.subr.mxu0 %v624
  %4315 = vmatpush1.msra.mxu0 %v623
  %4316 = vmatprep.subr.mxu0 %v632
  %4317 = vmatpush1.msra.mxu0 %v631
  %4318 = vmatprep.subr.mxu0 %v640
  %4319 = vmatpush1.msra.mxu0 %v639
  %4320 = vmatprep.subr.mxu0 %v648
  %4321 = vmatpush1.msra.mxu0 %v647
  %4322 = vmatprep.subr.mxu0 %v656
  %4323 = vmatpush1.msra.mxu0 %v655
  %4324 = vmatprep.subr.mxu0 %v664
  %4325 = vmatpush1.msra.mxu0 %v663
  %4326 = vmatprep.subr.mxu0 %v672
  %4327 = vmatpush1.msra.mxu0 %v671
  %4328 = vmatprep.subr.mxu0 %v680
  %4329 = vmatpush1.msra.mxu0 %v679
  %4330 = vmatprep.subr.mxu0 %v688
  %4331 = vmatpush1.msra.mxu0 %v687
  %4332 = vmatprep.subr.mxu0 %v696
  %4333 = vmatpush1.msra.mxu0 %v695
  %4334 = vmatprep.subr.mxu0 %v704
  %4335 = vmatpush1.msra.mxu0 %v703
  %4336 = vmatprep.subr.mxu0 %v712
  %4337 = vmatpush1.msra.mxu0 %v711
  %4338 = vmatprep.subr.mxu0 %v720
  %4339 = vmatpush1.msra.mxu0 %v719
  %4340 = vmatprep.subr.mxu0 %v728
  %4341 = vmatpush1.msra.mxu0 %v727
  %4342 = vmatprep.subr.mxu0 %v736
  %4343 = vmatpush1.msra.mxu0 %v735
  %4344 = vmatprep.subr.mxu0 %v744
  %4345 = vmatpush1.msra.mxu0 %v743
  %4346 = vmatprep.subr.mxu0 %v752
  %4347 = vmatpush1.msra.mxu0 %v751
  %4348 = vmatprep.subr.mxu0 %v760
  %4349 = vmatpush1.msra.mxu0 %v759
  %4350 = vmatprep.subr.mxu0 %v768
  %4351 = vmatpush1.msra.mxu0 %v767
  %4352 = vmatprep.subr.mxu0 %v776
  %4353 = vmatpush1.msra.mxu0 %v775
  %4354 = vmatprep.subr.mxu0 %v784
  %4355 = vmatpush1.msra.mxu0 %v783
  %4356 = vmatprep.subr.mxu0 %v792
  %4357 = vmatpush1.msra.mxu0 %v791
  %4358 = vmatprep.subr.mxu0 %v800
  %4359 = vmatpush1.msra.mxu0 %v799
  %4360 = vmatprep.subr.mxu0 %v808
  %4361 = vmatpush1.msra.mxu0 %v807
  %4362 = vmatprep.subr.mxu0 %v816
  %4363 = vmatpush1.msra.mxu0 %v815
  %4364 = vmatprep.mubr.f32.mxu0 %v33
  %4365 = vmatmul.mubr.f32.gmra.mrb[0].mxu0 %v32
  %v4366 = vpop.f32.mrb[0].mxu0
  %v4367 = vadd.f32 %v4296, %v4366
  %v4368 = vpop.f32.mrb[0].mxu0
  %v4369 = vadd.f32 %v4298, %v4368
  %4370 = vdwg.mxu0
  %4371 = vmatprep.subr.mxu0 %v824
  %4372 = vmatpush1.msra.mxu0 %v823
  %4373 = vmatprep.subr.mxu0 %v832
  %4374 = vmatpush1.msra.mxu0 %v831
  %4375 = vmatprep.subr.mxu0 %v840
  %4376 = vmatpush1.msra.mxu0 %v839
  %4377 = vmatprep.subr.mxu0 %v848
  %4378 = vmatpush1.msra.mxu0 %v847
  %4379 = vmatprep.subr.mxu0 %v856
  %4380 = vmatpush1.msra.mxu0 %v855
  %4381 = vmatprep.subr.mxu0 %v864
  %4382 = vmatpush1.msra.mxu0 %v863
  %4383 = vmatprep.subr.mxu0 %v872
  %4384 = vmatpush1.msra.mxu0 %v871
  %4385 = vmatprep.subr.mxu0 %v880
  %4386 = vmatpush1.msra.mxu0 %v879
  %4387 = vmatprep.subr.mxu0 %v888
  %4388 = vmatpush1.msra.mxu0 %v887
  %4389 = vmatprep.subr.mxu0 %v896
  %4390 = vmatpush1.msra.mxu0 %v895
  %4391 = vmatprep.subr.mxu0 %v904
  %4392 = vmatpush1.msra.mxu0 %v903
  %4393 = vmatprep.subr.mxu0 %v912
  %4394 = vmatpush1.msra.mxu0 %v911
  %4395 = vmatprep.subr.mxu0 %v920
  %4396 = vmatpush1.msra.mxu0 %v919
  %4397 = vmatprep.subr.mxu0 %v928
  %4398 = vmatpush1.msra.mxu0 %v927
  %4399 = vmatprep.subr.mxu0 %v936
  %4400 = vmatpush1.msra.mxu0 %v935
  %4401 = vmatprep.subr.mxu0 %v944
  %4402 = vmatpush1.msra.mxu0 %v943
  %4403 = vmatprep.subr.mxu0 %v952
  %4404 = vmatpush1.msra.mxu0 %v951
  %4405 = vmatprep.subr.mxu0 %v960
  %4406 = vmatpush1.msra.mxu0 %v959
  %4407 = vmatprep.subr.mxu0 %v968
  %4408 = vmatpush1.msra.mxu0 %v967
  %4409 = vmatprep.subr.mxu0 %v976
  %4410 = vmatpush1.msra.mxu0 %v975
  %4411 = vmatprep.subr.mxu0 %v984
  %4412 = vmatpush1.msra.mxu0 %v983
  %4413 = vmatprep.subr.mxu0 %v992
  %4414 = vmatpush1.msra.mxu0 %v991
  %4415 = vmatprep.subr.mxu0 %v1000
  %4416 = vmatpush1.msra.mxu0 %v999
  %4417 = vmatprep.subr.mxu0 %v1008
  %4418 = vmatpush1.msra.mxu0 %v1007
  %4419 = vmatprep.subr.mxu0 %v1016
  %4420 = vmatpush1.msra.mxu0 %v1015
  %4421 = vmatprep.subr.mxu0 %v1024
  %4422 = vmatpush1.msra.mxu0 %v1023
  %4423 = vmatprep.subr.mxu0 %v1032
  %4424 = vmatpush1.msra.mxu0 %v1031
  %4425 = vmatprep.subr.mxu0 %v1040
  %4426 = vmatpush1.msra.mxu0 %v1039
  %4427 = vmatprep.subr.mxu0 %v1048
  %4428 = vmatpush1.msra.mxu0 %v1047
  %4429 = vmatprep.subr.mxu0 %v1056
  %4430 = vmatpush1.msra.mxu0 %v1055
  %4431 = vmatprep.subr.mxu0 %v1064
  %4432 = vmatpush1.msra.mxu0 %v1063
  %4433 = vmatprep.subr.mxu0 %v1072
  %4434 = vmatpush1.msra.mxu0 %v1071
  %4435 = vmatprep.mubr.f32.mxu0 %v35
  %4436 = vmatmul.mubr.f32.gmra.mrb[0].mxu0 %v34
  %v4437 = vpop.f32.mrb[0].mxu0
  %v4438 = vadd.f32 %v4367, %v4437
  %v4439 = vpop.f32.mrb[0].mxu0
  %v4440 = vadd.f32 %v4369, %v4439
  %4441 = vdwg.mxu0
  %4442 = vmatprep.subr.mxu0 %v1080
  %4443 = vmatpush1.msra.mxu0 %v1079
  %4444 = vmatprep.subr.mxu0 %v1088
  %4445 = vmatpush1.msra.mxu0 %v1087
  %4446 = vmatprep.subr.mxu0 %v1096
  %4447 = vmatpush1.msra.mxu0 %v1095
  %4448 = vmatprep.subr.mxu0 %v1104
  %4449 = vmatpush1.msra.mxu0 %v1103
  %4450 = vmatprep.subr.mxu0 %v1112
  %4451 = vmatpush1.msra.mxu0 %v1111
  %4452 = vmatprep.subr.mxu0 %v1120
  %4453 = vmatpush1.msra.mxu0 %v1119
  %4454 = vmatprep.subr.mxu0 %v1128
  %4455 = vmatpush1.msra.mxu0 %v1127
  %4456 = vmatprep.subr.mxu0 %v1136
  %4457 = vmatpush1.msra.mxu0 %v1135
  %4458 = vmatprep.subr.mxu0 %v1144
  %4459 = vmatpush1.msra.mxu0 %v1143
  %4460 = vmatprep.subr.mxu0 %v1152
  %4461 = vmatpush1.msra.mxu0 %v1151
  %4462 = vmatprep.subr.mxu0 %v1160
  %4463 = vmatpush1.msra.mxu0 %v1159
  %4464 = vmatprep.subr.mxu0 %v1168
  %4465 = vmatpush1.msra.mxu0 %v1167
  %4466 = vmatprep.subr.mxu0 %v1176
  %4467 = vmatpush1.msra.mxu0 %v1175
  %4468 = vmatprep.subr.mxu0 %v1184
  %4469 = vmatpush1.msra.mxu0 %v1183
  %4470 = vmatprep.subr.mxu0 %v1192
  %4471 = vmatpush1.msra.mxu0 %v1191
  %4472 = vmatprep.subr.mxu0 %v1200
  %4473 = vmatpush1.msra.mxu0 %v1199
  %4474 = vmatprep.subr.mxu0 %v1208
  %4475 = vmatpush1.msra.mxu0 %v1207
  %4476 = vmatprep.subr.mxu0 %v1216
  %4477 = vmatpush1.msra.mxu0 %v1215
  %4478 = vmatprep.subr.mxu0 %v1224
  %4479 = vmatpush1.msra.mxu0 %v1223
  %4480 = vmatprep.subr.mxu0 %v1232
  %4481 = vmatpush1.msra.mxu0 %v1231
  %4482 = vmatprep.subr.mxu0 %v1240
  %4483 = vmatpush1.msra.mxu0 %v1239
  %4484 = vmatprep.subr.mxu0 %v1248
  %4485 = vmatpush1.msra.mxu0 %v1247
  %4486 = vmatprep.subr.mxu0 %v1256
  %4487 = vmatpush1.msra.mxu0 %v1255
  %4488 = vmatprep.subr.mxu0 %v1264
  %4489 = vmatpush1.msra.mxu0 %v1263
  %4490 = vmatprep.subr.mxu0 %v1272
  %4491 = vmatpush1.msra.mxu0 %v1271
  %4492 = vmatprep.subr.mxu0 %v1280
  %4493 = vmatpush1.msra.mxu0 %v1279
  %4494 = vmatprep.subr.mxu0 %v1288
  %4495 = vmatpush1.msra.mxu0 %v1287
  %4496 = vmatprep.subr.mxu0 %v1296
  %4497 = vmatpush1.msra.mxu0 %v1295
  %4498 = vmatprep.subr.mxu0 %v1304
  %4499 = vmatpush1.msra.mxu0 %v1303
  %4500 = vmatprep.subr.mxu0 %v1312
  %4501 = vmatpush1.msra.mxu0 %v1311
  %4502 = vmatprep.subr.mxu0 %v1320
  %4503 = vmatpush1.msra.mxu0 %v1319
  %4504 = vmatprep.subr.mxu0 %v1328
  %4505 = vmatpush1.msra.mxu0 %v1327
  %4506 = vmatprep.mubr.f32.mxu0 %v37
  %4507 = vmatmul.mubr.f32.gmra.mrb[0].mxu0 %v36
  %v4508 = vpop.f32.mrb[0].mxu0
  %v4509 = vadd.f32 %v4438, %v4508
  %v4510 = vpop.f32.mrb[0].mxu0
  %v4511 = vadd.f32 %v4440, %v4510
  %4512 = vdwg.mxu0
  %4513 = vmatprep.subr.mxu0 %v1336
  %4514 = vmatpush1.msra.mxu0 %v1335
  %4515 = vmatprep.subr.mxu0 %v1344
  %4516 = vmatpush1.msra.mxu0 %v1343
  %4517 = vmatprep.subr.mxu0 %v1352
  %4518 = vmatpush1.msra.mxu0 %v1351
  %4519 = vmatprep.subr.mxu0 %v1360
  %4520 = vmatpush1.msra.mxu0 %v1359
  %4521 = vmatprep.subr.mxu0 %v1368
  %4522 = vmatpush1.msra.mxu0 %v1367
  %4523 = vmatprep.subr.mxu0 %v1376
  %4524 = vmatpush1.msra.mxu0 %v1375
  %4525 = vmatprep.subr.mxu0 %v1384
  %4526 = vmatpush1.msra.mxu0 %v1383
  %4527 = vmatprep.subr.mxu0 %v1392
  %4528 = vmatpush1.msra.mxu0 %v1391
  %4529 = vmatprep.subr.mxu0 %v1400
  %4530 = vmatpush1.msra.mxu0 %v1399
  %4531 = vmatprep.subr.mxu0 %v1408
  %4532 = vmatpush1.msra.mxu0 %v1407
  %4533 = vmatprep.subr.mxu0 %v1416
  %4534 = vmatpush1.msra.mxu0 %v1415
  %4535 = vmatprep.subr.mxu0 %v1424
  %4536 = vmatpush1.msra.mxu0 %v1423
  %4537 = vmatprep.subr.mxu0 %v1432
  %4538 = vmatpush1.msra.mxu0 %v1431
  %4539 = vmatprep.subr.mxu0 %v1440
  %4540 = vmatpush1.msra.mxu0 %v1439
  %4541 = vmatprep.subr.mxu0 %v1448
  %4542 = vmatpush1.msra.mxu0 %v1447
  %4543 = vmatprep.subr.mxu0 %v1456
  %4544 = vmatpush1.msra.mxu0 %v1455
  %4545 = vmatprep.subr.mxu0 %v1464
  %4546 = vmatpush1.msra.mxu0 %v1463
  %4547 = vmatprep.subr.mxu0 %v1472
  %4548 = vmatpush1.msra.mxu0 %v1471
  %4549 = vmatprep.subr.mxu0 %v1480
  %4550 = vmatpush1.msra.mxu0 %v1479
  %4551 = vmatprep.subr.mxu0 %v1488
  %4552 = vmatpush1.msra.mxu0 %v1487
  %4553 = vmatprep.subr.mxu0 %v1496
  %4554 = vmatpush1.msra.mxu0 %v1495
  %4555 = vmatprep.subr.mxu0 %v1504
  %4556 = vmatpush1.msra.mxu0 %v1503
  %4557 = vmatprep.subr.mxu0 %v1512
  %4558 = vmatpush1.msra.mxu0 %v1511
  %4559 = vmatprep.subr.mxu0 %v1520
  %4560 = vmatpush1.msra.mxu0 %v1519
  %4561 = vmatprep.subr.mxu0 %v1528
  %4562 = vmatpush1.msra.mxu0 %v1527
  %4563 = vmatprep.subr.mxu0 %v1536
  %4564 = vmatpush1.msra.mxu0 %v1535
  %4565 = vmatprep.subr.mxu0 %v1544
  %4566 = vmatpush1.msra.mxu0 %v1543
  %4567 = vmatprep.subr.mxu0 %v1552
  %4568 = vmatpush1.msra.mxu0 %v1551
  %4569 = vmatprep.subr.mxu0 %v1560
  %4570 = vmatpush1.msra.mxu0 %v1559
  %4571 = vmatprep.subr.mxu0 %v1568
  %4572 = vmatpush1.msra.mxu0 %v1567
  %4573 = vmatprep.subr.mxu0 %v1576
  %4574 = vmatpush1.msra.mxu0 %v1575
  %4575 = vmatprep.subr.mxu0 %v1584
  %4576 = vmatpush1.msra.mxu0 %v1583
  %4577 = vmatprep.mubr.f32.mxu0 %v39
  %4578 = vmatmul.mubr.f32.gmra.mrb[0].mxu0 %v38
  %v4579 = vpop.f32.mrb[0].mxu0
  %v4580 = vadd.f32 %v4509, %v4579
  %v4581 = vpop.f32.mrb[0].mxu0
  %v4582 = vadd.f32 %v4511, %v4581
  %4583 = vdwg.mxu0
  %4584 = vmatprep.subr.mxu0 %v1592
  %4585 = vmatpush1.msra.mxu0 %v1591
  %4586 = vmatprep.subr.mxu0 %v1600
  %4587 = vmatpush1.msra.mxu0 %v1599
  %4588 = vmatprep.subr.mxu0 %v1608
  %4589 = vmatpush1.msra.mxu0 %v1607
  %4590 = vmatprep.subr.mxu0 %v1616
  %4591 = vmatpush1.msra.mxu0 %v1615
  %4592 = vmatprep.subr.mxu0 %v1624
  %4593 = vmatpush1.msra.mxu0 %v1623
  %4594 = vmatprep.subr.mxu0 %v1632
  %4595 = vmatpush1.msra.mxu0 %v1631
  %4596 = vmatprep.subr.mxu0 %v1640
  %4597 = vmatpush1.msra.mxu0 %v1639
  %4598 = vmatprep.subr.mxu0 %v1648
  %4599 = vmatpush1.msra.mxu0 %v1647
  %4600 = vmatprep.subr.mxu0 %v1656
  %4601 = vmatpush1.msra.mxu0 %v1655
  %4602 = vmatprep.subr.mxu0 %v1664
  %4603 = vmatpush1.msra.mxu0 %v1663
  %4604 = vmatprep.subr.mxu0 %v1672
  %4605 = vmatpush1.msra.mxu0 %v1671
  %4606 = vmatprep.subr.mxu0 %v1680
  %4607 = vmatpush1.msra.mxu0 %v1679
  %4608 = vmatprep.subr.mxu0 %v1688
  %4609 = vmatpush1.msra.mxu0 %v1687
  %4610 = vmatprep.subr.mxu0 %v1696
  %4611 = vmatpush1.msra.mxu0 %v1695
  %4612 = vmatprep.subr.mxu0 %v1704
  %4613 = vmatpush1.msra.mxu0 %v1703
  %4614 = vmatprep.subr.mxu0 %v1712
  %4615 = vmatpush1.msra.mxu0 %v1711
  %4616 = vmatprep.subr.mxu0 %v1720
  %4617 = vmatpush1.msra.mxu0 %v1719
  %4618 = vmatprep.subr.mxu0 %v1728
  %4619 = vmatpush1.msra.mxu0 %v1727
  %4620 = vmatprep.subr.mxu0 %v1736
  %4621 = vmatpush1.msra.mxu0 %v1735
  %4622 = vmatprep.subr.mxu0 %v1744
  %4623 = vmatpush1.msra.mxu0 %v1743
  %4624 = vmatprep.subr.mxu0 %v1752
  %4625 = vmatpush1.msra.mxu0 %v1751
  %4626 = vmatprep.subr.mxu0 %v1760
  %4627 = vmatpush1.msra.mxu0 %v1759
  %4628 = vmatprep.subr.mxu0 %v1768
  %4629 = vmatpush1.msra.mxu0 %v1767
  %4630 = vmatprep.subr.mxu0 %v1776
  %4631 = vmatpush1.msra.mxu0 %v1775
  %4632 = vmatprep.subr.mxu0 %v1784
  %4633 = vmatpush1.msra.mxu0 %v1783
  %4634 = vmatprep.subr.mxu0 %v1792
  %4635 = vmatpush1.msra.mxu0 %v1791
  %4636 = vmatprep.subr.mxu0 %v1800
  %4637 = vmatpush1.msra.mxu0 %v1799
  %4638 = vmatprep.subr.mxu0 %v1808
  %4639 = vmatpush1.msra.mxu0 %v1807
  %4640 = vmatprep.subr.mxu0 %v1816
  %4641 = vmatpush1.msra.mxu0 %v1815
  %4642 = vmatprep.subr.mxu0 %v1824
  %4643 = vmatpush1.msra.mxu0 %v1823
  %4644 = vmatprep.subr.mxu0 %v1832
  %4645 = vmatpush1.msra.mxu0 %v1831
  %4646 = vmatprep.subr.mxu0 %v1840
  %4647 = vmatpush1.msra.mxu0 %v1839
  %4648 = vmatprep.mubr.f32.mxu0 %v41
  %4649 = vmatmul.mubr.f32.gmra.mrb[0].mxu0 %v40
  %v4650 = vpop.f32.mrb[0].mxu0
  %v4651 = vadd.f32 %v4580, %v4650
  %v4652 = vpop.f32.mrb[0].mxu0
  %v4653 = vadd.f32 %v4582, %v4652
  %4654 = vdwg.mxu0
  %4655 = vmatprep.subr.mxu0 %v1848
  %4656 = vmatpush1.msra.mxu0 %v1847
  %4657 = vmatprep.subr.mxu0 %v1856
  %4658 = vmatpush1.msra.mxu0 %v1855
  %4659 = vmatprep.subr.mxu0 %v1864
  %4660 = vmatpush1.msra.mxu0 %v1863
  %4661 = vmatprep.subr.mxu0 %v1872
  %4662 = vmatpush1.msra.mxu0 %v1871
  %4663 = vmatprep.subr.mxu0 %v1880
  %4664 = vmatpush1.msra.mxu0 %v1879
  %4665 = vmatprep.subr.mxu0 %v1888
  %4666 = vmatpush1.msra.mxu0 %v1887
  %4667 = vmatprep.subr.mxu0 %v1896
  %4668 = vmatpush1.msra.mxu0 %v1895
  %4669 = vmatprep.subr.mxu0 %v1904
  %4670 = vmatpush1.msra.mxu0 %v1903
  %4671 = vmatprep.subr.mxu0 %v1912
  %4672 = vmatpush1.msra.mxu0 %v1911
  %4673 = vmatprep.subr.mxu0 %v1920
  %4674 = vmatpush1.msra.mxu0 %v1919
  %4675 = vmatprep.subr.mxu0 %v1928
  %4676 = vmatpush1.msra.mxu0 %v1927
  %4677 = vmatprep.subr.mxu0 %v1936
  %4678 = vmatpush1.msra.mxu0 %v1935
  %4679 = vmatprep.subr.mxu0 %v1944
  %4680 = vmatpush1.msra.mxu0 %v1943
  %4681 = vmatprep.subr.mxu0 %v1952
  %4682 = vmatpush1.msra.mxu0 %v1951
  %4683 = vmatprep.subr.mxu0 %v1960
  %4684 = vmatpush1.msra.mxu0 %v1959
  %4685 = vmatprep.subr.mxu0 %v1968
  %4686 = vmatpush1.msra.mxu0 %v1967
  %4687 = vmatprep.subr.mxu0 %v1976
  %4688 = vmatpush1.msra.mxu0 %v1975
  %4689 = vmatprep.subr.mxu0 %v1984
  %4690 = vmatpush1.msra.mxu0 %v1983
  %4691 = vmatprep.subr.mxu0 %v1992
  %4692 = vmatpush1.msra.mxu0 %v1991
  %4693 = vmatprep.subr.mxu0 %v2000
  %4694 = vmatpush1.msra.mxu0 %v1999
  %4695 = vmatprep.subr.mxu0 %v2008
  %4696 = vmatpush1.msra.mxu0 %v2007
  %4697 = vmatprep.subr.mxu0 %v2016
  %4698 = vmatpush1.msra.mxu0 %v2015
  %4699 = vmatprep.subr.mxu0 %v2024
  %4700 = vmatpush1.msra.mxu0 %v2023
  %4701 = vmatprep.subr.mxu0 %v2032
  %4702 = vmatpush1.msra.mxu0 %v2031
  %4703 = vmatprep.subr.mxu0 %v2040
  %4704 = vmatpush1.msra.mxu0 %v2039
  %4705 = vmatprep.subr.mxu0 %v2048
  %4706 = vmatpush1.msra.mxu0 %v2047
  %4707 = vmatprep.subr.mxu0 %v2056
  %4708 = vmatpush1.msra.mxu0 %v2055
  %4709 = vmatprep.subr.mxu0 %v2064
  %4710 = vmatpush1.msra.mxu0 %v2063
  %4711 = vmatprep.subr.mxu0 %v2072
  %4712 = vmatpush1.msra.mxu0 %v2071
  %4713 = vmatprep.subr.mxu0 %v2080
  %4714 = vmatpush1.msra.mxu0 %v2079
  %4715 = vmatprep.subr.mxu0 %v2088
  %4716 = vmatpush1.msra.mxu0 %v2087
  %4717 = vmatprep.subr.mxu0 %v2096
  %4718 = vmatpush1.msra.mxu0 %v2095
  %4719 = vmatprep.mubr.f32.mxu0 %v43
  %4720 = vmatmul.mubr.f32.gmra.mrb[0].mxu0 %v42
  %v4721 = vpop.f32.mrb[0].mxu0
  %v4722 = vadd.f32 %v4651, %v4721
  %v4723 = vpop.f32.mrb[0].mxu0
  %v4724 = vadd.f32 %v4653, %v4723
  %4725 = vdwg.mxu0
  %4726 = vmatprep.subr.mxu0 %v2104
  %4727 = vmatpush1.msra.mxu0 %v2103
  %4728 = vmatprep.subr.mxu0 %v2112
  %4729 = vmatpush1.msra.mxu0 %v2111
  %4730 = vmatprep.subr.mxu0 %v2120
  %4731 = vmatpush1.msra.mxu0 %v2119
  %4732 = vmatprep.subr.mxu0 %v2128
  %4733 = vmatpush1.msra.mxu0 %v2127
  %4734 = vmatprep.subr.mxu0 %v2136
  %4735 = vmatpush1.msra.mxu0 %v2135
  %4736 = vmatprep.subr.mxu0 %v2144
  %4737 = vmatpush1.msra.mxu0 %v2143
  %4738 = vmatprep.subr.mxu0 %v2152
  %4739 = vmatpush1.msra.mxu0 %v2151
  %4740 = vmatprep.subr.mxu0 %v2160
  %4741 = vmatpush1.msra.mxu0 %v2159
  %4742 = vmatprep.subr.mxu0 %v2168
  %4743 = vmatpush1.msra.mxu0 %v2167
  %4744 = vmatprep.subr.mxu0 %v2176
  %4745 = vmatpush1.msra.mxu0 %v2175
  %4746 = vmatprep.subr.mxu0 %v2184
  %4747 = vmatpush1.msra.mxu0 %v2183
  %4748 = vmatprep.subr.mxu0 %v2192
  %4749 = vmatpush1.msra.mxu0 %v2191
  %4750 = vmatprep.subr.mxu0 %v2200
  %4751 = vmatpush1.msra.mxu0 %v2199
  %4752 = vmatprep.subr.mxu0 %v2208
  %4753 = vmatpush1.msra.mxu0 %v2207
  %4754 = vmatprep.subr.mxu0 %v2216
  %4755 = vmatpush1.msra.mxu0 %v2215
  %4756 = vmatprep.subr.mxu0 %v2224
  %4757 = vmatpush1.msra.mxu0 %v2223
  %4758 = vmatprep.subr.mxu0 %v2232
  %4759 = vmatpush1.msra.mxu0 %v2231
  %4760 = vmatprep.subr.mxu0 %v2240
  %4761 = vmatpush1.msra.mxu0 %v2239
  %4762 = vmatprep.subr.mxu0 %v2248
  %4763 = vmatpush1.msra.mxu0 %v2247
  %4764 = vmatprep.subr.mxu0 %v2256
  %4765 = vmatpush1.msra.mxu0 %v2255
  %4766 = vmatprep.subr.mxu0 %v2264
  %4767 = vmatpush1.msra.mxu0 %v2263
  %4768 = vmatprep.subr.mxu0 %v2272
  %4769 = vmatpush1.msra.mxu0 %v2271
  %4770 = vmatprep.subr.mxu0 %v2280
  %4771 = vmatpush1.msra.mxu0 %v2279
  %4772 = vmatprep.subr.mxu0 %v2288
  %4773 = vmatpush1.msra.mxu0 %v2287
  %4774 = vmatprep.subr.mxu0 %v2296
  %4775 = vmatpush1.msra.mxu0 %v2295
  %4776 = vmatprep.subr.mxu0 %v2304
  %4777 = vmatpush1.msra.mxu0 %v2303
  %4778 = vmatprep.subr.mxu0 %v2312
  %4779 = vmatpush1.msra.mxu0 %v2311
  %4780 = vmatprep.subr.mxu0 %v2320
  %4781 = vmatpush1.msra.mxu0 %v2319
  %4782 = vmatprep.subr.mxu0 %v2328
  %4783 = vmatpush1.msra.mxu0 %v2327
  %4784 = vmatprep.subr.mxu0 %v2336
  %4785 = vmatpush1.msra.mxu0 %v2335
  %4786 = vmatprep.subr.mxu0 %v2344
  %4787 = vmatpush1.msra.mxu0 %v2343
  %4788 = vmatprep.subr.mxu0 %v2352
  %4789 = vmatpush1.msra.mxu0 %v2351
  %4790 = vmatprep.mubr.f32.mxu0 %v45
  %4791 = vmatmul.mubr.f32.gmra.mrb[0].mxu0 %v44
  %v4792 = vpop.f32.mrb[0].mxu0
  %v4793 = vadd.f32 %v4722, %v4792
  %v4794 = vpop.f32.mrb[0].mxu0
  %v4795 = vadd.f32 %v4724, %v4794
  %4796 = vdwg.mxu0
  %4797 = vmatprep.subr.mxu0 %v2360
  %4798 = vmatpush1.msra.mxu0 %v2359
  %4799 = vmatprep.subr.mxu0 %v2368
  %4800 = vmatpush1.msra.mxu0 %v2367
  %4801 = vmatprep.subr.mxu0 %v2376
  %4802 = vmatpush1.msra.mxu0 %v2375
  %4803 = vmatprep.subr.mxu0 %v2384
  %4804 = vmatpush1.msra.mxu0 %v2383
  %4805 = vmatprep.subr.mxu0 %v2392
  %4806 = vmatpush1.msra.mxu0 %v2391
  %4807 = vmatprep.subr.mxu0 %v2400
  %4808 = vmatpush1.msra.mxu0 %v2399
  %4809 = vmatprep.subr.mxu0 %v2408
  %4810 = vmatpush1.msra.mxu0 %v2407
  %4811 = vmatprep.subr.mxu0 %v2416
  %4812 = vmatpush1.msra.mxu0 %v2415
  %4813 = vmatprep.subr.mxu0 %v2424
  %4814 = vmatpush1.msra.mxu0 %v2423
  %4815 = vmatprep.subr.mxu0 %v2432
  %4816 = vmatpush1.msra.mxu0 %v2431
  %4817 = vmatprep.subr.mxu0 %v2440
  %4818 = vmatpush1.msra.mxu0 %v2439
  %4819 = vmatprep.subr.mxu0 %v2448
  %4820 = vmatpush1.msra.mxu0 %v2447
  %4821 = vmatprep.subr.mxu0 %v2456
  %4822 = vmatpush1.msra.mxu0 %v2455
  %4823 = vmatprep.subr.mxu0 %v2464
  %4824 = vmatpush1.msra.mxu0 %v2463
  %4825 = vmatprep.subr.mxu0 %v2472
  %4826 = vmatpush1.msra.mxu0 %v2471
  %4827 = vmatprep.subr.mxu0 %v2480
  %4828 = vmatpush1.msra.mxu0 %v2479
  %4829 = vmatprep.subr.mxu0 %v2488
  %4830 = vmatpush1.msra.mxu0 %v2487
  %4831 = vmatprep.subr.mxu0 %v2496
  %4832 = vmatpush1.msra.mxu0 %v2495
  %4833 = vmatprep.subr.mxu0 %v2504
  %4834 = vmatpush1.msra.mxu0 %v2503
  %4835 = vmatprep.subr.mxu0 %v2512
  %4836 = vmatpush1.msra.mxu0 %v2511
  %4837 = vmatprep.subr.mxu0 %v2520
  %4838 = vmatpush1.msra.mxu0 %v2519
  %4839 = vmatprep.subr.mxu0 %v2528
  %4840 = vmatpush1.msra.mxu0 %v2527
  %4841 = vmatprep.subr.mxu0 %v2536
  %4842 = vmatpush1.msra.mxu0 %v2535
  %4843 = vmatprep.subr.mxu0 %v2544
  %4844 = vmatpush1.msra.mxu0 %v2543
  %4845 = vmatprep.subr.mxu0 %v2552
  %4846 = vmatpush1.msra.mxu0 %v2551
  %4847 = vmatprep.subr.mxu0 %v2560
  %4848 = vmatpush1.msra.mxu0 %v2559
  %4849 = vmatprep.subr.mxu0 %v2568
  %4850 = vmatpush1.msra.mxu0 %v2567
  %4851 = vmatprep.subr.mxu0 %v2576
  %4852 = vmatpush1.msra.mxu0 %v2575
  %4853 = vmatprep.subr.mxu0 %v2584
  %4854 = vmatpush1.msra.mxu0 %v2583
  %4855 = vmatprep.subr.mxu0 %v2592
  %4856 = vmatpush1.msra.mxu0 %v2591
  %4857 = vmatprep.subr.mxu0 %v2600
  %4858 = vmatpush1.msra.mxu0 %v2599
  %4859 = vmatprep.subr.mxu0 %v2608
  %4860 = vmatpush1.msra.mxu0 %v2607
  %4861 = vmatprep.mubr.f32.mxu0 %v47
  %4862 = vmatmul.mubr.f32.gmra.mrb[0].mxu0 %v46
  %v4863 = vpop.f32.mrb[0].mxu0
  %v4864 = vadd.f32 %v4793, %v4863
  %v4865 = vpop.f32.mrb[0].mxu0
  %v4866 = vadd.f32 %v4795, %v4865
  %4867 = vdwg.mxu0
  %4868 = vmatprep.subr.mxu0 %v2616
  %4869 = vmatpush1.msra.mxu0 %v2615
  %4870 = vmatprep.subr.mxu0 %v2624
  %4871 = vmatpush1.msra.mxu0 %v2623
  %4872 = vmatprep.subr.mxu0 %v2632
  %4873 = vmatpush1.msra.mxu0 %v2631
  %4874 = vmatprep.subr.mxu0 %v2640
  %4875 = vmatpush1.msra.mxu0 %v2639
  %4876 = vmatprep.subr.mxu0 %v2648
  %4877 = vmatpush1.msra.mxu0 %v2647
  %4878 = vmatprep.subr.mxu0 %v2656
  %4879 = vmatpush1.msra.mxu0 %v2655
  %4880 = vmatprep.subr.mxu0 %v2664
  %4881 = vmatpush1.msra.mxu0 %v2663
  %4882 = vmatprep.subr.mxu0 %v2672
  %4883 = vmatpush1.msra.mxu0 %v2671
  %4884 = vmatprep.subr.mxu0 %v2680
  %4885 = vmatpush1.msra.mxu0 %v2679
  %4886 = vmatprep.subr.mxu0 %v2688
  %4887 = vmatpush1.msra.mxu0 %v2687
  %4888 = vmatprep.subr.mxu0 %v2696
  %4889 = vmatpush1.msra.mxu0 %v2695
  %4890 = vmatprep.subr.mxu0 %v2704
  %4891 = vmatpush1.msra.mxu0 %v2703
  %4892 = vmatprep.subr.mxu0 %v2712
  %4893 = vmatpush1.msra.mxu0 %v2711
  %4894 = vmatprep.subr.mxu0 %v2720
  %4895 = vmatpush1.msra.mxu0 %v2719
  %4896 = vmatprep.subr.mxu0 %v2728
  %4897 = vmatpush1.msra.mxu0 %v2727
  %4898 = vmatprep.subr.mxu0 %v2736
  %4899 = vmatpush1.msra.mxu0 %v2735
  %4900 = vmatprep.subr.mxu0 %v2744
  %4901 = vmatpush1.msra.mxu0 %v2743
  %4902 = vmatprep.subr.mxu0 %v2752
  %4903 = vmatpush1.msra.mxu0 %v2751
  %4904 = vmatprep.subr.mxu0 %v2760
  %4905 = vmatpush1.msra.mxu0 %v2759
  %4906 = vmatprep.subr.mxu0 %v2768
  %4907 = vmatpush1.msra.mxu0 %v2767
  %4908 = vmatprep.subr.mxu0 %v2776
  %4909 = vmatpush1.msra.mxu0 %v2775
  %4910 = vmatprep.subr.mxu0 %v2784
  %4911 = vmatpush1.msra.mxu0 %v2783
  %4912 = vmatprep.subr.mxu0 %v2792
  %4913 = vmatpush1.msra.mxu0 %v2791
  %4914 = vmatprep.subr.mxu0 %v2800
  %4915 = vmatpush1.msra.mxu0 %v2799
  %4916 = vmatprep.subr.mxu0 %v2808
  %4917 = vmatpush1.msra.mxu0 %v2807
  %4918 = vmatprep.subr.mxu0 %v2816
  %4919 = vmatpush1.msra.mxu0 %v2815
  %4920 = vmatprep.subr.mxu0 %v2824
  %4921 = vmatpush1.msra.mxu0 %v2823
  %4922 = vmatprep.subr.mxu0 %v2832
  %4923 = vmatpush1.msra.mxu0 %v2831
  %4924 = vmatprep.subr.mxu0 %v2840
  %4925 = vmatpush1.msra.mxu0 %v2839
  %4926 = vmatprep.subr.mxu0 %v2848
  %4927 = vmatpush1.msra.mxu0 %v2847
  %4928 = vmatprep.subr.mxu0 %v2856
  %4929 = vmatpush1.msra.mxu0 %v2855
  %4930 = vmatprep.subr.mxu0 %v2864
  %4931 = vmatpush1.msra.mxu0 %v2863
  %4932 = vmatprep.mubr.f32.mxu0 %v49
  %4933 = vmatmul.mubr.f32.gmra.mrb[0].mxu0 %v48
  %v4934 = vpop.f32.mrb[0].mxu0
  %v4935 = vadd.f32 %v4864, %v4934
  %v4936 = vpop.f32.mrb[0].mxu0
  %v4937 = vadd.f32 %v4866, %v4936
  %4938 = vdwg.mxu0
  %4939 = vmatprep.subr.mxu0 %v2872
  %4940 = vmatpush1.msra.mxu0 %v2871
  %4941 = vmatprep.subr.mxu0 %v2880
  %4942 = vmatpush1.msra.mxu0 %v2879
  %4943 = vmatprep.subr.mxu0 %v2888
  %4944 = vmatpush1.msra.mxu0 %v2887
  %4945 = vmatprep.subr.mxu0 %v2896
  %4946 = vmatpush1.msra.mxu0 %v2895
  %4947 = vmatprep.subr.mxu0 %v2904
  %4948 = vmatpush1.msra.mxu0 %v2903
  %4949 = vmatprep.subr.mxu0 %v2912
  %4950 = vmatpush1.msra.mxu0 %v2911
  %4951 = vmatprep.subr.mxu0 %v2920
  %4952 = vmatpush1.msra.mxu0 %v2919
  %4953 = vmatprep.subr.mxu0 %v2928
  %4954 = vmatpush1.msra.mxu0 %v2927
  %4955 = vmatprep.subr.mxu0 %v2936
  %4956 = vmatpush1.msra.mxu0 %v2935
  %4957 = vmatprep.subr.mxu0 %v2944
  %4958 = vmatpush1.msra.mxu0 %v2943
  %4959 = vmatprep.subr.mxu0 %v2952
  %4960 = vmatpush1.msra.mxu0 %v2951
  %4961 = vmatprep.subr.mxu0 %v2960
  %4962 = vmatpush1.msra.mxu0 %v2959
  %4963 = vmatprep.subr.mxu0 %v2968
  %4964 = vmatpush1.msra.mxu0 %v2967
  %4965 = vmatprep.subr.mxu0 %v2976
  %4966 = vmatpush1.msra.mxu0 %v2975
  %4967 = vmatprep.subr.mxu0 %v2984
  %4968 = vmatpush1.msra.mxu0 %v2983
  %4969 = vmatprep.subr.mxu0 %v2992
  %4970 = vmatpush1.msra.mxu0 %v2991
  %4971 = vmatprep.subr.mxu0 %v3000
  %4972 = vmatpush1.msra.mxu0 %v2999
  %4973 = vmatprep.subr.mxu0 %v3008
  %4974 = vmatpush1.msra.mxu0 %v3007
  %4975 = vmatprep.subr.mxu0 %v3016
  %4976 = vmatpush1.msra.mxu0 %v3015
  %4977 = vmatprep.subr.mxu0 %v3024
  %4978 = vmatpush1.msra.mxu0 %v3023
  %4979 = vmatprep.subr.mxu0 %v3032
  %4980 = vmatpush1.msra.mxu0 %v3031
  %4981 = vmatprep.subr.mxu0 %v3040
  %4982 = vmatpush1.msra.mxu0 %v3039
  %4983 = vmatprep.subr.mxu0 %v3048
  %4984 = vmatpush1.msra.mxu0 %v3047
  %4985 = vmatprep.subr.mxu0 %v3056
  %4986 = vmatpush1.msra.mxu0 %v3055
  %4987 = vmatprep.subr.mxu0 %v3064
  %4988 = vmatpush1.msra.mxu0 %v3063
  %4989 = vmatprep.subr.mxu0 %v3072
  %4990 = vmatpush1.msra.mxu0 %v3071
  %4991 = vmatprep.subr.mxu0 %v3080
  %4992 = vmatpush1.msra.mxu0 %v3079
  %4993 = vmatprep.subr.mxu0 %v3088
  %4994 = vmatpush1.msra.mxu0 %v3087
  %4995 = vmatprep.subr.mxu0 %v3096
  %4996 = vmatpush1.msra.mxu0 %v3095
  %4997 = vmatprep.subr.mxu0 %v3104
  %4998 = vmatpush1.msra.mxu0 %v3103
  %4999 = vmatprep.subr.mxu0 %v3112
  %5000 = vmatpush1.msra.mxu0 %v3111
  %5001 = vmatprep.subr.mxu0 %v3120
  %5002 = vmatpush1.msra.mxu0 %v3119
  %5003 = vmatprep.mubr.f32.mxu0 %v51
  %5004 = vmatmul.mubr.f32.gmra.mrb[0].mxu0 %v50
  %v5005 = vpop.f32.mrb[0].mxu0
  %v5006 = vadd.f32 %v4935, %v5005
  %v5007 = vpop.f32.mrb[0].mxu0
  %v5008 = vadd.f32 %v4937, %v5007
  %5009 = vdwg.mxu0
  %5010 = vmatprep.subr.mxu0 %v3128
  %5011 = vmatpush1.msra.mxu0 %v3127
  %5012 = vmatprep.subr.mxu0 %v3136
  %5013 = vmatpush1.msra.mxu0 %v3135
  %5014 = vmatprep.subr.mxu0 %v3144
  %5015 = vmatpush1.msra.mxu0 %v3143
  %5016 = vmatprep.subr.mxu0 %v3152
  %5017 = vmatpush1.msra.mxu0 %v3151
  %5018 = vmatprep.subr.mxu0 %v3160
  %5019 = vmatpush1.msra.mxu0 %v3159
  %5020 = vmatprep.subr.mxu0 %v3168
  %5021 = vmatpush1.msra.mxu0 %v3167
  %5022 = vmatprep.subr.mxu0 %v3176
  %5023 = vmatpush1.msra.mxu0 %v3175
  %5024 = vmatprep.subr.mxu0 %v3184
  %5025 = vmatpush1.msra.mxu0 %v3183
  %5026 = vmatprep.subr.mxu0 0.0
  %5027 = vmatpush1.msra.mxu0 0.0
  %5028 = vmatprep.subr.mxu0 0.0
  %5029 = vmatpush1.msra.mxu0 0.0
  %5030 = vmatprep.subr.mxu0 0.0
  %5031 = vmatpush1.msra.mxu0 0.0
  %5032 = vmatprep.subr.mxu0 0.0
  %5033 = vmatpush1.msra.mxu0 0.0
  %5034 = vmatprep.subr.mxu0 0.0
  %5035 = vmatpush1.msra.mxu0 0.0
  %5036 = vmatprep.subr.mxu0 0.0
  %5037 = vmatpush1.msra.mxu0 0.0
  %5038 = vmatprep.subr.mxu0 0.0
  %5039 = vmatpush1.msra.mxu0 0.0
  %5040 = vmatprep.subr.mxu0 0.0
  %5041 = vmatpush1.msra.mxu0 0.0
  %5042 = vmatprep.subr.mxu0 0.0
  %5043 = vmatpush1.msra.mxu0 0.0
  %5044 = vmatprep.subr.mxu0 0.0
  %5045 = vmatpush1.msra.mxu0 0.0
  %5046 = vmatprep.subr.mxu0 0.0
  %5047 = vmatpush1.msra.mxu0 0.0
  %5048 = vmatprep.subr.mxu0 0.0
  %5049 = vmatpush1.msra.mxu0 0.0
  %5050 = vmatprep.subr.mxu0 0.0
  %5051 = vmatpush1.msra.mxu0 0.0
  %5052 = vmatprep.subr.mxu0 0.0
  %5053 = vmatpush1.msra.mxu0 0.0
  %5054 = vmatprep.subr.mxu0 0.0
  %5055 = vmatpush1.msra.mxu0 0.0
  %5056 = vmatprep.subr.mxu0 0.0
  %5057 = vmatpush1.msra.mxu0 0.0
  %5058 = vmatprep.subr.mxu0 0.0
  %5059 = vmatpush1.msra.mxu0 0.0
  %5060 = vmatprep.subr.mxu0 0.0
  %5061 = vmatpush1.msra.mxu0 0.0
  %5062 = vmatprep.subr.mxu0 0.0
  %5063 = vmatpush1.msra.mxu0 0.0
  %5064 = vmatprep.subr.mxu0 0.0
  %5065 = vmatpush1.msra.mxu0 0.0
  %5066 = vmatprep.subr.mxu0 0.0
  %5067 = vmatpush1.msra.mxu0 0.0
  %5068 = vmatprep.subr.mxu0 0.0
  %5069 = vmatpush1.msra.mxu0 0.0
  %5070 = vmatprep.subr.mxu0 0.0
  %5071 = vmatpush1.msra.mxu0 0.0
  %5072 = vmatprep.subr.mxu0 0.0
  %5073 = vmatpush1.msra.mxu0 0.0
  %5074 = vmatprep.mubr.f32.mxu0 0.0
  %5075 = vmatmul.mubr.f32.gmra.mrb[0].mxu0 %v3233
  %v5076 = vpop.f32.mrb[0].mxu0
  %v5077 = vadd.f32 %v5006, %v5076
  %v5078 = vpop.f32.mrb[0].mxu0
  %v5079 = vadd.f32 %v5008, %v5078
  %5080 = vdwg.mxu0
  %5081 = vmatprep.subr.mxu0 %v58
  %5082 = vmatpush1.msra.mxu0 %v57
  %5083 = vmatprep.subr.mxu0 %v66
  %5084 = vmatpush1.msra.mxu0 %v65
  %5085 = vmatprep.subr.mxu0 %v74
  %5086 = vmatpush1.msra.mxu0 %v73
  %5087 = vmatprep.subr.mxu0 %v82
  %5088 = vmatpush1.msra.mxu0 %v81
  %5089 = vmatprep.subr.mxu0 %v90
  %5090 = vmatpush1.msra.mxu0 %v89
  %5091 = vmatprep.subr.mxu0 %v98
  %5092 = vmatpush1.msra.mxu0 %v97
  %5093 = vmatprep.subr.mxu0 %v106
  %5094 = vmatpush1.msra.mxu0 %v105
  %5095 = vmatprep.subr.mxu0 %v114
  %5096 = vmatpush1.msra.mxu0 %v113
  %5097 = vmatprep.subr.mxu0 %v122
  %5098 = vmatpush1.msra.mxu0 %v121
  %5099 = vmatprep.subr.mxu0 %v130
  %5100 = vmatpush1.msra.mxu0 %v129
  %5101 = vmatprep.subr.mxu0 %v138
  %5102 = vmatpush1.msra.mxu0 %v137
  %5103 = vmatprep.subr.mxu0 %v146
  %5104 = vmatpush1.msra.mxu0 %v145
  %5105 = vmatprep.subr.mxu0 %v154
  %5106 = vmatpush1.msra.mxu0 %v153
  %5107 = vmatprep.subr.mxu0 %v162
  %5108 = vmatpush1.msra.mxu0 %v161
  %5109 = vmatprep.subr.mxu0 %v170
  %5110 = vmatpush1.msra.mxu0 %v169
  %5111 = vmatprep.subr.mxu0 %v178
  %5112 = vmatpush1.msra.mxu0 %v177
  %5113 = vmatprep.subr.mxu0 %v186
  %5114 = vmatpush1.msra.mxu0 %v185
  %5115 = vmatprep.subr.mxu0 %v194
  %5116 = vmatpush1.msra.mxu0 %v193
  %5117 = vmatprep.subr.mxu0 %v202
  %5118 = vmatpush1.msra.mxu0 %v201
  %5119 = vmatprep.subr.mxu0 %v210
  %5120 = vmatpush1.msra.mxu0 %v209
  %5121 = vmatprep.subr.mxu0 %v218
  %5122 = vmatpush1.msra.mxu0 %v217
  %5123 = vmatprep.subr.mxu0 %v226
  %5124 = vmatpush1.msra.mxu0 %v225
  %5125 = vmatprep.subr.mxu0 %v234
  %5126 = vmatpush1.msra.mxu0 %v233
  %5127 = vmatprep.subr.mxu0 %v242
  %5128 = vmatpush1.msra.mxu0 %v241
  %5129 = vmatprep.subr.mxu0 %v250
  %5130 = vmatpush1.msra.mxu0 %v249
  %5131 = vmatprep.subr.mxu0 %v258
  %5132 = vmatpush1.msra.mxu0 %v257
  %5133 = vmatprep.subr.mxu0 %v266
  %5134 = vmatpush1.msra.mxu0 %v265
  %5135 = vmatprep.subr.mxu0 %v274
  %5136 = vmatpush1.msra.mxu0 %v273
  %5137 = vmatprep.subr.mxu0 %v282
  %5138 = vmatpush1.msra.mxu0 %v281
  %5139 = vmatprep.subr.mxu0 %v290
  %5140 = vmatpush1.msra.mxu0 %v289
  %5141 = vmatprep.subr.mxu0 %v298
  %5142 = vmatpush1.msra.mxu0 %v297
  %5143 = vmatprep.subr.mxu0 %v306
  %5144 = vmatpush1.msra.mxu0 %v305
  %5145 = vmatprep.mubr.f32.mxu0 %v29
  %5146 = vmatmul.mubr.f32.gmra.mrb[0].mxu0 %v28
  %v5147 = vpop.f32.mrb[0].mxu0
  %v5148 = vadd.f32 %v3210, %v5147
  %v5149 = vpop.f32.mrb[0].mxu0
  %v5150 = vadd.f32 %v3214, %v5149
  %5151 = vdwg.mxu0
  %5152 = vmatprep.subr.mxu0 %v314
  %5153 = vmatpush1.msra.mxu0 %v313
  %5154 = vmatprep.subr.mxu0 %v322
  %5155 = vmatpush1.msra.mxu0 %v321
  %5156 = vmatprep.subr.mxu0 %v330
  %5157 = vmatpush1.msra.mxu0 %v329
  %5158 = vmatprep.subr.mxu0 %v338
  %5159 = vmatpush1.msra.mxu0 %v337
  %5160 = vmatprep.subr.mxu0 %v346
  %5161 = vmatpush1.msra.mxu0 %v345
  %5162 = vmatprep.subr.mxu0 %v354
  %5163 = vmatpush1.msra.mxu0 %v353
  %5164 = vmatprep.subr.mxu0 %v362
  %5165 = vmatpush1.msra.mxu0 %v361
  %5166 = vmatprep.subr.mxu0 %v370
  %5167 = vmatpush1.msra.mxu0 %v369
  %5168 = vmatprep.subr.mxu0 %v378
  %5169 = vmatpush1.msra.mxu0 %v377
  %5170 = vmatprep.subr.mxu0 %v386
  %5171 = vmatpush1.msra.mxu0 %v385
  %5172 = vmatprep.subr.mxu0 %v394
  %5173 = vmatpush1.msra.mxu0 %v393
  %5174 = vmatprep.subr.mxu0 %v402
  %5175 = vmatpush1.msra.mxu0 %v401
  %5176 = vmatprep.subr.mxu0 %v410
  %5177 = vmatpush1.msra.mxu0 %v409
  %5178 = vmatprep.subr.mxu0 %v418
  %5179 = vmatpush1.msra.mxu0 %v417
  %5180 = vmatprep.subr.mxu0 %v426
  %5181 = vmatpush1.msra.mxu0 %v425
  %5182 = vmatprep.subr.mxu0 %v434
  %5183 = vmatpush1.msra.mxu0 %v433
  %5184 = vmatprep.subr.mxu0 %v442
  %5185 = vmatpush1.msra.mxu0 %v441
  %5186 = vmatprep.subr.mxu0 %v450
  %5187 = vmatpush1.msra.mxu0 %v449
  %5188 = vmatprep.subr.mxu0 %v458
  %5189 = vmatpush1.msra.mxu0 %v457
  %5190 = vmatprep.subr.mxu0 %v466
  %5191 = vmatpush1.msra.mxu0 %v465
  %5192 = vmatprep.subr.mxu0 %v474
  %5193 = vmatpush1.msra.mxu0 %v473
  %5194 = vmatprep.subr.mxu0 %v482
  %5195 = vmatpush1.msra.mxu0 %v481
  %5196 = vmatprep.subr.mxu0 %v490
  %5197 = vmatpush1.msra.mxu0 %v489
  %5198 = vmatprep.subr.mxu0 %v498
  %5199 = vmatpush1.msra.mxu0 %v497
  %5200 = vmatprep.subr.mxu0 %v506
  %5201 = vmatpush1.msra.mxu0 %v505
  %5202 = vmatprep.subr.mxu0 %v514
  %5203 = vmatpush1.msra.mxu0 %v513
  %5204 = vmatprep.subr.mxu0 %v522
  %5205 = vmatpush1.msra.mxu0 %v521
  %5206 = vmatprep.subr.mxu0 %v530
  %5207 = vmatpush1.msra.mxu0 %v529
  %5208 = vmatprep.subr.mxu0 %v538
  %5209 = vmatpush1.msra.mxu0 %v537
  %5210 = vmatprep.subr.mxu0 %v546
  %5211 = vmatpush1.msra.mxu0 %v545
  %5212 = vmatprep.subr.mxu0 %v554
  %5213 = vmatpush1.msra.mxu0 %v553
  %5214 = vmatprep.subr.mxu0 %v562
  %5215 = vmatpush1.msra.mxu0 %v561
  %5216 = vmatprep.mubr.f32.mxu0 %v31
  %5217 = vmatmul.mubr.f32.gmra.mrb[0].mxu0 %v30
  %v5218 = vpop.f32.mrb[0].mxu0
  %v5219 = vadd.f32 %v5148, %v5218
  %v5220 = vpop.f32.mrb[0].mxu0
  %v5221 = vadd.f32 %v5150, %v5220
  %5222 = vdwg.mxu0
  %5223 = vmatprep.subr.mxu0 %v570
  %5224 = vmatpush1.msra.mxu0 %v569
  %5225 = vmatprep.subr.mxu0 %v578
  %5226 = vmatpush1.msra.mxu0 %v577
  %5227 = vmatprep.subr.mxu0 %v586
  %5228 = vmatpush1.msra.mxu0 %v585
  %5229 = vmatprep.subr.mxu0 %v594
  %5230 = vmatpush1.msra.mxu0 %v593
  %5231 = vmatprep.subr.mxu0 %v602
  %5232 = vmatpush1.msra.mxu0 %v601
  %5233 = vmatprep.subr.mxu0 %v610
  %5234 = vmatpush1.msra.mxu0 %v609
  %5235 = vmatprep.subr.mxu0 %v618
  %5236 = vmatpush1.msra.mxu0 %v617
  %5237 = vmatprep.subr.mxu0 %v626
  %5238 = vmatpush1.msra.mxu0 %v625
  %5239 = vmatprep.subr.mxu0 %v634
  %5240 = vmatpush1.msra.mxu0 %v633
  %5241 = vmatprep.subr.mxu0 %v642
  %5242 = vmatpush1.msra.mxu0 %v641
  %5243 = vmatprep.subr.mxu0 %v650
  %5244 = vmatpush1.msra.mxu0 %v649
  %5245 = vmatprep.subr.mxu0 %v658
  %5246 = vmatpush1.msra.mxu0 %v657
  %5247 = vmatprep.subr.mxu0 %v666
  %5248 = vmatpush1.msra.mxu0 %v665
  %5249 = vmatprep.subr.mxu0 %v674
  %5250 = vmatpush1.msra.mxu0 %v673
  %5251 = vmatprep.subr.mxu0 %v682
  %5252 = vmatpush1.msra.mxu0 %v681
  %5253 = vmatprep.subr.mxu0 %v690
  %5254 = vmatpush1.msra.mxu0 %v689
  %5255 = vmatprep.subr.mxu0 %v698
  %5256 = vmatpush1.msra.mxu0 %v697
  %5257 = vmatprep.subr.mxu0 %v706
  %5258 = vmatpush1.msra.mxu0 %v705
  %5259 = vmatprep.subr.mxu0 %v714
  %5260 = vmatpush1.msra.mxu0 %v713
  %5261 = vmatprep.subr.mxu0 %v722
  %5262 = vmatpush1.msra.mxu0 %v721
  %5263 = vmatprep.subr.mxu0 %v730
  %5264 = vmatpush1.msra.mxu0 %v729
  %5265 = vmatprep.subr.mxu0 %v738
  %5266 = vmatpush1.msra.mxu0 %v737
  %5267 = vmatprep.subr.mxu0 %v746
  %5268 = vmatpush1.msra.mxu0 %v745
  %5269 = vmatprep.subr.mxu0 %v754
  %5270 = vmatpush1.msra.mxu0 %v753
  %5271 = vmatprep.subr.mxu0 %v762
  %5272 = vmatpush1.msra.mxu0 %v761
  %5273 = vmatprep.subr.mxu0 %v770
  %5274 = vmatpush1.msra.mxu0 %v769
  %5275 = vmatprep.subr.mxu0 %v778
  %5276 = vmatpush1.msra.mxu0 %v777
  %5277 = vmatprep.subr.mxu0 %v786
  %5278 = vmatpush1.msra.mxu0 %v785
  %5279 = vmatprep.subr.mxu0 %v794
  %5280 = vmatpush1.msra.mxu0 %v793
  %5281 = vmatprep.subr.mxu0 %v802
  %5282 = vmatpush1.msra.mxu0 %v801
  %5283 = vmatprep.subr.mxu0 %v810
  %5284 = vmatpush1.msra.mxu0 %v809
  %5285 = vmatprep.subr.mxu0 %v818
  %5286 = vmatpush1.msra.mxu0 %v817
  %5287 = vmatprep.mubr.f32.mxu0 %v33
  %5288 = vmatmul.mubr.f32.gmra.mrb[0].mxu0 %v32
  %v5289 = vpop.f32.mrb[0].mxu0
  %v5290 = vadd.f32 %v5219, %v5289
  %v5291 = vpop.f32.mrb[0].mxu0
  %v5292 = vadd.f32 %v5221, %v5291
  %5293 = vdwg.mxu0
  %5294 = vmatprep.subr.mxu0 %v826
  %5295 = vmatpush1.msra.mxu0 %v825
  %5296 = vmatprep.subr.mxu0 %v834
  %5297 = vmatpush1.msra.mxu0 %v833
  %5298 = vmatprep.subr.mxu0 %v842
  %5299 = vmatpush1.msra.mxu0 %v841
  %5300 = vmatprep.subr.mxu0 %v850
  %5301 = vmatpush1.msra.mxu0 %v849
  %5302 = vmatprep.subr.mxu0 %v858
  %5303 = vmatpush1.msra.mxu0 %v857
  %5304 = vmatprep.subr.mxu0 %v866
  %5305 = vmatpush1.msra.mxu0 %v865
  %5306 = vmatprep.subr.mxu0 %v874
  %5307 = vmatpush1.msra.mxu0 %v873
  %5308 = vmatprep.subr.mxu0 %v882
  %5309 = vmatpush1.msra.mxu0 %v881
  %5310 = vmatprep.subr.mxu0 %v890
  %5311 = vmatpush1.msra.mxu0 %v889
  %5312 = vmatprep.subr.mxu0 %v898
  %5313 = vmatpush1.msra.mxu0 %v897
  %5314 = vmatprep.subr.mxu0 %v906
  %5315 = vmatpush1.msra.mxu0 %v905
  %5316 = vmatprep.subr.mxu0 %v914
  %5317 = vmatpush1.msra.mxu0 %v913
  %5318 = vmatprep.subr.mxu0 %v922
  %5319 = vmatpush1.msra.mxu0 %v921
  %5320 = vmatprep.subr.mxu0 %v930
  %5321 = vmatpush1.msra.mxu0 %v929
  %5322 = vmatprep.subr.mxu0 %v938
  %5323 = vmatpush1.msra.mxu0 %v937
  %5324 = vmatprep.subr.mxu0 %v946
  %5325 = vmatpush1.msra.mxu0 %v945
  %5326 = vmatprep.subr.mxu0 %v954
  %5327 = vmatpush1.msra.mxu0 %v953
  %5328 = vmatprep.subr.mxu0 %v962
  %5329 = vmatpush1.msra.mxu0 %v961
  %5330 = vmatprep.subr.mxu0 %v970
  %5331 = vmatpush1.msra.mxu0 %v969
  %5332 = vmatprep.subr.mxu0 %v978
  %5333 = vmatpush1.msra.mxu0 %v977
  %5334 = vmatprep.subr.mxu0 %v986
  %5335 = vmatpush1.msra.mxu0 %v985
  %5336 = vmatprep.subr.mxu0 %v994
  %5337 = vmatpush1.msra.mxu0 %v993
  %5338 = vmatprep.subr.mxu0 %v1002
  %5339 = vmatpush1.msra.mxu0 %v1001
  %5340 = vmatprep.subr.mxu0 %v1010
  %5341 = vmatpush1.msra.mxu0 %v1009
  %5342 = vmatprep.subr.mxu0 %v1018
  %5343 = vmatpush1.msra.mxu0 %v1017
  %5344 = vmatprep.subr.mxu0 %v1026
  %5345 = vmatpush1.msra.mxu0 %v1025
  %5346 = vmatprep.subr.mxu0 %v1034
  %5347 = vmatpush1.msra.mxu0 %v1033
  %5348 = vmatprep.subr.mxu0 %v1042
  %5349 = vmatpush1.msra.mxu0 %v1041
  %5350 = vmatprep.subr.mxu0 %v1050
  %5351 = vmatpush1.msra.mxu0 %v1049
  %5352 = vmatprep.subr.mxu0 %v1058
  %5353 = vmatpush1.msra.mxu0 %v1057
  %5354 = vmatprep.subr.mxu0 %v1066
  %5355 = vmatpush1.msra.mxu0 %v1065
  %5356 = vmatprep.subr.mxu0 %v1074
  %5357 = vmatpush1.msra.mxu0 %v1073
  %5358 = vmatprep.mubr.f32.mxu0 %v35
  %5359 = vmatmul.mubr.f32.gmra.mrb[0].mxu0 %v34
  %v5360 = vpop.f32.mrb[0].mxu0
  %v5361 = vadd.f32 %v5290, %v5360
  %v5362 = vpop.f32.mrb[0].mxu0
  %v5363 = vadd.f32 %v5292, %v5362
  %5364 = vdwg.mxu0
  %5365 = vmatprep.subr.mxu0 %v1082
  %5366 = vmatpush1.msra.mxu0 %v1081
  %5367 = vmatprep.subr.mxu0 %v1090
  %5368 = vmatpush1.msra.mxu0 %v1089
  %5369 = vmatprep.subr.mxu0 %v1098
  %5370 = vmatpush1.msra.mxu0 %v1097
  %5371 = vmatprep.subr.mxu0 %v1106
  %5372 = vmatpush1.msra.mxu0 %v1105
  %5373 = vmatprep.subr.mxu0 %v1114
  %5374 = vmatpush1.msra.mxu0 %v1113
  %5375 = vmatprep.subr.mxu0 %v1122
  %5376 = vmatpush1.msra.mxu0 %v1121
  %5377 = vmatprep.subr.mxu0 %v1130
  %5378 = vmatpush1.msra.mxu0 %v1129
  %5379 = vmatprep.subr.mxu0 %v1138
  %5380 = vmatpush1.msra.mxu0 %v1137
  %5381 = vmatprep.subr.mxu0 %v1146
  %5382 = vmatpush1.msra.mxu0 %v1145
  %5383 = vmatprep.subr.mxu0 %v1154
  %5384 = vmatpush1.msra.mxu0 %v1153
  %5385 = vmatprep.subr.mxu0 %v1162
  %5386 = vmatpush1.msra.mxu0 %v1161
  %5387 = vmatprep.subr.mxu0 %v1170
  %5388 = vmatpush1.msra.mxu0 %v1169
  %5389 = vmatprep.subr.mxu0 %v1178
  %5390 = vmatpush1.msra.mxu0 %v1177
  %5391 = vmatprep.subr.mxu0 %v1186
  %5392 = vmatpush1.msra.mxu0 %v1185
  %5393 = vmatprep.subr.mxu0 %v1194
  %5394 = vmatpush1.msra.mxu0 %v1193
  %5395 = vmatprep.subr.mxu0 %v1202
  %5396 = vmatpush1.msra.mxu0 %v1201
  %5397 = vmatprep.subr.mxu0 %v1210
  %5398 = vmatpush1.msra.mxu0 %v1209
  %5399 = vmatprep.subr.mxu0 %v1218
  %5400 = vmatpush1.msra.mxu0 %v1217
  %5401 = vmatprep.subr.mxu0 %v1226
  %5402 = vmatpush1.msra.mxu0 %v1225
  %5403 = vmatprep.subr.mxu0 %v1234
  %5404 = vmatpush1.msra.mxu0 %v1233
  %5405 = vmatprep.subr.mxu0 %v1242
  %5406 = vmatpush1.msra.mxu0 %v1241
  %5407 = vmatprep.subr.mxu0 %v1250
  %5408 = vmatpush1.msra.mxu0 %v1249
  %5409 = vmatprep.subr.mxu0 %v1258
  %5410 = vmatpush1.msra.mxu0 %v1257
  %5411 = vmatprep.subr.mxu0 %v1266
  %5412 = vmatpush1.msra.mxu0 %v1265
  %5413 = vmatprep.subr.mxu0 %v1274
  %5414 = vmatpush1.msra.mxu0 %v1273
  %5415 = vmatprep.subr.mxu0 %v1282
  %5416 = vmatpush1.msra.mxu0 %v1281
  %5417 = vmatprep.subr.mxu0 %v1290
  %5418 = vmatpush1.msra.mxu0 %v1289
  %5419 = vmatprep.subr.mxu0 %v1298
  %5420 = vmatpush1.msra.mxu0 %v1297
  %5421 = vmatprep.subr.mxu0 %v1306
  %5422 = vmatpush1.msra.mxu0 %v1305
  %5423 = vmatprep.subr.mxu0 %v1314
  %5424 = vmatpush1.msra.mxu0 %v1313
  %5425 = vmatprep.subr.mxu0 %v1322
  %5426 = vmatpush1.msra.mxu0 %v1321
  %5427 = vmatprep.subr.mxu0 %v1330
  %5428 = vmatpush1.msra.mxu0 %v1329
  %5429 = vmatprep.mubr.f32.mxu0 %v37
  %5430 = vmatmul.mubr.f32.gmra.mrb[0].mxu0 %v36
  %v5431 = vpop.f32.mrb[0].mxu0
  %v5432 = vadd.f32 %v5361, %v5431
  %v5433 = vpop.f32.mrb[0].mxu0
  %v5434 = vadd.f32 %v5363, %v5433
  %5435 = vdwg.mxu0
  %5436 = vmatprep.subr.mxu0 %v1338
  %5437 = vmatpush1.msra.mxu0 %v1337
  %5438 = vmatprep.subr.mxu0 %v1346
  %5439 = vmatpush1.msra.mxu0 %v1345
  %5440 = vmatprep.subr.mxu0 %v1354
  %5441 = vmatpush1.msra.mxu0 %v1353
  %5442 = vmatprep.subr.mxu0 %v1362
  %5443 = vmatpush1.msra.mxu0 %v1361
  %5444 = vmatprep.subr.mxu0 %v1370
  %5445 = vmatpush1.msra.mxu0 %v1369
  %5446 = vmatprep.subr.mxu0 %v1378
  %5447 = vmatpush1.msra.mxu0 %v1377
  %5448 = vmatprep.subr.mxu0 %v1386
  %5449 = vmatpush1.msra.mxu0 %v1385
  %5450 = vmatprep.subr.mxu0 %v1394
  %5451 = vmatpush1.msra.mxu0 %v1393
  %5452 = vmatprep.subr.mxu0 %v1402
  %5453 = vmatpush1.msra.mxu0 %v1401
  %5454 = vmatprep.subr.mxu0 %v1410
  %5455 = vmatpush1.msra.mxu0 %v1409
  %5456 = vmatprep.subr.mxu0 %v1418
  %5457 = vmatpush1.msra.mxu0 %v1417
  %5458 = vmatprep.subr.mxu0 %v1426
  %5459 = vmatpush1.msra.mxu0 %v1425
  %5460 = vmatprep.subr.mxu0 %v1434
  %5461 = vmatpush1.msra.mxu0 %v1433
  %5462 = vmatprep.subr.mxu0 %v1442
  %5463 = vmatpush1.msra.mxu0 %v1441
  %5464 = vmatprep.subr.mxu0 %v1450
  %5465 = vmatpush1.msra.mxu0 %v1449
  %5466 = vmatprep.subr.mxu0 %v1458
  %5467 = vmatpush1.msra.mxu0 %v1457
  %5468 = vmatprep.subr.mxu0 %v1466
  %5469 = vmatpush1.msra.mxu0 %v1465
  %5470 = vmatprep.subr.mxu0 %v1474
  %5471 = vmatpush1.msra.mxu0 %v1473
  %5472 = vmatprep.subr.mxu0 %v1482
  %5473 = vmatpush1.msra.mxu0 %v1481
  %5474 = vmatprep.subr.mxu0 %v1490
  %5475 = vmatpush1.msra.mxu0 %v1489
  %5476 = vmatprep.subr.mxu0 %v1498
  %5477 = vmatpush1.msra.mxu0 %v1497
  %5478 = vmatprep.subr.mxu0 %v1506
  %5479 = vmatpush1.msra.mxu0 %v1505
  %5480 = vmatprep.subr.mxu0 %v1514
  %5481 = vmatpush1.msra.mxu0 %v1513
  %5482 = vmatprep.subr.mxu0 %v1522
  %5483 = vmatpush1.msra.mxu0 %v1521
  %5484 = vmatprep.subr.mxu0 %v1530
  %5485 = vmatpush1.msra.mxu0 %v1529
  %5486 = vmatprep.subr.mxu0 %v1538
  %5487 = vmatpush1.msra.mxu0 %v1537
  %5488 = vmatprep.subr.mxu0 %v1546
  %5489 = vmatpush1.msra.mxu0 %v1545
  %5490 = vmatprep.subr.mxu0 %v1554
  %5491 = vmatpush1.msra.mxu0 %v1553
  %5492 = vmatprep.subr.mxu0 %v1562
  %5493 = vmatpush1.msra.mxu0 %v1561
  %5494 = vmatprep.subr.mxu0 %v1570
  %5495 = vmatpush1.msra.mxu0 %v1569
  %5496 = vmatprep.subr.mxu0 %v1578
  %5497 = vmatpush1.msra.mxu0 %v1577
  %5498 = vmatprep.subr.mxu0 %v1586
  %5499 = vmatpush1.msra.mxu0 %v1585
  %5500 = vmatprep.mubr.f32.mxu0 %v39
  %5501 = vmatmul.mubr.f32.gmra.mrb[0].mxu0 %v38
  %v5502 = vpop.f32.mrb[0].mxu0
  %v5503 = vadd.f32 %v5432, %v5502
  %v5504 = vpop.f32.mrb[0].mxu0
  %v5505 = vadd.f32 %v5434, %v5504
  %5506 = vdwg.mxu0
  %5507 = vmatprep.subr.mxu0 %v1594
  %5508 = vmatpush1.msra.mxu0 %v1593
  %5509 = vmatprep.subr.mxu0 %v1602
  %5510 = vmatpush1.msra.mxu0 %v1601
  %5511 = vmatprep.subr.mxu0 %v1610
  %5512 = vmatpush1.msra.mxu0 %v1609
  %5513 = vmatprep.subr.mxu0 %v1618
  %5514 = vmatpush1.msra.mxu0 %v1617
  %5515 = vmatprep.subr.mxu0 %v1626
  %5516 = vmatpush1.msra.mxu0 %v1625
  %5517 = vmatprep.subr.mxu0 %v1634
  %5518 = vmatpush1.msra.mxu0 %v1633
  %5519 = vmatprep.subr.mxu0 %v1642
  %5520 = vmatpush1.msra.mxu0 %v1641
  %5521 = vmatprep.subr.mxu0 %v1650
  %5522 = vmatpush1.msra.mxu0 %v1649
  %5523 = vmatprep.subr.mxu0 %v1658
  %5524 = vmatpush1.msra.mxu0 %v1657
  %5525 = vmatprep.subr.mxu0 %v1666
  %5526 = vmatpush1.msra.mxu0 %v1665
  %5527 = vmatprep.subr.mxu0 %v1674
  %5528 = vmatpush1.msra.mxu0 %v1673
  %5529 = vmatprep.subr.mxu0 %v1682
  %5530 = vmatpush1.msra.mxu0 %v1681
  %5531 = vmatprep.subr.mxu0 %v1690
  %5532 = vmatpush1.msra.mxu0 %v1689
  %5533 = vmatprep.subr.mxu0 %v1698
  %5534 = vmatpush1.msra.mxu0 %v1697
  %5535 = vmatprep.subr.mxu0 %v1706
  %5536 = vmatpush1.msra.mxu0 %v1705
  %5537 = vmatprep.subr.mxu0 %v1714
  %5538 = vmatpush1.msra.mxu0 %v1713
  %5539 = vmatprep.subr.mxu0 %v1722
  %5540 = vmatpush1.msra.mxu0 %v1721
  %5541 = vmatprep.subr.mxu0 %v1730
  %5542 = vmatpush1.msra.mxu0 %v1729
  %5543 = vmatprep.subr.mxu0 %v1738
  %5544 = vmatpush1.msra.mxu0 %v1737
  %5545 = vmatprep.subr.mxu0 %v1746
  %5546 = vmatpush1.msra.mxu0 %v1745
  %5547 = vmatprep.subr.mxu0 %v1754
  %5548 = vmatpush1.msra.mxu0 %v1753
  %5549 = vmatprep.subr.mxu0 %v1762
  %5550 = vmatpush1.msra.mxu0 %v1761
  %5551 = vmatprep.subr.mxu0 %v1770
  %5552 = vmatpush1.msra.mxu0 %v1769
  %5553 = vmatprep.subr.mxu0 %v1778
  %5554 = vmatpush1.msra.mxu0 %v1777
  %5555 = vmatprep.subr.mxu0 %v1786
  %5556 = vmatpush1.msra.mxu0 %v1785
  %5557 = vmatprep.subr.mxu0 %v1794
  %5558 = vmatpush1.msra.mxu0 %v1793
  %5559 = vmatprep.subr.mxu0 %v1802
  %5560 = vmatpush1.msra.mxu0 %v1801
  %5561 = vmatprep.subr.mxu0 %v1810
  %5562 = vmatpush1.msra.mxu0 %v1809
  %5563 = vmatprep.subr.mxu0 %v1818
  %5564 = vmatpush1.msra.mxu0 %v1817
  %5565 = vmatprep.subr.mxu0 %v1826
  %5566 = vmatpush1.msra.mxu0 %v1825
  %5567 = vmatprep.subr.mxu0 %v1834
  %5568 = vmatpush1.msra.mxu0 %v1833
  %5569 = vmatprep.subr.mxu0 %v1842
  %5570 = vmatpush1.msra.mxu0 %v1841
  %5571 = vmatprep.mubr.f32.mxu0 %v41
  %5572 = vmatmul.mubr.f32.gmra.mrb[0].mxu0 %v40
  %v5573 = vpop.f32.mrb[0].mxu0
  %v5574 = vadd.f32 %v5503, %v5573
  %v5575 = vpop.f32.mrb[0].mxu0
  %v5576 = vadd.f32 %v5505, %v5575
  %5577 = vdwg.mxu0
  %5578 = vmatprep.subr.mxu0 %v1850
  %5579 = vmatpush1.msra.mxu0 %v1849
  %5580 = vmatprep.subr.mxu0 %v1858
  %5581 = vmatpush1.msra.mxu0 %v1857
  %5582 = vmatprep.subr.mxu0 %v1866
  %5583 = vmatpush1.msra.mxu0 %v1865
  %5584 = vmatprep.subr.mxu0 %v1874
  %5585 = vmatpush1.msra.mxu0 %v1873
  %5586 = vmatprep.subr.mxu0 %v1882
  %5587 = vmatpush1.msra.mxu0 %v1881
  %5588 = vmatprep.subr.mxu0 %v1890
  %5589 = vmatpush1.msra.mxu0 %v1889
  %5590 = vmatprep.subr.mxu0 %v1898
  %5591 = vmatpush1.msra.mxu0 %v1897
  %5592 = vmatprep.subr.mxu0 %v1906
  %5593 = vmatpush1.msra.mxu0 %v1905
  %5594 = vmatprep.subr.mxu0 %v1914
  %5595 = vmatpush1.msra.mxu0 %v1913
  %5596 = vmatprep.subr.mxu0 %v1922
  %5597 = vmatpush1.msra.mxu0 %v1921
  %5598 = vmatprep.subr.mxu0 %v1930
  %5599 = vmatpush1.msra.mxu0 %v1929
  %5600 = vmatprep.subr.mxu0 %v1938
  %5601 = vmatpush1.msra.mxu0 %v1937
  %5602 = vmatprep.subr.mxu0 %v1946
  %5603 = vmatpush1.msra.mxu0 %v1945
  %5604 = vmatprep.subr.mxu0 %v1954
  %5605 = vmatpush1.msra.mxu0 %v1953
  %5606 = vmatprep.subr.mxu0 %v1962
  %5607 = vmatpush1.msra.mxu0 %v1961
  %5608 = vmatprep.subr.mxu0 %v1970
  %5609 = vmatpush1.msra.mxu0 %v1969
  %5610 = vmatprep.subr.mxu0 %v1978
  %5611 = vmatpush1.msra.mxu0 %v1977
  %5612 = vmatprep.subr.mxu0 %v1986
  %5613 = vmatpush1.msra.mxu0 %v1985
  %5614 = vmatprep.subr.mxu0 %v1994
  %5615 = vmatpush1.msra.mxu0 %v1993
  %5616 = vmatprep.subr.mxu0 %v2002
  %5617 = vmatpush1.msra.mxu0 %v2001
  %5618 = vmatprep.subr.mxu0 %v2010
  %5619 = vmatpush1.msra.mxu0 %v2009
  %5620 = vmatprep.subr.mxu0 %v2018
  %5621 = vmatpush1.msra.mxu0 %v2017
  %5622 = vmatprep.subr.mxu0 %v2026
  %5623 = vmatpush1.msra.mxu0 %v2025
  %5624 = vmatprep.subr.mxu0 %v2034
  %5625 = vmatpush1.msra.mxu0 %v2033
  %5626 = vmatprep.subr.mxu0 %v2042
  %5627 = vmatpush1.msra.mxu0 %v2041
  %5628 = vmatprep.subr.mxu0 %v2050
  %5629 = vmatpush1.msra.mxu0 %v2049
  %5630 = vmatprep.subr.mxu0 %v2058
  %5631 = vmatpush1.msra.mxu0 %v2057
  %5632 = vmatprep.subr.mxu0 %v2066
  %5633 = vmatpush1.msra.mxu0 %v2065
  %5634 = vmatprep.subr.mxu0 %v2074
  %5635 = vmatpush1.msra.mxu0 %v2073
  %5636 = vmatprep.subr.mxu0 %v2082
  %5637 = vmatpush1.msra.mxu0 %v2081
  %5638 = vmatprep.subr.mxu0 %v2090
  %5639 = vmatpush1.msra.mxu0 %v2089
  %5640 = vmatprep.subr.mxu0 %v2098
  %5641 = vmatpush1.msra.mxu0 %v2097
  %5642 = vmatprep.mubr.f32.mxu0 %v43
  %5643 = vmatmul.mubr.f32.gmra.mrb[0].mxu0 %v42
  %v5644 = vpop.f32.mrb[0].mxu0
  %v5645 = vadd.f32 %v5574, %v5644
  %v5646 = vpop.f32.mrb[0].mxu0
  %v5647 = vadd.f32 %v5576, %v5646
  %5648 = vdwg.mxu0
  %5649 = vmatprep.subr.mxu0 %v2106
  %5650 = vmatpush1.msra.mxu0 %v2105
  %5651 = vmatprep.subr.mxu0 %v2114
  %5652 = vmatpush1.msra.mxu0 %v2113
  %5653 = vmatprep.subr.mxu0 %v2122
  %5654 = vmatpush1.msra.mxu0 %v2121
  %5655 = vmatprep.subr.mxu0 %v2130
  %5656 = vmatpush1.msra.mxu0 %v2129
  %5657 = vmatprep.subr.mxu0 %v2138
  %5658 = vmatpush1.msra.mxu0 %v2137
  %5659 = vmatprep.subr.mxu0 %v2146
  %5660 = vmatpush1.msra.mxu0 %v2145
  %5661 = vmatprep.subr.mxu0 %v2154
  %5662 = vmatpush1.msra.mxu0 %v2153
  %5663 = vmatprep.subr.mxu0 %v2162
  %5664 = vmatpush1.msra.mxu0 %v2161
  %5665 = vmatprep.subr.mxu0 %v2170
  %5666 = vmatpush1.msra.mxu0 %v2169
  %5667 = vmatprep.subr.mxu0 %v2178
  %5668 = vmatpush1.msra.mxu0 %v2177
  %5669 = vmatprep.subr.mxu0 %v2186
  %5670 = vmatpush1.msra.mxu0 %v2185
  %5671 = vmatprep.subr.mxu0 %v2194
  %5672 = vmatpush1.msra.mxu0 %v2193
  %5673 = vmatprep.subr.mxu0 %v2202
  %5674 = vmatpush1.msra.mxu0 %v2201
  %5675 = vmatprep.subr.mxu0 %v2210
  %5676 = vmatpush1.msra.mxu0 %v2209
  %5677 = vmatprep.subr.mxu0 %v2218
  %5678 = vmatpush1.msra.mxu0 %v2217
  %5679 = vmatprep.subr.mxu0 %v2226
  %5680 = vmatpush1.msra.mxu0 %v2225
  %5681 = vmatprep.subr.mxu0 %v2234
  %5682 = vmatpush1.msra.mxu0 %v2233
  %5683 = vmatprep.subr.mxu0 %v2242
  %5684 = vmatpush1.msra.mxu0 %v2241
  %5685 = vmatprep.subr.mxu0 %v2250
  %5686 = vmatpush1.msra.mxu0 %v2249
  %5687 = vmatprep.subr.mxu0 %v2258
  %5688 = vmatpush1.msra.mxu0 %v2257
  %5689 = vmatprep.subr.mxu0 %v2266
  %5690 = vmatpush1.msra.mxu0 %v2265
  %5691 = vmatprep.subr.mxu0 %v2274
  %5692 = vmatpush1.msra.mxu0 %v2273
  %5693 = vmatprep.subr.mxu0 %v2282
  %5694 = vmatpush1.msra.mxu0 %v2281
  %5695 = vmatprep.subr.mxu0 %v2290
  %5696 = vmatpush1.msra.mxu0 %v2289
  %5697 = vmatprep.subr.mxu0 %v2298
  %5698 = vmatpush1.msra.mxu0 %v2297
  %5699 = vmatprep.subr.mxu0 %v2306
  %5700 = vmatpush1.msra.mxu0 %v2305
  %5701 = vmatprep.subr.mxu0 %v2314
  %5702 = vmatpush1.msra.mxu0 %v2313
  %5703 = vmatprep.subr.mxu0 %v2322
  %5704 = vmatpush1.msra.mxu0 %v2321
  %5705 = vmatprep.subr.mxu0 %v2330
  %5706 = vmatpush1.msra.mxu0 %v2329
  %5707 = vmatprep.subr.mxu0 %v2338
  %5708 = vmatpush1.msra.mxu0 %v2337
  %5709 = vmatprep.subr.mxu0 %v2346
  %5710 = vmatpush1.msra.mxu0 %v2345
  %5711 = vmatprep.subr.mxu0 %v2354
  %5712 = vmatpush1.msra.mxu0 %v2353
  %5713 = vmatprep.mubr.f32.mxu0 %v45
  %5714 = vmatmul.mubr.f32.gmra.mrb[0].mxu0 %v44
  %v5715 = vpop.f32.mrb[0].mxu0
  %v5716 = vadd.f32 %v5645, %v5715
  %v5717 = vpop.f32.mrb[0].mxu0
  %v5718 = vadd.f32 %v5647, %v5717
  %5719 = vdwg.mxu0
  %5720 = vmatprep.subr.mxu0 %v2362
  %5721 = vmatpush1.msra.mxu0 %v2361
  %5722 = vmatprep.subr.mxu0 %v2370
  %5723 = vmatpush1.msra.mxu0 %v2369
  %5724 = vmatprep.subr.mxu0 %v2378
  %5725 = vmatpush1.msra.mxu0 %v2377
  %5726 = vmatprep.subr.mxu0 %v2386
  %5727 = vmatpush1.msra.mxu0 %v2385
  %5728 = vmatprep.subr.mxu0 %v2394
  %5729 = vmatpush1.msra.mxu0 %v2393
  %5730 = vmatprep.subr.mxu0 %v2402
  %5731 = vmatpush1.msra.mxu0 %v2401
  %5732 = vmatprep.subr.mxu0 %v2410
  %5733 = vmatpush1.msra.mxu0 %v2409
  %5734 = vmatprep.subr.mxu0 %v2418
  %5735 = vmatpush1.msra.mxu0 %v2417
  %5736 = vmatprep.subr.mxu0 %v2426
  %5737 = vmatpush1.msra.mxu0 %v2425
  %5738 = vmatprep.subr.mxu0 %v2434
  %5739 = vmatpush1.msra.mxu0 %v2433
  %5740 = vmatprep.subr.mxu0 %v2442
  %5741 = vmatpush1.msra.mxu0 %v2441
  %5742 = vmatprep.subr.mxu0 %v2450
  %5743 = vmatpush1.msra.mxu0 %v2449
  %5744 = vmatprep.subr.mxu0 %v2458
  %5745 = vmatpush1.msra.mxu0 %v2457
  %5746 = vmatprep.subr.mxu0 %v2466
  %5747 = vmatpush1.msra.mxu0 %v2465
  %5748 = vmatprep.subr.mxu0 %v2474
  %5749 = vmatpush1.msra.mxu0 %v2473
  %5750 = vmatprep.subr.mxu0 %v2482
  %5751 = vmatpush1.msra.mxu0 %v2481
  %5752 = vmatprep.subr.mxu0 %v2490
  %5753 = vmatpush1.msra.mxu0 %v2489
  %5754 = vmatprep.subr.mxu0 %v2498
  %5755 = vmatpush1.msra.mxu0 %v2497
  %5756 = vmatprep.subr.mxu0 %v2506
  %5757 = vmatpush1.msra.mxu0 %v2505
  %5758 = vmatprep.subr.mxu0 %v2514
  %5759 = vmatpush1.msra.mxu0 %v2513
  %5760 = vmatprep.subr.mxu0 %v2522
  %5761 = vmatpush1.msra.mxu0 %v2521
  %5762 = vmatprep.subr.mxu0 %v2530
  %5763 = vmatpush1.msra.mxu0 %v2529
  %5764 = vmatprep.subr.mxu0 %v2538
  %5765 = vmatpush1.msra.mxu0 %v2537
  %5766 = vmatprep.subr.mxu0 %v2546
  %5767 = vmatpush1.msra.mxu0 %v2545
  %5768 = vmatprep.subr.mxu0 %v2554
  %5769 = vmatpush1.msra.mxu0 %v2553
  %5770 = vmatprep.subr.mxu0 %v2562
  %5771 = vmatpush1.msra.mxu0 %v2561
  %5772 = vmatprep.subr.mxu0 %v2570
  %5773 = vmatpush1.msra.mxu0 %v2569
  %5774 = vmatprep.subr.mxu0 %v2578
  %5775 = vmatpush1.msra.mxu0 %v2577
  %5776 = vmatprep.subr.mxu0 %v2586
  %5777 = vmatpush1.msra.mxu0 %v2585
  %5778 = vmatprep.subr.mxu0 %v2594
  %5779 = vmatpush1.msra.mxu0 %v2593
  %5780 = vmatprep.subr.mxu0 %v2602
  %5781 = vmatpush1.msra.mxu0 %v2601
  %5782 = vmatprep.subr.mxu0 %v2610
  %5783 = vmatpush1.msra.mxu0 %v2609
  %5784 = vmatprep.mubr.f32.mxu0 %v47
  %5785 = vmatmul.mubr.f32.gmra.mrb[0].mxu0 %v46
  %v5786 = vpop.f32.mrb[0].mxu0
  %v5787 = vadd.f32 %v5716, %v5786
  %v5788 = vpop.f32.mrb[0].mxu0
  %v5789 = vadd.f32 %v5718, %v5788
  %5790 = vdwg.mxu0
  %5791 = vmatprep.subr.mxu0 %v2618
  %5792 = vmatpush1.msra.mxu0 %v2617
  %5793 = vmatprep.subr.mxu0 %v2626
  %5794 = vmatpush1.msra.mxu0 %v2625
  %5795 = vmatprep.subr.mxu0 %v2634
  %5796 = vmatpush1.msra.mxu0 %v2633
  %5797 = vmatprep.subr.mxu0 %v2642
  %5798 = vmatpush1.msra.mxu0 %v2641
  %5799 = vmatprep.subr.mxu0 %v2650
  %5800 = vmatpush1.msra.mxu0 %v2649
  %5801 = vmatprep.subr.mxu0 %v2658
  %5802 = vmatpush1.msra.mxu0 %v2657
  %5803 = vmatprep.subr.mxu0 %v2666
  %5804 = vmatpush1.msra.mxu0 %v2665
  %5805 = vmatprep.subr.mxu0 %v2674
  %5806 = vmatpush1.msra.mxu0 %v2673
  %5807 = vmatprep.subr.mxu0 %v2682
  %5808 = vmatpush1.msra.mxu0 %v2681
  %5809 = vmatprep.subr.mxu0 %v2690
  %5810 = vmatpush1.msra.mxu0 %v2689
  %5811 = vmatprep.subr.mxu0 %v2698
  %5812 = vmatpush1.msra.mxu0 %v2697
  %5813 = vmatprep.subr.mxu0 %v2706
  %5814 = vmatpush1.msra.mxu0 %v2705
  %5815 = vmatprep.subr.mxu0 %v2714
  %5816 = vmatpush1.msra.mxu0 %v2713
  %5817 = vmatprep.subr.mxu0 %v2722
  %5818 = vmatpush1.msra.mxu0 %v2721
  %5819 = vmatprep.subr.mxu0 %v2730
  %5820 = vmatpush1.msra.mxu0 %v2729
  %5821 = vmatprep.subr.mxu0 %v2738
  %5822 = vmatpush1.msra.mxu0 %v2737
  %5823 = vmatprep.subr.mxu0 %v2746
  %5824 = vmatpush1.msra.mxu0 %v2745
  %5825 = vmatprep.subr.mxu0 %v2754
  %5826 = vmatpush1.msra.mxu0 %v2753
  %5827 = vmatprep.subr.mxu0 %v2762
  %5828 = vmatpush1.msra.mxu0 %v2761
  %5829 = vmatprep.subr.mxu0 %v2770
  %5830 = vmatpush1.msra.mxu0 %v2769
  %5831 = vmatprep.subr.mxu0 %v2778
  %5832 = vmatpush1.msra.mxu0 %v2777
  %5833 = vmatprep.subr.mxu0 %v2786
  %5834 = vmatpush1.msra.mxu0 %v2785
  %5835 = vmatprep.subr.mxu0 %v2794
  %5836 = vmatpush1.msra.mxu0 %v2793
  %5837 = vmatprep.subr.mxu0 %v2802
  %5838 = vmatpush1.msra.mxu0 %v2801
  %5839 = vmatprep.subr.mxu0 %v2810
  %5840 = vmatpush1.msra.mxu0 %v2809
  %5841 = vmatprep.subr.mxu0 %v2818
  %5842 = vmatpush1.msra.mxu0 %v2817
  %5843 = vmatprep.subr.mxu0 %v2826
  %5844 = vmatpush1.msra.mxu0 %v2825
  %5845 = vmatprep.subr.mxu0 %v2834
  %5846 = vmatpush1.msra.mxu0 %v2833
  %5847 = vmatprep.subr.mxu0 %v2842
  %5848 = vmatpush1.msra.mxu0 %v2841
  %5849 = vmatprep.subr.mxu0 %v2850
  %5850 = vmatpush1.msra.mxu0 %v2849
  %5851 = vmatprep.subr.mxu0 %v2858
  %5852 = vmatpush1.msra.mxu0 %v2857
  %5853 = vmatprep.subr.mxu0 %v2866
  %5854 = vmatpush1.msra.mxu0 %v2865
  %5855 = vmatprep.mubr.f32.mxu0 %v49
  %5856 = vmatmul.mubr.f32.gmra.mrb[0].mxu0 %v48
  %v5857 = vpop.f32.mrb[0].mxu0
  %v5858 = vadd.f32 %v5787, %v5857
  %v5859 = vpop.f32.mrb[0].mxu0
  %v5860 = vadd.f32 %v5789, %v5859
  %5861 = vdwg.mxu0
  %5862 = vmatprep.subr.mxu0 %v2874
  %5863 = vmatpush1.msra.mxu0 %v2873
  %5864 = vmatprep.subr.mxu0 %v2882
  %5865 = vmatpush1.msra.mxu0 %v2881
  %5866 = vmatprep.subr.mxu0 %v2890
  %5867 = vmatpush1.msra.mxu0 %v2889
  %5868 = vmatprep.subr.mxu0 %v2898
  %5869 = vmatpush1.msra.mxu0 %v2897
  %5870 = vmatprep.subr.mxu0 %v2906
  %5871 = vmatpush1.msra.mxu0 %v2905
  %5872 = vmatprep.subr.mxu0 %v2914
  %5873 = vmatpush1.msra.mxu0 %v2913
  %5874 = vmatprep.subr.mxu0 %v2922
  %5875 = vmatpush1.msra.mxu0 %v2921
  %5876 = vmatprep.subr.mxu0 %v2930
  %5877 = vmatpush1.msra.mxu0 %v2929
  %5878 = vmatprep.subr.mxu0 %v2938
  %5879 = vmatpush1.msra.mxu0 %v2937
  %5880 = vmatprep.subr.mxu0 %v2946
  %5881 = vmatpush1.msra.mxu0 %v2945
  %5882 = vmatprep.subr.mxu0 %v2954
  %5883 = vmatpush1.msra.mxu0 %v2953
  %5884 = vmatprep.subr.mxu0 %v2962
  %5885 = vmatpush1.msra.mxu0 %v2961
  %5886 = vmatprep.subr.mxu0 %v2970
  %5887 = vmatpush1.msra.mxu0 %v2969
  %5888 = vmatprep.subr.mxu0 %v2978
  %5889 = vmatpush1.msra.mxu0 %v2977
  %5890 = vmatprep.subr.mxu0 %v2986
  %5891 = vmatpush1.msra.mxu0 %v2985
  %5892 = vmatprep.subr.mxu0 %v2994
  %5893 = vmatpush1.msra.mxu0 %v2993
  %5894 = vmatprep.subr.mxu0 %v3002
  %5895 = vmatpush1.msra.mxu0 %v3001
  %5896 = vmatprep.subr.mxu0 %v3010
  %5897 = vmatpush1.msra.mxu0 %v3009
  %5898 = vmatprep.subr.mxu0 %v3018
  %5899 = vmatpush1.msra.mxu0 %v3017
  %5900 = vmatprep.subr.mxu0 %v3026
  %5901 = vmatpush1.msra.mxu0 %v3025
  %5902 = vmatprep.subr.mxu0 %v3034
  %5903 = vmatpush1.msra.mxu0 %v3033
  %5904 = vmatprep.subr.mxu0 %v3042
  %5905 = vmatpush1.msra.mxu0 %v3041
  %5906 = vmatprep.subr.mxu0 %v3050
  %5907 = vmatpush1.msra.mxu0 %v3049
  %5908 = vmatprep.subr.mxu0 %v3058
  %5909 = vmatpush1.msra.mxu0 %v3057
  %5910 = vmatprep.subr.mxu0 %v3066
  %5911 = vmatpush1.msra.mxu0 %v3065
  %5912 = vmatprep.subr.mxu0 %v3074
  %5913 = vmatpush1.msra.mxu0 %v3073
  %5914 = vmatprep.subr.mxu0 %v3082
  %5915 = vmatpush1.msra.mxu0 %v3081
  %5916 = vmatprep.subr.mxu0 %v3090
  %5917 = vmatpush1.msra.mxu0 %v3089
  %5918 = vmatprep.subr.mxu0 %v3098
  %5919 = vmatpush1.msra.mxu0 %v3097
  %5920 = vmatprep.subr.mxu0 %v3106
  %5921 = vmatpush1.msra.mxu0 %v3105
  %5922 = vmatprep.subr.mxu0 %v3114
  %5923 = vmatpush1.msra.mxu0 %v3113
  %5924 = vmatprep.subr.mxu0 %v3122
  %5925 = vmatpush1.msra.mxu0 %v3121
  %5926 = vmatprep.mubr.f32.mxu0 %v51
  %5927 = vmatmul.mubr.f32.gmra.mrb[0].mxu0 %v50
  %v5928 = vpop.f32.mrb[0].mxu0
  %v5929 = vadd.f32 %v5858, %v5928
  %v5930 = vpop.f32.mrb[0].mxu0
  %v5931 = vadd.f32 %v5860, %v5930
  %5932 = vdwg.mxu0
  %5933 = vmatprep.subr.mxu0 %v3130
  %5934 = vmatpush1.msra.mxu0 %v3129
  %5935 = vmatprep.subr.mxu0 %v3138
  %5936 = vmatpush1.msra.mxu0 %v3137
  %5937 = vmatprep.subr.mxu0 %v3146
  %5938 = vmatpush1.msra.mxu0 %v3145
  %5939 = vmatprep.subr.mxu0 %v3154
  %5940 = vmatpush1.msra.mxu0 %v3153
  %5941 = vmatprep.subr.mxu0 %v3162
  %5942 = vmatpush1.msra.mxu0 %v3161
  %5943 = vmatprep.subr.mxu0 %v3170
  %5944 = vmatpush1.msra.mxu0 %v3169
  %5945 = vmatprep.subr.mxu0 %v3178
  %5946 = vmatpush1.msra.mxu0 %v3177
  %5947 = vmatprep.subr.mxu0 %v3186
  %5948 = vmatpush1.msra.mxu0 %v3185
  %5949 = vmatprep.subr.mxu0 0.0
  %5950 = vmatpush1.msra.mxu0 0.0
  %5951 = vmatprep.subr.mxu0 0.0
  %5952 = vmatpush1.msra.mxu0 0.0
  %5953 = vmatprep.subr.mxu0 0.0
  %5954 = vmatpush1.msra.mxu0 0.0
  %5955 = vmatprep.subr.mxu0 0.0
  %5956 = vmatpush1.msra.mxu0 0.0
  %5957 = vmatprep.subr.mxu0 0.0
  %5958 = vmatpush1.msra.mxu0 0.0
  %5959 = vmatprep.subr.mxu0 0.0
  %5960 = vmatpush1.msra.mxu0 0.0
  %5961 = vmatprep.subr.mxu0 0.0
  %5962 = vmatpush1.msra.mxu0 0.0
  %5963 = vmatprep.subr.mxu0 0.0
  %5964 = vmatpush1.msra.mxu0 0.0
  %5965 = vmatprep.subr.mxu0 0.0
  %5966 = vmatpush1.msra.mxu0 0.0
  %5967 = vmatprep.subr.mxu0 0.0
  %5968 = vmatpush1.msra.mxu0 0.0
  %5969 = vmatprep.subr.mxu0 0.0
  %5970 = vmatpush1.msra.mxu0 0.0
  %5971 = vmatprep.subr.mxu0 0.0
  %5972 = vmatpush1.msra.mxu0 0.0
  %5973 = vmatprep.subr.mxu0 0.0
  %5974 = vmatpush1.msra.mxu0 0.0
  %5975 = vmatprep.subr.mxu0 0.0
  %5976 = vmatpush1.msra.mxu0 0.0
  %5977 = vmatprep.subr.mxu0 0.0
  %5978 = vmatpush1.msra.mxu0 0.0
  %5979 = vmatprep.subr.mxu0 0.0
  %5980 = vmatpush1.msra.mxu0 0.0
  %5981 = vmatprep.subr.mxu0 0.0
  %5982 = vmatpush1.msra.mxu0 0.0
  %5983 = vmatprep.subr.mxu0 0.0
  %5984 = vmatpush1.msra.mxu0 0.0
  %5985 = vmatprep.subr.mxu0 0.0
  %5986 = vmatpush1.msra.mxu0 0.0
  %5987 = vmatprep.subr.mxu0 0.0
  %5988 = vmatpush1.msra.mxu0 0.0
  %5989 = vmatprep.subr.mxu0 0.0
  %5990 = vmatpush1.msra.mxu0 0.0
  %5991 = vmatprep.subr.mxu0 0.0
  %5992 = vmatpush1.msra.mxu0 0.0
  %5993 = vmatprep.subr.mxu0 0.0
  %5994 = vmatpush1.msra.mxu0 0.0
  %5995 = vmatprep.subr.mxu0 0.0
  %5996 = vmatpush1.msra.mxu0 0.0
  %5997 = vmatprep.mubr.f32.mxu0 0.0
  %5998 = vmatmul.mubr.f32.gmra.mrb[0].mxu0 %v3233
  %v5999 = vpop.f32.mrb[0].mxu0
  %v6000 = vadd.f32 %v5929, %v5999
  %v6001 = vpop.f32.mrb[0].mxu0
  %v6002 = vadd.f32 %v5931, %v6001
  %6003 = vdwg.mxu0
  %6004 = vmatprep.subr.mxu0 %v60
  %6005 = vmatpush1.msra.mxu0 %v59
  %6006 = vmatprep.subr.mxu0 %v68
  %6007 = vmatpush1.msra.mxu0 %v67
  %6008 = vmatprep.subr.mxu0 %v76
  %6009 = vmatpush1.msra.mxu0 %v75
  %6010 = vmatprep.subr.mxu0 %v84
  %6011 = vmatpush1.msra.mxu0 %v83
  %6012 = vmatprep.subr.mxu0 %v92
  %6013 = vmatpush1.msra.mxu0 %v91
  %6014 = vmatprep.subr.mxu0 %v100
  %6015 = vmatpush1.msra.mxu0 %v99
  %6016 = vmatprep.subr.mxu0 %v108
  %6017 = vmatpush1.msra.mxu0 %v107
  %6018 = vmatprep.subr.mxu0 %v116
  %6019 = vmatpush1.msra.mxu0 %v115
  %6020 = vmatprep.subr.mxu0 %v124
  %6021 = vmatpush1.msra.mxu0 %v123
  %6022 = vmatprep.subr.mxu0 %v132
  %6023 = vmatpush1.msra.mxu0 %v131
  %6024 = vmatprep.subr.mxu0 %v140
  %6025 = vmatpush1.msra.mxu0 %v139
  %6026 = vmatprep.subr.mxu0 %v148
  %6027 = vmatpush1.msra.mxu0 %v147
  %6028 = vmatprep.subr.mxu0 %v156
  %6029 = vmatpush1.msra.mxu0 %v155
  %6030 = vmatprep.subr.mxu0 %v164
  %6031 = vmatpush1.msra.mxu0 %v163
  %6032 = vmatprep.subr.mxu0 %v172
  %6033 = vmatpush1.msra.mxu0 %v171
  %6034 = vmatprep.subr.mxu0 %v180
  %6035 = vmatpush1.msra.mxu0 %v179
  %6036 = vmatprep.subr.mxu0 %v188
  %6037 = vmatpush1.msra.mxu0 %v187
  %6038 = vmatprep.subr.mxu0 %v196
  %6039 = vmatpush1.msra.mxu0 %v195
  %6040 = vmatprep.subr.mxu0 %v204
  %6041 = vmatpush1.msra.mxu0 %v203
  %6042 = vmatprep.subr.mxu0 %v212
  %6043 = vmatpush1.msra.mxu0 %v211
  %6044 = vmatprep.subr.mxu0 %v220
  %6045 = vmatpush1.msra.mxu0 %v219
  %6046 = vmatprep.subr.mxu0 %v228
  %6047 = vmatpush1.msra.mxu0 %v227
  %6048 = vmatprep.subr.mxu0 %v236
  %6049 = vmatpush1.msra.mxu0 %v235
  %6050 = vmatprep.subr.mxu0 %v244
  %6051 = vmatpush1.msra.mxu0 %v243
  %6052 = vmatprep.subr.mxu0 %v252
  %6053 = vmatpush1.msra.mxu0 %v251
  %6054 = vmatprep.subr.mxu0 %v260
  %6055 = vmatpush1.msra.mxu0 %v259
  %6056 = vmatprep.subr.mxu0 %v268
  %6057 = vmatpush1.msra.mxu0 %v267
  %6058 = vmatprep.subr.mxu0 %v276
  %6059 = vmatpush1.msra.mxu0 %v275
  %6060 = vmatprep.subr.mxu0 %v284
  %6061 = vmatpush1.msra.mxu0 %v283
  %6062 = vmatprep.subr.mxu0 %v292
  %6063 = vmatpush1.msra.mxu0 %v291
  %6064 = vmatprep.subr.mxu0 %v300
  %6065 = vmatpush1.msra.mxu0 %v299
  %6066 = vmatprep.subr.mxu0 %v308
  %6067 = vmatpush1.msra.mxu0 %v307
  %6068 = vmatprep.mubr.f32.mxu0 %v29
  %6069 = vmatmul.mubr.f32.gmra.mrb[0].mxu0 %v28
  %v6070 = vpop.f32.mrb[0].mxu0
  %v6071 = vadd.f32 %v3218, %v6070
  %v6072 = vpop.f32.mrb[0].mxu0
  %v6073 = vadd.f32 %v3222, %v6072
  %6074 = vdwg.mxu0
  %6075 = vmatprep.subr.mxu0 %v316
  %6076 = vmatpush1.msra.mxu0 %v315
  %6077 = vmatprep.subr.mxu0 %v324
  %6078 = vmatpush1.msra.mxu0 %v323
  %6079 = vmatprep.subr.mxu0 %v332
  %6080 = vmatpush1.msra.mxu0 %v331
  %6081 = vmatprep.subr.mxu0 %v340
  %6082 = vmatpush1.msra.mxu0 %v339
  %6083 = vmatprep.subr.mxu0 %v348
  %6084 = vmatpush1.msra.mxu0 %v347
  %6085 = vmatprep.subr.mxu0 %v356
  %6086 = vmatpush1.msra.mxu0 %v355
  %6087 = vmatprep.subr.mxu0 %v364
  %6088 = vmatpush1.msra.mxu0 %v363
  %6089 = vmatprep.subr.mxu0 %v372
  %6090 = vmatpush1.msra.mxu0 %v371
  %6091 = vmatprep.subr.mxu0 %v380
  %6092 = vmatpush1.msra.mxu0 %v379
  %6093 = vmatprep.subr.mxu0 %v388
  %6094 = vmatpush1.msra.mxu0 %v387
  %6095 = vmatprep.subr.mxu0 %v396
  %6096 = vmatpush1.msra.mxu0 %v395
  %6097 = vmatprep.subr.mxu0 %v404
  %6098 = vmatpush1.msra.mxu0 %v403
  %6099 = vmatprep.subr.mxu0 %v412
  %6100 = vmatpush1.msra.mxu0 %v411
  %6101 = vmatprep.subr.mxu0 %v420
  %6102 = vmatpush1.msra.mxu0 %v419
  %6103 = vmatprep.subr.mxu0 %v428
  %6104 = vmatpush1.msra.mxu0 %v427
  %6105 = vmatprep.subr.mxu0 %v436
  %6106 = vmatpush1.msra.mxu0 %v435
  %6107 = vmatprep.subr.mxu0 %v444
  %6108 = vmatpush1.msra.mxu0 %v443
  %6109 = vmatprep.subr.mxu0 %v452
  %6110 = vmatpush1.msra.mxu0 %v451
  %6111 = vmatprep.subr.mxu0 %v460
  %6112 = vmatpush1.msra.mxu0 %v459
  %6113 = vmatprep.subr.mxu0 %v468
  %6114 = vmatpush1.msra.mxu0 %v467
  %6115 = vmatprep.subr.mxu0 %v476
  %6116 = vmatpush1.msra.mxu0 %v475
  %6117 = vmatprep.subr.mxu0 %v484
  %6118 = vmatpush1.msra.mxu0 %v483
  %6119 = vmatprep.subr.mxu0 %v492
  %6120 = vmatpush1.msra.mxu0 %v491
  %6121 = vmatprep.subr.mxu0 %v500
  %6122 = vmatpush1.msra.mxu0 %v499
  %6123 = vmatprep.subr.mxu0 %v508
  %6124 = vmatpush1.msra.mxu0 %v507
  %6125 = vmatprep.subr.mxu0 %v516
  %6126 = vmatpush1.msra.mxu0 %v515
  %6127 = vmatprep.subr.mxu0 %v524
  %6128 = vmatpush1.msra.mxu0 %v523
  %6129 = vmatprep.subr.mxu0 %v532
  %6130 = vmatpush1.msra.mxu0 %v531
  %6131 = vmatprep.subr.mxu0 %v540
  %6132 = vmatpush1.msra.mxu0 %v539
  %6133 = vmatprep.subr.mxu0 %v548
  %6134 = vmatpush1.msra.mxu0 %v547
  %6135 = vmatprep.subr.mxu0 %v556
  %6136 = vmatpush1.msra.mxu0 %v555
  %6137 = vmatprep.subr.mxu0 %v564
  %6138 = vmatpush1.msra.mxu0 %v563
  %6139 = vmatprep.mubr.f32.mxu0 %v31
  %6140 = vmatmul.mubr.f32.gmra.mrb[0].mxu0 %v30
  %v6141 = vpop.f32.mrb[0].mxu0
  %v6142 = vadd.f32 %v6071, %v6141
  %v6143 = vpop.f32.mrb[0].mxu0
  %v6144 = vadd.f32 %v6073, %v6143
  %6145 = vdwg.mxu0
  %6146 = vmatprep.subr.mxu0 %v572
  %6147 = vmatpush1.msra.mxu0 %v571
  %6148 = vmatprep.subr.mxu0 %v580
  %6149 = vmatpush1.msra.mxu0 %v579
  %6150 = vmatprep.subr.mxu0 %v588
  %6151 = vmatpush1.msra.mxu0 %v587
  %6152 = vmatprep.subr.mxu0 %v596
  %6153 = vmatpush1.msra.mxu0 %v595
  %6154 = vmatprep.subr.mxu0 %v604
  %6155 = vmatpush1.msra.mxu0 %v603
  %6156 = vmatprep.subr.mxu0 %v612
  %6157 = vmatpush1.msra.mxu0 %v611
  %6158 = vmatprep.subr.mxu0 %v620
  %6159 = vmatpush1.msra.mxu0 %v619
  %6160 = vmatprep.subr.mxu0 %v628
  %6161 = vmatpush1.msra.mxu0 %v627
  %6162 = vmatprep.subr.mxu0 %v636
  %6163 = vmatpush1.msra.mxu0 %v635
  %6164 = vmatprep.subr.mxu0 %v644
  %6165 = vmatpush1.msra.mxu0 %v643
  %6166 = vmatprep.subr.mxu0 %v652
  %6167 = vmatpush1.msra.mxu0 %v651
  %6168 = vmatprep.subr.mxu0 %v660
  %6169 = vmatpush1.msra.mxu0 %v659
  %6170 = vmatprep.subr.mxu0 %v668
  %6171 = vmatpush1.msra.mxu0 %v667
  %6172 = vmatprep.subr.mxu0 %v676
  %6173 = vmatpush1.msra.mxu0 %v675
  %6174 = vmatprep.subr.mxu0 %v684
  %6175 = vmatpush1.msra.mxu0 %v683
  %6176 = vmatprep.subr.mxu0 %v692
  %6177 = vmatpush1.msra.mxu0 %v691
  %6178 = vmatprep.subr.mxu0 %v700
  %6179 = vmatpush1.msra.mxu0 %v699
  %6180 = vmatprep.subr.mxu0 %v708
  %6181 = vmatpush1.msra.mxu0 %v707
  %6182 = vmatprep.subr.mxu0 %v716
  %6183 = vmatpush1.msra.mxu0 %v715
  %6184 = vmatprep.subr.mxu0 %v724
  %6185 = vmatpush1.msra.mxu0 %v723
  %6186 = vmatprep.subr.mxu0 %v732
  %6187 = vmatpush1.msra.mxu0 %v731
  %6188 = vmatprep.subr.mxu0 %v740
  %6189 = vmatpush1.msra.mxu0 %v739
  %6190 = vmatprep.subr.mxu0 %v748
  %6191 = vmatpush1.msra.mxu0 %v747
  %6192 = vmatprep.subr.mxu0 %v756
  %6193 = vmatpush1.msra.mxu0 %v755
  %6194 = vmatprep.subr.mxu0 %v764
  %6195 = vmatpush1.msra.mxu0 %v763
  %6196 = vmatprep.subr.mxu0 %v772
  %6197 = vmatpush1.msra.mxu0 %v771
  %6198 = vmatprep.subr.mxu0 %v780
  %6199 = vmatpush1.msra.mxu0 %v779
  %6200 = vmatprep.subr.mxu0 %v788
  %6201 = vmatpush1.msra.mxu0 %v787
  %6202 = vmatprep.subr.mxu0 %v796
  %6203 = vmatpush1.msra.mxu0 %v795
  %6204 = vmatprep.subr.mxu0 %v804
  %6205 = vmatpush1.msra.mxu0 %v803
  %6206 = vmatprep.subr.mxu0 %v812
  %6207 = vmatpush1.msra.mxu0 %v811
  %6208 = vmatprep.subr.mxu0 %v820
  %6209 = vmatpush1.msra.mxu0 %v819
  %6210 = vmatprep.mubr.f32.mxu0 %v33
  %6211 = vmatmul.mubr.f32.gmra.mrb[0].mxu0 %v32
  %v6212 = vpop.f32.mrb[0].mxu0
  %v6213 = vadd.f32 %v6142, %v6212
  %v6214 = vpop.f32.mrb[0].mxu0
  %v6215 = vadd.f32 %v6144, %v6214
  %6216 = vdwg.mxu0
  %6217 = vmatprep.subr.mxu0 %v828
  %6218 = vmatpush1.msra.mxu0 %v827
  %6219 = vmatprep.subr.mxu0 %v836
  %6220 = vmatpush1.msra.mxu0 %v835
  %6221 = vmatprep.subr.mxu0 %v844
  %6222 = vmatpush1.msra.mxu0 %v843
  %6223 = vmatprep.subr.mxu0 %v852
  %6224 = vmatpush1.msra.mxu0 %v851
  %6225 = vmatprep.subr.mxu0 %v860
  %6226 = vmatpush1.msra.mxu0 %v859
  %6227 = vmatprep.subr.mxu0 %v868
  %6228 = vmatpush1.msra.mxu0 %v867
  %6229 = vmatprep.subr.mxu0 %v876
  %6230 = vmatpush1.msra.mxu0 %v875
  %6231 = vmatprep.subr.mxu0 %v884
  %6232 = vmatpush1.msra.mxu0 %v883
  %6233 = vmatprep.subr.mxu0 %v892
  %6234 = vmatpush1.msra.mxu0 %v891
  %6235 = vmatprep.subr.mxu0 %v900
  %6236 = vmatpush1.msra.mxu0 %v899
  %6237 = vmatprep.subr.mxu0 %v908
  %6238 = vmatpush1.msra.mxu0 %v907
  %6239 = vmatprep.subr.mxu0 %v916
  %6240 = vmatpush1.msra.mxu0 %v915
  %6241 = vmatprep.subr.mxu0 %v924
  %6242 = vmatpush1.msra.mxu0 %v923
  %6243 = vmatprep.subr.mxu0 %v932
  %6244 = vmatpush1.msra.mxu0 %v931
  %6245 = vmatprep.subr.mxu0 %v940
  %6246 = vmatpush1.msra.mxu0 %v939
  %6247 = vmatprep.subr.mxu0 %v948
  %6248 = vmatpush1.msra.mxu0 %v947
  %6249 = vmatprep.subr.mxu0 %v956
  %6250 = vmatpush1.msra.mxu0 %v955
  %6251 = vmatprep.subr.mxu0 %v964
  %6252 = vmatpush1.msra.mxu0 %v963
  %6253 = vmatprep.subr.mxu0 %v972
  %6254 = vmatpush1.msra.mxu0 %v971
  %6255 = vmatprep.subr.mxu0 %v980
  %6256 = vmatpush1.msra.mxu0 %v979
  %6257 = vmatprep.subr.mxu0 %v988
  %6258 = vmatpush1.msra.mxu0 %v987
  %6259 = vmatprep.subr.mxu0 %v996
  %6260 = vmatpush1.msra.mxu0 %v995
  %6261 = vmatprep.subr.mxu0 %v1004
  %6262 = vmatpush1.msra.mxu0 %v1003
  %6263 = vmatprep.subr.mxu0 %v1012
  %6264 = vmatpush1.msra.mxu0 %v1011
  %6265 = vmatprep.subr.mxu0 %v1020
  %6266 = vmatpush1.msra.mxu0 %v1019
  %6267 = vmatprep.subr.mxu0 %v1028
  %6268 = vmatpush1.msra.mxu0 %v1027
  %6269 = vmatprep.subr.mxu0 %v1036
  %6270 = vmatpush1.msra.mxu0 %v1035
  %6271 = vmatprep.subr.mxu0 %v1044
  %6272 = vmatpush1.msra.mxu0 %v1043
  %6273 = vmatprep.subr.mxu0 %v1052
  %6274 = vmatpush1.msra.mxu0 %v1051
  %6275 = vmatprep.subr.mxu0 %v1060
  %6276 = vmatpush1.msra.mxu0 %v1059
  %6277 = vmatprep.subr.mxu0 %v1068
  %6278 = vmatpush1.msra.mxu0 %v1067
  %6279 = vmatprep.subr.mxu0 %v1076
  %6280 = vmatpush1.msra.mxu0 %v1075
  %6281 = vmatprep.mubr.f32.mxu0 %v35
  %6282 = vmatmul.mubr.f32.gmra.mrb[0].mxu0 %v34
  %v6283 = vpop.f32.mrb[0].mxu0
  %v6284 = vadd.f32 %v6213, %v6283
  %v6285 = vpop.f32.mrb[0].mxu0
  %v6286 = vadd.f32 %v6215, %v6285
  %6287 = vdwg.mxu0
  %6288 = vmatprep.subr.mxu0 %v1084
  %6289 = vmatpush1.msra.mxu0 %v1083
  %6290 = vmatprep.subr.mxu0 %v1092
  %6291 = vmatpush1.msra.mxu0 %v1091
  %6292 = vmatprep.subr.mxu0 %v1100
  %6293 = vmatpush1.msra.mxu0 %v1099
  %6294 = vmatprep.subr.mxu0 %v1108
  %6295 = vmatpush1.msra.mxu0 %v1107
  %6296 = vmatprep.subr.mxu0 %v1116
  %6297 = vmatpush1.msra.mxu0 %v1115
  %6298 = vmatprep.subr.mxu0 %v1124
  %6299 = vmatpush1.msra.mxu0 %v1123
  %6300 = vmatprep.subr.mxu0 %v1132
  %6301 = vmatpush1.msra.mxu0 %v1131
  %6302 = vmatprep.subr.mxu0 %v1140
  %6303 = vmatpush1.msra.mxu0 %v1139
  %6304 = vmatprep.subr.mxu0 %v1148
  %6305 = vmatpush1.msra.mxu0 %v1147
  %6306 = vmatprep.subr.mxu0 %v1156
  %6307 = vmatpush1.msra.mxu0 %v1155
  %6308 = vmatprep.subr.mxu0 %v1164
  %6309 = vmatpush1.msra.mxu0 %v1163
  %6310 = vmatprep.subr.mxu0 %v1172
  %6311 = vmatpush1.msra.mxu0 %v1171
  %6312 = vmatprep.subr.mxu0 %v1180
  %6313 = vmatpush1.msra.mxu0 %v1179
  %6314 = vmatprep.subr.mxu0 %v1188
  %6315 = vmatpush1.msra.mxu0 %v1187
  %6316 = vmatprep.subr.mxu0 %v1196
  %6317 = vmatpush1.msra.mxu0 %v1195
  %6318 = vmatprep.subr.mxu0 %v1204
  %6319 = vmatpush1.msra.mxu0 %v1203
  %6320 = vmatprep.subr.mxu0 %v1212
  %6321 = vmatpush1.msra.mxu0 %v1211
  %6322 = vmatprep.subr.mxu0 %v1220
  %6323 = vmatpush1.msra.mxu0 %v1219
  %6324 = vmatprep.subr.mxu0 %v1228
  %6325 = vmatpush1.msra.mxu0 %v1227
  %6326 = vmatprep.subr.mxu0 %v1236
  %6327 = vmatpush1.msra.mxu0 %v1235
  %6328 = vmatprep.subr.mxu0 %v1244
  %6329 = vmatpush1.msra.mxu0 %v1243
  %6330 = vmatprep.subr.mxu0 %v1252
  %6331 = vmatpush1.msra.mxu0 %v1251
  %6332 = vmatprep.subr.mxu0 %v1260
  %6333 = vmatpush1.msra.mxu0 %v1259
  %6334 = vmatprep.subr.mxu0 %v1268
  %6335 = vmatpush1.msra.mxu0 %v1267
  %6336 = vmatprep.subr.mxu0 %v1276
  %6337 = vmatpush1.msra.mxu0 %v1275
  %6338 = vmatprep.subr.mxu0 %v1284
  %6339 = vmatpush1.msra.mxu0 %v1283
  %6340 = vmatprep.subr.mxu0 %v1292
  %6341 = vmatpush1.msra.mxu0 %v1291
  %6342 = vmatprep.subr.mxu0 %v1300
  %6343 = vmatpush1.msra.mxu0 %v1299
  %6344 = vmatprep.subr.mxu0 %v1308
  %6345 = vmatpush1.msra.mxu0 %v1307
  %6346 = vmatprep.subr.mxu0 %v1316
  %6347 = vmatpush1.msra.mxu0 %v1315
  %6348 = vmatprep.subr.mxu0 %v1324
  %6349 = vmatpush1.msra.mxu0 %v1323
  %6350 = vmatprep.subr.mxu0 %v1332
  %6351 = vmatpush1.msra.mxu0 %v1331
  %6352 = vmatprep.mubr.f32.mxu0 %v37
  %6353 = vmatmul.mubr.f32.gmra.mrb[0].mxu0 %v36
  %v6354 = vpop.f32.mrb[0].mxu0
  %v6355 = vadd.f32 %v6284, %v6354
  %v6356 = vpop.f32.mrb[0].mxu0
  %v6357 = vadd.f32 %v6286, %v6356
  %6358 = vdwg.mxu0
  %6359 = vmatprep.subr.mxu0 %v1340
  %6360 = vmatpush1.msra.mxu0 %v1339
  %6361 = vmatprep.subr.mxu0 %v1348
  %6362 = vmatpush1.msra.mxu0 %v1347
  %6363 = vmatprep.subr.mxu0 %v1356
  %6364 = vmatpush1.msra.mxu0 %v1355
  %6365 = vmatprep.subr.mxu0 %v1364
  %6366 = vmatpush1.msra.mxu0 %v1363
  %6367 = vmatprep.subr.mxu0 %v1372
  %6368 = vmatpush1.msra.mxu0 %v1371
  %6369 = vmatprep.subr.mxu0 %v1380
  %6370 = vmatpush1.msra.mxu0 %v1379
  %6371 = vmatprep.subr.mxu0 %v1388
  %6372 = vmatpush1.msra.mxu0 %v1387
  %6373 = vmatprep.subr.mxu0 %v1396
  %6374 = vmatpush1.msra.mxu0 %v1395
  %6375 = vmatprep.subr.mxu0 %v1404
  %6376 = vmatpush1.msra.mxu0 %v1403
  %6377 = vmatprep.subr.mxu0 %v1412
  %6378 = vmatpush1.msra.mxu0 %v1411
  %6379 = vmatprep.subr.mxu0 %v1420
  %6380 = vmatpush1.msra.mxu0 %v1419
  %6381 = vmatprep.subr.mxu0 %v1428
  %6382 = vmatpush1.msra.mxu0 %v1427
  %6383 = vmatprep.subr.mxu0 %v1436
  %6384 = vmatpush1.msra.mxu0 %v1435
  %6385 = vmatprep.subr.mxu0 %v1444
  %6386 = vmatpush1.msra.mxu0 %v1443
  %6387 = vmatprep.subr.mxu0 %v1452
  %6388 = vmatpush1.msra.mxu0 %v1451
  %6389 = vmatprep.subr.mxu0 %v1460
  %6390 = vmatpush1.msra.mxu0 %v1459
  %6391 = vmatprep.subr.mxu0 %v1468
  %6392 = vmatpush1.msra.mxu0 %v1467
  %6393 = vmatprep.subr.mxu0 %v1476
  %6394 = vmatpush1.msra.mxu0 %v1475
  %6395 = vmatprep.subr.mxu0 %v1484
  %6396 = vmatpush1.msra.mxu0 %v1483
  %6397 = vmatprep.subr.mxu0 %v1492
  %6398 = vmatpush1.msra.mxu0 %v1491
  %6399 = vmatprep.subr.mxu0 %v1500
  %6400 = vmatpush1.msra.mxu0 %v1499
  %6401 = vmatprep.subr.mxu0 %v1508
  %6402 = vmatpush1.msra.mxu0 %v1507
  %6403 = vmatprep.subr.mxu0 %v1516
  %6404 = vmatpush1.msra.mxu0 %v1515
  %6405 = vmatprep.subr.mxu0 %v1524
  %6406 = vmatpush1.msra.mxu0 %v1523
  %6407 = vmatprep.subr.mxu0 %v1532
  %6408 = vmatpush1.msra.mxu0 %v1531
  %6409 = vmatprep.subr.mxu0 %v1540
  %6410 = vmatpush1.msra.mxu0 %v1539
  %6411 = vmatprep.subr.mxu0 %v1548
  %6412 = vmatpush1.msra.mxu0 %v1547
  %6413 = vmatprep.subr.mxu0 %v1556
  %6414 = vmatpush1.msra.mxu0 %v1555
  %6415 = vmatprep.subr.mxu0 %v1564
  %6416 = vmatpush1.msra.mxu0 %v1563
  %6417 = vmatprep.subr.mxu0 %v1572
  %6418 = vmatpush1.msra.mxu0 %v1571
  %6419 = vmatprep.subr.mxu0 %v1580
  %6420 = vmatpush1.msra.mxu0 %v1579
  %6421 = vmatprep.subr.mxu0 %v1588
  %6422 = vmatpush1.msra.mxu0 %v1587
  %6423 = vmatprep.mubr.f32.mxu0 %v39
  %6424 = vmatmul.mubr.f32.gmra.mrb[0].mxu0 %v38
  %v6425 = vpop.f32.mrb[0].mxu0
  %v6426 = vadd.f32 %v6355, %v6425
  %v6427 = vpop.f32.mrb[0].mxu0
  %v6428 = vadd.f32 %v6357, %v6427
  %6429 = vdwg.mxu0
  %6430 = vmatprep.subr.mxu0 %v1596
  %6431 = vmatpush1.msra.mxu0 %v1595
  %6432 = vmatprep.subr.mxu0 %v1604
  %6433 = vmatpush1.msra.mxu0 %v1603
  %6434 = vmatprep.subr.mxu0 %v1612
  %6435 = vmatpush1.msra.mxu0 %v1611
  %6436 = vmatprep.subr.mxu0 %v1620
  %6437 = vmatpush1.msra.mxu0 %v1619
  %6438 = vmatprep.subr.mxu0 %v1628
  %6439 = vmatpush1.msra.mxu0 %v1627
  %6440 = vmatprep.subr.mxu0 %v1636
  %6441 = vmatpush1.msra.mxu0 %v1635
  %6442 = vmatprep.subr.mxu0 %v1644
  %6443 = vmatpush1.msra.mxu0 %v1643
  %6444 = vmatprep.subr.mxu0 %v1652
  %6445 = vmatpush1.msra.mxu0 %v1651
  %6446 = vmatprep.subr.mxu0 %v1660
  %6447 = vmatpush1.msra.mxu0 %v1659
  %6448 = vmatprep.subr.mxu0 %v1668
  %6449 = vmatpush1.msra.mxu0 %v1667
  %6450 = vmatprep.subr.mxu0 %v1676
  %6451 = vmatpush1.msra.mxu0 %v1675
  %6452 = vmatprep.subr.mxu0 %v1684
  %6453 = vmatpush1.msra.mxu0 %v1683
  %6454 = vmatprep.subr.mxu0 %v1692
  %6455 = vmatpush1.msra.mxu0 %v1691
  %6456 = vmatprep.subr.mxu0 %v1700
  %6457 = vmatpush1.msra.mxu0 %v1699
  %6458 = vmatprep.subr.mxu0 %v1708
  %6459 = vmatpush1.msra.mxu0 %v1707
  %6460 = vmatprep.subr.mxu0 %v1716
  %6461 = vmatpush1.msra.mxu0 %v1715
  %6462 = vmatprep.subr.mxu0 %v1724
  %6463 = vmatpush1.msra.mxu0 %v1723
  %6464 = vmatprep.subr.mxu0 %v1732
  %6465 = vmatpush1.msra.mxu0 %v1731
  %6466 = vmatprep.subr.mxu0 %v1740
  %6467 = vmatpush1.msra.mxu0 %v1739
  %6468 = vmatprep.subr.mxu0 %v1748
  %6469 = vmatpush1.msra.mxu0 %v1747
  %6470 = vmatprep.subr.mxu0 %v1756
  %6471 = vmatpush1.msra.mxu0 %v1755
  %6472 = vmatprep.subr.mxu0 %v1764
  %6473 = vmatpush1.msra.mxu0 %v1763
  %6474 = vmatprep.subr.mxu0 %v1772
  %6475 = vmatpush1.msra.mxu0 %v1771
  %6476 = vmatprep.subr.mxu0 %v1780
  %6477 = vmatpush1.msra.mxu0 %v1779
  %6478 = vmatprep.subr.mxu0 %v1788
  %6479 = vmatpush1.msra.mxu0 %v1787
  %6480 = vmatprep.subr.mxu0 %v1796
  %6481 = vmatpush1.msra.mxu0 %v1795
  %6482 = vmatprep.subr.mxu0 %v1804
  %6483 = vmatpush1.msra.mxu0 %v1803
  %6484 = vmatprep.subr.mxu0 %v1812
  %6485 = vmatpush1.msra.mxu0 %v1811
  %6486 = vmatprep.subr.mxu0 %v1820
  %6487 = vmatpush1.msra.mxu0 %v1819
  %6488 = vmatprep.subr.mxu0 %v1828
  %6489 = vmatpush1.msra.mxu0 %v1827
  %6490 = vmatprep.subr.mxu0 %v1836
  %6491 = vmatpush1.msra.mxu0 %v1835
  %6492 = vmatprep.subr.mxu0 %v1844
  %6493 = vmatpush1.msra.mxu0 %v1843
  %6494 = vmatprep.mubr.f32.mxu0 %v41
  %6495 = vmatmul.mubr.f32.gmra.mrb[0].mxu0 %v40
  %v6496 = vpop.f32.mrb[0].mxu0
  %v6497 = vadd.f32 %v6426, %v6496
  %v6498 = vpop.f32.mrb[0].mxu0
  %v6499 = vadd.f32 %v6428, %v6498
  %6500 = vdwg.mxu0
  %6501 = vmatprep.subr.mxu0 %v1852
  %6502 = vmatpush1.msra.mxu0 %v1851
  %6503 = vmatprep.subr.mxu0 %v1860
  %6504 = vmatpush1.msra.mxu0 %v1859
  %6505 = vmatprep.subr.mxu0 %v1868
  %6506 = vmatpush1.msra.mxu0 %v1867
  %6507 = vmatprep.subr.mxu0 %v1876
  %6508 = vmatpush1.msra.mxu0 %v1875
  %6509 = vmatprep.subr.mxu0 %v1884
  %6510 = vmatpush1.msra.mxu0 %v1883
  %6511 = vmatprep.subr.mxu0 %v1892
  %6512 = vmatpush1.msra.mxu0 %v1891
  %6513 = vmatprep.subr.mxu0 %v1900
  %6514 = vmatpush1.msra.mxu0 %v1899
  %6515 = vmatprep.subr.mxu0 %v1908
  %6516 = vmatpush1.msra.mxu0 %v1907
  %6517 = vmatprep.subr.mxu0 %v1916
  %6518 = vmatpush1.msra.mxu0 %v1915
  %6519 = vmatprep.subr.mxu0 %v1924
  %6520 = vmatpush1.msra.mxu0 %v1923
  %6521 = vmatprep.subr.mxu0 %v1932
  %6522 = vmatpush1.msra.mxu0 %v1931
  %6523 = vmatprep.subr.mxu0 %v1940
  %6524 = vmatpush1.msra.mxu0 %v1939
  %6525 = vmatprep.subr.mxu0 %v1948
  %6526 = vmatpush1.msra.mxu0 %v1947
  %6527 = vmatprep.subr.mxu0 %v1956
  %6528 = vmatpush1.msra.mxu0 %v1955
  %6529 = vmatprep.subr.mxu0 %v1964
  %6530 = vmatpush1.msra.mxu0 %v1963
  %6531 = vmatprep.subr.mxu0 %v1972
  %6532 = vmatpush1.msra.mxu0 %v1971
  %6533 = vmatprep.subr.mxu0 %v1980
  %6534 = vmatpush1.msra.mxu0 %v1979
  %6535 = vmatprep.subr.mxu0 %v1988
  %6536 = vmatpush1.msra.mxu0 %v1987
  %6537 = vmatprep.subr.mxu0 %v1996
  %6538 = vmatpush1.msra.mxu0 %v1995
  %6539 = vmatprep.subr.mxu0 %v2004
  %6540 = vmatpush1.msra.mxu0 %v2003
  %6541 = vmatprep.subr.mxu0 %v2012
  %6542 = vmatpush1.msra.mxu0 %v2011
  %6543 = vmatprep.subr.mxu0 %v2020
  %6544 = vmatpush1.msra.mxu0 %v2019
  %6545 = vmatprep.subr.mxu0 %v2028
  %6546 = vmatpush1.msra.mxu0 %v2027
  %6547 = vmatprep.subr.mxu0 %v2036
  %6548 = vmatpush1.msra.mxu0 %v2035
  %6549 = vmatprep.subr.mxu0 %v2044
  %6550 = vmatpush1.msra.mxu0 %v2043
  %6551 = vmatprep.subr.mxu0 %v2052
  %6552 = vmatpush1.msra.mxu0 %v2051
  %6553 = vmatprep.subr.mxu0 %v2060
  %6554 = vmatpush1.msra.mxu0 %v2059
  %6555 = vmatprep.subr.mxu0 %v2068
  %6556 = vmatpush1.msra.mxu0 %v2067
  %6557 = vmatprep.subr.mxu0 %v2076
  %6558 = vmatpush1.msra.mxu0 %v2075
  %6559 = vmatprep.subr.mxu0 %v2084
  %6560 = vmatpush1.msra.mxu0 %v2083
  %6561 = vmatprep.subr.mxu0 %v2092
  %6562 = vmatpush1.msra.mxu0 %v2091
  %6563 = vmatprep.subr.mxu0 %v2100
  %6564 = vmatpush1.msra.mxu0 %v2099
  %6565 = vmatprep.mubr.f32.mxu0 %v43
  %6566 = vmatmul.mubr.f32.gmra.mrb[0].mxu0 %v42
  %v6567 = vpop.f32.mrb[0].mxu0
  %v6568 = vadd.f32 %v6497, %v6567
  %v6569 = vpop.f32.mrb[0].mxu0
  %v6570 = vadd.f32 %v6499, %v6569
  %6571 = vdwg.mxu0
  %6572 = vmatprep.subr.mxu0 %v2108
  %6573 = vmatpush1.msra.mxu0 %v2107
  %6574 = vmatprep.subr.mxu0 %v2116
  %6575 = vmatpush1.msra.mxu0 %v2115
  %6576 = vmatprep.subr.mxu0 %v2124
  %6577 = vmatpush1.msra.mxu0 %v2123
  %6578 = vmatprep.subr.mxu0 %v2132
  %6579 = vmatpush1.msra.mxu0 %v2131
  %6580 = vmatprep.subr.mxu0 %v2140
  %6581 = vmatpush1.msra.mxu0 %v2139
  %6582 = vmatprep.subr.mxu0 %v2148
  %6583 = vmatpush1.msra.mxu0 %v2147
  %6584 = vmatprep.subr.mxu0 %v2156
  %6585 = vmatpush1.msra.mxu0 %v2155
  %6586 = vmatprep.subr.mxu0 %v2164
  %6587 = vmatpush1.msra.mxu0 %v2163
  %6588 = vmatprep.subr.mxu0 %v2172
  %6589 = vmatpush1.msra.mxu0 %v2171
  %6590 = vmatprep.subr.mxu0 %v2180
  %6591 = vmatpush1.msra.mxu0 %v2179
  %6592 = vmatprep.subr.mxu0 %v2188
  %6593 = vmatpush1.msra.mxu0 %v2187
  %6594 = vmatprep.subr.mxu0 %v2196
  %6595 = vmatpush1.msra.mxu0 %v2195
  %6596 = vmatprep.subr.mxu0 %v2204
  %6597 = vmatpush1.msra.mxu0 %v2203
  %6598 = vmatprep.subr.mxu0 %v2212
  %6599 = vmatpush1.msra.mxu0 %v2211
  %6600 = vmatprep.subr.mxu0 %v2220
  %6601 = vmatpush1.msra.mxu0 %v2219
  %6602 = vmatprep.subr.mxu0 %v2228
  %6603 = vmatpush1.msra.mxu0 %v2227
  %6604 = vmatprep.subr.mxu0 %v2236
  %6605 = vmatpush1.msra.mxu0 %v2235
  %6606 = vmatprep.subr.mxu0 %v2244
  %6607 = vmatpush1.msra.mxu0 %v2243
  %6608 = vmatprep.subr.mxu0 %v2252
  %6609 = vmatpush1.msra.mxu0 %v2251
  %6610 = vmatprep.subr.mxu0 %v2260
  %6611 = vmatpush1.msra.mxu0 %v2259
  %6612 = vmatprep.subr.mxu0 %v2268
  %6613 = vmatpush1.msra.mxu0 %v2267
  %6614 = vmatprep.subr.mxu0 %v2276
  %6615 = vmatpush1.msra.mxu0 %v2275
  %6616 = vmatprep.subr.mxu0 %v2284
  %6617 = vmatpush1.msra.mxu0 %v2283
  %6618 = vmatprep.subr.mxu0 %v2292
  %6619 = vmatpush1.msra.mxu0 %v2291
  %6620 = vmatprep.subr.mxu0 %v2300
  %6621 = vmatpush1.msra.mxu0 %v2299
  %6622 = vmatprep.subr.mxu0 %v2308
  %6623 = vmatpush1.msra.mxu0 %v2307
  %6624 = vmatprep.subr.mxu0 %v2316
  %6625 = vmatpush1.msra.mxu0 %v2315
  %6626 = vmatprep.subr.mxu0 %v2324
  %6627 = vmatpush1.msra.mxu0 %v2323
  %6628 = vmatprep.subr.mxu0 %v2332
  %6629 = vmatpush1.msra.mxu0 %v2331
  %6630 = vmatprep.subr.mxu0 %v2340
  %6631 = vmatpush1.msra.mxu0 %v2339
  %6632 = vmatprep.subr.mxu0 %v2348
  %6633 = vmatpush1.msra.mxu0 %v2347
  %6634 = vmatprep.subr.mxu0 %v2356
  %6635 = vmatpush1.msra.mxu0 %v2355
  %6636 = vmatprep.mubr.f32.mxu0 %v45
  %6637 = vmatmul.mubr.f32.gmra.mrb[0].mxu0 %v44
  %v6638 = vpop.f32.mrb[0].mxu0
  %v6639 = vadd.f32 %v6568, %v6638
  %v6640 = vpop.f32.mrb[0].mxu0
  %v6641 = vadd.f32 %v6570, %v6640
  %6642 = vdwg.mxu0
  %6643 = vmatprep.subr.mxu0 %v2364
  %6644 = vmatpush1.msra.mxu0 %v2363
  %6645 = vmatprep.subr.mxu0 %v2372
  %6646 = vmatpush1.msra.mxu0 %v2371
  %6647 = vmatprep.subr.mxu0 %v2380
  %6648 = vmatpush1.msra.mxu0 %v2379
  %6649 = vmatprep.subr.mxu0 %v2388
  %6650 = vmatpush1.msra.mxu0 %v2387
  %6651 = vmatprep.subr.mxu0 %v2396
  %6652 = vmatpush1.msra.mxu0 %v2395
  %6653 = vmatprep.subr.mxu0 %v2404
  %6654 = vmatpush1.msra.mxu0 %v2403
  %6655 = vmatprep.subr.mxu0 %v2412
  %6656 = vmatpush1.msra.mxu0 %v2411
  %6657 = vmatprep.subr.mxu0 %v2420
  %6658 = vmatpush1.msra.mxu0 %v2419
  %6659 = vmatprep.subr.mxu0 %v2428
  %6660 = vmatpush1.msra.mxu0 %v2427
  %6661 = vmatprep.subr.mxu0 %v2436
  %6662 = vmatpush1.msra.mxu0 %v2435
  %6663 = vmatprep.subr.mxu0 %v2444
  %6664 = vmatpush1.msra.mxu0 %v2443
  %6665 = vmatprep.subr.mxu0 %v2452
  %6666 = vmatpush1.msra.mxu0 %v2451
  %6667 = vmatprep.subr.mxu0 %v2460
  %6668 = vmatpush1.msra.mxu0 %v2459
  %6669 = vmatprep.subr.mxu0 %v2468
  %6670 = vmatpush1.msra.mxu0 %v2467
  %6671 = vmatprep.subr.mxu0 %v2476
  %6672 = vmatpush1.msra.mxu0 %v2475
  %6673 = vmatprep.subr.mxu0 %v2484
  %6674 = vmatpush1.msra.mxu0 %v2483
  %6675 = vmatprep.subr.mxu0 %v2492
  %6676 = vmatpush1.msra.mxu0 %v2491
  %6677 = vmatprep.subr.mxu0 %v2500
  %6678 = vmatpush1.msra.mxu0 %v2499
  %6679 = vmatprep.subr.mxu0 %v2508
  %6680 = vmatpush1.msra.mxu0 %v2507
  %6681 = vmatprep.subr.mxu0 %v2516
  %6682 = vmatpush1.msra.mxu0 %v2515
  %6683 = vmatprep.subr.mxu0 %v2524
  %6684 = vmatpush1.msra.mxu0 %v2523
  %6685 = vmatprep.subr.mxu0 %v2532
  %6686 = vmatpush1.msra.mxu0 %v2531
  %6687 = vmatprep.subr.mxu0 %v2540
  %6688 = vmatpush1.msra.mxu0 %v2539
  %6689 = vmatprep.subr.mxu0 %v2548
  %6690 = vmatpush1.msra.mxu0 %v2547
  %6691 = vmatprep.subr.mxu0 %v2556
  %6692 = vmatpush1.msra.mxu0 %v2555
  %6693 = vmatprep.subr.mxu0 %v2564
  %6694 = vmatpush1.msra.mxu0 %v2563
  %6695 = vmatprep.subr.mxu0 %v2572
  %6696 = vmatpush1.msra.mxu0 %v2571
  %6697 = vmatprep.subr.mxu0 %v2580
  %6698 = vmatpush1.msra.mxu0 %v2579
  %6699 = vmatprep.subr.mxu0 %v2588
  %6700 = vmatpush1.msra.mxu0 %v2587
  %6701 = vmatprep.subr.mxu0 %v2596
  %6702 = vmatpush1.msra.mxu0 %v2595
  %6703 = vmatprep.subr.mxu0 %v2604
  %6704 = vmatpush1.msra.mxu0 %v2603
  %6705 = vmatprep.subr.mxu0 %v2612
  %6706 = vmatpush1.msra.mxu0 %v2611
  %6707 = vmatprep.mubr.f32.mxu0 %v47
  %6708 = vmatmul.mubr.f32.gmra.mrb[0].mxu0 %v46
  %v6709 = vpop.f32.mrb[0].mxu0
  %v6710 = vadd.f32 %v6639, %v6709
  %v6711 = vpop.f32.mrb[0].mxu0
  %v6712 = vadd.f32 %v6641, %v6711
  %6713 = vdwg.mxu0
  %6714 = vmatprep.subr.mxu0 %v2620
  %6715 = vmatpush1.msra.mxu0 %v2619
  %6716 = vmatprep.subr.mxu0 %v2628
  %6717 = vmatpush1.msra.mxu0 %v2627
  %6718 = vmatprep.subr.mxu0 %v2636
  %6719 = vmatpush1.msra.mxu0 %v2635
  %6720 = vmatprep.subr.mxu0 %v2644
  %6721 = vmatpush1.msra.mxu0 %v2643
  %6722 = vmatprep.subr.mxu0 %v2652
  %6723 = vmatpush1.msra.mxu0 %v2651
  %6724 = vmatprep.subr.mxu0 %v2660
  %6725 = vmatpush1.msra.mxu0 %v2659
  %6726 = vmatprep.subr.mxu0 %v2668
  %6727 = vmatpush1.msra.mxu0 %v2667
  %6728 = vmatprep.subr.mxu0 %v2676
  %6729 = vmatpush1.msra.mxu0 %v2675
  %6730 = vmatprep.subr.mxu0 %v2684
  %6731 = vmatpush1.msra.mxu0 %v2683
  %6732 = vmatprep.subr.mxu0 %v2692
  %6733 = vmatpush1.msra.mxu0 %v2691
  %6734 = vmatprep.subr.mxu0 %v2700
  %6735 = vmatpush1.msra.mxu0 %v2699
  %6736 = vmatprep.subr.mxu0 %v2708
  %6737 = vmatpush1.msra.mxu0 %v2707
  %6738 = vmatprep.subr.mxu0 %v2716
  %6739 = vmatpush1.msra.mxu0 %v2715
  %6740 = vmatprep.subr.mxu0 %v2724
  %6741 = vmatpush1.msra.mxu0 %v2723
  %6742 = vmatprep.subr.mxu0 %v2732
  %6743 = vmatpush1.msra.mxu0 %v2731
  %6744 = vmatprep.subr.mxu0 %v2740
  %6745 = vmatpush1.msra.mxu0 %v2739
  %6746 = vmatprep.subr.mxu0 %v2748
  %6747 = vmatpush1.msra.mxu0 %v2747
  %6748 = vmatprep.subr.mxu0 %v2756
  %6749 = vmatpush1.msra.mxu0 %v2755
  %6750 = vmatprep.subr.mxu0 %v2764
  %6751 = vmatpush1.msra.mxu0 %v2763
  %6752 = vmatprep.subr.mxu0 %v2772
  %6753 = vmatpush1.msra.mxu0 %v2771
  %6754 = vmatprep.subr.mxu0 %v2780
  %6755 = vmatpush1.msra.mxu0 %v2779
  %6756 = vmatprep.subr.mxu0 %v2788
  %6757 = vmatpush1.msra.mxu0 %v2787
  %6758 = vmatprep.subr.mxu0 %v2796
  %6759 = vmatpush1.msra.mxu0 %v2795
  %6760 = vmatprep.subr.mxu0 %v2804
  %6761 = vmatpush1.msra.mxu0 %v2803
  %6762 = vmatprep.subr.mxu0 %v2812
  %6763 = vmatpush1.msra.mxu0 %v2811
  %6764 = vmatprep.subr.mxu0 %v2820
  %6765 = vmatpush1.msra.mxu0 %v2819
  %6766 = vmatprep.subr.mxu0 %v2828
  %6767 = vmatpush1.msra.mxu0 %v2827
  %6768 = vmatprep.subr.mxu0 %v2836
  %6769 = vmatpush1.msra.mxu0 %v2835
  %6770 = vmatprep.subr.mxu0 %v2844
  %6771 = vmatpush1.msra.mxu0 %v2843
  %6772 = vmatprep.subr.mxu0 %v2852
  %6773 = vmatpush1.msra.mxu0 %v2851
  %6774 = vmatprep.subr.mxu0 %v2860
  %6775 = vmatpush1.msra.mxu0 %v2859
  %6776 = vmatprep.subr.mxu0 %v2868
  %6777 = vmatpush1.msra.mxu0 %v2867
  %6778 = vmatprep.mubr.f32.mxu0 %v49
  %6779 = vmatmul.mubr.f32.gmra.mrb[0].mxu0 %v48
  %v6780 = vpop.f32.mrb[0].mxu0
  %v6781 = vadd.f32 %v6710, %v6780
  %v6782 = vpop.f32.mrb[0].mxu0
  %v6783 = vadd.f32 %v6712, %v6782
  %6784 = vdwg.mxu0
  %6785 = vmatprep.subr.mxu0 %v2876
  %6786 = vmatpush1.msra.mxu0 %v2875
  %6787 = vmatprep.subr.mxu0 %v2884
  %6788 = vmatpush1.msra.mxu0 %v2883
  %6789 = vmatprep.subr.mxu0 %v2892
  %6790 = vmatpush1.msra.mxu0 %v2891
  %6791 = vmatprep.subr.mxu0 %v2900
  %6792 = vmatpush1.msra.mxu0 %v2899
  %6793 = vmatprep.subr.mxu0 %v2908
  %6794 = vmatpush1.msra.mxu0 %v2907
  %6795 = vmatprep.subr.mxu0 %v2916
  %6796 = vmatpush1.msra.mxu0 %v2915
  %6797 = vmatprep.subr.mxu0 %v2924
  %6798 = vmatpush1.msra.mxu0 %v2923
  %6799 = vmatprep.subr.mxu0 %v2932
  %6800 = vmatpush1.msra.mxu0 %v2931
  %6801 = vmatprep.subr.mxu0 %v2940
  %6802 = vmatpush1.msra.mxu0 %v2939
  %6803 = vmatprep.subr.mxu0 %v2948
  %6804 = vmatpush1.msra.mxu0 %v2947
  %6805 = vmatprep.subr.mxu0 %v2956
  %6806 = vmatpush1.msra.mxu0 %v2955
  %6807 = vmatprep.subr.mxu0 %v2964
  %6808 = vmatpush1.msra.mxu0 %v2963
  %6809 = vmatprep.subr.mxu0 %v2972
  %6810 = vmatpush1.msra.mxu0 %v2971
  %6811 = vmatprep.subr.mxu0 %v2980
  %6812 = vmatpush1.msra.mxu0 %v2979
  %6813 = vmatprep.subr.mxu0 %v2988
  %6814 = vmatpush1.msra.mxu0 %v2987
  %6815 = vmatprep.subr.mxu0 %v2996
  %6816 = vmatpush1.msra.mxu0 %v2995
  %6817 = vmatprep.subr.mxu0 %v3004
  %6818 = vmatpush1.msra.mxu0 %v3003
  %6819 = vmatprep.subr.mxu0 %v3012
  %6820 = vmatpush1.msra.mxu0 %v3011
  %6821 = vmatprep.subr.mxu0 %v3020
  %6822 = vmatpush1.msra.mxu0 %v3019
  %6823 = vmatprep.subr.mxu0 %v3028
  %6824 = vmatpush1.msra.mxu0 %v3027
  %6825 = vmatprep.subr.mxu0 %v3036
  %6826 = vmatpush1.msra.mxu0 %v3035
  %6827 = vmatprep.subr.mxu0 %v3044
  %6828 = vmatpush1.msra.mxu0 %v3043
  %6829 = vmatprep.subr.mxu0 %v3052
  %6830 = vmatpush1.msra.mxu0 %v3051
  %6831 = vmatprep.subr.mxu0 %v3060
  %6832 = vmatpush1.msra.mxu0 %v3059
  %6833 = vmatprep.subr.mxu0 %v3068
  %6834 = vmatpush1.msra.mxu0 %v3067
  %6835 = vmatprep.subr.mxu0 %v3076
  %6836 = vmatpush1.msra.mxu0 %v3075
  %6837 = vmatprep.subr.mxu0 %v3084
  %6838 = vmatpush1.msra.mxu0 %v3083
  %6839 = vmatprep.subr.mxu0 %v3092
  %6840 = vmatpush1.msra.mxu0 %v3091
  %6841 = vmatprep.subr.mxu0 %v3100
  %6842 = vmatpush1.msra.mxu0 %v3099
  %6843 = vmatprep.subr.mxu0 %v3108
  %6844 = vmatpush1.msra.mxu0 %v3107
  %6845 = vmatprep.subr.mxu0 %v3116
  %6846 = vmatpush1.msra.mxu0 %v3115
  %6847 = vmatprep.subr.mxu0 %v3124
  %6848 = vmatpush1.msra.mxu0 %v3123
  %6849 = vmatprep.mubr.f32.mxu0 %v51
  %6850 = vmatmul.mubr.f32.gmra.mrb[0].mxu0 %v50
  %v6851 = vpop.f32.mrb[0].mxu0
  %v6852 = vadd.f32 %v6781, %v6851
  %v6853 = vpop.f32.mrb[0].mxu0
  %v6854 = vadd.f32 %v6783, %v6853
  %6855 = vdwg.mxu0
  %6856 = vmatprep.subr.mxu0 %v3132
  %6857 = vmatpush1.msra.mxu0 %v3131
  %6858 = vmatprep.subr.mxu0 %v3140
  %6859 = vmatpush1.msra.mxu0 %v3139
  %6860 = vmatprep.subr.mxu0 %v3148
  %6861 = vmatpush1.msra.mxu0 %v3147
  %6862 = vmatprep.subr.mxu0 %v3156
  %6863 = vmatpush1.msra.mxu0 %v3155
  %6864 = vmatprep.subr.mxu0 %v3164
  %6865 = vmatpush1.msra.mxu0 %v3163
  %6866 = vmatprep.subr.mxu0 %v3172
  %6867 = vmatpush1.msra.mxu0 %v3171
  %6868 = vmatprep.subr.mxu0 %v3180
  %6869 = vmatpush1.msra.mxu0 %v3179
  %6870 = vmatprep.subr.mxu0 %v3188
  %6871 = vmatpush1.msra.mxu0 %v3187
  %6872 = vmatprep.subr.mxu0 0.0
  %6873 = vmatpush1.msra.mxu0 0.0
  %6874 = vmatprep.subr.mxu0 0.0
  %6875 = vmatpush1.msra.mxu0 0.0
  %6876 = vmatprep.subr.mxu0 0.0
  %6877 = vmatpush1.msra.mxu0 0.0
  %6878 = vmatprep.subr.mxu0 0.0
  %6879 = vmatpush1.msra.mxu0 0.0
  %6880 = vmatprep.subr.mxu0 0.0
  %6881 = vmatpush1.msra.mxu0 0.0
  %6882 = vmatprep.subr.mxu0 0.0
  %6883 = vmatpush1.msra.mxu0 0.0
  %6884 = vmatprep.subr.mxu0 0.0
  %6885 = vmatpush1.msra.mxu0 0.0
  %6886 = vmatprep.subr.mxu0 0.0
  %6887 = vmatpush1.msra.mxu0 0.0
  %6888 = vmatprep.subr.mxu0 0.0
  %6889 = vmatpush1.msra.mxu0 0.0
  %6890 = vmatprep.subr.mxu0 0.0
  %6891 = vmatpush1.msra.mxu0 0.0
  %6892 = vmatprep.subr.mxu0 0.0
  %6893 = vmatpush1.msra.mxu0 0.0
  %6894 = vmatprep.subr.mxu0 0.0
  %6895 = vmatpush1.msra.mxu0 0.0
  %6896 = vmatprep.subr.mxu0 0.0
  %6897 = vmatpush1.msra.mxu0 0.0
  %6898 = vmatprep.subr.mxu0 0.0
  %6899 = vmatpush1.msra.mxu0 0.0
  %6900 = vmatprep.subr.mxu0 0.0
  %6901 = vmatpush1.msra.mxu0 0.0
  %6902 = vmatprep.subr.mxu0 0.0
  %6903 = vmatpush1.msra.mxu0 0.0
  %6904 = vmatprep.subr.mxu0 0.0
  %6905 = vmatpush1.msra.mxu0 0.0
  %6906 = vmatprep.subr.mxu0 0.0
  %6907 = vmatpush1.msra.mxu0 0.0
  %6908 = vmatprep.subr.mxu0 0.0
  %6909 = vmatpush1.msra.mxu0 0.0
  %6910 = vmatprep.subr.mxu0 0.0
  %6911 = vmatpush1.msra.mxu0 0.0
  %6912 = vmatprep.subr.mxu0 0.0
  %6913 = vmatpush1.msra.mxu0 0.0
  %6914 = vmatprep.subr.mxu0 0.0
  %6915 = vmatpush1.msra.mxu0 0.0
  %6916 = vmatprep.subr.mxu0 0.0
  %6917 = vmatpush1.msra.mxu0 0.0
  %6918 = vmatprep.subr.mxu0 0.0
  %6919 = vmatpush1.msra.mxu0 0.0
  %6920 = vmatprep.mubr.f32.mxu0 0.0
  %6921 = vmatmul.mubr.f32.gmra.mrb[0].mxu0 %v3233
  %v6922 = vpop.f32.mrb[0].mxu0
  %v6923 = vadd.f32 %v6852, %v6922
  %v6924 = vpop.f32.mrb[0].mxu0
  %v6925 = vadd.f32 %v6854, %v6924
  %6926 = vdwg.mxu0
  %v6927 = vmax.f32 %v4154, 0.0
  %v6928 = vmax.f32 %v4156, 0.0
  %v6929 = vmax.f32 %v5077, 0.0
  %v6930 = vmax.f32 %v5079, 0.0
  %v6931 = vmax.f32 %v6000, 0.0
  %v6932 = vmax.f32 %v6002, 0.0
  %v6933 = vmax.f32 %v6923, 0.0
  %v6934 = vmax.f32 %v6925, 0.0
  %v6935 = vld [vmem:[%s3] sm:$0xff]
  %v6936 = vld [vmem:[%s3 + $0x8] sm:$0xff]
  %v6937 = vld [vmem:[%s3 + $0x10] sm:$0xff]
  %v6938 = vld [vmem:[%s3 + $0x18] sm:$0xff]
  %v6939 = vld [vmem:[%s3 + $0x20] sm:$0xff]
  %v6940 = vld [vmem:[%s3 + $0x28] sm:$0xff]
  %v6941 = vld [vmem:[%s3 + $0x30] sm:$0xff]
  %v6942 = vld [vmem:[%s3 + $0x38] sm:$0xff]
  %v6943 = vld [vmem:[%s3 + $0x40] sm:$0xff]
  %v6944 = vld [vmem:[%s3 + $0x48] sm:$0xff]
  %v6945 = vld [vmem:[%s3 + $0x50] sm:$0xff]
  %v6946 = vld [vmem:[%s3 + $0x58] sm:$0xff]
  %v6947 = vld [vmem:[%s3 + $0x60] sm:$0xff]
  %v6948 = vld [vmem:[%s3 + $0x68] sm:$0xff]
  %v6949 = vld [vmem:[%s3 + $0x70] sm:$0xff]
  %v6950 = vld [vmem:[%s3 + $0x78] sm:$0xff]
  %v6951 = vld [vmem:[%s3 + $0x80] sm:$0xff]
  %v6952 = vld [vmem:[%s3 + $0x88] sm:$0xff]
  %v6953 = vld [vmem:[%s3 + $0x90] sm:$0xff]
  %v6954 = vld [vmem:[%s3 + $0x98] sm:$0xff]
  %v6955 = vld [vmem:[%s3 + $0xa0] sm:$0xff]
  %v6956 = vld [vmem:[%s3 + $0xa8] sm:$0xff]
  %v6957 = vld [vmem:[%s3 + $0xb0] sm:$0xff]
  %v6958 = vld [vmem:[%s3 + $0xb8] sm:$0xff]
  %v6959 = vld [vmem:[%s3 + $0xc0] sm:$0xff]
  %v6960 = vld [vmem:[%s3 + $0xc8] sm:$0xff]
  %v6961 = vld [vmem:[%s3 + $0xd0] sm:$0xff]
  %v6962 = vld [vmem:[%s3 + $0xd8] sm:$0xff]
  %v6963 = vld [vmem:[%s3 + $0xe0] sm:$0xff]
  %v6964 = vld [vmem:[%s3 + $0xe8] sm:$0xff]
  %v6965 = vld [vmem:[%s3 + $0xf0] sm:$0xff]
  %v6966 = vld [vmem:[%s3 + $0xf8] sm:$0xff]
  %v6967 = vld [vmem:[%s3 + $0x100] sm:$0xff]
  %v6968 = vld [vmem:[%s3 + $0x108] sm:$0xff]
  %v6969 = vld [vmem:[%s3 + $0x110] sm:$0xff]
  %v6970 = vld [vmem:[%s3 + $0x118] sm:$0xff]
  %v6971 = vld [vmem:[%s3 + $0x120] sm:$0xff]
  %v6972 = vld [vmem:[%s3 + $0x128] sm:$0xff]
  %v6973 = vld [vmem:[%s3 + $0x130] sm:$0xff]
  %v6974 = vld [vmem:[%s3 + $0x138] sm:$0xff]
  %v6975 = vld [vmem:[%s3 + $0x140] sm:$0xff]
  %v6976 = vld [vmem:[%s3 + $0x148] sm:$0xff]
  %v6977 = vld [vmem:[%s3 + $0x150] sm:$0xff]
  %v6978 = vld [vmem:[%s3 + $0x158] sm:$0xff]
  %v6979 = vld [vmem:[%s3 + $0x160] sm:$0xff]
  %v6980 = vld [vmem:[%s3 + $0x168] sm:$0xff]
  %v6981 = vld [vmem:[%s3 + $0x170] sm:$0xff]
  %v6982 = vld [vmem:[%s3 + $0x178] sm:$0xff]
  %v6983 = vld [vmem:[%s3 + $0x180] sm:$0xff]
  %v6984 = vld [vmem:[%s3 + $0x188] sm:$0xff]
  %v6985 = vld [vmem:[%s3 + $0x190] sm:$0xff]
  %v6986 = vld [vmem:[%s3 + $0x198] sm:$0xff]
  %v6987 = vld [vmem:[%s3 + $0x1a0] sm:$0xff]
  %v6988 = vld [vmem:[%s3 + $0x1a8] sm:$0xff]
  %v6989 = vld [vmem:[%s3 + $0x1b0] sm:$0xff]
  %v6990 = vld [vmem:[%s3 + $0x1b8] sm:$0xff]
  %v6991 = vld [vmem:[%s3 + $0x1c0] sm:$0xff]
  %v6992 = vld [vmem:[%s3 + $0x1c8] sm:$0xff]
  %v6993 = vld [vmem:[%s3 + $0x1d0] sm:$0xff]
  %v6994 = vld [vmem:[%s3 + $0x1d8] sm:$0xff]
  %v6995 = vld [vmem:[%s3 + $0x1e0] sm:$0xff]
  %v6996 = vld [vmem:[%s3 + $0x1e8] sm:$0xff]
  %v6997 = vld [vmem:[%s3 + $0x1f0] sm:$0xff]
  %v6998 = vld [vmem:[%s3 + $0x1f8] sm:$0xff]
  %v6999 = vld [vmem:[%s4] sm:$0x1]
  %v7001 = vlaneseq
  %v7002 = vshrl.u32 %v7001, 7
  %v7003 = vsub.s32 0, %v7002
  %v7004 = vrot.slane %v6999, %v7003
  %7006 = vmatprep.subr.mxu0 0.0
  %7007 = vmatpush1.msra.mxu0 %v6935
  %7008 = vmatprep.subr.mxu0 0.0
  %7009 = vmatpush1.msra.mxu0 %v6936
  %7010 = vmatprep.subr.mxu0 0.0
  %7011 = vmatpush1.msra.mxu0 %v6937
  %7012 = vmatprep.subr.mxu0 0.0
  %7013 = vmatpush1.msra.mxu0 %v6938
  %7014 = vmatprep.subr.mxu0 0.0
  %7015 = vmatpush1.msra.mxu0 %v6939
  %7016 = vmatprep.subr.mxu0 0.0
  %7017 = vmatpush1.msra.mxu0 %v6940
  %7018 = vmatprep.subr.mxu0 0.0
  %7019 = vmatpush1.msra.mxu0 %v6941
  %7020 = vmatprep.subr.mxu0 0.0
  %7021 = vmatpush1.msra.mxu0 %v6942
  %7022 = vmatprep.subr.mxu0 0.0
  %7023 = vmatpush1.msra.mxu0 %v6943
  %7024 = vmatprep.subr.mxu0 0.0
  %7025 = vmatpush1.msra.mxu0 %v6944
  %7026 = vmatprep.subr.mxu0 0.0
  %7027 = vmatpush1.msra.mxu0 %v6945
  %7028 = vmatprep.subr.mxu0 0.0
  %7029 = vmatpush1.msra.mxu0 %v6946
  %7030 = vmatprep.subr.mxu0 0.0
  %7031 = vmatpush1.msra.mxu0 %v6947
  %7032 = vmatprep.subr.mxu0 0.0
  %7033 = vmatpush1.msra.mxu0 %v6948
  %7034 = vmatprep.subr.mxu0 0.0
  %7035 = vmatpush1.msra.mxu0 %v6949
  %7036 = vmatprep.subr.mxu0 0.0
  %7037 = vmatpush1.msra.mxu0 %v6950
  %7038 = vmatprep.subr.mxu0 0.0
  %7039 = vmatpush1.msra.mxu0 %v6951
  %7040 = vmatprep.subr.mxu0 0.0
  %7041 = vmatpush1.msra.mxu0 %v6952
  %7042 = vmatprep.subr.mxu0 0.0
  %7043 = vmatpush1.msra.mxu0 %v6953
  %7044 = vmatprep.subr.mxu0 0.0
  %7045 = vmatpush1.msra.mxu0 %v6954
  %7046 = vmatprep.subr.mxu0 0.0
  %7047 = vmatpush1.msra.mxu0 %v6955
  %7048 = vmatprep.subr.mxu0 0.0
  %7049 = vmatpush1.msra.mxu0 %v6956
  %7050 = vmatprep.subr.mxu0 0.0
  %7051 = vmatpush1.msra.mxu0 %v6957
  %7052 = vmatprep.subr.mxu0 0.0
  %7053 = vmatpush1.msra.mxu0 %v6958
  %7054 = vmatprep.subr.mxu0 0.0
  %7055 = vmatpush1.msra.mxu0 %v6959
  %7056 = vmatprep.subr.mxu0 0.0
  %7057 = vmatpush1.msra.mxu0 %v6960
  %7058 = vmatprep.subr.mxu0 0.0
  %7059 = vmatpush1.msra.mxu0 %v6961
  %7060 = vmatprep.subr.mxu0 0.0
  %7061 = vmatpush1.msra.mxu0 %v6962
  %7062 = vmatprep.subr.mxu0 0.0
  %7063 = vmatpush1.msra.mxu0 %v6963
  %7064 = vmatprep.subr.mxu0 0.0
  %7065 = vmatpush1.msra.mxu0 %v6964
  %7066 = vmatprep.subr.mxu0 0.0
  %7067 = vmatpush1.msra.mxu0 %v6965
  %7068 = vmatprep.subr.mxu0 0.0
  %7069 = vmatpush1.msra.mxu0 %v6966
  %7070 = vmatprep.mubr.f32.mxu0 %v6928
  %7071 = vmatmul.mubr.f32.gmra.mrb[0].mxu0 %v6927
  %v7072 = vpop.f32.mrb[0].mxu0
  %v7073 = vadd.f32 %v7004, %v7072
  %v7074 = vpop.f32.mrb[0].mxu0
  %7075 = vdwg.mxu0
  %7076 = vmatprep.subr.mxu0 0.0
  %7077 = vmatpush1.msra.mxu0 %v6967
  %7078 = vmatprep.subr.mxu0 0.0
  %7079 = vmatpush1.msra.mxu0 %v6968
  %7080 = vmatprep.subr.mxu0 0.0
  %7081 = vmatpush1.msra.mxu0 %v6969
  %7082 = vmatprep.subr.mxu0 0.0
  %7083 = vmatpush1.msra.mxu0 %v6970
  %7084 = vmatprep.subr.mxu0 0.0
  %7085 = vmatpush1.msra.mxu0 %v6971
  %7086 = vmatprep.subr.mxu0 0.0
  %7087 = vmatpush1.msra.mxu0 %v6972
  %7088 = vmatprep.subr.mxu0 0.0
  %7089 = vmatpush1.msra.mxu0 %v6973
  %7090 = vmatprep.subr.mxu0 0.0
  %7091 = vmatpush1.msra.mxu0 %v6974
  %7092 = vmatprep.subr.mxu0 0.0
  %7093 = vmatpush1.msra.mxu0 %v6975
  %7094 = vmatprep.subr.mxu0 0.0
  %7095 = vmatpush1.msra.mxu0 %v6976
  %7096 = vmatprep.subr.mxu0 0.0
  %7097 = vmatpush1.msra.mxu0 %v6977
  %7098 = vmatprep.subr.mxu0 0.0
  %7099 = vmatpush1.msra.mxu0 %v6978
  %7100 = vmatprep.subr.mxu0 0.0
  %7101 = vmatpush1.msra.mxu0 %v6979
  %7102 = vmatprep.subr.mxu0 0.0
  %7103 = vmatpush1.msra.mxu0 %v6980
  %7104 = vmatprep.subr.mxu0 0.0
  %7105 = vmatpush1.msra.mxu0 %v6981
  %7106 = vmatprep.subr.mxu0 0.0
  %7107 = vmatpush1.msra.mxu0 %v6982
  %7108 = vmatprep.subr.mxu0 0.0
  %7109 = vmatpush1.msra.mxu0 %v6983
  %7110 = vmatprep.subr.mxu0 0.0
  %7111 = vmatpush1.msra.mxu0 %v6984
  %7112 = vmatprep.subr.mxu0 0.0
  %7113 = vmatpush1.msra.mxu0 %v6985
  %7114 = vmatprep.subr.mxu0 0.0
  %7115 = vmatpush1.msra.mxu0 %v6986
  %7116 = vmatprep.subr.mxu0 0.0
  %7117 = vmatpush1.msra.mxu0 %v6987
  %7118 = vmatprep.subr.mxu0 0.0
  %7119 = vmatpush1.msra.mxu0 %v6988
  %7120 = vmatprep.subr.mxu0 0.0
  %7121 = vmatpush1.msra.mxu0 %v6989
  %7122 = vmatprep.subr.mxu0 0.0
  %7123 = vmatpush1.msra.mxu0 %v6990
  %7124 = vmatprep.subr.mxu0 0.0
  %7125 = vmatpush1.msra.mxu0 %v6991
  %7126 = vmatprep.subr.mxu0 0.0
  %7127 = vmatpush1.msra.mxu0 %v6992
  %7128 = vmatprep.subr.mxu0 0.0
  %7129 = vmatpush1.msra.mxu0 %v6993
  %7130 = vmatprep.subr.mxu0 0.0
  %7131 = vmatpush1.msra.mxu0 %v6994
  %7132 = vmatprep.subr.mxu0 0.0
  %7133 = vmatpush1.msra.mxu0 %v6995
  %7134 = vmatprep.subr.mxu0 0.0
  %7135 = vmatpush1.msra.mxu0 %v6996
  %7136 = vmatprep.subr.mxu0 0.0
  %7137 = vmatpush1.msra.mxu0 %v6997
  %7138 = vmatprep.subr.mxu0 0.0
  %7139 = vmatpush1.msra.mxu0 %v6998
  %7140 = vmatprep.mubr.f32.mxu0 %v6930
  %7141 = vmatmul.mubr.f32.gmra.mrb[0].mxu0 %v6929
  %v7142 = vpop.f32.mrb[0].mxu0
  %v7143 = vadd.f32 %v7073, %v7142
  %v7144 = vpop.f32.mrb[0].mxu0
  %7145 = vdwg.mxu0
  %v7146 = vld [vmem:[%s5] sm:$0xff]
  %v7147 = vld [vmem:[%s5 + $0x8] sm:$0xff]
  %v7148 = vld [vmem:[%s5 + $0x10] sm:$0xff]
  %v7149 = vld [vmem:[%s5 + $0x18] sm:$0xff]
  %v7150 = vld [vmem:[%s5 + $0x20] sm:$0xff]
  %v7151 = vld [vmem:[%s5 + $0x28] sm:$0xff]
  %v7152 = vld [vmem:[%s5 + $0x30] sm:$0xff]
  %v7153 = vld [vmem:[%s5 + $0x38] sm:$0xff]
  %v7154 = vld [vmem:[%s5 + $0x40] sm:$0xff]
  %v7155 = vld [vmem:[%s5 + $0x48] sm:$0xff]
  %v7156 = vld [vmem:[%s5 + $0x50] sm:$0xff]
  %v7157 = vld [vmem:[%s5 + $0x58] sm:$0xff]
  %v7158 = vld [vmem:[%s5 + $0x60] sm:$0xff]
  %v7159 = vld [vmem:[%s5 + $0x68] sm:$0xff]
  %v7160 = vld [vmem:[%s5 + $0x70] sm:$0xff]
  %v7161 = vld [vmem:[%s5 + $0x78] sm:$0xff]
  %v7162 = vld [vmem:[%s5 + $0x80] sm:$0xff]
  %v7163 = vld [vmem:[%s5 + $0x88] sm:$0xff]
  %v7164 = vld [vmem:[%s5 + $0x90] sm:$0xff]
  %v7165 = vld [vmem:[%s5 + $0x98] sm:$0xff]
  %v7166 = vld [vmem:[%s5 + $0xa0] sm:$0xff]
  %v7167 = vld [vmem:[%s5 + $0xa8] sm:$0xff]
  %v7168 = vld [vmem:[%s5 + $0xb0] sm:$0xff]
  %v7169 = vld [vmem:[%s5 + $0xb8] sm:$0xff]
  %v7170 = vld [vmem:[%s5 + $0xc0] sm:$0xff]
  %v7171 = vld [vmem:[%s5 + $0xc8] sm:$0xff]
  %v7172 = vld [vmem:[%s5 + $0xd0] sm:$0xff]
  %v7173 = vld [vmem:[%s5 + $0xd8] sm:$0xff]
  %v7174 = vld [vmem:[%s5 + $0xe0] sm:$0xff]
  %v7175 = vld [vmem:[%s5 + $0xe8] sm:$0xff]
  %v7176 = vld [vmem:[%s5 + $0xf0] sm:$0xff]
  %v7177 = vld [vmem:[%s5 + $0xf8] sm:$0xff]
  %v7178 = vld [vmem:[%s5 + $0x100] sm:$0xff]
  %v7179 = vld [vmem:[%s5 + $0x108] sm:$0xff]
  %v7180 = vld [vmem:[%s5 + $0x110] sm:$0xff]
  %v7181 = vld [vmem:[%s5 + $0x118] sm:$0xff]
  %v7182 = vld [vmem:[%s5 + $0x120] sm:$0xff]
  %v7183 = vld [vmem:[%s5 + $0x128] sm:$0xff]
  %v7184 = vld [vmem:[%s5 + $0x130] sm:$0xff]
  %v7185 = vld [vmem:[%s5 + $0x138] sm:$0xff]
  %v7186 = vld [vmem:[%s5 + $0x140] sm:$0xff]
  %v7187 = vld [vmem:[%s5 + $0x148] sm:$0xff]
  %v7188 = vld [vmem:[%s5 + $0x150] sm:$0xff]
  %v7189 = vld [vmem:[%s5 + $0x158] sm:$0xff]
  %v7190 = vld [vmem:[%s5 + $0x160] sm:$0xff]
  %v7191 = vld [vmem:[%s5 + $0x168] sm:$0xff]
  %v7192 = vld [vmem:[%s5 + $0x170] sm:$0xff]
  %v7193 = vld [vmem:[%s5 + $0x178] sm:$0xff]
  %v7194 = vld [vmem:[%s5 + $0x180] sm:$0xff]
  %v7195 = vld [vmem:[%s5 + $0x188] sm:$0xff]
  %v7196 = vld [vmem:[%s5 + $0x190] sm:$0xff]
  %v7197 = vld [vmem:[%s5 + $0x198] sm:$0xff]
  %v7198 = vld [vmem:[%s5 + $0x1a0] sm:$0xff]
  %v7199 = vld [vmem:[%s5 + $0x1a8] sm:$0xff]
  %v7200 = vld [vmem:[%s5 + $0x1b0] sm:$0xff]
  %v7201 = vld [vmem:[%s5 + $0x1b8] sm:$0xff]
  %v7202 = vld [vmem:[%s5 + $0x1c0] sm:$0xff]
  %v7203 = vld [vmem:[%s5 + $0x1c8] sm:$0xff]
  %v7204 = vld [vmem:[%s5 + $0x1d0] sm:$0xff]
  %v7205 = vld [vmem:[%s5 + $0x1d8] sm:$0xff]
  %v7206 = vld [vmem:[%s5 + $0x1e0] sm:$0xff]
  %v7207 = vld [vmem:[%s5 + $0x1e8] sm:$0xff]
  %v7208 = vld [vmem:[%s5 + $0x1f0] sm:$0xff]
  %v7209 = vld [vmem:[%s5 + $0x1f8] sm:$0xff]
  %v7210 = vld [vmem:[#allocation2] sm:$0x1]
  %v7212 = vlaneseq
  %v7213 = vshrl.u32 %v7212, 7
  %v7214 = vsub.s32 0, %v7213
  %v7215 = vrot.slane %v7210, %v7214
  %7217 = vmatprep.subr.mxu0 0.0
  %7218 = vmatpush1.msra.mxu0 %v7146
  %7219 = vmatprep.subr.mxu0 0.0
  %7220 = vmatpush1.msra.mxu0 %v7147
  %7221 = vmatprep.subr.mxu0 0.0
  %7222 = vmatpush1.msra.mxu0 %v7148
  %7223 = vmatprep.subr.mxu0 0.0
  %7224 = vmatpush1.msra.mxu0 %v7149
  %7225 = vmatprep.subr.mxu0 0.0
  %7226 = vmatpush1.msra.mxu0 %v7150
  %7227 = vmatprep.subr.mxu0 0.0
  %7228 = vmatpush1.msra.mxu0 %v7151
  %7229 = vmatprep.subr.mxu0 0.0
  %7230 = vmatpush1.msra.mxu0 %v7152
  %7231 = vmatprep.subr.mxu0 0.0
  %7232 = vmatpush1.msra.mxu0 %v7153
  %7233 = vmatprep.subr.mxu0 0.0
  %7234 = vmatpush1.msra.mxu0 %v7154
  %7235 = vmatprep.subr.mxu0 0.0
  %7236 = vmatpush1.msra.mxu0 %v7155
  %7237 = vmatprep.subr.mxu0 0.0
  %7238 = vmatpush1.msra.mxu0 %v7156
  %7239 = vmatprep.subr.mxu0 0.0
  %7240 = vmatpush1.msra.mxu0 %v7157
  %7241 = vmatprep.subr.mxu0 0.0
  %7242 = vmatpush1.msra.mxu0 %v7158
  %7243 = vmatprep.subr.mxu0 0.0
  %7244 = vmatpush1.msra.mxu0 %v7159
  %7245 = vmatprep.subr.mxu0 0.0
  %7246 = vmatpush1.msra.mxu0 %v7160
  %7247 = vmatprep.subr.mxu0 0.0
  %7248 = vmatpush1.msra.mxu0 %v7161
  %7249 = vmatprep.subr.mxu0 0.0
  %7250 = vmatpush1.msra.mxu0 %v7162
  %7251 = vmatprep.subr.mxu0 0.0
  %7252 = vmatpush1.msra.mxu0 %v7163
  %7253 = vmatprep.subr.mxu0 0.0
  %7254 = vmatpush1.msra.mxu0 %v7164
  %7255 = vmatprep.subr.mxu0 0.0
  %7256 = vmatpush1.msra.mxu0 %v7165
  %7257 = vmatprep.subr.mxu0 0.0
  %7258 = vmatpush1.msra.mxu0 %v7166
  %7259 = vmatprep.subr.mxu0 0.0
  %7260 = vmatpush1.msra.mxu0 %v7167
  %7261 = vmatprep.subr.mxu0 0.0
  %7262 = vmatpush1.msra.mxu0 %v7168
  %7263 = vmatprep.subr.mxu0 0.0
  %7264 = vmatpush1.msra.mxu0 %v7169
  %7265 = vmatprep.subr.mxu0 0.0
  %7266 = vmatpush1.msra.mxu0 %v7170
  %7267 = vmatprep.subr.mxu0 0.0
  %7268 = vmatpush1.msra.mxu0 %v7171
  %7269 = vmatprep.subr.mxu0 0.0
  %7270 = vmatpush1.msra.mxu0 %v7172
  %7271 = vmatprep.subr.mxu0 0.0
  %7272 = vmatpush1.msra.mxu0 %v7173
  %7273 = vmatprep.subr.mxu0 0.0
  %7274 = vmatpush1.msra.mxu0 %v7174
  %7275 = vmatprep.subr.mxu0 0.0
  %7276 = vmatpush1.msra.mxu0 %v7175
  %7277 = vmatprep.subr.mxu0 0.0
  %7278 = vmatpush1.msra.mxu0 %v7176
  %7279 = vmatprep.subr.mxu0 0.0
  %7280 = vmatpush1.msra.mxu0 %v7177
  %7281 = vmatprep.mubr.f32.mxu0 %v6932
  %7282 = vmatmul.mubr.f32.gmra.mrb[0].mxu0 %v6931
  %v7283 = vpop.f32.mrb[0].mxu0
  %v7284 = vadd.f32 %v7215, %v7283
  %v7285 = vpop.f32.mrb[0].mxu0
  %7286 = vdwg.mxu0
  %7287 = vmatprep.subr.mxu0 0.0
  %7288 = vmatpush1.msra.mxu0 %v7178
  %7289 = vmatprep.subr.mxu0 0.0
  %7290 = vmatpush1.msra.mxu0 %v7179
  %7291 = vmatprep.subr.mxu0 0.0
  %7292 = vmatpush1.msra.mxu0 %v7180
  %7293 = vmatprep.subr.mxu0 0.0
  %7294 = vmatpush1.msra.mxu0 %v7181
  %7295 = vmatprep.subr.mxu0 0.0
  %7296 = vmatpush1.msra.mxu0 %v7182
  %7297 = vmatprep.subr.mxu0 0.0
  %7298 = vmatpush1.msra.mxu0 %v7183
  %7299 = vmatprep.subr.mxu0 0.0
  %7300 = vmatpush1.msra.mxu0 %v7184
  %7301 = vmatprep.subr.mxu0 0.0
  %7302 = vmatpush1.msra.mxu0 %v7185
  %7303 = vmatprep.subr.mxu0 0.0
  %7304 = vmatpush1.msra.mxu0 %v7186
  %7305 = vmatprep.subr.mxu0 0.0
  %7306 = vmatpush1.msra.mxu0 %v7187
  %7307 = vmatprep.subr.mxu0 0.0
  %7308 = vmatpush1.msra.mxu0 %v7188
  %7309 = vmatprep.subr.mxu0 0.0
  %7310 = vmatpush1.msra.mxu0 %v7189
  %7311 = vmatprep.subr.mxu0 0.0
  %7312 = vmatpush1.msra.mxu0 %v7190
  %7313 = vmatprep.subr.mxu0 0.0
  %7314 = vmatpush1.msra.mxu0 %v7191
  %7315 = vmatprep.subr.mxu0 0.0
  %7316 = vmatpush1.msra.mxu0 %v7192
  %7317 = vmatprep.subr.mxu0 0.0
  %7318 = vmatpush1.msra.mxu0 %v7193
  %7319 = vmatprep.subr.mxu0 0.0
  %7320 = vmatpush1.msra.mxu0 %v7194
  %7321 = vmatprep.subr.mxu0 0.0
  %7322 = vmatpush1.msra.mxu0 %v7195
  %7323 = vmatprep.subr.mxu0 0.0
  %7324 = vmatpush1.msra.mxu0 %v7196
  %7325 = vmatprep.subr.mxu0 0.0
  %7326 = vmatpush1.msra.mxu0 %v7197
  %7327 = vmatprep.subr.mxu0 0.0
  %7328 = vmatpush1.msra.mxu0 %v7198
  %7329 = vmatprep.subr.mxu0 0.0
  %7330 = vmatpush1.msra.mxu0 %v7199
  %7331 = vmatprep.subr.mxu0 0.0
  %7332 = vmatpush1.msra.mxu0 %v7200
  %7333 = vmatprep.subr.mxu0 0.0
  %7334 = vmatpush1.msra.mxu0 %v7201
  %7335 = vmatprep.subr.mxu0 0.0
  %7336 = vmatpush1.msra.mxu0 %v7202
  %7337 = vmatprep.subr.mxu0 0.0
  %7338 = vmatpush1.msra.mxu0 %v7203
  %7339 = vmatprep.subr.mxu0 0.0
  %7340 = vmatpush1.msra.mxu0 %v7204
  %7341 = vmatprep.subr.mxu0 0.0
  %7342 = vmatpush1.msra.mxu0 %v7205
  %7343 = vmatprep.subr.mxu0 0.0
  %7344 = vmatpush1.msra.mxu0 %v7206
  %7345 = vmatprep.subr.mxu0 0.0
  %7346 = vmatpush1.msra.mxu0 %v7207
  %7347 = vmatprep.subr.mxu0 0.0
  %7348 = vmatpush1.msra.mxu0 %v7208
  %7349 = vmatprep.subr.mxu0 0.0
  %7350 = vmatpush1.msra.mxu0 %v7209
  %7351 = vmatprep.mubr.f32.mxu0 %v6934
  %7352 = vmatmul.mubr.f32.gmra.mrb[0].mxu0 %v6933
  %v7353 = vpop.f32.mrb[0].mxu0
  %v7354 = vadd.f32 %v7284, %v7353
  %v7355 = vpop.f32.mrb[0].mxu0
  %7356 = vdwg.mxu0
  %7357 = vadd.xlane.f32.xlu0 %v7143
  %v7358 = vpop.xlane.xlu0 %7357
  %v7359 = vmul.f32 %v7358, 0.16666667
  %7361 = vset.pattern.permute.xlu0 0
  %7362 = vperm.xlu0 %7361, %v7354
  %v7363 = vpop.permute.xlu0 %7362
  %v7365 = vadd.f32 %v7143, %v7363
  %v7366 = vsub.f32 %v7365, %v7359
  %7367 = vst [vmem:[%s7] sm:$0xff] %v7366
  // Predicated region
  $region30: #{d2qn_forward.7} parent=0 // pred_check
    _
  $region31: #{d2qn_forward.7} parent=0 // pred_check_branch
    %7369 = sbr.rel (0) target = $region33
  $region32: #{d2qn_forward.7} parent=0 // pred_region
    _
  $region33: #{d2qn_forward.7} parent=0 // pred_fallthru
    _
  // Predicated region
  $region34: #{d2qn_forward.7} parent=0 // pred_check
    _
  $region35: #{d2qn_forward.7} parent=0 // pred_check_branch
    %7371 = sbr.rel (0) target = $region37
  $region36: #{d2qn_forward.7} parent=0 // pred_region
    _
  $region37: #{d2qn_forward.7} parent=0 // pred_fallthru
    _

</llo_original>
